<compile_context>
chip_gen: v5e
topology: v5e:2x2
jax: 0.10.0
libtpu: 0.0.40
codegen_flags: <defaults>
</compile_context>

<pallas_src>
import jax
import jax.numpy as jnp
from jax import lax
from jax.experimental import pallas as pl
from jax.experimental.pallas import tpu as pltpu

PAD = 0
_VMEM = pl.BlockSpec(memory_space=pltpu.MemorySpace.VMEM)  # whole-array-in-VMEM


def _sigmoid(x):
    return jax.nn.sigmoid(x)


# --------------------------------------------------------------------------- #
# fused bidirectional masked-LSTM encoder (both directions interleaved in one
# loop body; backward direction consumes pre-flipped inputs -> static indexing)
# --------------------------------------------------------------------------- #
def _bilstm_encoder_kernel(cvf_ref, cvb_ref, mf_ref, mb_ref,
                           winf_ref, winb_ref, whhf_ref, whhb_ref,
                           bf_ref, bb_ref,
                           hsf_ref, hsb_ref, hfin_ref, cfin_ref,
                           xpf_ref, xpb_ref):
    B, C, _ = cvf_ref.shape
    H = whhf_ref.shape[0]

    # Hoisted non-recurrent work: input projection (+bias) for ALL timesteps,
    # done as B static (C,E)@(E,4H) matmuls per direction (off the serial
    # chain), stored in (C,B,4H) scratch so the loop only does a [t] load.
    for b in range(B):
        xpf_ref[:, b, :] = (
            jnp.dot(cvf_ref[b], winf_ref[...],
                    preferred_element_type=jnp.float32) + bf_ref[...])
        xpb_ref[:, b, :] = (
            jnp.dot(cvb_ref[b], winb_ref[...],
                    preferred_element_type=jnp.float32) + bb_ref[...])

    def cell(pre, h, c, m):
        # fused (B,4H) pre-activations; gates via static lane slices (i,f,g,o)
        i = _sigmoid(pre[:, 0:H])
        f = _sigmoid(pre[:, H:2 * H])
        g = jnp.tanh(pre[:, 2 * H:3 * H])
        o = _sigmoid(pre[:, 3 * H:4 * H])
        c_new = f * c + i * g
        h_new = o * jnp.tanh(c_new)
        h_keep = m * h_new + (1.0 - m) * h        # carry state through PAD
        c_keep = m * c_new + (1.0 - m) * c
        return h_keep, c_keep, m * h_new          # PAD outputs -> 0

    def body(t, carry):
        hf, cf, hb, cb = carry
        # only the recurrent h @ W_hh matmul remains inside the chain
        pre_f = xpf_ref[t] + jnp.dot(hf, whhf_ref[...],
                                     preferred_element_type=jnp.float32)
        pre_b = xpb_ref[t] + jnp.dot(hb, whhb_ref[...],
                                     preferred_element_type=jnp.float32)
        hf, cf, of_ = cell(pre_f, hf, cf, mf_ref[t])
        hb, cb, ob_ = cell(pre_b, hb, cb, mb_ref[t])
        hsf_ref[t] = of_
        hsb_ref[t] = ob_                          # flipped time; un-flipped in wrapper
        return hf, cf, hb, cb

    z = jnp.zeros((B, H), jnp.float32)
    hf, cf, hb, cb = lax.fori_loop(0, C, body, (z, z, z, z), unroll=True)
    hfin_ref[0] = hf
    hfin_ref[1] = hb
    cfin_ref[0] = cf
    cfin_ref[1] = cb


def bilstm_encode(cvf, cvb, m_f, m_b, winf, winb, whhf, whhb, bf, bb):
    B, C, _ = cvf.shape
    H = whhf.shape[0]
    return pl.pallas_call(
        _bilstm_encoder_kernel,
        out_shape=(jax.ShapeDtypeStruct((C, B, H), jnp.float32),   # fwd outputs
                   jax.ShapeDtypeStruct((C, B, H), jnp.float32),   # bwd outputs (flipped)
                   jax.ShapeDtypeStruct((2, B, H), jnp.float32),   # final h (fwd,bwd)
                   jax.ShapeDtypeStruct((2, B, H), jnp.float32)),  # final c (fwd,bwd)
        in_specs=[_VMEM] * 10,
        out_specs=(_VMEM, _VMEM, _VMEM, _VMEM),
        scratch_shapes=[pltpu.VMEM((C, B, 4 * H), jnp.float32),
                        pltpu.VMEM((C, B, 4 * H), jnp.float32)],
    )(cvf, cvb, m_f, m_b, winf, winb, whhf, whhb, bf, bb)


# --------------------------------------------------------------------------- #
# fused decoder: h/c init proj + att_projection + per-step (LSTM cell, batched
# attention on the MXU, combined projection) + DEFERRED generator
# (fc + log_softmax on the whole (Q*B, Vp) slab)
# --------------------------------------------------------------------------- #
def _decoder_generator_kernel(qv_ref, ench_ref, mask_ref, hcat_ref, ccat_ref,
                              whp_ref, wcp_ref, watt_ref,
                              wq_ref, wo_ref, wdh_ref, db_ref,
                              wch_ref, wca_ref, wgen_ref, bgen_ref,
                              out_ref,
                              xq_ref, oall_ref):
    QB = qv_ref.shape[0]
    B, C, H2 = ench_ref.shape                      # H2 == 2H
    H = wdh_ref.shape[0]
    Q = QB // B

    # ---- hoisted non-recurrent work ----
    # q-embedding path for ALL timesteps: one lane-dense matmul (+bias folded in)
    xq_ref[:, 0, :] = (jnp.dot(qv_ref[...], wq_ref[...],
                               preferred_element_type=jnp.float32)
                       + db_ref[...])

    # loop-invariant weights broadcast once to batched rank-3 form
    woB = jnp.broadcast_to(wo_ref[...], (B, H, 4 * H))
    whB = jnp.broadcast_to(wdh_ref[...], (B, H, 4 * H))
    wchB = jnp.broadcast_to(wch_ref[...], (B, H, H))
    wcaB = jnp.broadcast_to(wca_ref[...], (B, H2, H))

    ench = ench_ref[...]                           # (B, C, 2H)
    # att_projection over the whole slab: one batched matmul
    encp = jnp.einsum('bcx,bxh->bch', ench,
                      jnp.broadcast_to(watt_ref[...], (B, H2, H)),
                      preferred_element_type=jnp.float32)   # (B, C, H)
    mask3 = mask_ref[...]                          # (B, 1, C); 1.0 = real token
    neg = jnp.float32(-1e30)                       # masked_fill(-inf) surrogate

    # decoder init state: [h_fwd, h_bwd] @ W_{h,c}proj
    h0 = jnp.einsum('bqx,bxh->bqh', hcat_ref[...],
                    jnp.broadcast_to(whp_ref[...], (B, H2, H)),
                    preferred_element_type=jnp.float32)     # (B, 1, H)
    c0 = jnp.einsum('bqx,bxh->bqh', ccat_ref[...],
                    jnp.broadcast_to(wcp_ref[...], (B, H2, H)),
                    preferred_element_type=jnp.float32)

    def body(t, carry):
        h, c, o_prev = carry                       # each (B, 1, H)
        row = pl.multiple_of(t * B, B)
        x_t = xq_ref[pl.ds(row, B)]                # (B, 1, 4H) precomputed

        # recurrent paths only (o_prev / h); gates via static lane slices
        pre = (x_t
               + jnp.einsum('bqh,bhk->bqk', o_prev, woB,
                            preferred_element_type=jnp.float32)
               + jnp.einsum('bqh,bhk->bqk', h, whB,
                            preferred_element_type=jnp.float32))
        i = _sigmoid(pre[..., 0:H])
        f = _sigmoid(pre[..., H:2 * H])
        g = jnp.tanh(pre[..., 2 * H:3 * H])
        o = _sigmoid(pre[..., 3 * H:4 * H])
        c_new = f * c + i * g
        h_new = o * jnp.tanh(c_new)                # (B, 1, H)  decoder hidden

        # attention: batched MXU contractions (no per-batch loops / concats)
        e = jnp.einsum('bqh,bch->bqc', h_new, encp,
                       preferred_element_type=jnp.float32)  # (B, 1, C)
        e = jnp.where(mask3 > 0.5, e, neg)
        emax = jnp.max(e, axis=-1, keepdims=True)
        p = jnp.exp(e - emax)
        alpha = p * pl.reciprocal(jnp.sum(p, axis=-1, keepdims=True),
                                  approx=True)
        a = jnp.einsum('bqc,bcx->bqx', alpha, ench,
                       preferred_element_type=jnp.float32)  # (B, 1, 2H)

        # combined output projection, U_t = [h_new, a]
        v = (jnp.einsum('bqh,bhk->bqk', h_new, wchB,
                        preferred_element_type=jnp.float32)
             + jnp.einsum('bqx,bxk->bqk', a, wcaB,
                          preferred_element_type=jnp.float32))
        o_t = jnp.tanh(v)                          # dropout(p=0.0) == identity
        oall_ref[pl.ds(row, B)] = o_t              # defer generator to post-loop
        return h_new, c_new, o_t

    lax.fori_loop(0, Q, body,
                  (h0, c0, jnp.zeros((B, 1, H), jnp.float32)), unroll=True)

    # ---- deferred generator: one lane-dense matmul + log_softmax on the slab ----
    o_flat = oall_ref[:, 0, :]                     # (Q*B, H)
    logits = (jnp.dot(o_flat, wgen_ref[...],
                      preferred_element_type=jnp.float32) + bgen_ref[...])
    lmax = jnp.max(logits, axis=-1, keepdims=True)
    z = logits - lmax
    lse = jnp.log(jnp.sum(jnp.exp(z), axis=-1, keepdims=True))
    out_ref[...] = (z - lse).astype(out_ref.dtype)  # single (Q*B, Vp) store


def decode_and_generate(qv2d, ench, mask3, hcat3, ccat3,
                        whp, wcp, watt, wq, wo, wdh, db, wch, wca, wgen, bgen):
    QB = qv2d.shape[0]
    H = wdh.shape[0]
    Vp = wgen.shape[1]
    return pl.pallas_call(
        _decoder_generator_kernel,
        out_shape=jax.ShapeDtypeStruct((QB, Vp), jnp.float32),
        in_specs=[_VMEM] * 16,
        out_specs=_VMEM,
        scratch_shapes=[pltpu.VMEM((QB, 1, 4 * H), jnp.float32),  # q-path slab
                        pltpu.VMEM((QB, 1, H), jnp.float32)],     # o_t slab
    )(qv2d, ench, mask3, hcat3, ccat3, whp, wcp, watt, wq, wo, wdh, db,
      wch, wca, wgen, bgen)


# --------------------------------------------------------------------------- #
# parameters + wrapper-side weight composition / layout plumbing + forward
# --------------------------------------------------------------------------- #
def init_params(key, vocab, emb_dim, hidden, out_size):
    ks = jax.random.split(key, 17)
    s = 0.1
    rnd = lambda k, shape: jax.random.normal(k, shape, jnp.float32) * s
    H = hidden
    return {
        'word_vectors': rnd(ks[0], (vocab, emb_dim)),
        'w_emb':     rnd(ks[1], (emb_dim, H)),
        'enc_f_wih': rnd(ks[2], (H, 4 * H)),
        'enc_f_whh': rnd(ks[3], (H, 4 * H)),
        'enc_f_b':   rnd(ks[4], (1, 4 * H)),
        'enc_b_wih': rnd(ks[5], (H, 4 * H)),
        'enc_b_whh': rnd(ks[6], (H, 4 * H)),
        'enc_b_b':   rnd(ks[7], (1, 4 * H)),
        'w_hproj':   rnd(ks[8], (2 * H, H)),
        'w_cproj':   rnd(ks[9], (2 * H, H)),
        'w_att':     rnd(ks[10], (2 * H, H)),
        'dec_wih':   rnd(ks[11], (2 * H, 4 * H)),
        'dec_whh':   rnd(ks[12], (H, 4 * H)),
        'dec_b':     rnd(ks[13], (1, 4 * H)),
        'w_comb':    rnd(ks[14], (3 * H, H)),
        'w_gen':     rnd(ks[15], (H, out_size)),
        'b_gen':     rnd(ks[16], (1, out_size)),
    }


def seq2seq_attn_forward(params, cw_idxs, qw_idxs, hidden):
    H = hidden
    B, C = cw_idxs.shape
    Q = qw_idxs.shape[1]
    w_emb = params['w_emb']

    # compose the shared embedding projection into the input-gate weights
    # (x @ (W_emb @ W_ih) == (x @ W_emb) @ W_ih) -> no per-step embedding matmul
    winf = w_emb @ params['enc_f_wih']            # (E, 4H)
    winb = w_emb @ params['enc_b_wih']
    wq = w_emb @ params['dec_wih'][:H]            # q-embedding path of decoder
    wo = params['dec_wih'][H:]                    # o_prev path of decoder

    # embedding lookup (XLA gather glue) + layout plumbing
    c_vec = jnp.take(params['word_vectors'], cw_idxs, axis=0)     # (B, C, E)
    q_vec = jnp.take(params['word_vectors'], qw_idxs, axis=0)     # (B, Q, E)
    E = c_vec.shape[-1]
    c_vec_rev = c_vec[:, ::-1, :]                 # pre-flipped backward input
    c_mask = (cw_idxs != PAD).astype(jnp.float32)                 # (B, C)
    m_f = jnp.transpose(c_mask)[:, :, None]                       # (C, B, 1)
    m_b = m_f[::-1]                                               # flipped mask
    qv2d = jnp.transpose(q_vec, (1, 0, 2)).reshape(Q * B, E)      # row = t*B + b

    # ---- fused bidirectional encoder (1 pallas_call, interleaved directions) ----
    hsf, hsb_rev, hfin, cfin = bilstm_encode(
        c_vec, c_vec_rev, m_f, m_b, winf, winb,
        params['enc_f_whh'], params['enc_b_whh'],
        params['enc_f_b'], params['enc_b_b'])

    # wrapper-side relayout (off the kernels' serial time)
    hsb = hsb_rev[::-1]                                           # original time
    enc_h = jnp.concatenate([jnp.transpose(hsf, (1, 0, 2)),
                             jnp.transpose(hsb, (1, 0, 2))], axis=-1)  # (B,C,2H)
    hcat3 = jnp.concatenate([hfin[0], hfin[1]], axis=-1)[:, None, :]   # (B,1,2H)
    ccat3 = jnp.concatenate([cfin[0], cfin[1]], axis=-1)[:, None, :]
    mask3 = c_mask[:, None, :]                                         # (B,1,C)

    # pad the generator to a lane-dense multiple of 128 (pad logits -> -1e30)
    V = params['w_gen'].shape[1]
    Vp = ((V + 127) // 128) * 128
    wgen = jnp.pad(params['w_gen'], ((0, 0), (0, Vp - V)))
    bgen = jnp.pad(params['b_gen'], ((0, 0), (0, Vp - V)),
                   constant_values=-1e30)

    wch = params['w_comb'][:H, :]                 # U_t = [h_dec, a] split weights
    wca = params['w_comb'][H:, :]

    # ---- fused decoder + attention + combined proj + generator (1 pallas_call) ----
    logp2d = decode_and_generate(qv2d, enc_h, mask3, hcat3, ccat3,
                                 params['w_hproj'], params['w_cproj'],
                                 params['w_att'], wq, wo,
                                 params['dec_whh'], params['dec_b'],
                                 wch, wca, wgen, bgen)
    logp = logp2d.reshape(Q, B, Vp)[:, :, :V]
    return jnp.transpose(logp, (1, 0, 2))         # (B, Q, V)


if __name__ == "__main__":
    VOCAB, EMB, HIDDEN, OUT = 50, 32, 32, 50
    B, C_LEN, Q_LEN = 2, 16, 8

    key = jax.random.PRNGKey(0)
    k_p, k_c, k_q = jax.random.split(key, 3)
    params = init_params(k_p, VOCAB, EMB, HIDDEN, OUT)

    cw_idxs = jax.random.randint(k_c, (B, C_LEN), 1, VOCAB, dtype=jnp.int32)
    cw_idxs = cw_idxs.at[0, 13:].set(PAD).at[1, 10:].set(PAD)   # padded tails
    qw_idxs = jax.random.randint(k_q, (B, Q_LEN), 1, VOCAB, dtype=jnp.int32)

    fwd = jax.jit(lambda c, q: seq2seq_attn_forward(params, c, q, HIDDEN))
    log_probs = jax.block_until_ready(fwd(cw_idxs, qw_idxs))

    assert log_probs.shape == (B, Q_LEN, OUT)
    assert bool(jnp.all(jnp.isfinite(log_probs)))
    print("KERNEL_OK")
</pallas_src>

<mosaic_0001>
module attributes {stable_mosaic.version = 11 : i64} {
  func.func @_decoder_generator_kernel(%arg0: memref<16x32xf32, #tpu.memory_space<vmem>>, %arg1: memref<2x16x64xf32, #tpu.memory_space<vmem>>, %arg2: memref<2x1x16xf32, #tpu.memory_space<vmem>>, %arg3: memref<2x1x64xf32, #tpu.memory_space<vmem>>, %arg4: memref<2x1x64xf32, #tpu.memory_space<vmem>>, %arg5: memref<64x32xf32, #tpu.memory_space<vmem>>, %arg6: memref<64x32xf32, #tpu.memory_space<vmem>>, %arg7: memref<64x32xf32, #tpu.memory_space<vmem>>, %arg8: memref<32x128xf32, #tpu.memory_space<vmem>>, %arg9: memref<32x128xf32, #tpu.memory_space<vmem>>, %arg10: memref<32x128xf32, #tpu.memory_space<vmem>>, %arg11: memref<1x128xf32, #tpu.memory_space<vmem>>, %arg12: memref<32x32xf32, #tpu.memory_space<vmem>>, %arg13: memref<64x32xf32, #tpu.memory_space<vmem>>, %arg14: memref<32x128xf32, #tpu.memory_space<vmem>>, %arg15: memref<1x128xf32, #tpu.memory_space<vmem>>, %arg16: memref<16x128xf32, #tpu.memory_space<vmem>>, %arg17: memref<16x1x128xf32, #tpu.memory_space<vmem>>, %arg18: memref<16x1x32xf32, #tpu.memory_space<vmem>>) attributes {dimension_semantics = [], scalar_prefetch = 0 : i64, scratch_operands = 2 : i64, tpu.core_type = #tpu.core_type<tc>} {
    %c0 = arith.constant 0 : index
    %c0_0 = arith.constant 0 : index
    %0 = vector.load %arg0[%c0, %c0_0] : memref<16x32xf32, #tpu.memory_space<vmem>>, vector<16x32xf32>
    %c0_1 = arith.constant 0 : index
    %c0_2 = arith.constant 0 : index
    %1 = vector.load %arg8[%c0_1, %c0_2] : memref<32x128xf32, #tpu.memory_space<vmem>>, vector<32x128xf32>
    %cst = arith.constant dense<0.000000e+00> : vector<16x128xf32>
    %2 = tpu.matmul %0, %1, %cst {dimension_numbers = #tpu.dot_dimension_numbers<[1], [0], [0], [1], [0, 0, 1, 1], [], []>} : vector<16x32xf32>, vector<32x128xf32>, vector<16x128xf32> -> vector<16x128xf32>
    %c0_3 = arith.constant 0 : index
    %c0_4 = arith.constant 0 : index
    %3 = vector.load %arg11[%c0_3, %c0_4] : memref<1x128xf32, #tpu.memory_space<vmem>>, vector<1x128xf32>
    %4 = vector.broadcast %3 : vector<1x128xf32> to vector<16x128xf32>
    %5 = arith.addf %2, %4 : vector<16x128xf32>
    %c0_5 = arith.constant 0 : index
    %c0_6 = arith.constant 0 : index
    %c0_7 = arith.constant 0 : index
    %6 = vector.load %arg17[%c0_5, %c0_6, %c0_7] : memref<16x1x128xf32, #tpu.memory_space<vmem>>, vector<16x1x128xf32>
    %7 = vector.shape_cast %6 : vector<16x1x128xf32> to vector<16x128xf32>
    %8 = vector.shape_cast %5 : vector<16x128xf32> to vector<16x1x128xf32>
    tpu.vector_store %arg17[%c0_5, %c0_6, %c0_7], %8 {strides = array<i32>} : memref<16x1x128xf32, #tpu.memory_space<vmem>>, vector<16x1x128xf32>,
    %c0_8 = arith.constant 0 : index
    %c0_9 = arith.constant 0 : index
    %9 = vector.load %arg9[%c0_8, %c0_9] : memref<32x128xf32, #tpu.memory_space<vmem>>, vector<32x128xf32>
    %10 = vector.shape_cast %9 : vector<32x128xf32> to vector<1x32x128xf32>
    %11 = vector.broadcast %10 : vector<1x32x128xf32> to vector<2x32x128xf32>
    %c0_10 = arith.constant 0 : index
    %c0_11 = arith.constant 0 : index
    %12 = vector.load %arg10[%c0_10, %c0_11] : memref<32x128xf32, #tpu.memory_space<vmem>>, vector<32x128xf32>
    %13 = vector.shape_cast %12 : vector<32x128xf32> to vector<1x32x128xf32>
    %14 = vector.broadcast %13 : vector<1x32x128xf32> to vector<2x32x128xf32>
    %c0_12 = arith.constant 0 : index
    %c0_13 = arith.constant 0 : index
    %15 = vector.load %arg12[%c0_12, %c0_13] : memref<32x32xf32, #tpu.memory_space<vmem>>, vector<32x32xf32>
    %16 = vector.shape_cast %15 : vector<32x32xf32> to vector<1x32x32xf32>
    %17 = vector.broadcast %16 : vector<1x32x32xf32> to vector<2x32x32xf32>
    %c0_14 = arith.constant 0 : index
    %c0_15 = arith.constant 0 : index
    %18 = vector.load %arg13[%c0_14, %c0_15] : memref<64x32xf32, #tpu.memory_space<vmem>>, vector<64x32xf32>
    %19 = vector.shape_cast %18 : vector<64x32xf32> to vector<1x64x32xf32>
    %20 = vector.broadcast %19 : vector<1x64x32xf32> to vector<2x64x32xf32>
    %c0_16 = arith.constant 0 : index
    %c0_17 = arith.constant 0 : index
    %c0_18 = arith.constant 0 : index
    %21 = vector.load %arg1[%c0_16, %c0_17, %c0_18] : memref<2x16x64xf32, #tpu.memory_space<vmem>>, vector<2x16x64xf32>
    %c0_19 = arith.constant 0 : index
    %c0_20 = arith.constant 0 : index
    %22 = vector.load %arg7[%c0_19, %c0_20] : memref<64x32xf32, #tpu.memory_space<vmem>>, vector<64x32xf32>
    %23 = vector.shape_cast %22 : vector<64x32xf32> to vector<1x64x32xf32>
    %24 = vector.broadcast %23 : vector<1x64x32xf32> to vector<2x64x32xf32>
    "tpu.trace_start"() <{level = 10 : i32, message = "bcx,bxh->bch"}> : () -> ()
    %cst_21 = arith.constant dense<0.000000e+00> : vector<2x16x32xf32>
    %25 = tpu.matmul %21, %24, %cst_21 {dimension_numbers = #tpu.dot_dimension_numbers<[2], [1], [1], [2], [0, 0, 0, 1, 1, 2], [0], [0]>} : vector<2x16x64xf32>, vector<2x64x32xf32>, vector<2x16x32xf32> -> vector<2x16x32xf32>
    "tpu.trace_stop"() : () -> ()
    %c0_22 = arith.constant 0 : index
    %c0_23 = arith.constant 0 : index
    %c0_24 = arith.constant 0 : index
    %26 = vector.load %arg2[%c0_22, %c0_23, %c0_24] : memref<2x1x16xf32, #tpu.memory_space<vmem>>, vector<2x1x16xf32>
    %c0_25 = arith.constant 0 : index
    %c0_26 = arith.constant 0 : index
    %c0_27 = arith.constant 0 : index
    %27 = vector.load %arg3[%c0_25, %c0_26, %c0_27] : memref<2x1x64xf32, #tpu.memory_space<vmem>>, vector<2x1x64xf32>
    %c0_28 = arith.constant 0 : index
    %c0_29 = arith.constant 0 : index
    %28 = vector.load %arg5[%c0_28, %c0_29] : memref<64x32xf32, #tpu.memory_space<vmem>>, vector<64x32xf32>
    %29 = vector.shape_cast %28 : vector<64x32xf32> to vector<1x64x32xf32>
    %30 = vector.broadcast %29 : vector<1x64x32xf32> to vector<2x64x32xf32>
    "tpu.trace_start"() <{level = 10 : i32, message = "bqx,bxh->bqh"}> : () -> ()
    %cst_30 = arith.constant dense<0.000000e+00> : vector<2x1x32xf32>
    %31 = tpu.matmul %27, %30, %cst_30 {dimension_numbers = #tpu.dot_dimension_numbers<[2], [1], [1], [2], [0, 0, 0, 1, 1, 2], [0], [0]>} : vector<2x1x64xf32>, vector<2x64x32xf32>, vector<2x1x32xf32> -> vector<2x1x32xf32>
    "tpu.trace_stop"() : () -> ()
    %c0_31 = arith.constant 0 : index
    %c0_32 = arith.constant 0 : index
    %c0_33 = arith.constant 0 : index
    %32 = vector.load %arg4[%c0_31, %c0_32, %c0_33] : memref<2x1x64xf32, #tpu.memory_space<vmem>>, vector<2x1x64xf32>
    %c0_34 = arith.constant 0 : index
    %c0_35 = arith.constant 0 : index
    %33 = vector.load %arg6[%c0_34, %c0_35] : memref<64x32xf32, #tpu.memory_space<vmem>>, vector<64x32xf32>
    %34 = vector.shape_cast %33 : vector<64x32xf32> to vector<1x64x32xf32>
    %35 = vector.broadcast %34 : vector<1x64x32xf32> to vector<2x64x32xf32>
    "tpu.trace_start"() <{level = 10 : i32, message = "bqx,bxh->bqh"}> : () -> ()
    %cst_36 = arith.constant dense<0.000000e+00> : vector<2x1x32xf32>
    %36 = tpu.matmul %32, %35, %cst_36 {dimension_numbers = #tpu.dot_dimension_numbers<[2], [1], [1], [2], [0, 0, 0, 1, 1, 2], [0], [0]>} : vector<2x1x64xf32>, vector<2x64x32xf32>, vector<2x1x32xf32> -> vector<2x1x32xf32>
    %cst_37 = arith.constant 0.000000e+00 : f32
    "tpu.trace_stop"() : () -> ()
    %37 = vector.broadcast %cst_37 : f32 to vector<2x1x32xf32>
    %cst_38 = arith.constant -1.000000e+30 : f32
    %c0_i32 = arith.constant 0 : i32
    %c2_i32 = arith.constant 2 : i32
    %38 = arith.muli %c0_i32, %c2_i32 : i32
    %39 = tpu.assume_multiple %38, 2 : i32
    %40 = arith.index_cast %39 : i32 to index
    %c0_39 = arith.constant 0 : index
    %c0_40 = arith.constant 0 : index
    %41 = vector.load %arg17[%40, %c0_39, %c0_40] : memref<16x1x128xf32, #tpu.memory_space<vmem>>, vector<2x1x128xf32>
    "tpu.trace_start"() <{level = 10 : i32, message = "bqh,bhk->bqk"}> : () -> ()
    %cst_41 = arith.constant dense<0.000000e+00> : vector<2x1x128xf32>
    %42 = tpu.matmul %37, %11, %cst_41 {dimension_numbers = #tpu.dot_dimension_numbers<[2], [1], [1], [2], [0, 0, 0, 1, 1, 2], [0], [0]>} : vector<2x1x32xf32>, vector<2x32x128xf32>, vector<2x1x128xf32> -> vector<2x1x128xf32>
    "tpu.trace_stop"() : () -> ()
    %43 = arith.addf %41, %42 : vector<2x1x128xf32>
    "tpu.trace_start"() <{level = 10 : i32, message = "bqh,bhk->bqk"}> : () -> ()
    %cst_42 = arith.constant dense<0.000000e+00> : vector<2x1x128xf32>
    %44 = tpu.matmul %31, %14, %cst_42 {dimension_numbers = #tpu.dot_dimension_numbers<[2], [1], [1], [2], [0, 0, 0, 1, 1, 2], [0], [0]>} : vector<2x1x32xf32>, vector<2x32x128xf32>, vector<2x1x128xf32> -> vector<2x1x128xf32>
    "tpu.trace_stop"() : () -> ()
    %45 = arith.addf %43, %44 : vector<2x1x128xf32>
    %46 = vector.extract_strided_slice %45 {offsets = [0, 0, 0], sizes = [2, 1, 32], strides = [1, 1, 1]} : vector<2x1x128xf32> to vector<2x1x32xf32>
    %47 = arith.negf %46 : vector<2x1x32xf32>
    %48 = math.exp %47 : vector<2x1x32xf32>
    %cst_43 = arith.constant 1.000000e+00 : f32
    %49 = vector.broadcast %cst_43 : f32 to vector<2x1x32xf32>
    %50 = arith.addf %49, %48 : vector<2x1x32xf32>
    %51 = arith.divf %49, %50 : vector<2x1x32xf32>
    %52 = vector.extract_strided_slice %45 {offsets = [0, 0, 32], sizes = [2, 1, 32], strides = [1, 1, 1]} : vector<2x1x128xf32> to vector<2x1x32xf32>
    %53 = arith.negf %52 : vector<2x1x32xf32>
    %54 = math.exp %53 : vector<2x1x32xf32>
    %cst_44 = arith.constant 1.000000e+00 : f32
    %55 = vector.broadcast %cst_44 : f32 to vector<2x1x32xf32>
    %56 = arith.addf %55, %54 : vector<2x1x32xf32>
    %57 = arith.divf %55, %56 : vector<2x1x32xf32>
    %58 = vector.extract_strided_slice %45 {offsets = [0, 0, 64], sizes = [2, 1, 32], strides = [1, 1, 1]} : vector<2x1x128xf32> to vector<2x1x32xf32>
    %59 = math.tanh %58 : vector<2x1x32xf32>
    %60 = vector.extract_strided_slice %45 {offsets = [0, 0, 96], sizes = [2, 1, 32], strides = [1, 1, 1]} : vector<2x1x128xf32> to vector<2x1x32xf32>
    %61 = arith.negf %60 : vector<2x1x32xf32>
    %62 = math.exp %61 : vector<2x1x32xf32>
    %cst_45 = arith.constant 1.000000e+00 : f32
    %63 = vector.broadcast %cst_45 : f32 to vector<2x1x32xf32>
    %64 = arith.addf %63, %62 : vector<2x1x32xf32>
    %65 = arith.divf %63, %64 : vector<2x1x32xf32>
    %66 = arith.mulf %57, %36 : vector<2x1x32xf32>
    %67 = arith.mulf %51, %59 : vector<2x1x32xf32>
    %68 = arith.addf %66, %67 : vector<2x1x32xf32>
    %69 = math.tanh %68 : vector<2x1x32xf32>
    %70 = arith.mulf %65, %69 : vector<2x1x32xf32>
    "tpu.trace_start"() <{level = 10 : i32, message = "bqh,bch->bqc"}> : () -> ()
    %cst_46 = arith.constant dense<0.000000e+00> : vector<2x1x16xf32>
    %71 = tpu.matmul %70, %25, %cst_46 {dimension_numbers = #tpu.dot_dimension_numbers<[2], [2], [1], [1], [0, 0, 0, 1, 1, 1], [0], [0]>} : vector<2x1x32xf32>, vector<2x16x32xf32>, vector<2x1x16xf32> -> vector<2x1x16xf32>
    %cst_47 = arith.constant 5.000000e-01 : f32
    "tpu.trace_stop"() : () -> ()
    %72 = vector.broadcast %cst_47 : f32 to vector<2x1x16xf32>
    %73 = arith.cmpf ogt, %26, %72 : vector<2x1x16xf32>
    %74 = vector.broadcast %cst_38 : f32 to vector<2x1x16xf32>
    %75 = arith.select %73, %71, %74 : vector<2x1x16xi1>, vector<2x1x16xf32>
    %cst_48 = arith.constant dense<0xFF800000> : vector<2x1xf32>
    %76 = vector.multi_reduction <maximumf>, %75, %cst_48 [2] : vector<2x1x16xf32> to vector<2x1xf32>
    %77 = vector.shape_cast %76 : vector<2x1xf32> to vector<2x1x1xf32>
    %78 = vector.broadcast %77 : vector<2x1x1xf32> to vector<2x1x16xf32>
    %79 = arith.subf %75, %78 : vector<2x1x16xf32>
    %80 = math.exp %79 : vector<2x1x16xf32>
    %cst_49 = arith.constant dense<0.000000e+00> : vector<2x1xf32>
    %81 = vector.multi_reduction <add>, %80, %cst_49 [2] : vector<2x1x16xf32> to vector<2x1xf32>
    %82 = vector.shape_cast %81 : vector<2x1xf32> to vector<2x1x1xf32>
    %83 = tpu.reciprocal %82 {approx = true} : vector<2x1x1xf32> -> vector<2x1x1xf32>
    %84 = vector.broadcast %83 : vector<2x1x1xf32> to vector<2x1x16xf32>
    %85 = arith.mulf %80, %84 : vector<2x1x16xf32>
    "tpu.trace_start"() <{level = 10 : i32, message = "bqc,bcx->bqx"}> : () -> ()
    %cst_50 = arith.constant dense<0.000000e+00> : vector<2x1x64xf32>
    %86 = tpu.matmul %85, %21, %cst_50 {dimension_numbers = #tpu.dot_dimension_numbers<[2], [1], [1], [2], [0, 0, 0, 1, 1, 2], [0], [0]>} : vector<2x1x16xf32>, vector<2x16x64xf32>, vector<2x1x64xf32> -> vector<2x1x64xf32>
    "tpu.trace_stop"() : () -> ()
    "tpu.trace_start"() <{level = 10 : i32, message = "bqh,bhk->bqk"}> : () -> ()
    %cst_51 = arith.constant dense<0.000000e+00> : vector<2x1x32xf32>
    %87 = tpu.matmul %70, %17, %cst_51 {dimension_numbers = #tpu.dot_dimension_numbers<[2], [1], [1], [2], [0, 0, 0, 1, 1, 2], [0], [0]>} : vector<2x1x32xf32>, vector<2x32x32xf32>, vector<2x1x32xf32> -> vector<2x1x32xf32>
    "tpu.trace_stop"() : () -> ()
    "tpu.trace_start"() <{level = 10 : i32, message = "bqx,bxk->bqk"}> : () -> ()
    %cst_52 = arith.constant dense<0.000000e+00> : vector<2x1x32xf32>
    %88 = tpu.matmul %86, %20, %cst_52 {dimension_numbers = #tpu.dot_dimension_numbers<[2], [1], [1], [2], [0, 0, 0, 1, 1, 2], [0], [0]>} : vector<2x1x64xf32>, vector<2x64x32xf32>, vector<2x1x32xf32> -> vector<2x1x32xf32>
    "tpu.trace_stop"() : () -> ()
    %89 = arith.addf %87, %88 : vector<2x1x32xf32>
    %90 = math.tanh %89 : vector<2x1x32xf32>
    %91 = arith.index_cast %39 : i32 to index
    %c0_53 = arith.constant 0 : index
    %c0_54 = arith.constant 0 : index
    %92 = vector.load %arg18[%91, %c0_53, %c0_54] : memref<16x1x32xf32, #tpu.memory_space<vmem>>, vector<2x1x32xf32>
    tpu.vector_store %arg18[%91, %c0_53, %c0_54], %90 {strides = array<i32>} : memref<16x1x32xf32, #tpu.memory_space<vmem>>, vector<2x1x32xf32>,
    %c1_i32 = arith.constant 1 : i32
    %c2_i32_55 = arith.constant 2 : i32
    %93 = arith.muli %c1_i32, %c2_i32_55 : i32
    %94 = tpu.assume_multiple %93, 2 : i32
    %95 = arith.index_cast %94 : i32 to index
    %c0_56 = arith.constant 0 : index
    %c0_57 = arith.constant 0 : index
    %96 = vector.load %arg17[%95, %c0_56, %c0_57] : memref<16x1x128xf32, #tpu.memory_space<vmem>>, vector<2x1x128xf32>
    "tpu.trace_start"() <{level = 10 : i32, message = "bqh,bhk->bqk"}> : () -> ()
    %cst_58 = arith.constant dense<0.000000e+00> : vector<2x1x128xf32>
    %97 = tpu.matmul %90, %11, %cst_58 {dimension_numbers = #tpu.dot_dimension_numbers<[2], [1], [1], [2], [0, 0, 0, 1, 1, 2], [0], [0]>} : vector<2x1x32xf32>, vector<2x32x128xf32>, vector<2x1x128xf32> -> vector<2x1x128xf32>
    "tpu.trace_stop"() : () -> ()
    %98 = arith.addf %96, %97 : vector<2x1x128xf32>
    "tpu.trace_start"() <{level = 10 : i32, message = "bqh,bhk->bqk"}> : () -> ()
    %cst_59 = arith.constant dense<0.000000e+00> : vector<2x1x128xf32>
    %99 = tpu.matmul %70, %14, %cst_59 {dimension_numbers = #tpu.dot_dimension_numbers<[2], [1], [1], [2], [0, 0, 0, 1, 1, 2], [0], [0]>} : vector<2x1x32xf32>, vector<2x32x128xf32>, vector<2x1x128xf32> -> vector<2x1x128xf32>
    "tpu.trace_stop"() : () -> ()
    %100 = arith.addf %98, %99 : vector<2x1x128xf32>
    %101 = vector.extract_strided_slice %100 {offsets = [0, 0, 0], sizes = [2, 1, 32], strides = [1, 1, 1]} : vector<2x1x128xf32> to vector<2x1x32xf32>
    %102 = arith.negf %101 : vector<2x1x32xf32>
    %103 = math.exp %102 : vector<2x1x32xf32>
    %cst_60 = arith.constant 1.000000e+00 : f32
    %104 = vector.broadcast %cst_60 : f32 to vector<2x1x32xf32>
    %105 = arith.addf %104, %103 : vector<2x1x32xf32>
    %106 = arith.divf %104, %105 : vector<2x1x32xf32>
    %107 = vector.extract_strided_slice %100 {offsets = [0, 0, 32], sizes = [2, 1, 32], strides = [1, 1, 1]} : vector<2x1x128xf32> to vector<2x1x32xf32>
    %108 = arith.negf %107 : vector<2x1x32xf32>
    %109 = math.exp %108 : vector<2x1x32xf32>
    %cst_61 = arith.constant 1.000000e+00 : f32
    %110 = vector.broadcast %cst_61 : f32 to vector<2x1x32xf32>
    %111 = arith.addf %110, %109 : vector<2x1x32xf32>
    %112 = arith.divf %110, %111 : vector<2x1x32xf32>
    %113 = vector.extract_strided_slice %100 {offsets = [0, 0, 64], sizes = [2, 1, 32], strides = [1, 1, 1]} : vector<2x1x128xf32> to vector<2x1x32xf32>
    %114 = math.tanh %113 : vector<2x1x32xf32>
    %115 = vector.extract_strided_slice %100 {offsets = [0, 0, 96], sizes = [2, 1, 32], strides = [1, 1, 1]} : vector<2x1x128xf32> to vector<2x1x32xf32>
    %116 = arith.negf %115 : vector<2x1x32xf32>
    %117 = math.exp %116 : vector<2x1x32xf32>
    %cst_62 = arith.constant 1.000000e+00 : f32
    %118 = vector.broadcast %cst_62 : f32 to vector<2x1x32xf32>
    %119 = arith.addf %118, %117 : vector<2x1x32xf32>
    %120 = arith.divf %118, %119 : vector<2x1x32xf32>
    %121 = arith.mulf %112, %68 : vector<2x1x32xf32>
    %122 = arith.mulf %106, %114 : vector<2x1x32xf32>
    %123 = arith.addf %121, %122 : vector<2x1x32xf32>
    %124 = math.tanh %123 : vector<2x1x32xf32>
    %125 = arith.mulf %120, %124 : vector<2x1x32xf32>
    "tpu.trace_start"() <{level = 10 : i32, message = "bqh,bch->bqc"}> : () -> ()
    %cst_63 = arith.constant dense<0.000000e+00> : vector<2x1x16xf32>
    %126 = tpu.matmul %125, %25, %cst_63 {dimension_numbers = #tpu.dot_dimension_numbers<[2], [2], [1], [1], [0, 0, 0, 1, 1, 1], [0], [0]>} : vector<2x1x32xf32>, vector<2x16x32xf32>, vector<2x1x16xf32> -> vector<2x1x16xf32>
    %cst_64 = arith.constant 5.000000e-01 : f32
    "tpu.trace_stop"() : () -> ()
    %127 = vector.broadcast %cst_64 : f32 to vector<2x1x16xf32>
    %128 = arith.cmpf ogt, %26, %127 : vector<2x1x16xf32>
    %129 = vector.broadcast %cst_38 : f32 to vector<2x1x16xf32>
    %130 = arith.select %128, %126, %129 : vector<2x1x16xi1>, vector<2x1x16xf32>
    %cst_65 = arith.constant dense<0xFF800000> : vector<2x1xf32>
    %131 = vector.multi_reduction <maximumf>, %130, %cst_65 [2] : vector<2x1x16xf32> to vector<2x1xf32>
    %132 = vector.shape_cast %131 : vector<2x1xf32> to vector<2x1x1xf32>
    %133 = vector.broadcast %132 : vector<2x1x1xf32> to vector<2x1x16xf32>
    %134 = arith.subf %130, %133 : vector<2x1x16xf32>
    %135 = math.exp %134 : vector<2x1x16xf32>
    %cst_66 = arith.constant dense<0.000000e+00> : vector<2x1xf32>
    %136 = vector.multi_reduction <add>, %135, %cst_66 [2] : vector<2x1x16xf32> to vector<2x1xf32>
    %137 = vector.shape_cast %136 : vector<2x1xf32> to vector<2x1x1xf32>
    %138 = tpu.reciprocal %137 {approx = true} : vector<2x1x1xf32> -> vector<2x1x1xf32>
    %139 = vector.broadcast %138 : vector<2x1x1xf32> to vector<2x1x16xf32>
    %140 = arith.mulf %135, %139 : vector<2x1x16xf32>
    "tpu.trace_start"() <{level = 10 : i32, message = "bqc,bcx->bqx"}> : () -> ()
    %cst_67 = arith.constant dense<0.000000e+00> : vector<2x1x64xf32>
    %141 = tpu.matmul %140, %21, %cst_67 {dimension_numbers = #tpu.dot_dimension_numbers<[2], [1], [1], [2], [0, 0, 0, 1, 1, 2], [0], [0]>} : vector<2x1x16xf32>, vector<2x16x64xf32>, vector<2x1x64xf32> -> vector<2x1x64xf32>
    "tpu.trace_stop"() : () -> ()
    "tpu.trace_start"() <{level = 10 : i32, message = "bqh,bhk->bqk"}> : () -> ()
    %cst_68 = arith.constant dense<0.000000e+00> : vector<2x1x32xf32>
    %142 = tpu.matmul %125, %17, %cst_68 {dimension_numbers = #tpu.dot_dimension_numbers<[2], [1], [1], [2], [0, 0, 0, 1, 1, 2], [0], [0]>} : vector<2x1x32xf32>, vector<2x32x32xf32>, vector<2x1x32xf32> -> vector<2x1x32xf32>
    "tpu.trace_stop"() : () -> ()
    "tpu.trace_start"() <{level = 10 : i32, message = "bqx,bxk->bqk"}> : () -> ()
    %cst_69 = arith.constant dense<0.000000e+00> : vector<2x1x32xf32>
    %143 = tpu.matmul %141, %20, %cst_69 {dimension_numbers = #tpu.dot_dimension_numbers<[2], [1], [1], [2], [0, 0, 0, 1, 1, 2], [0], [0]>} : vector<2x1x64xf32>, vector<2x64x32xf32>, vector<2x1x32xf32> -> vector<2x1x32xf32>
    "tpu.trace_stop"() : () -> ()
    %144 = arith.addf %142, %143 : vector<2x1x32xf32>
    %145 = math.tanh %144 : vector<2x1x32xf32>
    %146 = arith.index_cast %94 : i32 to index
    %c0_70 = arith.constant 0 : index
    %c0_71 = arith.constant 0 : index
    %147 = vector.load %arg18[%146, %c0_70, %c0_71] : memref<16x1x32xf32, #tpu.memory_space<vmem>>, vector<2x1x32xf32>
    tpu.vector_store %arg18[%146, %c0_70, %c0_71], %145 {strides = array<i32>} : memref<16x1x32xf32, #tpu.memory_space<vmem>>, vector<2x1x32xf32>,
    %c2_i32_72 = arith.constant 2 : i32
    %c2_i32_73 = arith.constant 2 : i32
    %148 = arith.muli %c2_i32_72, %c2_i32_73 : i32
    %149 = tpu.assume_multiple %148, 2 : i32
    %150 = arith.index_cast %149 : i32 to index
    %c0_74 = arith.constant 0 : index
    %c0_75 = arith.constant 0 : index
    %151 = vector.load %arg17[%150, %c0_74, %c0_75] : memref<16x1x128xf32, #tpu.memory_space<vmem>>, vector<2x1x128xf32>
    "tpu.trace_start"() <{level = 10 : i32, message = "bqh,bhk->bqk"}> : () -> ()
    %cst_76 = arith.constant dense<0.000000e+00> : vector<2x1x128xf32>
    %152 = tpu.matmul %145, %11, %cst_76 {dimension_numbers = #tpu.dot_dimension_numbers<[2], [1], [1], [2], [0, 0, 0, 1, 1, 2], [0], [0]>} : vector<2x1x32xf32>, vector<2x32x128xf32>, vector<2x1x128xf32> -> vector<2x1x128xf32>
    "tpu.trace_stop"() : () -> ()
    %153 = arith.addf %151, %152 : vector<2x1x128xf32>
    "tpu.trace_start"() <{level = 10 : i32, message = "bqh,bhk->bqk"}> : () -> ()
    %cst_77 = arith.constant dense<0.000000e+00> : vector<2x1x128xf32>
    %154 = tpu.matmul %125, %14, %cst_77 {dimension_numbers = #tpu.dot_dimension_numbers<[2], [1], [1], [2], [0, 0, 0, 1, 1, 2], [0], [0]>} : vector<2x1x32xf32>, vector<2x32x128xf32>, vector<2x1x128xf32> -> vector<2x1x128xf32>
    "tpu.trace_stop"() : () -> ()
    %155 = arith.addf %153, %154 : vector<2x1x128xf32>
    %156 = vector.extract_strided_slice %155 {offsets = [0, 0, 0], sizes = [2, 1, 32], strides = [1, 1, 1]} : vector<2x1x128xf32> to vector<2x1x32xf32>
    %157 = arith.negf %156 : vector<2x1x32xf32>
    %158 = math.exp %157 : vector<2x1x32xf32>
    %cst_78 = arith.constant 1.000000e+00 : f32
    %159 = vector.broadcast %cst_78 : f32 to vector<2x1x32xf32>
    %160 = arith.addf %159, %158 : vector<2x1x32xf32>
    %161 = arith.divf %159, %160 : vector<2x1x32xf32>
    %162 = vector.extract_strided_slice %155 {offsets = [0, 0, 32], sizes = [2, 1, 32], strides = [1, 1, 1]} : vector<2x1x128xf32> to vector<2x1x32xf32>
    %163 = arith.negf %162 : vector<2x1x32xf32>
    %164 = math.exp %163 : vector<2x1x32xf32>
    %cst_79 = arith.constant 1.000000e+00 : f32
    %165 = vector.broadcast %cst_79 : f32 to vector<2x1x32xf32>
    %166 = arith.addf %165, %164 : vector<2x1x32xf32>
    %167 = arith.divf %165, %166 : vector<2x1x32xf32>
    %168 = vector.extract_strided_slice %155 {offsets = [0, 0, 64], sizes = [2, 1, 32], strides = [1, 1, 1]} : vector<2x1x128xf32> to vector<2x1x32xf32>
    %169 = math.tanh %168 : vector<2x1x32xf32>
    %170 = vector.extract_strided_slice %155 {offsets = [0, 0, 96], sizes = [2, 1, 32], strides = [1, 1, 1]} : vector<2x1x128xf32> to vector<2x1x32xf32>
    %171 = arith.negf %170 : vector<2x1x32xf32>
    %172 = math.exp %171 : vector<2x1x32xf32>
    %cst_80 = arith.constant 1.000000e+00 : f32
    %173 = vector.broadcast %cst_80 : f32 to vector<2x1x32xf32>
    %174 = arith.addf %173, %172 : vector<2x1x32xf32>
    %175 = arith.divf %173, %174 : vector<2x1x32xf32>
    %176 = arith.mulf %167, %123 : vector<2x1x32xf32>
    %177 = arith.mulf %161, %169 : vector<2x1x32xf32>
    %178 = arith.addf %176, %177 : vector<2x1x32xf32>
    %179 = math.tanh %178 : vector<2x1x32xf32>
    %180 = arith.mulf %175, %179 : vector<2x1x32xf32>
    "tpu.trace_start"() <{level = 10 : i32, message = "bqh,bch->bqc"}> : () -> ()
    %cst_81 = arith.constant dense<0.000000e+00> : vector<2x1x16xf32>
    %181 = tpu.matmul %180, %25, %cst_81 {dimension_numbers = #tpu.dot_dimension_numbers<[2], [2], [1], [1], [0, 0, 0, 1, 1, 1], [0], [0]>} : vector<2x1x32xf32>, vector<2x16x32xf32>, vector<2x1x16xf32> -> vector<2x1x16xf32>
    %cst_82 = arith.constant 5.000000e-01 : f32
    "tpu.trace_stop"() : () -> ()
    %182 = vector.broadcast %cst_82 : f32 to vector<2x1x16xf32>
    %183 = arith.cmpf ogt, %26, %182 : vector<2x1x16xf32>
    %184 = vector.broadcast %cst_38 : f32 to vector<2x1x16xf32>
    %185 = arith.select %183, %181, %184 : vector<2x1x16xi1>, vector<2x1x16xf32>
    %cst_83 = arith.constant dense<0xFF800000> : vector<2x1xf32>
    %186 = vector.multi_reduction <maximumf>, %185, %cst_83 [2] : vector<2x1x16xf32> to vector<2x1xf32>
    %187 = vector.shape_cast %186 : vector<2x1xf32> to vector<2x1x1xf32>
    %188 = vector.broadcast %187 : vector<2x1x1xf32> to vector<2x1x16xf32>
    %189 = arith.subf %185, %188 : vector<2x1x16xf32>
    %190 = math.exp %189 : vector<2x1x16xf32>
    %cst_84 = arith.constant dense<0.000000e+00> : vector<2x1xf32>
    %191 = vector.multi_reduction <add>, %190, %cst_84 [2] : vector<2x1x16xf32> to vector<2x1xf32>
    %192 = vector.shape_cast %191 : vector<2x1xf32> to vector<2x1x1xf32>
    %193 = tpu.reciprocal %192 {approx = true} : vector<2x1x1xf32> -> vector<2x1x1xf32>
    %194 = vector.broadcast %193 : vector<2x1x1xf32> to vector<2x1x16xf32>
    %195 = arith.mulf %190, %194 : vector<2x1x16xf32>
    "tpu.trace_start"() <{level = 10 : i32, message = "bqc,bcx->bqx"}> : () -> ()
    %cst_85 = arith.constant dense<0.000000e+00> : vector<2x1x64xf32>
    %196 = tpu.matmul %195, %21, %cst_85 {dimension_numbers = #tpu.dot_dimension_numbers<[2], [1], [1], [2], [0, 0, 0, 1, 1, 2], [0], [0]>} : vector<2x1x16xf32>, vector<2x16x64xf32>, vector<2x1x64xf32> -> vector<2x1x64xf32>
    "tpu.trace_stop"() : () -> ()
    "tpu.trace_start"() <{level = 10 : i32, message = "bqh,bhk->bqk"}> : () -> ()
    %cst_86 = arith.constant dense<0.000000e+00> : vector<2x1x32xf32>
    %197 = tpu.matmul %180, %17, %cst_86 {dimension_numbers = #tpu.dot_dimension_numbers<[2], [1], [1], [2], [0, 0, 0, 1, 1, 2], [0], [0]>} : vector<2x1x32xf32>, vector<2x32x32xf32>, vector<2x1x32xf32> -> vector<2x1x32xf32>
    "tpu.trace_stop"() : () -> ()
    "tpu.trace_start"() <{level = 10 : i32, message = "bqx,bxk->bqk"}> : () -> ()
    %cst_87 = arith.constant dense<0.000000e+00> : vector<2x1x32xf32>
    %198 = tpu.matmul %196, %20, %cst_87 {dimension_numbers = #tpu.dot_dimension_numbers<[2], [1], [1], [2], [0, 0, 0, 1, 1, 2], [0], [0]>} : vector<2x1x64xf32>, vector<2x64x32xf32>, vector<2x1x32xf32> -> vector<2x1x32xf32>
    "tpu.trace_stop"() : () -> ()
    %199 = arith.addf %197, %198 : vector<2x1x32xf32>
    %200 = math.tanh %199 : vector<2x1x32xf32>
    %201 = arith.index_cast %149 : i32 to index
    %c0_88 = arith.constant 0 : index
    %c0_89 = arith.constant 0 : index
    %202 = vector.load %arg18[%201, %c0_88, %c0_89] : memref<16x1x32xf32, #tpu.memory_space<vmem>>, vector<2x1x32xf32>
    tpu.vector_store %arg18[%201, %c0_88, %c0_89], %200 {strides = array<i32>} : memref<16x1x32xf32, #tpu.memory_space<vmem>>, vector<2x1x32xf32>,
    %c3_i32 = arith.constant 3 : i32
    %c2_i32_90 = arith.constant 2 : i32
    %203 = arith.muli %c3_i32, %c2_i32_90 : i32
    %204 = tpu.assume_multiple %203, 2 : i32
    %205 = arith.index_cast %204 : i32 to index
    %c0_91 = arith.constant 0 : index
    %c0_92 = arith.constant 0 : index
    %206 = vector.load %arg17[%205, %c0_91, %c0_92] : memref<16x1x128xf32, #tpu.memory_space<vmem>>, vector<2x1x128xf32>
    "tpu.trace_start"() <{level = 10 : i32, message = "bqh,bhk->bqk"}> : () -> ()
    %cst_93 = arith.constant dense<0.000000e+00> : vector<2x1x128xf32>
    %207 = tpu.matmul %200, %11, %cst_93 {dimension_numbers = #tpu.dot_dimension_numbers<[2], [1], [1], [2], [0, 0, 0, 1, 1, 2], [0], [0]>} : vector<2x1x32xf32>, vector<2x32x128xf32>, vector<2x1x128xf32> -> vector<2x1x128xf32>
    "tpu.trace_stop"() : () -> ()
    %208 = arith.addf %206, %207 : vector<2x1x128xf32>
    "tpu.trace_start"() <{level = 10 : i32, message = "bqh,bhk->bqk"}> : () -> ()
    %cst_94 = arith.constant dense<0.000000e+00> : vector<2x1x128xf32>
    %209 = tpu.matmul %180, %14, %cst_94 {dimension_numbers = #tpu.dot_dimension_numbers<[2], [1], [1], [2], [0, 0, 0, 1, 1, 2], [0], [0]>} : vector<2x1x32xf32>, vector<2x32x128xf32>, vector<2x1x128xf32> -> vector<2x1x128xf32>
    "tpu.trace_stop"() : () -> ()
    %210 = arith.addf %208, %209 : vector<2x1x128xf32>
    %211 = vector.extract_strided_slice %210 {offsets = [0, 0, 0], sizes = [2, 1, 32], strides = [1, 1, 1]} : vector<2x1x128xf32> to vector<2x1x32xf32>
    %212 = arith.negf %211 : vector<2x1x32xf32>
    %213 = math.exp %212 : vector<2x1x32xf32>
    %cst_95 = arith.constant 1.000000e+00 : f32
    %214 = vector.broadcast %cst_95 : f32 to vector<2x1x32xf32>
    %215 = arith.addf %214, %213 : vector<2x1x32xf32>
    %216 = arith.divf %214, %215 : vector<2x1x32xf32>
    %217 = vector.extract_strided_slice %210 {offsets = [0, 0, 32], sizes = [2, 1, 32], strides = [1, 1, 1]} : vector<2x1x128xf32> to vector<2x1x32xf32>
    %218 = arith.negf %217 : vector<2x1x32xf32>
    %219 = math.exp %218 : vector<2x1x32xf32>
    %cst_96 = arith.constant 1.000000e+00 : f32
    %220 = vector.broadcast %cst_96 : f32 to vector<2x1x32xf32>
    %221 = arith.addf %220, %219 : vector<2x1x32xf32>
    %222 = arith.divf %220, %221 : vector<2x1x32xf32>
    %223 = vector.extract_strided_slice %210 {offsets = [0, 0, 64], sizes = [2, 1, 32], strides = [1, 1, 1]} : vector<2x1x128xf32> to vector<2x1x32xf32>
    %224 = math.tanh %223 : vector<2x1x32xf32>
    %225 = vector.extract_strided_slice %210 {offsets = [0, 0, 96], sizes = [2, 1, 32], strides = [1, 1, 1]} : vector<2x1x128xf32> to vector<2x1x32xf32>
    %226 = arith.negf %225 : vector<2x1x32xf32>
    %227 = math.exp %226 : vector<2x1x32xf32>
    %cst_97 = arith.constant 1.000000e+00 : f32
    %228 = vector.broadcast %cst_97 : f32 to vector<2x1x32xf32>
    %229 = arith.addf %228, %227 : vector<2x1x32xf32>
    %230 = arith.divf %228, %229 : vector<2x1x32xf32>
    %231 = arith.mulf %222, %178 : vector<2x1x32xf32>
    %232 = arith.mulf %216, %224 : vector<2x1x32xf32>
    %233 = arith.addf %231, %232 : vector<2x1x32xf32>
    %234 = math.tanh %233 : vector<2x1x32xf32>
    %235 = arith.mulf %230, %234 : vector<2x1x32xf32>
    "tpu.trace_start"() <{level = 10 : i32, message = "bqh,bch->bqc"}> : () -> ()
    %cst_98 = arith.constant dense<0.000000e+00> : vector<2x1x16xf32>
    %236 = tpu.matmul %235, %25, %cst_98 {dimension_numbers = #tpu.dot_dimension_numbers<[2], [2], [1], [1], [0, 0, 0, 1, 1, 1], [0], [0]>} : vector<2x1x32xf32>, vector<2x16x32xf32>, vector<2x1x16xf32> -> vector<2x1x16xf32>
    %cst_99 = arith.constant 5.000000e-01 : f32
    "tpu.trace_stop"() : () -> ()
    %237 = vector.broadcast %cst_99 : f32 to vector<2x1x16xf32>
    %238 = arith.cmpf ogt, %26, %237 : vector<2x1x16xf32>
    %239 = vector.broadcast %cst_38 : f32 to vector<2x1x16xf32>
    %240 = arith.select %238, %236, %239 : vector<2x1x16xi1>, vector<2x1x16xf32>
    %cst_100 = arith.constant dense<0xFF800000> : vector<2x1xf32>
    %241 = vector.multi_reduction <maximumf>, %240, %cst_100 [2] : vector<2x1x16xf32> to vector<2x1xf32>
    %242 = vector.shape_cast %241 : vector<2x1xf32> to vector<2x1x1xf32>
    %243 = vector.broadcast %242 : vector<2x1x1xf32> to vector<2x1x16xf32>
    %244 = arith.subf %240, %243 : vector<2x1x16xf32>
    %245 = math.exp %244 : vector<2x1x16xf32>
    %cst_101 = arith.constant dense<0.000000e+00> : vector<2x1xf32>
    %246 = vector.multi_reduction <add>, %245, %cst_101 [2] : vector<2x1x16xf32> to vector<2x1xf32>
    %247 = vector.shape_cast %246 : vector<2x1xf32> to vector<2x1x1xf32>
    %248 = tpu.reciprocal %247 {approx = true} : vector<2x1x1xf32> -> vector<2x1x1xf32>
    %249 = vector.broadcast %248 : vector<2x1x1xf32> to vector<2x1x16xf32>
    %250 = arith.mulf %245, %249 : vector<2x1x16xf32>
    "tpu.trace_start"() <{level = 10 : i32, message = "bqc,bcx->bqx"}> : () -> ()
    %cst_102 = arith.constant dense<0.000000e+00> : vector<2x1x64xf32>
    %251 = tpu.matmul %250, %21, %cst_102 {dimension_numbers = #tpu.dot_dimension_numbers<[2], [1], [1], [2], [0, 0, 0, 1, 1, 2], [0], [0]>} : vector<2x1x16xf32>, vector<2x16x64xf32>, vector<2x1x64xf32> -> vector<2x1x64xf32>
    "tpu.trace_stop"() : () -> ()
    "tpu.trace_start"() <{level = 10 : i32, message = "bqh,bhk->bqk"}> : () -> ()
    %cst_103 = arith.constant dense<0.000000e+00> : vector<2x1x32xf32>
    %252 = tpu.matmul %235, %17, %cst_103 {dimension_numbers = #tpu.dot_dimension_numbers<[2], [1], [1], [2], [0, 0, 0, 1, 1, 2], [0], [0]>} : vector<2x1x32xf32>, vector<2x32x32xf32>, vector<2x1x32xf32> -> vector<2x1x32xf32>
    "tpu.trace_stop"() : () -> ()
    "tpu.trace_start"() <{level = 10 : i32, message = "bqx,bxk->bqk"}> : () -> ()
    %cst_104 = arith.constant dense<0.000000e+00> : vector<2x1x32xf32>
    %253 = tpu.matmul %251, %20, %cst_104 {dimension_numbers = #tpu.dot_dimension_numbers<[2], [1], [1], [2], [0, 0, 0, 1, 1, 2], [0], [0]>} : vector<2x1x64xf32>, vector<2x64x32xf32>, vector<2x1x32xf32> -> vector<2x1x32xf32>
    "tpu.trace_stop"() : () -> ()
    %254 = arith.addf %252, %253 : vector<2x1x32xf32>
    %255 = math.tanh %254 : vector<2x1x32xf32>
    %256 = arith.index_cast %204 : i32 to index
    %c0_105 = arith.constant 0 : index
    %c0_106 = arith.constant 0 : index
    %257 = vector.load %arg18[%256, %c0_105, %c0_106] : memref<16x1x32xf32, #tpu.memory_space<vmem>>, vector<2x1x32xf32>
    tpu.vector_store %arg18[%256, %c0_105, %c0_106], %255 {strides = array<i32>} : memref<16x1x32xf32, #tpu.memory_space<vmem>>, vector<2x1x32xf32>,
    %c4_i32 = arith.constant 4 : i32
    %c2_i32_107 = arith.constant 2 : i32
    %258 = arith.muli %c4_i32, %c2_i32_107 : i32
    %259 = tpu.assume_multiple %258, 2 : i32
    %260 = arith.index_cast %259 : i32 to index
    %c0_108 = arith.constant 0 : index
    %c0_109 = arith.constant 0 : index
    %261 = vector.load %arg17[%260, %c0_108, %c0_109] : memref<16x1x128xf32, #tpu.memory_space<vmem>>, vector<2x1x128xf32>
    "tpu.trace_start"() <{level = 10 : i32, message = "bqh,bhk->bqk"}> : () -> ()
    %cst_110 = arith.constant dense<0.000000e+00> : vector<2x1x128xf32>
    %262 = tpu.matmul %255, %11, %cst_110 {dimension_numbers = #tpu.dot_dimension_numbers<[2], [1], [1], [2], [0, 0, 0, 1, 1, 2], [0], [0]>} : vector<2x1x32xf32>, vector<2x32x128xf32>, vector<2x1x128xf32> -> vector<2x1x128xf32>
    "tpu.trace_stop"() : () -> ()
    %263 = arith.addf %261, %262 : vector<2x1x128xf32>
    "tpu.trace_start"() <{level = 10 : i32, message = "bqh,bhk->bqk"}> : () -> ()
    %cst_111 = arith.constant dense<0.000000e+00> : vector<2x1x128xf32>
    %264 = tpu.matmul %235, %14, %cst_111 {dimension_numbers = #tpu.dot_dimension_numbers<[2], [1], [1], [2], [0, 0, 0, 1, 1, 2], [0], [0]>} : vector<2x1x32xf32>, vector<2x32x128xf32>, vector<2x1x128xf32> -> vector<2x1x128xf32>
    "tpu.trace_stop"() : () -> ()
    %265 = arith.addf %263, %264 : vector<2x1x128xf32>
    %266 = vector.extract_strided_slice %265 {offsets = [0, 0, 0], sizes = [2, 1, 32], strides = [1, 1, 1]} : vector<2x1x128xf32> to vector<2x1x32xf32>
    %267 = arith.negf %266 : vector<2x1x32xf32>
    %268 = math.exp %267 : vector<2x1x32xf32>
    %cst_112 = arith.constant 1.000000e+00 : f32
    %269 = vector.broadcast %cst_112 : f32 to vector<2x1x32xf32>
    %270 = arith.addf %269, %268 : vector<2x1x32xf32>
    %271 = arith.divf %269, %270 : vector<2x1x32xf32>
    %272 = vector.extract_strided_slice %265 {offsets = [0, 0, 32], sizes = [2, 1, 32], strides = [1, 1, 1]} : vector<2x1x128xf32> to vector<2x1x32xf32>
    %273 = arith.negf %272 : vector<2x1x32xf32>
    %274 = math.exp %273 : vector<2x1x32xf32>
    %cst_113 = arith.constant 1.000000e+00 : f32
    %275 = vector.broadcast %cst_113 : f32 to vector<2x1x32xf32>
    %276 = arith.addf %275, %274 : vector<2x1x32xf32>
    %277 = arith.divf %275, %276 : vector<2x1x32xf32>
    %278 = vector.extract_strided_slice %265 {offsets = [0, 0, 64], sizes = [2, 1, 32], strides = [1, 1, 1]} : vector<2x1x128xf32> to vector<2x1x32xf32>
    %279 = math.tanh %278 : vector<2x1x32xf32>
    %280 = vector.extract_strided_slice %265 {offsets = [0, 0, 96], sizes = [2, 1, 32], strides = [1, 1, 1]} : vector<2x1x128xf32> to vector<2x1x32xf32>
    %281 = arith.negf %280 : vector<2x1x32xf32>
    %282 = math.exp %281 : vector<2x1x32xf32>
    %cst_114 = arith.constant 1.000000e+00 : f32
    %283 = vector.broadcast %cst_114 : f32 to vector<2x1x32xf32>
    %284 = arith.addf %283, %282 : vector<2x1x32xf32>
    %285 = arith.divf %283, %284 : vector<2x1x32xf32>
    %286 = arith.mulf %277, %233 : vector<2x1x32xf32>
    %287 = arith.mulf %271, %279 : vector<2x1x32xf32>
    %288 = arith.addf %286, %287 : vector<2x1x32xf32>
    %289 = math.tanh %288 : vector<2x1x32xf32>
    %290 = arith.mulf %285, %289 : vector<2x1x32xf32>
    "tpu.trace_start"() <{level = 10 : i32, message = "bqh,bch->bqc"}> : () -> ()
    %cst_115 = arith.constant dense<0.000000e+00> : vector<2x1x16xf32>
    %291 = tpu.matmul %290, %25, %cst_115 {dimension_numbers = #tpu.dot_dimension_numbers<[2], [2], [1], [1], [0, 0, 0, 1, 1, 1], [0], [0]>} : vector<2x1x32xf32>, vector<2x16x32xf32>, vector<2x1x16xf32> -> vector<2x1x16xf32>
    %cst_116 = arith.constant 5.000000e-01 : f32
    "tpu.trace_stop"() : () -> ()
    %292 = vector.broadcast %cst_116 : f32 to vector<2x1x16xf32>
    %293 = arith.cmpf ogt, %26, %292 : vector<2x1x16xf32>
    %294 = vector.broadcast %cst_38 : f32 to vector<2x1x16xf32>
    %295 = arith.select %293, %291, %294 : vector<2x1x16xi1>, vector<2x1x16xf32>
    %cst_117 = arith.constant dense<0xFF800000> : vector<2x1xf32>
    %296 = vector.multi_reduction <maximumf>, %295, %cst_117 [2] : vector<2x1x16xf32> to vector<2x1xf32>
    %297 = vector.shape_cast %296 : vector<2x1xf32> to vector<2x1x1xf32>
    %298 = vector.broadcast %297 : vector<2x1x1xf32> to vector<2x1x16xf32>
    %299 = arith.subf %295, %298 : vector<2x1x16xf32>
    %300 = math.exp %299 : vector<2x1x16xf32>
    %cst_118 = arith.constant dense<0.000000e+00> : vector<2x1xf32>
    %301 = vector.multi_reduction <add>, %300, %cst_118 [2] : vector<2x1x16xf32> to vector<2x1xf32>
    %302 = vector.shape_cast %301 : vector<2x1xf32> to vector<2x1x1xf32>
    %303 = tpu.reciprocal %302 {approx = true} : vector<2x1x1xf32> -> vector<2x1x1xf32>
    %304 = vector.broadcast %303 : vector<2x1x1xf32> to vector<2x1x16xf32>
    %305 = arith.mulf %300, %304 : vector<2x1x16xf32>
    "tpu.trace_start"() <{level = 10 : i32, message = "bqc,bcx->bqx"}> : () -> ()
    %cst_119 = arith.constant dense<0.000000e+00> : vector<2x1x64xf32>
    %306 = tpu.matmul %305, %21, %cst_119 {dimension_numbers = #tpu.dot_dimension_numbers<[2], [1], [1], [2], [0, 0, 0, 1, 1, 2], [0], [0]>} : vector<2x1x16xf32>, vector<2x16x64xf32>, vector<2x1x64xf32> -> vector<2x1x64xf32>
    "tpu.trace_stop"() : () -> ()
    "tpu.trace_start"() <{level = 10 : i32, message = "bqh,bhk->bqk"}> : () -> ()
    %cst_120 = arith.constant dense<0.000000e+00> : vector<2x1x32xf32>
    %307 = tpu.matmul %290, %17, %cst_120 {dimension_numbers = #tpu.dot_dimension_numbers<[2], [1], [1], [2], [0, 0, 0, 1, 1, 2], [0], [0]>} : vector<2x1x32xf32>, vector<2x32x32xf32>, vector<2x1x32xf32> -> vector<2x1x32xf32>
    "tpu.trace_stop"() : () -> ()
    "tpu.trace_start"() <{level = 10 : i32, message = "bqx,bxk->bqk"}> : () -> ()
    %cst_121 = arith.constant dense<0.000000e+00> : vector<2x1x32xf32>
    %308 = tpu.matmul %306, %20, %cst_121 {dimension_numbers = #tpu.dot_dimension_numbers<[2], [1], [1], [2], [0, 0, 0, 1, 1, 2], [0], [0]>} : vector<2x1x64xf32>, vector<2x64x32xf32>, vector<2x1x32xf32> -> vector<2x1x32xf32>
    "tpu.trace_stop"() : () -> ()
    %309 = arith.addf %307, %308 : vector<2x1x32xf32>
    %310 = math.tanh %309 : vector<2x1x32xf32>
    %311 = arith.index_cast %259 : i32 to index
    %c0_122 = arith.constant 0 : index
    %c0_123 = arith.constant 0 : index
    %312 = vector.load %arg18[%311, %c0_122, %c0_123] : memref<16x1x32xf32, #tpu.memory_space<vmem>>, vector<2x1x32xf32>
    tpu.vector_store %arg18[%311, %c0_122, %c0_123], %310 {strides = array<i32>} : memref<16x1x32xf32, #tpu.memory_space<vmem>>, vector<2x1x32xf32>,
    %c5_i32 = arith.constant 5 : i32
    %c2_i32_124 = arith.constant 2 : i32
    %313 = arith.muli %c5_i32, %c2_i32_124 : i32
    %314 = tpu.assume_multiple %313, 2 : i32
    %315 = arith.index_cast %314 : i32 to index
    %c0_125 = arith.constant 0 : index
    %c0_126 = arith.constant 0 : index
    %316 = vector.load %arg17[%315, %c0_125, %c0_126] : memref<16x1x128xf32, #tpu.memory_space<vmem>>, vector<2x1x128xf32>
    "tpu.trace_start"() <{level = 10 : i32, message = "bqh,bhk->bqk"}> : () -> ()
    %cst_127 = arith.constant dense<0.000000e+00> : vector<2x1x128xf32>
    %317 = tpu.matmul %310, %11, %cst_127 {dimension_numbers = #tpu.dot_dimension_numbers<[2], [1], [1], [2], [0, 0, 0, 1, 1, 2], [0], [0]>} : vector<2x1x32xf32>, vector<2x32x128xf32>, vector<2x1x128xf32> -> vector<2x1x128xf32>
    "tpu.trace_stop"() : () -> ()
    %318 = arith.addf %316, %317 : vector<2x1x128xf32>
    "tpu.trace_start"() <{level = 10 : i32, message = "bqh,bhk->bqk"}> : () -> ()
    %cst_128 = arith.constant dense<0.000000e+00> : vector<2x1x128xf32>
    %319 = tpu.matmul %290, %14, %cst_128 {dimension_numbers = #tpu.dot_dimension_numbers<[2], [1], [1], [2], [0, 0, 0, 1, 1, 2], [0], [0]>} : vector<2x1x32xf32>, vector<2x32x128xf32>, vector<2x1x128xf32> -> vector<2x1x128xf32>
    "tpu.trace_stop"() : () -> ()
    %320 = arith.addf %318, %319 : vector<2x1x128xf32>
    %321 = vector.extract_strided_slice %320 {offsets = [0, 0, 0], sizes = [2, 1, 32], strides = [1, 1, 1]} : vector<2x1x128xf32> to vector<2x1x32xf32>
    %322 = arith.negf %321 : vector<2x1x32xf32>
    %323 = math.exp %322 : vector<2x1x32xf32>
    %cst_129 = arith.constant 1.000000e+00 : f32
    %324 = vector.broadcast %cst_129 : f32 to vector<2x1x32xf32>
    %325 = arith.addf %324, %323 : vector<2x1x32xf32>
    %326 = arith.divf %324, %325 : vector<2x1x32xf32>
    %327 = vector.extract_strided_slice %320 {offsets = [0, 0, 32], sizes = [2, 1, 32], strides = [1, 1, 1]} : vector<2x1x128xf32> to vector<2x1x32xf32>
    %328 = arith.negf %327 : vector<2x1x32xf32>
    %329 = math.exp %328 : vector<2x1x32xf32>
    %cst_130 = arith.constant 1.000000e+00 : f32
    %330 = vector.broadcast %cst_130 : f32 to vector<2x1x32xf32>
    %331 = arith.addf %330, %329 : vector<2x1x32xf32>
    %332 = arith.divf %330, %331 : vector<2x1x32xf32>
    %333 = vector.extract_strided_slice %320 {offsets = [0, 0, 64], sizes = [2, 1, 32], strides = [1, 1, 1]} : vector<2x1x128xf32> to vector<2x1x32xf32>
    %334 = math.tanh %333 : vector<2x1x32xf32>
    %335 = vector.extract_strided_slice %320 {offsets = [0, 0, 96], sizes = [2, 1, 32], strides = [1, 1, 1]} : vector<2x1x128xf32> to vector<2x1x32xf32>
    %336 = arith.negf %335 : vector<2x1x32xf32>
    %337 = math.exp %336 : vector<2x1x32xf32>
    %cst_131 = arith.constant 1.000000e+00 : f32
    %338 = vector.broadcast %cst_131 : f32 to vector<2x1x32xf32>
    %339 = arith.addf %338, %337 : vector<2x1x32xf32>
    %340 = arith.divf %338, %339 : vector<2x1x32xf32>
    %341 = arith.mulf %332, %288 : vector<2x1x32xf32>
    %342 = arith.mulf %326, %334 : vector<2x1x32xf32>
    %343 = arith.addf %341, %342 : vector<2x1x32xf32>
    %344 = math.tanh %343 : vector<2x1x32xf32>
    %345 = arith.mulf %340, %344 : vector<2x1x32xf32>
    "tpu.trace_start"() <{level = 10 : i32, message = "bqh,bch->bqc"}> : () -> ()
    %cst_132 = arith.constant dense<0.000000e+00> : vector<2x1x16xf32>
    %346 = tpu.matmul %345, %25, %cst_132 {dimension_numbers = #tpu.dot_dimension_numbers<[2], [2], [1], [1], [0, 0, 0, 1, 1, 1], [0], [0]>} : vector<2x1x32xf32>, vector<2x16x32xf32>, vector<2x1x16xf32> -> vector<2x1x16xf32>
    %cst_133 = arith.constant 5.000000e-01 : f32
    "tpu.trace_stop"() : () -> ()
    %347 = vector.broadcast %cst_133 : f32 to vector<2x1x16xf32>
    %348 = arith.cmpf ogt, %26, %347 : vector<2x1x16xf32>
    %349 = vector.broadcast %cst_38 : f32 to vector<2x1x16xf32>
    %350 = arith.select %348, %346, %349 : vector<2x1x16xi1>, vector<2x1x16xf32>
    %cst_134 = arith.constant dense<0xFF800000> : vector<2x1xf32>
    %351 = vector.multi_reduction <maximumf>, %350, %cst_134 [2] : vector<2x1x16xf32> to vector<2x1xf32>
    %352 = vector.shape_cast %351 : vector<2x1xf32> to vector<2x1x1xf32>
    %353 = vector.broadcast %352 : vector<2x1x1xf32> to vector<2x1x16xf32>
    %354 = arith.subf %350, %353 : vector<2x1x16xf32>
    %355 = math.exp %354 : vector<2x1x16xf32>
    %cst_135 = arith.constant dense<0.000000e+00> : vector<2x1xf32>
    %356 = vector.multi_reduction <add>, %355, %cst_135 [2] : vector<2x1x16xf32> to vector<2x1xf32>
    %357 = vector.shape_cast %356 : vector<2x1xf32> to vector<2x1x1xf32>
    %358 = tpu.reciprocal %357 {approx = true} : vector<2x1x1xf32> -> vector<2x1x1xf32>
    %359 = vector.broadcast %358 : vector<2x1x1xf32> to vector<2x1x16xf32>
    %360 = arith.mulf %355, %359 : vector<2x1x16xf32>
    "tpu.trace_start"() <{level = 10 : i32, message = "bqc,bcx->bqx"}> : () -> ()
    %cst_136 = arith.constant dense<0.000000e+00> : vector<2x1x64xf32>
    %361 = tpu.matmul %360, %21, %cst_136 {dimension_numbers = #tpu.dot_dimension_numbers<[2], [1], [1], [2], [0, 0, 0, 1, 1, 2], [0], [0]>} : vector<2x1x16xf32>, vector<2x16x64xf32>, vector<2x1x64xf32> -> vector<2x1x64xf32>
    "tpu.trace_stop"() : () -> ()
    "tpu.trace_start"() <{level = 10 : i32, message = "bqh,bhk->bqk"}> : () -> ()
    %cst_137 = arith.constant dense<0.000000e+00> : vector<2x1x32xf32>
    %362 = tpu.matmul %345, %17, %cst_137 {dimension_numbers = #tpu.dot_dimension_numbers<[2], [1], [1], [2], [0, 0, 0, 1, 1, 2], [0], [0]>} : vector<2x1x32xf32>, vector<2x32x32xf32>, vector<2x1x32xf32> -> vector<2x1x32xf32>
    "tpu.trace_stop"() : () -> ()
    "tpu.trace_start"() <{level = 10 : i32, message = "bqx,bxk->bqk"}> : () -> ()
    %cst_138 = arith.constant dense<0.000000e+00> : vector<2x1x32xf32>
    %363 = tpu.matmul %361, %20, %cst_138 {dimension_numbers = #tpu.dot_dimension_numbers<[2], [1], [1], [2], [0, 0, 0, 1, 1, 2], [0], [0]>} : vector<2x1x64xf32>, vector<2x64x32xf32>, vector<2x1x32xf32> -> vector<2x1x32xf32>
    "tpu.trace_stop"() : () -> ()
    %364 = arith.addf %362, %363 : vector<2x1x32xf32>
    %365 = math.tanh %364 : vector<2x1x32xf32>
    %366 = arith.index_cast %314 : i32 to index
    %c0_139 = arith.constant 0 : index
    %c0_140 = arith.constant 0 : index
    %367 = vector.load %arg18[%366, %c0_139, %c0_140] : memref<16x1x32xf32, #tpu.memory_space<vmem>>, vector<2x1x32xf32>
    tpu.vector_store %arg18[%366, %c0_139, %c0_140], %365 {strides = array<i32>} : memref<16x1x32xf32, #tpu.memory_space<vmem>>, vector<2x1x32xf32>,
    %c6_i32 = arith.constant 6 : i32
    %c2_i32_141 = arith.constant 2 : i32
    %368 = arith.muli %c6_i32, %c2_i32_141 : i32
    %369 = tpu.assume_multiple %368, 2 : i32
    %370 = arith.index_cast %369 : i32 to index
    %c0_142 = arith.constant 0 : index
    %c0_143 = arith.constant 0 : index
    %371 = vector.load %arg17[%370, %c0_142, %c0_143] : memref<16x1x128xf32, #tpu.memory_space<vmem>>, vector<2x1x128xf32>
    "tpu.trace_start"() <{level = 10 : i32, message = "bqh,bhk->bqk"}> : () -> ()
    %cst_144 = arith.constant dense<0.000000e+00> : vector<2x1x128xf32>
    %372 = tpu.matmul %365, %11, %cst_144 {dimension_numbers = #tpu.dot_dimension_numbers<[2], [1], [1], [2], [0, 0, 0, 1, 1, 2], [0], [0]>} : vector<2x1x32xf32>, vector<2x32x128xf32>, vector<2x1x128xf32> -> vector<2x1x128xf32>
    "tpu.trace_stop"() : () -> ()
    %373 = arith.addf %371, %372 : vector<2x1x128xf32>
    "tpu.trace_start"() <{level = 10 : i32, message = "bqh,bhk->bqk"}> : () -> ()
    %cst_145 = arith.constant dense<0.000000e+00> : vector<2x1x128xf32>
    %374 = tpu.matmul %345, %14, %cst_145 {dimension_numbers = #tpu.dot_dimension_numbers<[2], [1], [1], [2], [0, 0, 0, 1, 1, 2], [0], [0]>} : vector<2x1x32xf32>, vector<2x32x128xf32>, vector<2x1x128xf32> -> vector<2x1x128xf32>
    "tpu.trace_stop"() : () -> ()
    %375 = arith.addf %373, %374 : vector<2x1x128xf32>
    %376 = vector.extract_strided_slice %375 {offsets = [0, 0, 0], sizes = [2, 1, 32], strides = [1, 1, 1]} : vector<2x1x128xf32> to vector<2x1x32xf32>
    %377 = arith.negf %376 : vector<2x1x32xf32>
    %378 = math.exp %377 : vector<2x1x32xf32>
    %cst_146 = arith.constant 1.000000e+00 : f32
    %379 = vector.broadcast %cst_146 : f32 to vector<2x1x32xf32>
    %380 = arith.addf %379, %378 : vector<2x1x32xf32>
    %381 = arith.divf %379, %380 : vector<2x1x32xf32>
    %382 = vector.extract_strided_slice %375 {offsets = [0, 0, 32], sizes = [2, 1, 32], strides = [1, 1, 1]} : vector<2x1x128xf32> to vector<2x1x32xf32>
    %383 = arith.negf %382 : vector<2x1x32xf32>
    %384 = math.exp %383 : vector<2x1x32xf32>
    %cst_147 = arith.constant 1.000000e+00 : f32
    %385 = vector.broadcast %cst_147 : f32 to vector<2x1x32xf32>
    %386 = arith.addf %385, %384 : vector<2x1x32xf32>
    %387 = arith.divf %385, %386 : vector<2x1x32xf32>
    %388 = vector.extract_strided_slice %375 {offsets = [0, 0, 64], sizes = [2, 1, 32], strides = [1, 1, 1]} : vector<2x1x128xf32> to vector<2x1x32xf32>
    %389 = math.tanh %388 : vector<2x1x32xf32>
    %390 = vector.extract_strided_slice %375 {offsets = [0, 0, 96], sizes = [2, 1, 32], strides = [1, 1, 1]} : vector<2x1x128xf32> to vector<2x1x32xf32>
    %391 = arith.negf %390 : vector<2x1x32xf32>
    %392 = math.exp %391 : vector<2x1x32xf32>
    %cst_148 = arith.constant 1.000000e+00 : f32
    %393 = vector.broadcast %cst_148 : f32 to vector<2x1x32xf32>
    %394 = arith.addf %393, %392 : vector<2x1x32xf32>
    %395 = arith.divf %393, %394 : vector<2x1x32xf32>
    %396 = arith.mulf %387, %343 : vector<2x1x32xf32>
    %397 = arith.mulf %381, %389 : vector<2x1x32xf32>
    %398 = arith.addf %396, %397 : vector<2x1x32xf32>
    %399 = math.tanh %398 : vector<2x1x32xf32>
    %400 = arith.mulf %395, %399 : vector<2x1x32xf32>
    "tpu.trace_start"() <{level = 10 : i32, message = "bqh,bch->bqc"}> : () -> ()
    %cst_149 = arith.constant dense<0.000000e+00> : vector<2x1x16xf32>
    %401 = tpu.matmul %400, %25, %cst_149 {dimension_numbers = #tpu.dot_dimension_numbers<[2], [2], [1], [1], [0, 0, 0, 1, 1, 1], [0], [0]>} : vector<2x1x32xf32>, vector<2x16x32xf32>, vector<2x1x16xf32> -> vector<2x1x16xf32>
    %cst_150 = arith.constant 5.000000e-01 : f32
    "tpu.trace_stop"() : () -> ()
    %402 = vector.broadcast %cst_150 : f32 to vector<2x1x16xf32>
    %403 = arith.cmpf ogt, %26, %402 : vector<2x1x16xf32>
    %404 = vector.broadcast %cst_38 : f32 to vector<2x1x16xf32>
    %405 = arith.select %403, %401, %404 : vector<2x1x16xi1>, vector<2x1x16xf32>
    %cst_151 = arith.constant dense<0xFF800000> : vector<2x1xf32>
    %406 = vector.multi_reduction <maximumf>, %405, %cst_151 [2] : vector<2x1x16xf32> to vector<2x1xf32>
    %407 = vector.shape_cast %406 : vector<2x1xf32> to vector<2x1x1xf32>
    %408 = vector.broadcast %407 : vector<2x1x1xf32> to vector<2x1x16xf32>
    %409 = arith.subf %405, %408 : vector<2x1x16xf32>
    %410 = math.exp %409 : vector<2x1x16xf32>
    %cst_152 = arith.constant dense<0.000000e+00> : vector<2x1xf32>
    %411 = vector.multi_reduction <add>, %410, %cst_152 [2] : vector<2x1x16xf32> to vector<2x1xf32>
    %412 = vector.shape_cast %411 : vector<2x1xf32> to vector<2x1x1xf32>
    %413 = tpu.reciprocal %412 {approx = true} : vector<2x1x1xf32> -> vector<2x1x1xf32>
    %414 = vector.broadcast %413 : vector<2x1x1xf32> to vector<2x1x16xf32>
    %415 = arith.mulf %410, %414 : vector<2x1x16xf32>
    "tpu.trace_start"() <{level = 10 : i32, message = "bqc,bcx->bqx"}> : () -> ()
    %cst_153 = arith.constant dense<0.000000e+00> : vector<2x1x64xf32>
    %416 = tpu.matmul %415, %21, %cst_153 {dimension_numbers = #tpu.dot_dimension_numbers<[2], [1], [1], [2], [0, 0, 0, 1, 1, 2], [0], [0]>} : vector<2x1x16xf32>, vector<2x16x64xf32>, vector<2x1x64xf32> -> vector<2x1x64xf32>
    "tpu.trace_stop"() : () -> ()
    "tpu.trace_start"() <{level = 10 : i32, message = "bqh,bhk->bqk"}> : () -> ()
    %cst_154 = arith.constant dense<0.000000e+00> : vector<2x1x32xf32>
    %417 = tpu.matmul %400, %17, %cst_154 {dimension_numbers = #tpu.dot_dimension_numbers<[2], [1], [1], [2], [0, 0, 0, 1, 1, 2], [0], [0]>} : vector<2x1x32xf32>, vector<2x32x32xf32>, vector<2x1x32xf32> -> vector<2x1x32xf32>
    "tpu.trace_stop"() : () -> ()
    "tpu.trace_start"() <{level = 10 : i32, message = "bqx,bxk->bqk"}> : () -> ()
    %cst_155 = arith.constant dense<0.000000e+00> : vector<2x1x32xf32>
    %418 = tpu.matmul %416, %20, %cst_155 {dimension_numbers = #tpu.dot_dimension_numbers<[2], [1], [1], [2], [0, 0, 0, 1, 1, 2], [0], [0]>} : vector<2x1x64xf32>, vector<2x64x32xf32>, vector<2x1x32xf32> -> vector<2x1x32xf32>
    "tpu.trace_stop"() : () -> ()
    %419 = arith.addf %417, %418 : vector<2x1x32xf32>
    %420 = math.tanh %419 : vector<2x1x32xf32>
    %421 = arith.index_cast %369 : i32 to index
    %c0_156 = arith.constant 0 : index
    %c0_157 = arith.constant 0 : index
    %422 = vector.load %arg18[%421, %c0_156, %c0_157] : memref<16x1x32xf32, #tpu.memory_space<vmem>>, vector<2x1x32xf32>
    tpu.vector_store %arg18[%421, %c0_156, %c0_157], %420 {strides = array<i32>} : memref<16x1x32xf32, #tpu.memory_space<vmem>>, vector<2x1x32xf32>,
    %c7_i32 = arith.constant 7 : i32
    %c2_i32_158 = arith.constant 2 : i32
    %423 = arith.muli %c7_i32, %c2_i32_158 : i32
    %424 = tpu.assume_multiple %423, 2 : i32
    %425 = arith.index_cast %424 : i32 to index
    %c0_159 = arith.constant 0 : index
    %c0_160 = arith.constant 0 : index
    %426 = vector.load %arg17[%425, %c0_159, %c0_160] : memref<16x1x128xf32, #tpu.memory_space<vmem>>, vector<2x1x128xf32>
    "tpu.trace_start"() <{level = 10 : i32, message = "bqh,bhk->bqk"}> : () -> ()
    %cst_161 = arith.constant dense<0.000000e+00> : vector<2x1x128xf32>
    %427 = tpu.matmul %420, %11, %cst_161 {dimension_numbers = #tpu.dot_dimension_numbers<[2], [1], [1], [2], [0, 0, 0, 1, 1, 2], [0], [0]>} : vector<2x1x32xf32>, vector<2x32x128xf32>, vector<2x1x128xf32> -> vector<2x1x128xf32>
    "tpu.trace_stop"() : () -> ()
    %428 = arith.addf %426, %427 : vector<2x1x128xf32>
    "tpu.trace_start"() <{level = 10 : i32, message = "bqh,bhk->bqk"}> : () -> ()
    %cst_162 = arith.constant dense<0.000000e+00> : vector<2x1x128xf32>
    %429 = tpu.matmul %400, %14, %cst_162 {dimension_numbers = #tpu.dot_dimension_numbers<[2], [1], [1], [2], [0, 0, 0, 1, 1, 2], [0], [0]>} : vector<2x1x32xf32>, vector<2x32x128xf32>, vector<2x1x128xf32> -> vector<2x1x128xf32>
    "tpu.trace_stop"() : () -> ()
    %430 = arith.addf %428, %429 : vector<2x1x128xf32>
    %431 = vector.extract_strided_slice %430 {offsets = [0, 0, 0], sizes = [2, 1, 32], strides = [1, 1, 1]} : vector<2x1x128xf32> to vector<2x1x32xf32>
    %432 = arith.negf %431 : vector<2x1x32xf32>
    %433 = math.exp %432 : vector<2x1x32xf32>
    %cst_163 = arith.constant 1.000000e+00 : f32
    %434 = vector.broadcast %cst_163 : f32 to vector<2x1x32xf32>
    %435 = arith.addf %434, %433 : vector<2x1x32xf32>
    %436 = arith.divf %434, %435 : vector<2x1x32xf32>
    %437 = vector.extract_strided_slice %430 {offsets = [0, 0, 32], sizes = [2, 1, 32], strides = [1, 1, 1]} : vector<2x1x128xf32> to vector<2x1x32xf32>
    %438 = arith.negf %437 : vector<2x1x32xf32>
    %439 = math.exp %438 : vector<2x1x32xf32>
    %cst_164 = arith.constant 1.000000e+00 : f32
    %440 = vector.broadcast %cst_164 : f32 to vector<2x1x32xf32>
    %441 = arith.addf %440, %439 : vector<2x1x32xf32>
    %442 = arith.divf %440, %441 : vector<2x1x32xf32>
    %443 = vector.extract_strided_slice %430 {offsets = [0, 0, 64], sizes = [2, 1, 32], strides = [1, 1, 1]} : vector<2x1x128xf32> to vector<2x1x32xf32>
    %444 = math.tanh %443 : vector<2x1x32xf32>
    %445 = vector.extract_strided_slice %430 {offsets = [0, 0, 96], sizes = [2, 1, 32], strides = [1, 1, 1]} : vector<2x1x128xf32> to vector<2x1x32xf32>
    %446 = arith.negf %445 : vector<2x1x32xf32>
    %447 = math.exp %446 : vector<2x1x32xf32>
    %cst_165 = arith.constant 1.000000e+00 : f32
    %448 = vector.broadcast %cst_165 : f32 to vector<2x1x32xf32>
    %449 = arith.addf %448, %447 : vector<2x1x32xf32>
    %450 = arith.divf %448, %449 : vector<2x1x32xf32>
    %451 = arith.mulf %442, %398 : vector<2x1x32xf32>
    %452 = arith.mulf %436, %444 : vector<2x1x32xf32>
    %453 = arith.addf %451, %452 : vector<2x1x32xf32>
    %454 = math.tanh %453 : vector<2x1x32xf32>
    %455 = arith.mulf %450, %454 : vector<2x1x32xf32>
    "tpu.trace_start"() <{level = 10 : i32, message = "bqh,bch->bqc"}> : () -> ()
    %cst_166 = arith.constant dense<0.000000e+00> : vector<2x1x16xf32>
    %456 = tpu.matmul %455, %25, %cst_166 {dimension_numbers = #tpu.dot_dimension_numbers<[2], [2], [1], [1], [0, 0, 0, 1, 1, 1], [0], [0]>} : vector<2x1x32xf32>, vector<2x16x32xf32>, vector<2x1x16xf32> -> vector<2x1x16xf32>
    %cst_167 = arith.constant 5.000000e-01 : f32
    "tpu.trace_stop"() : () -> ()
    %457 = vector.broadcast %cst_167 : f32 to vector<2x1x16xf32>
    %458 = arith.cmpf ogt, %26, %457 : vector<2x1x16xf32>
    %459 = vector.broadcast %cst_38 : f32 to vector<2x1x16xf32>
    %460 = arith.select %458, %456, %459 : vector<2x1x16xi1>, vector<2x1x16xf32>
    %cst_168 = arith.constant dense<0xFF800000> : vector<2x1xf32>
    %461 = vector.multi_reduction <maximumf>, %460, %cst_168 [2] : vector<2x1x16xf32> to vector<2x1xf32>
    %462 = vector.shape_cast %461 : vector<2x1xf32> to vector<2x1x1xf32>
    %463 = vector.broadcast %462 : vector<2x1x1xf32> to vector<2x1x16xf32>
    %464 = arith.subf %460, %463 : vector<2x1x16xf32>
    %465 = math.exp %464 : vector<2x1x16xf32>
    %cst_169 = arith.constant dense<0.000000e+00> : vector<2x1xf32>
    %466 = vector.multi_reduction <add>, %465, %cst_169 [2] : vector<2x1x16xf32> to vector<2x1xf32>
    %467 = vector.shape_cast %466 : vector<2x1xf32> to vector<2x1x1xf32>
    %468 = tpu.reciprocal %467 {approx = true} : vector<2x1x1xf32> -> vector<2x1x1xf32>
    %469 = vector.broadcast %468 : vector<2x1x1xf32> to vector<2x1x16xf32>
    %470 = arith.mulf %465, %469 : vector<2x1x16xf32>
    "tpu.trace_start"() <{level = 10 : i32, message = "bqc,bcx->bqx"}> : () -> ()
    %cst_170 = arith.constant dense<0.000000e+00> : vector<2x1x64xf32>
    %471 = tpu.matmul %470, %21, %cst_170 {dimension_numbers = #tpu.dot_dimension_numbers<[2], [1], [1], [2], [0, 0, 0, 1, 1, 2], [0], [0]>} : vector<2x1x16xf32>, vector<2x16x64xf32>, vector<2x1x64xf32> -> vector<2x1x64xf32>
    "tpu.trace_stop"() : () -> ()
    "tpu.trace_start"() <{level = 10 : i32, message = "bqh,bhk->bqk"}> : () -> ()
    %cst_171 = arith.constant dense<0.000000e+00> : vector<2x1x32xf32>
    %472 = tpu.matmul %455, %17, %cst_171 {dimension_numbers = #tpu.dot_dimension_numbers<[2], [1], [1], [2], [0, 0, 0, 1, 1, 2], [0], [0]>} : vector<2x1x32xf32>, vector<2x32x32xf32>, vector<2x1x32xf32> -> vector<2x1x32xf32>
    "tpu.trace_stop"() : () -> ()
    "tpu.trace_start"() <{level = 10 : i32, message = "bqx,bxk->bqk"}> : () -> ()
    %cst_172 = arith.constant dense<0.000000e+00> : vector<2x1x32xf32>
    %473 = tpu.matmul %471, %20, %cst_172 {dimension_numbers = #tpu.dot_dimension_numbers<[2], [1], [1], [2], [0, 0, 0, 1, 1, 2], [0], [0]>} : vector<2x1x64xf32>, vector<2x64x32xf32>, vector<2x1x32xf32> -> vector<2x1x32xf32>
    "tpu.trace_stop"() : () -> ()
    %474 = arith.addf %472, %473 : vector<2x1x32xf32>
    %475 = math.tanh %474 : vector<2x1x32xf32>
    %476 = arith.index_cast %424 : i32 to index
    %c0_173 = arith.constant 0 : index
    %c0_174 = arith.constant 0 : index
    %477 = vector.load %arg18[%476, %c0_173, %c0_174] : memref<16x1x32xf32, #tpu.memory_space<vmem>>, vector<2x1x32xf32>
    tpu.vector_store %arg18[%476, %c0_173, %c0_174], %475 {strides = array<i32>} : memref<16x1x32xf32, #tpu.memory_space<vmem>>, vector<2x1x32xf32>,
    %c8_i32 = arith.constant 8 : i32
    %c0_175 = arith.constant 0 : index
    %c0_176 = arith.constant 0 : index
    %c0_177 = arith.constant 0 : index
    %478 = vector.load %arg18[%c0_175, %c0_176, %c0_177] : memref<16x1x32xf32, #tpu.memory_space<vmem>>, vector<16x1x32xf32>
    %479 = vector.shape_cast %478 : vector<16x1x32xf32> to vector<16x32xf32>
    %c0_178 = arith.constant 0 : index
    %c0_179 = arith.constant 0 : index
    %480 = vector.load %arg14[%c0_178, %c0_179] : memref<32x128xf32, #tpu.memory_space<vmem>>, vector<32x128xf32>
    %cst_180 = arith.constant dense<0.000000e+00> : vector<16x128xf32>
    %481 = tpu.matmul %479, %480, %cst_180 {dimension_numbers = #tpu.dot_dimension_numbers<[1], [0], [0], [1], [0, 0, 1, 1], [], []>} : vector<16x32xf32>, vector<32x128xf32>, vector<16x128xf32> -> vector<16x128xf32>
    %c0_181 = arith.constant 0 : index
    %c0_182 = arith.constant 0 : index
    %482 = vector.load %arg15[%c0_181, %c0_182] : memref<1x128xf32, #tpu.memory_space<vmem>>, vector<1x128xf32>
    %483 = vector.broadcast %482 : vector<1x128xf32> to vector<16x128xf32>
    %484 = arith.addf %481, %483 : vector<16x128xf32>
    %cst_183 = arith.constant dense<0xFF800000> : vector<16xf32>
    %485 = vector.multi_reduction <maximumf>, %484, %cst_183 [1] : vector<16x128xf32> to vector<16xf32>
    %486 = vector.shape_cast %485 : vector<16xf32> to vector<16x1xf32>
    %487 = vector.broadcast %486 : vector<16x1xf32> to vector<16x128xf32>
    %488 = arith.subf %484, %487 : vector<16x128xf32>
    %489 = math.exp %488 : vector<16x128xf32>
    %cst_184 = arith.constant dense<0.000000e+00> : vector<16xf32>
    %490 = vector.multi_reduction <add>, %489, %cst_184 [1] : vector<16x128xf32> to vector<16xf32>
    %491 = vector.shape_cast %490 : vector<16xf32> to vector<16x1xf32>
    %492 = math.log %491 : vector<16x1xf32>
    %493 = vector.broadcast %492 : vector<16x1xf32> to vector<16x128xf32>
    %494 = arith.subf %488, %493 : vector<16x128xf32>
    %c0_185 = arith.constant 0 : index
    %c0_186 = arith.constant 0 : index
    %495 = vector.load %arg16[%c0_185, %c0_186] : memref<16x128xf32, #tpu.memory_space<vmem>>, vector<16x128xf32>
    tpu.vector_store %arg16[%c0_185, %c0_186], %494 {strides = array<i32>} : memref<16x128xf32, #tpu.memory_space<vmem>>, vector<16x128xf32>,
    return
  }
}

module attributes {stable_mosaic.version = 11 : i64} {
  func.func @_bilstm_encoder_kernel(%arg0: memref<2x16x32xf32, #tpu.memory_space<vmem>>, %arg1: memref<2x16x32xf32, #tpu.memory_space<vmem>>, %arg2: memref<16x2x1xf32, #tpu.memory_space<vmem>>, %arg3: memref<16x2x1xf32, #tpu.memory_space<vmem>>, %arg4: memref<32x128xf32, #tpu.memory_space<vmem>>, %arg5: memref<32x128xf32, #tpu.memory_space<vmem>>, %arg6: memref<32x128xf32, #tpu.memory_space<vmem>>, %arg7: memref<32x128xf32, #tpu.memory_space<vmem>>, %arg8: memref<1x128xf32, #tpu.memory_space<vmem>>, %arg9: memref<1x128xf32, #tpu.memory_space<vmem>>, %arg10: memref<16x2x32xf32, #tpu.memory_space<vmem>>, %arg11: memref<16x2x32xf32, #tpu.memory_space<vmem>>, %arg12: memref<2x2x32xf32, #tpu.memory_space<vmem>>, %arg13: memref<2x2x32xf32, #tpu.memory_space<vmem>>, %arg14: memref<16x2x128xf32, #tpu.memory_space<vmem>>, %arg15: memref<16x2x128xf32, #tpu.memory_space<vmem>>) attributes {dimension_semantics = [], scalar_prefetch = 0 : i64, scratch_operands = 2 : i64, tpu.core_type = #tpu.core_type<tc>} {
    %c0 = arith.constant 0 : index
    %c0_0 = arith.constant 0 : index
    %c0_1 = arith.constant 0 : index
    %0 = vector.load %arg0[%c0, %c0_0, %c0_1] : memref<2x16x32xf32, #tpu.memory_space<vmem>>, vector<1x16x32xf32>
    %1 = vector.shape_cast %0 : vector<1x16x32xf32> to vector<16x32xf32>
    %c0_2 = arith.constant 0 : index
    %c0_3 = arith.constant 0 : index
    %2 = vector.load %arg4[%c0_2, %c0_3] : memref<32x128xf32, #tpu.memory_space<vmem>>, vector<32x128xf32>
    %cst = arith.constant dense<0.000000e+00> : vector<16x128xf32>
    %3 = tpu.matmul %1, %2, %cst {dimension_numbers = #tpu.dot_dimension_numbers<[1], [0], [0], [1], [0, 0, 1, 1], [], []>} : vector<16x32xf32>, vector<32x128xf32>, vector<16x128xf32> -> vector<16x128xf32>
    %c0_4 = arith.constant 0 : index
    %c0_5 = arith.constant 0 : index
    %4 = vector.load %arg8[%c0_4, %c0_5] : memref<1x128xf32, #tpu.memory_space<vmem>>, vector<1x128xf32>
    %5 = vector.broadcast %4 : vector<1x128xf32> to vector<16x128xf32>
    %6 = arith.addf %3, %5 : vector<16x128xf32>
    %c0_6 = arith.constant 0 : index
    %c0_7 = arith.constant 0 : index
    %c0_8 = arith.constant 0 : index
    %7 = vector.load %arg14[%c0_6, %c0_7, %c0_8] : memref<16x2x128xf32, #tpu.memory_space<vmem>>, vector<16x1x128xf32>
    %8 = vector.shape_cast %7 : vector<16x1x128xf32> to vector<16x128xf32>
    %9 = vector.shape_cast %6 : vector<16x128xf32> to vector<16x1x128xf32>
    tpu.vector_store %arg14[%c0_6, %c0_7, %c0_8], %9 {strides = array<i32>} : memref<16x2x128xf32, #tpu.memory_space<vmem>>, vector<16x1x128xf32>,
    %c0_9 = arith.constant 0 : index
    %c0_10 = arith.constant 0 : index
    %c0_11 = arith.constant 0 : index
    %10 = vector.load %arg1[%c0_9, %c0_10, %c0_11] : memref<2x16x32xf32, #tpu.memory_space<vmem>>, vector<1x16x32xf32>
    %11 = vector.shape_cast %10 : vector<1x16x32xf32> to vector<16x32xf32>
    %c0_12 = arith.constant 0 : index
    %c0_13 = arith.constant 0 : index
    %12 = vector.load %arg5[%c0_12, %c0_13] : memref<32x128xf32, #tpu.memory_space<vmem>>, vector<32x128xf32>
    %cst_14 = arith.constant dense<0.000000e+00> : vector<16x128xf32>
    %13 = tpu.matmul %11, %12, %cst_14 {dimension_numbers = #tpu.dot_dimension_numbers<[1], [0], [0], [1], [0, 0, 1, 1], [], []>} : vector<16x32xf32>, vector<32x128xf32>, vector<16x128xf32> -> vector<16x128xf32>
    %c0_15 = arith.constant 0 : index
    %c0_16 = arith.constant 0 : index
    %14 = vector.load %arg9[%c0_15, %c0_16] : memref<1x128xf32, #tpu.memory_space<vmem>>, vector<1x128xf32>
    %15 = vector.broadcast %14 : vector<1x128xf32> to vector<16x128xf32>
    %16 = arith.addf %13, %15 : vector<16x128xf32>
    %c0_17 = arith.constant 0 : index
    %c0_18 = arith.constant 0 : index
    %c0_19 = arith.constant 0 : index
    %17 = vector.load %arg15[%c0_17, %c0_18, %c0_19] : memref<16x2x128xf32, #tpu.memory_space<vmem>>, vector<16x1x128xf32>
    %18 = vector.shape_cast %17 : vector<16x1x128xf32> to vector<16x128xf32>
    %19 = vector.shape_cast %16 : vector<16x128xf32> to vector<16x1x128xf32>
    tpu.vector_store %arg15[%c0_17, %c0_18, %c0_19], %19 {strides = array<i32>} : memref<16x2x128xf32, #tpu.memory_space<vmem>>, vector<16x1x128xf32>,
    %c1 = arith.constant 1 : index
    %c0_20 = arith.constant 0 : index
    %c0_21 = arith.constant 0 : index
    %20 = vector.load %arg0[%c1, %c0_20, %c0_21] : memref<2x16x32xf32, #tpu.memory_space<vmem>>, vector<1x16x32xf32>
    %21 = vector.shape_cast %20 : vector<1x16x32xf32> to vector<16x32xf32>
    %c0_22 = arith.constant 0 : index
    %c0_23 = arith.constant 0 : index
    %22 = vector.load %arg4[%c0_22, %c0_23] : memref<32x128xf32, #tpu.memory_space<vmem>>, vector<32x128xf32>
    %cst_24 = arith.constant dense<0.000000e+00> : vector<16x128xf32>
    %23 = tpu.matmul %21, %22, %cst_24 {dimension_numbers = #tpu.dot_dimension_numbers<[1], [0], [0], [1], [0, 0, 1, 1], [], []>} : vector<16x32xf32>, vector<32x128xf32>, vector<16x128xf32> -> vector<16x128xf32>
    %c0_25 = arith.constant 0 : index
    %c0_26 = arith.constant 0 : index
    %24 = vector.load %arg8[%c0_25, %c0_26] : memref<1x128xf32, #tpu.memory_space<vmem>>, vector<1x128xf32>
    %25 = vector.broadcast %24 : vector<1x128xf32> to vector<16x128xf32>
    %26 = arith.addf %23, %25 : vector<16x128xf32>
    %c0_27 = arith.constant 0 : index
    %c1_28 = arith.constant 1 : index
    %c0_29 = arith.constant 0 : index
    %27 = vector.load %arg14[%c0_27, %c1_28, %c0_29] : memref<16x2x128xf32, #tpu.memory_space<vmem>>, vector<16x1x128xf32>
    %28 = vector.shape_cast %27 : vector<16x1x128xf32> to vector<16x128xf32>
    %29 = vector.shape_cast %26 : vector<16x128xf32> to vector<16x1x128xf32>
    tpu.vector_store %arg14[%c0_27, %c1_28, %c0_29], %29 {strides = array<i32>} : memref<16x2x128xf32, #tpu.memory_space<vmem>>, vector<16x1x128xf32>,
    %c1_30 = arith.constant 1 : index
    %c0_31 = arith.constant 0 : index
    %c0_32 = arith.constant 0 : index
    %30 = vector.load %arg1[%c1_30, %c0_31, %c0_32] : memref<2x16x32xf32, #tpu.memory_space<vmem>>, vector<1x16x32xf32>
    %31 = vector.shape_cast %30 : vector<1x16x32xf32> to vector<16x32xf32>
    %c0_33 = arith.constant 0 : index
    %c0_34 = arith.constant 0 : index
    %32 = vector.load %arg5[%c0_33, %c0_34] : memref<32x128xf32, #tpu.memory_space<vmem>>, vector<32x128xf32>
    %cst_35 = arith.constant dense<0.000000e+00> : vector<16x128xf32>
    %33 = tpu.matmul %31, %32, %cst_35 {dimension_numbers = #tpu.dot_dimension_numbers<[1], [0], [0], [1], [0, 0, 1, 1], [], []>} : vector<16x32xf32>, vector<32x128xf32>, vector<16x128xf32> -> vector<16x128xf32>
    %c0_36 = arith.constant 0 : index
    %c0_37 = arith.constant 0 : index
    %34 = vector.load %arg9[%c0_36, %c0_37] : memref<1x128xf32, #tpu.memory_space<vmem>>, vector<1x128xf32>
    %35 = vector.broadcast %34 : vector<1x128xf32> to vector<16x128xf32>
    %36 = arith.addf %33, %35 : vector<16x128xf32>
    %c0_38 = arith.constant 0 : index
    %c1_39 = arith.constant 1 : index
    %c0_40 = arith.constant 0 : index
    %37 = vector.load %arg15[%c0_38, %c1_39, %c0_40] : memref<16x2x128xf32, #tpu.memory_space<vmem>>, vector<16x1x128xf32>
    %38 = vector.shape_cast %37 : vector<16x1x128xf32> to vector<16x128xf32>
    %39 = vector.shape_cast %36 : vector<16x128xf32> to vector<16x1x128xf32>
    tpu.vector_store %arg15[%c0_38, %c1_39, %c0_40], %39 {strides = array<i32>} : memref<16x2x128xf32, #tpu.memory_space<vmem>>, vector<16x1x128xf32>,
    %cst_41 = arith.constant 0.000000e+00 : f32
    %40 = vector.broadcast %cst_41 : f32 to vector<2x32xf32>
    %c0_i32 = arith.constant 0 : i32
    %41 = arith.index_cast %c0_i32 : i32 to index
    %c0_42 = arith.constant 0 : index
    %c0_43 = arith.constant 0 : index
    %42 = vector.load %arg14[%41, %c0_42, %c0_43] : memref<16x2x128xf32, #tpu.memory_space<vmem>>, vector<1x2x128xf32>
    %43 = vector.shape_cast %42 : vector<1x2x128xf32> to vector<2x128xf32>
    %c0_44 = arith.constant 0 : index
    %c0_45 = arith.constant 0 : index
    %44 = vector.load %arg6[%c0_44, %c0_45] : memref<32x128xf32, #tpu.memory_space<vmem>>, vector<32x128xf32>
    %cst_46 = arith.constant dense<0.000000e+00> : vector<2x128xf32>
    %45 = tpu.matmul %40, %44, %cst_46 {dimension_numbers = #tpu.dot_dimension_numbers<[1], [0], [0], [1], [0, 0, 1, 1], [], []>} : vector<2x32xf32>, vector<32x128xf32>, vector<2x128xf32> -> vector<2x128xf32>
    %46 = arith.addf %43, %45 : vector<2x128xf32>
    %47 = arith.index_cast %c0_i32 : i32 to index
    %c0_47 = arith.constant 0 : index
    %c0_48 = arith.constant 0 : index
    %48 = vector.load %arg15[%47, %c0_47, %c0_48] : memref<16x2x128xf32, #tpu.memory_space<vmem>>, vector<1x2x128xf32>
    %49 = vector.shape_cast %48 : vector<1x2x128xf32> to vector<2x128xf32>
    %c0_49 = arith.constant 0 : index
    %c0_50 = arith.constant 0 : index
    %50 = vector.load %arg7[%c0_49, %c0_50] : memref<32x128xf32, #tpu.memory_space<vmem>>, vector<32x128xf32>
    %cst_51 = arith.constant dense<0.000000e+00> : vector<2x128xf32>
    %51 = tpu.matmul %40, %50, %cst_51 {dimension_numbers = #tpu.dot_dimension_numbers<[1], [0], [0], [1], [0, 0, 1, 1], [], []>} : vector<2x32xf32>, vector<32x128xf32>, vector<2x128xf32> -> vector<2x128xf32>
    %52 = arith.addf %49, %51 : vector<2x128xf32>
    %53 = arith.index_cast %c0_i32 : i32 to index
    %c0_52 = arith.constant 0 : index
    %c0_53 = arith.constant 0 : index
    %54 = vector.load %arg2[%53, %c0_52, %c0_53] : memref<16x2x1xf32, #tpu.memory_space<vmem>>, vector<1x2x1xf32>
    %55 = vector.shape_cast %54 : vector<1x2x1xf32> to vector<2x1xf32>
    %56 = vector.extract_strided_slice %46 {offsets = [0, 0], sizes = [2, 32], strides = [1, 1]} : vector<2x128xf32> to vector<2x32xf32>
    %57 = arith.negf %56 : vector<2x32xf32>
    %58 = math.exp %57 : vector<2x32xf32>
    %cst_54 = arith.constant 1.000000e+00 : f32
    %59 = vector.broadcast %cst_54 : f32 to vector<2x32xf32>
    %60 = arith.addf %59, %58 : vector<2x32xf32>
    %61 = arith.divf %59, %60 : vector<2x32xf32>
    %62 = vector.extract_strided_slice %46 {offsets = [0, 32], sizes = [2, 32], strides = [1, 1]} : vector<2x128xf32> to vector<2x32xf32>
    %63 = arith.negf %62 : vector<2x32xf32>
    %64 = math.exp %63 : vector<2x32xf32>
    %cst_55 = arith.constant 1.000000e+00 : f32
    %65 = vector.broadcast %cst_55 : f32 to vector<2x32xf32>
    %66 = arith.addf %65, %64 : vector<2x32xf32>
    %67 = arith.divf %65, %66 : vector<2x32xf32>
    %68 = vector.extract_strided_slice %46 {offsets = [0, 64], sizes = [2, 32], strides = [1, 1]} : vector<2x128xf32> to vector<2x32xf32>
    %69 = math.tanh %68 : vector<2x32xf32>
    %70 = vector.extract_strided_slice %46 {offsets = [0, 96], sizes = [2, 32], strides = [1, 1]} : vector<2x128xf32> to vector<2x32xf32>
    %71 = arith.negf %70 : vector<2x32xf32>
    %72 = math.exp %71 : vector<2x32xf32>
    %cst_56 = arith.constant 1.000000e+00 : f32
    %73 = vector.broadcast %cst_56 : f32 to vector<2x32xf32>
    %74 = arith.addf %73, %72 : vector<2x32xf32>
    %75 = arith.divf %73, %74 : vector<2x32xf32>
    %76 = arith.mulf %67, %40 : vector<2x32xf32>
    %77 = arith.mulf %61, %69 : vector<2x32xf32>
    %78 = arith.addf %76, %77 : vector<2x32xf32>
    %79 = math.tanh %78 : vector<2x32xf32>
    %80 = arith.mulf %75, %79 : vector<2x32xf32>
    %81 = vector.broadcast %55 : vector<2x1xf32> to vector<2x32xf32>
    %82 = arith.mulf %81, %80 : vector<2x32xf32>
    %cst_57 = arith.constant 1.000000e+00 : f32
    %83 = vector.broadcast %cst_57 : f32 to vector<2x1xf32>
    %84 = arith.subf %83, %55 : vector<2x1xf32>
    %85 = vector.broadcast %84 : vector<2x1xf32> to vector<2x32xf32>
    %86 = arith.mulf %85, %40 : vector<2x32xf32>
    %87 = arith.addf %82, %86 : vector<2x32xf32>
    %88 = vector.broadcast %55 : vector<2x1xf32> to vector<2x32xf32>
    %89 = arith.mulf %88, %78 : vector<2x32xf32>
    %cst_58 = arith.constant 1.000000e+00 : f32
    %90 = vector.broadcast %cst_58 : f32 to vector<2x1xf32>
    %91 = arith.subf %90, %55 : vector<2x1xf32>
    %92 = vector.broadcast %91 : vector<2x1xf32> to vector<2x32xf32>
    %93 = arith.mulf %92, %40 : vector<2x32xf32>
    %94 = arith.addf %89, %93 : vector<2x32xf32>
    %95 = vector.broadcast %55 : vector<2x1xf32> to vector<2x32xf32>
    %96 = arith.mulf %95, %80 : vector<2x32xf32>
    %97 = arith.index_cast %c0_i32 : i32 to index
    %c0_59 = arith.constant 0 : index
    %c0_60 = arith.constant 0 : index
    %98 = vector.load %arg3[%97, %c0_59, %c0_60] : memref<16x2x1xf32, #tpu.memory_space<vmem>>, vector<1x2x1xf32>
    %99 = vector.shape_cast %98 : vector<1x2x1xf32> to vector<2x1xf32>
    %100 = vector.extract_strided_slice %52 {offsets = [0, 0], sizes = [2, 32], strides = [1, 1]} : vector<2x128xf32> to vector<2x32xf32>
    %101 = arith.negf %100 : vector<2x32xf32>
    %102 = math.exp %101 : vector<2x32xf32>
    %cst_61 = arith.constant 1.000000e+00 : f32
    %103 = vector.broadcast %cst_61 : f32 to vector<2x32xf32>
    %104 = arith.addf %103, %102 : vector<2x32xf32>
    %105 = arith.divf %103, %104 : vector<2x32xf32>
    %106 = vector.extract_strided_slice %52 {offsets = [0, 32], sizes = [2, 32], strides = [1, 1]} : vector<2x128xf32> to vector<2x32xf32>
    %107 = arith.negf %106 : vector<2x32xf32>
    %108 = math.exp %107 : vector<2x32xf32>
    %cst_62 = arith.constant 1.000000e+00 : f32
    %109 = vector.broadcast %cst_62 : f32 to vector<2x32xf32>
    %110 = arith.addf %109, %108 : vector<2x32xf32>
    %111 = arith.divf %109, %110 : vector<2x32xf32>
    %112 = vector.extract_strided_slice %52 {offsets = [0, 64], sizes = [2, 32], strides = [1, 1]} : vector<2x128xf32> to vector<2x32xf32>
    %113 = math.tanh %112 : vector<2x32xf32>
    %114 = vector.extract_strided_slice %52 {offsets = [0, 96], sizes = [2, 32], strides = [1, 1]} : vector<2x128xf32> to vector<2x32xf32>
    %115 = arith.negf %114 : vector<2x32xf32>
    %116 = math.exp %115 : vector<2x32xf32>
    %cst_63 = arith.constant 1.000000e+00 : f32
    %117 = vector.broadcast %cst_63 : f32 to vector<2x32xf32>
    %118 = arith.addf %117, %116 : vector<2x32xf32>
    %119 = arith.divf %117, %118 : vector<2x32xf32>
    %120 = arith.mulf %111, %40 : vector<2x32xf32>
    %121 = arith.mulf %105, %113 : vector<2x32xf32>
    %122 = arith.addf %120, %121 : vector<2x32xf32>
    %123 = math.tanh %122 : vector<2x32xf32>
    %124 = arith.mulf %119, %123 : vector<2x32xf32>
    %125 = vector.broadcast %99 : vector<2x1xf32> to vector<2x32xf32>
    %126 = arith.mulf %125, %124 : vector<2x32xf32>
    %cst_64 = arith.constant 1.000000e+00 : f32
    %127 = vector.broadcast %cst_64 : f32 to vector<2x1xf32>
    %128 = arith.subf %127, %99 : vector<2x1xf32>
    %129 = vector.broadcast %128 : vector<2x1xf32> to vector<2x32xf32>
    %130 = arith.mulf %129, %40 : vector<2x32xf32>
    %131 = arith.addf %126, %130 : vector<2x32xf32>
    %132 = vector.broadcast %99 : vector<2x1xf32> to vector<2x32xf32>
    %133 = arith.mulf %132, %122 : vector<2x32xf32>
    %cst_65 = arith.constant 1.000000e+00 : f32
    %134 = vector.broadcast %cst_65 : f32 to vector<2x1xf32>
    %135 = arith.subf %134, %99 : vector<2x1xf32>
    %136 = vector.broadcast %135 : vector<2x1xf32> to vector<2x32xf32>
    %137 = arith.mulf %136, %40 : vector<2x32xf32>
    %138 = arith.addf %133, %137 : vector<2x32xf32>
    %139 = vector.broadcast %99 : vector<2x1xf32> to vector<2x32xf32>
    %140 = arith.mulf %139, %124 : vector<2x32xf32>
    %141 = arith.index_cast %c0_i32 : i32 to index
    %c0_66 = arith.constant 0 : index
    %c0_67 = arith.constant 0 : index
    %142 = vector.load %arg10[%141, %c0_66, %c0_67] : memref<16x2x32xf32, #tpu.memory_space<vmem>>, vector<1x2x32xf32>
    %143 = vector.shape_cast %142 : vector<1x2x32xf32> to vector<2x32xf32>
    %144 = vector.shape_cast %96 : vector<2x32xf32> to vector<1x2x32xf32>
    tpu.vector_store %arg10[%141, %c0_66, %c0_67], %144 {strides = array<i32>} : memref<16x2x32xf32, #tpu.memory_space<vmem>>, vector<1x2x32xf32>,
    %145 = arith.index_cast %c0_i32 : i32 to index
    %c0_68 = arith.constant 0 : index
    %c0_69 = arith.constant 0 : index
    %146 = vector.load %arg11[%145, %c0_68, %c0_69] : memref<16x2x32xf32, #tpu.memory_space<vmem>>, vector<1x2x32xf32>
    %147 = vector.shape_cast %146 : vector<1x2x32xf32> to vector<2x32xf32>
    %148 = vector.shape_cast %140 : vector<2x32xf32> to vector<1x2x32xf32>
    tpu.vector_store %arg11[%145, %c0_68, %c0_69], %148 {strides = array<i32>} : memref<16x2x32xf32, #tpu.memory_space<vmem>>, vector<1x2x32xf32>,
    %c1_i32 = arith.constant 1 : i32
    %149 = arith.index_cast %c1_i32 : i32 to index
    %c0_70 = arith.constant 0 : index
    %c0_71 = arith.constant 0 : index
    %150 = vector.load %arg14[%149, %c0_70, %c0_71] : memref<16x2x128xf32, #tpu.memory_space<vmem>>, vector<1x2x128xf32>
    %151 = vector.shape_cast %150 : vector<1x2x128xf32> to vector<2x128xf32>
    %c0_72 = arith.constant 0 : index
    %c0_73 = arith.constant 0 : index
    %152 = vector.load %arg6[%c0_72, %c0_73] : memref<32x128xf32, #tpu.memory_space<vmem>>, vector<32x128xf32>
    %cst_74 = arith.constant dense<0.000000e+00> : vector<2x128xf32>
    %153 = tpu.matmul %87, %152, %cst_74 {dimension_numbers = #tpu.dot_dimension_numbers<[1], [0], [0], [1], [0, 0, 1, 1], [], []>} : vector<2x32xf32>, vector<32x128xf32>, vector<2x128xf32> -> vector<2x128xf32>
    %154 = arith.addf %151, %153 : vector<2x128xf32>
    %155 = arith.index_cast %c1_i32 : i32 to index
    %c0_75 = arith.constant 0 : index
    %c0_76 = arith.constant 0 : index
    %156 = vector.load %arg15[%155, %c0_75, %c0_76] : memref<16x2x128xf32, #tpu.memory_space<vmem>>, vector<1x2x128xf32>
    %157 = vector.shape_cast %156 : vector<1x2x128xf32> to vector<2x128xf32>
    %c0_77 = arith.constant 0 : index
    %c0_78 = arith.constant 0 : index
    %158 = vector.load %arg7[%c0_77, %c0_78] : memref<32x128xf32, #tpu.memory_space<vmem>>, vector<32x128xf32>
    %cst_79 = arith.constant dense<0.000000e+00> : vector<2x128xf32>
    %159 = tpu.matmul %131, %158, %cst_79 {dimension_numbers = #tpu.dot_dimension_numbers<[1], [0], [0], [1], [0, 0, 1, 1], [], []>} : vector<2x32xf32>, vector<32x128xf32>, vector<2x128xf32> -> vector<2x128xf32>
    %160 = arith.addf %157, %159 : vector<2x128xf32>
    %161 = arith.index_cast %c1_i32 : i32 to index
    %c0_80 = arith.constant 0 : index
    %c0_81 = arith.constant 0 : index
    %162 = vector.load %arg2[%161, %c0_80, %c0_81] : memref<16x2x1xf32, #tpu.memory_space<vmem>>, vector<1x2x1xf32>
    %163 = vector.shape_cast %162 : vector<1x2x1xf32> to vector<2x1xf32>
    %164 = vector.extract_strided_slice %154 {offsets = [0, 0], sizes = [2, 32], strides = [1, 1]} : vector<2x128xf32> to vector<2x32xf32>
    %165 = arith.negf %164 : vector<2x32xf32>
    %166 = math.exp %165 : vector<2x32xf32>
    %cst_82 = arith.constant 1.000000e+00 : f32
    %167 = vector.broadcast %cst_82 : f32 to vector<2x32xf32>
    %168 = arith.addf %167, %166 : vector<2x32xf32>
    %169 = arith.divf %167, %168 : vector<2x32xf32>
    %170 = vector.extract_strided_slice %154 {offsets = [0, 32], sizes = [2, 32], strides = [1, 1]} : vector<2x128xf32> to vector<2x32xf32>
    %171 = arith.negf %170 : vector<2x32xf32>
    %172 = math.exp %171 : vector<2x32xf32>
    %cst_83 = arith.constant 1.000000e+00 : f32
    %173 = vector.broadcast %cst_83 : f32 to vector<2x32xf32>
    %174 = arith.addf %173, %172 : vector<2x32xf32>
    %175 = arith.divf %173, %174 : vector<2x32xf32>
    %176 = vector.extract_strided_slice %154 {offsets = [0, 64], sizes = [2, 32], strides = [1, 1]} : vector<2x128xf32> to vector<2x32xf32>
    %177 = math.tanh %176 : vector<2x32xf32>
    %178 = vector.extract_strided_slice %154 {offsets = [0, 96], sizes = [2, 32], strides = [1, 1]} : vector<2x128xf32> to vector<2x32xf32>
    %179 = arith.negf %178 : vector<2x32xf32>
    %180 = math.exp %179 : vector<2x32xf32>
    %cst_84 = arith.constant 1.000000e+00 : f32
    %181 = vector.broadcast %cst_84 : f32 to vector<2x32xf32>
    %182 = arith.addf %181, %180 : vector<2x32xf32>
    %183 = arith.divf %181, %182 : vector<2x32xf32>
    %184 = arith.mulf %175, %94 : vector<2x32xf32>
    %185 = arith.mulf %169, %177 : vector<2x32xf32>
    %186 = arith.addf %184, %185 : vector<2x32xf32>
    %187 = math.tanh %186 : vector<2x32xf32>
    %188 = arith.mulf %183, %187 : vector<2x32xf32>
    %189 = vector.broadcast %163 : vector<2x1xf32> to vector<2x32xf32>
    %190 = arith.mulf %189, %188 : vector<2x32xf32>
    %cst_85 = arith.constant 1.000000e+00 : f32
    %191 = vector.broadcast %cst_85 : f32 to vector<2x1xf32>
    %192 = arith.subf %191, %163 : vector<2x1xf32>
    %193 = vector.broadcast %192 : vector<2x1xf32> to vector<2x32xf32>
    %194 = arith.mulf %193, %87 : vector<2x32xf32>
    %195 = arith.addf %190, %194 : vector<2x32xf32>
    %196 = vector.broadcast %163 : vector<2x1xf32> to vector<2x32xf32>
    %197 = arith.mulf %196, %186 : vector<2x32xf32>
    %cst_86 = arith.constant 1.000000e+00 : f32
    %198 = vector.broadcast %cst_86 : f32 to vector<2x1xf32>
    %199 = arith.subf %198, %163 : vector<2x1xf32>
    %200 = vector.broadcast %199 : vector<2x1xf32> to vector<2x32xf32>
    %201 = arith.mulf %200, %94 : vector<2x32xf32>
    %202 = arith.addf %197, %201 : vector<2x32xf32>
    %203 = vector.broadcast %163 : vector<2x1xf32> to vector<2x32xf32>
    %204 = arith.mulf %203, %188 : vector<2x32xf32>
    %205 = arith.index_cast %c1_i32 : i32 to index
    %c0_87 = arith.constant 0 : index
    %c0_88 = arith.constant 0 : index
    %206 = vector.load %arg3[%205, %c0_87, %c0_88] : memref<16x2x1xf32, #tpu.memory_space<vmem>>, vector<1x2x1xf32>
    %207 = vector.shape_cast %206 : vector<1x2x1xf32> to vector<2x1xf32>
    %208 = vector.extract_strided_slice %160 {offsets = [0, 0], sizes = [2, 32], strides = [1, 1]} : vector<2x128xf32> to vector<2x32xf32>
    %209 = arith.negf %208 : vector<2x32xf32>
    %210 = math.exp %209 : vector<2x32xf32>
    %cst_89 = arith.constant 1.000000e+00 : f32
    %211 = vector.broadcast %cst_89 : f32 to vector<2x32xf32>
    %212 = arith.addf %211, %210 : vector<2x32xf32>
    %213 = arith.divf %211, %212 : vector<2x32xf32>
    %214 = vector.extract_strided_slice %160 {offsets = [0, 32], sizes = [2, 32], strides = [1, 1]} : vector<2x128xf32> to vector<2x32xf32>
    %215 = arith.negf %214 : vector<2x32xf32>
    %216 = math.exp %215 : vector<2x32xf32>
    %cst_90 = arith.constant 1.000000e+00 : f32
    %217 = vector.broadcast %cst_90 : f32 to vector<2x32xf32>
    %218 = arith.addf %217, %216 : vector<2x32xf32>
    %219 = arith.divf %217, %218 : vector<2x32xf32>
    %220 = vector.extract_strided_slice %160 {offsets = [0, 64], sizes = [2, 32], strides = [1, 1]} : vector<2x128xf32> to vector<2x32xf32>
    %221 = math.tanh %220 : vector<2x32xf32>
    %222 = vector.extract_strided_slice %160 {offsets = [0, 96], sizes = [2, 32], strides = [1, 1]} : vector<2x128xf32> to vector<2x32xf32>
    %223 = arith.negf %222 : vector<2x32xf32>
    %224 = math.exp %223 : vector<2x32xf32>
    %cst_91 = arith.constant 1.000000e+00 : f32
    %225 = vector.broadcast %cst_91 : f32 to vector<2x32xf32>
    %226 = arith.addf %225, %224 : vector<2x32xf32>
    %227 = arith.divf %225, %226 : vector<2x32xf32>
    %228 = arith.mulf %219, %138 : vector<2x32xf32>
    %229 = arith.mulf %213, %221 : vector<2x32xf32>
    %230 = arith.addf %228, %229 : vector<2x32xf32>
    %231 = math.tanh %230 : vector<2x32xf32>
    %232 = arith.mulf %227, %231 : vector<2x32xf32>
    %233 = vector.broadcast %207 : vector<2x1xf32> to vector<2x32xf32>
    %234 = arith.mulf %233, %232 : vector<2x32xf32>
    %cst_92 = arith.constant 1.000000e+00 : f32
    %235 = vector.broadcast %cst_92 : f32 to vector<2x1xf32>
    %236 = arith.subf %235, %207 : vector<2x1xf32>
    %237 = vector.broadcast %236 : vector<2x1xf32> to vector<2x32xf32>
    %238 = arith.mulf %237, %131 : vector<2x32xf32>
    %239 = arith.addf %234, %238 : vector<2x32xf32>
    %240 = vector.broadcast %207 : vector<2x1xf32> to vector<2x32xf32>
    %241 = arith.mulf %240, %230 : vector<2x32xf32>
    %cst_93 = arith.constant 1.000000e+00 : f32
    %242 = vector.broadcast %cst_93 : f32 to vector<2x1xf32>
    %243 = arith.subf %242, %207 : vector<2x1xf32>
    %244 = vector.broadcast %243 : vector<2x1xf32> to vector<2x32xf32>
    %245 = arith.mulf %244, %138 : vector<2x32xf32>
    %246 = arith.addf %241, %245 : vector<2x32xf32>
    %247 = vector.broadcast %207 : vector<2x1xf32> to vector<2x32xf32>
    %248 = arith.mulf %247, %232 : vector<2x32xf32>
    %249 = arith.index_cast %c1_i32 : i32 to index
    %c0_94 = arith.constant 0 : index
    %c0_95 = arith.constant 0 : index
    %250 = vector.load %arg10[%249, %c0_94, %c0_95] : memref<16x2x32xf32, #tpu.memory_space<vmem>>, vector<1x2x32xf32>
    %251 = vector.shape_cast %250 : vector<1x2x32xf32> to vector<2x32xf32>
    %252 = vector.shape_cast %204 : vector<2x32xf32> to vector<1x2x32xf32>
    tpu.vector_store %arg10[%249, %c0_94, %c0_95], %252 {strides = array<i32>} : memref<16x2x32xf32, #tpu.memory_space<vmem>>, vector<1x2x32xf32>,
    %253 = arith.index_cast %c1_i32 : i32 to index
    %c0_96 = arith.constant 0 : index
    %c0_97 = arith.constant 0 : index
    %254 = vector.load %arg11[%253, %c0_96, %c0_97] : memref<16x2x32xf32, #tpu.memory_space<vmem>>, vector<1x2x32xf32>
    %255 = vector.shape_cast %254 : vector<1x2x32xf32> to vector<2x32xf32>
    %256 = vector.shape_cast %248 : vector<2x32xf32> to vector<1x2x32xf32>
    tpu.vector_store %arg11[%253, %c0_96, %c0_97], %256 {strides = array<i32>} : memref<16x2x32xf32, #tpu.memory_space<vmem>>, vector<1x2x32xf32>,
    %c2_i32 = arith.constant 2 : i32
    %257 = arith.index_cast %c2_i32 : i32 to index
    %c0_98 = arith.constant 0 : index
    %c0_99 = arith.constant 0 : index
    %258 = vector.load %arg14[%257, %c0_98, %c0_99] : memref<16x2x128xf32, #tpu.memory_space<vmem>>, vector<1x2x128xf32>
    %259 = vector.shape_cast %258 : vector<1x2x128xf32> to vector<2x128xf32>
    %c0_100 = arith.constant 0 : index
    %c0_101 = arith.constant 0 : index
    %260 = vector.load %arg6[%c0_100, %c0_101] : memref<32x128xf32, #tpu.memory_space<vmem>>, vector<32x128xf32>
    %cst_102 = arith.constant dense<0.000000e+00> : vector<2x128xf32>
    %261 = tpu.matmul %195, %260, %cst_102 {dimension_numbers = #tpu.dot_dimension_numbers<[1], [0], [0], [1], [0, 0, 1, 1], [], []>} : vector<2x32xf32>, vector<32x128xf32>, vector<2x128xf32> -> vector<2x128xf32>
    %262 = arith.addf %259, %261 : vector<2x128xf32>
    %263 = arith.index_cast %c2_i32 : i32 to index
    %c0_103 = arith.constant 0 : index
    %c0_104 = arith.constant 0 : index
    %264 = vector.load %arg15[%263, %c0_103, %c0_104] : memref<16x2x128xf32, #tpu.memory_space<vmem>>, vector<1x2x128xf32>
    %265 = vector.shape_cast %264 : vector<1x2x128xf32> to vector<2x128xf32>
    %c0_105 = arith.constant 0 : index
    %c0_106 = arith.constant 0 : index
    %266 = vector.load %arg7[%c0_105, %c0_106] : memref<32x128xf32, #tpu.memory_space<vmem>>, vector<32x128xf32>
    %cst_107 = arith.constant dense<0.000000e+00> : vector<2x128xf32>
    %267 = tpu.matmul %239, %266, %cst_107 {dimension_numbers = #tpu.dot_dimension_numbers<[1], [0], [0], [1], [0, 0, 1, 1], [], []>} : vector<2x32xf32>, vector<32x128xf32>, vector<2x128xf32> -> vector<2x128xf32>
    %268 = arith.addf %265, %267 : vector<2x128xf32>
    %269 = arith.index_cast %c2_i32 : i32 to index
    %c0_108 = arith.constant 0 : index
    %c0_109 = arith.constant 0 : index
    %270 = vector.load %arg2[%269, %c0_108, %c0_109] : memref<16x2x1xf32, #tpu.memory_space<vmem>>, vector<1x2x1xf32>
    %271 = vector.shape_cast %270 : vector<1x2x1xf32> to vector<2x1xf32>
    %272 = vector.extract_strided_slice %262 {offsets = [0, 0], sizes = [2, 32], strides = [1, 1]} : vector<2x128xf32> to vector<2x32xf32>
    %273 = arith.negf %272 : vector<2x32xf32>
    %274 = math.exp %273 : vector<2x32xf32>
    %cst_110 = arith.constant 1.000000e+00 : f32
    %275 = vector.broadcast %cst_110 : f32 to vector<2x32xf32>
    %276 = arith.addf %275, %274 : vector<2x32xf32>
    %277 = arith.divf %275, %276 : vector<2x32xf32>
    %278 = vector.extract_strided_slice %262 {offsets = [0, 32], sizes = [2, 32], strides = [1, 1]} : vector<2x128xf32> to vector<2x32xf32>
    %279 = arith.negf %278 : vector<2x32xf32>
    %280 = math.exp %279 : vector<2x32xf32>
    %cst_111 = arith.constant 1.000000e+00 : f32
    %281 = vector.broadcast %cst_111 : f32 to vector<2x32xf32>
    %282 = arith.addf %281, %280 : vector<2x32xf32>
    %283 = arith.divf %281, %282 : vector<2x32xf32>
    %284 = vector.extract_strided_slice %262 {offsets = [0, 64], sizes = [2, 32], strides = [1, 1]} : vector<2x128xf32> to vector<2x32xf32>
    %285 = math.tanh %284 : vector<2x32xf32>
    %286 = vector.extract_strided_slice %262 {offsets = [0, 96], sizes = [2, 32], strides = [1, 1]} : vector<2x128xf32> to vector<2x32xf32>
    %287 = arith.negf %286 : vector<2x32xf32>
    %288 = math.exp %287 : vector<2x32xf32>
    %cst_112 = arith.constant 1.000000e+00 : f32
    %289 = vector.broadcast %cst_112 : f32 to vector<2x32xf32>
    %290 = arith.addf %289, %288 : vector<2x32xf32>
    %291 = arith.divf %289, %290 : vector<2x32xf32>
    %292 = arith.mulf %283, %202 : vector<2x32xf32>
    %293 = arith.mulf %277, %285 : vector<2x32xf32>
    %294 = arith.addf %292, %293 : vector<2x32xf32>
    %295 = math.tanh %294 : vector<2x32xf32>
    %296 = arith.mulf %291, %295 : vector<2x32xf32>
    %297 = vector.broadcast %271 : vector<2x1xf32> to vector<2x32xf32>
    %298 = arith.mulf %297, %296 : vector<2x32xf32>
    %cst_113 = arith.constant 1.000000e+00 : f32
    %299 = vector.broadcast %cst_113 : f32 to vector<2x1xf32>
    %300 = arith.subf %299, %271 : vector<2x1xf32>
    %301 = vector.broadcast %300 : vector<2x1xf32> to vector<2x32xf32>
    %302 = arith.mulf %301, %195 : vector<2x32xf32>
    %303 = arith.addf %298, %302 : vector<2x32xf32>
    %304 = vector.broadcast %271 : vector<2x1xf32> to vector<2x32xf32>
    %305 = arith.mulf %304, %294 : vector<2x32xf32>
    %cst_114 = arith.constant 1.000000e+00 : f32
    %306 = vector.broadcast %cst_114 : f32 to vector<2x1xf32>
    %307 = arith.subf %306, %271 : vector<2x1xf32>
    %308 = vector.broadcast %307 : vector<2x1xf32> to vector<2x32xf32>
    %309 = arith.mulf %308, %202 : vector<2x32xf32>
    %310 = arith.addf %305, %309 : vector<2x32xf32>
    %311 = vector.broadcast %271 : vector<2x1xf32> to vector<2x32xf32>
    %312 = arith.mulf %311, %296 : vector<2x32xf32>
    %313 = arith.index_cast %c2_i32 : i32 to index
    %c0_115 = arith.constant 0 : index
    %c0_116 = arith.constant 0 : index
    %314 = vector.load %arg3[%313, %c0_115, %c0_116] : memref<16x2x1xf32, #tpu.memory_space<vmem>>, vector<1x2x1xf32>
    %315 = vector.shape_cast %314 : vector<1x2x1xf32> to vector<2x1xf32>
    %316 = vector.extract_strided_slice %268 {offsets = [0, 0], sizes = [2, 32], strides = [1, 1]} : vector<2x128xf32> to vector<2x32xf32>
    %317 = arith.negf %316 : vector<2x32xf32>
    %318 = math.exp %317 : vector<2x32xf32>
    %cst_117 = arith.constant 1.000000e+00 : f32
    %319 = vector.broadcast %cst_117 : f32 to vector<2x32xf32>
    %320 = arith.addf %319, %318 : vector<2x32xf32>
    %321 = arith.divf %319, %320 : vector<2x32xf32>
    %322 = vector.extract_strided_slice %268 {offsets = [0, 32], sizes = [2, 32], strides = [1, 1]} : vector<2x128xf32> to vector<2x32xf32>
    %323 = arith.negf %322 : vector<2x32xf32>
    %324 = math.exp %323 : vector<2x32xf32>
    %cst_118 = arith.constant 1.000000e+00 : f32
    %325 = vector.broadcast %cst_118 : f32 to vector<2x32xf32>
    %326 = arith.addf %325, %324 : vector<2x32xf32>
    %327 = arith.divf %325, %326 : vector<2x32xf32>
    %328 = vector.extract_strided_slice %268 {offsets = [0, 64], sizes = [2, 32], strides = [1, 1]} : vector<2x128xf32> to vector<2x32xf32>
    %329 = math.tanh %328 : vector<2x32xf32>
    %330 = vector.extract_strided_slice %268 {offsets = [0, 96], sizes = [2, 32], strides = [1, 1]} : vector<2x128xf32> to vector<2x32xf32>
    %331 = arith.negf %330 : vector<2x32xf32>
    %332 = math.exp %331 : vector<2x32xf32>
    %cst_119 = arith.constant 1.000000e+00 : f32
    %333 = vector.broadcast %cst_119 : f32 to vector<2x32xf32>
    %334 = arith.addf %333, %332 : vector<2x32xf32>
    %335 = arith.divf %333, %334 : vector<2x32xf32>
    %336 = arith.mulf %327, %246 : vector<2x32xf32>
    %337 = arith.mulf %321, %329 : vector<2x32xf32>
    %338 = arith.addf %336, %337 : vector<2x32xf32>
    %339 = math.tanh %338 : vector<2x32xf32>
    %340 = arith.mulf %335, %339 : vector<2x32xf32>
    %341 = vector.broadcast %315 : vector<2x1xf32> to vector<2x32xf32>
    %342 = arith.mulf %341, %340 : vector<2x32xf32>
    %cst_120 = arith.constant 1.000000e+00 : f32
    %343 = vector.broadcast %cst_120 : f32 to vector<2x1xf32>
    %344 = arith.subf %343, %315 : vector<2x1xf32>
    %345 = vector.broadcast %344 : vector<2x1xf32> to vector<2x32xf32>
    %346 = arith.mulf %345, %239 : vector<2x32xf32>
    %347 = arith.addf %342, %346 : vector<2x32xf32>
    %348 = vector.broadcast %315 : vector<2x1xf32> to vector<2x32xf32>
    %349 = arith.mulf %348, %338 : vector<2x32xf32>
    %cst_121 = arith.constant 1.000000e+00 : f32
    %350 = vector.broadcast %cst_121 : f32 to vector<2x1xf32>
    %351 = arith.subf %350, %315 : vector<2x1xf32>
    %352 = vector.broadcast %351 : vector<2x1xf32> to vector<2x32xf32>
    %353 = arith.mulf %352, %246 : vector<2x32xf32>
    %354 = arith.addf %349, %353 : vector<2x32xf32>
    %355 = vector.broadcast %315 : vector<2x1xf32> to vector<2x32xf32>
    %356 = arith.mulf %355, %340 : vector<2x32xf32>
    %357 = arith.index_cast %c2_i32 : i32 to index
    %c0_122 = arith.constant 0 : index
    %c0_123 = arith.constant 0 : index
    %358 = vector.load %arg10[%357, %c0_122, %c0_123] : memref<16x2x32xf32, #tpu.memory_space<vmem>>, vector<1x2x32xf32>
    %359 = vector.shape_cast %358 : vector<1x2x32xf32> to vector<2x32xf32>
    %360 = vector.shape_cast %312 : vector<2x32xf32> to vector<1x2x32xf32>
    tpu.vector_store %arg10[%357, %c0_122, %c0_123], %360 {strides = array<i32>} : memref<16x2x32xf32, #tpu.memory_space<vmem>>, vector<1x2x32xf32>,
    %361 = arith.index_cast %c2_i32 : i32 to index
    %c0_124 = arith.constant 0 : index
    %c0_125 = arith.constant 0 : index
    %362 = vector.load %arg11[%361, %c0_124, %c0_125] : memref<16x2x32xf32, #tpu.memory_space<vmem>>, vector<1x2x32xf32>
    %363 = vector.shape_cast %362 : vector<1x2x32xf32> to vector<2x32xf32>
    %364 = vector.shape_cast %356 : vector<2x32xf32> to vector<1x2x32xf32>
    tpu.vector_store %arg11[%361, %c0_124, %c0_125], %364 {strides = array<i32>} : memref<16x2x32xf32, #tpu.memory_space<vmem>>, vector<1x2x32xf32>,
    %c3_i32 = arith.constant 3 : i32
    %365 = arith.index_cast %c3_i32 : i32 to index
    %c0_126 = arith.constant 0 : index
    %c0_127 = arith.constant 0 : index
    %366 = vector.load %arg14[%365, %c0_126, %c0_127] : memref<16x2x128xf32, #tpu.memory_space<vmem>>, vector<1x2x128xf32>
    %367 = vector.shape_cast %366 : vector<1x2x128xf32> to vector<2x128xf32>
    %c0_128 = arith.constant 0 : index
    %c0_129 = arith.constant 0 : index
    %368 = vector.load %arg6[%c0_128, %c0_129] : memref<32x128xf32, #tpu.memory_space<vmem>>, vector<32x128xf32>
    %cst_130 = arith.constant dense<0.000000e+00> : vector<2x128xf32>
    %369 = tpu.matmul %303, %368, %cst_130 {dimension_numbers = #tpu.dot_dimension_numbers<[1], [0], [0], [1], [0, 0, 1, 1], [], []>} : vector<2x32xf32>, vector<32x128xf32>, vector<2x128xf32> -> vector<2x128xf32>
    %370 = arith.addf %367, %369 : vector<2x128xf32>
    %371 = arith.index_cast %c3_i32 : i32 to index
    %c0_131 = arith.constant 0 : index
    %c0_132 = arith.constant 0 : index
    %372 = vector.load %arg15[%371, %c0_131, %c0_132] : memref<16x2x128xf32, #tpu.memory_space<vmem>>, vector<1x2x128xf32>
    %373 = vector.shape_cast %372 : vector<1x2x128xf32> to vector<2x128xf32>
    %c0_133 = arith.constant 0 : index
    %c0_134 = arith.constant 0 : index
    %374 = vector.load %arg7[%c0_133, %c0_134] : memref<32x128xf32, #tpu.memory_space<vmem>>, vector<32x128xf32>
    %cst_135 = arith.constant dense<0.000000e+00> : vector<2x128xf32>
    %375 = tpu.matmul %347, %374, %cst_135 {dimension_numbers = #tpu.dot_dimension_numbers<[1], [0], [0], [1], [0, 0, 1, 1], [], []>} : vector<2x32xf32>, vector<32x128xf32>, vector<2x128xf32> -> vector<2x128xf32>
    %376 = arith.addf %373, %375 : vector<2x128xf32>
    %377 = arith.index_cast %c3_i32 : i32 to index
    %c0_136 = arith.constant 0 : index
    %c0_137 = arith.constant 0 : index
    %378 = vector.load %arg2[%377, %c0_136, %c0_137] : memref<16x2x1xf32, #tpu.memory_space<vmem>>, vector<1x2x1xf32>
    %379 = vector.shape_cast %378 : vector<1x2x1xf32> to vector<2x1xf32>
    %380 = vector.extract_strided_slice %370 {offsets = [0, 0], sizes = [2, 32], strides = [1, 1]} : vector<2x128xf32> to vector<2x32xf32>
    %381 = arith.negf %380 : vector<2x32xf32>
    %382 = math.exp %381 : vector<2x32xf32>
    %cst_138 = arith.constant 1.000000e+00 : f32
    %383 = vector.broadcast %cst_138 : f32 to vector<2x32xf32>
    %384 = arith.addf %383, %382 : vector<2x32xf32>
    %385 = arith.divf %383, %384 : vector<2x32xf32>
    %386 = vector.extract_strided_slice %370 {offsets = [0, 32], sizes = [2, 32], strides = [1, 1]} : vector<2x128xf32> to vector<2x32xf32>
    %387 = arith.negf %386 : vector<2x32xf32>
    %388 = math.exp %387 : vector<2x32xf32>
    %cst_139 = arith.constant 1.000000e+00 : f32
    %389 = vector.broadcast %cst_139 : f32 to vector<2x32xf32>
    %390 = arith.addf %389, %388 : vector<2x32xf32>
    %391 = arith.divf %389, %390 : vector<2x32xf32>
    %392 = vector.extract_strided_slice %370 {offsets = [0, 64], sizes = [2, 32], strides = [1, 1]} : vector<2x128xf32> to vector<2x32xf32>
    %393 = math.tanh %392 : vector<2x32xf32>
    %394 = vector.extract_strided_slice %370 {offsets = [0, 96], sizes = [2, 32], strides = [1, 1]} : vector<2x128xf32> to vector<2x32xf32>
    %395 = arith.negf %394 : vector<2x32xf32>
    %396 = math.exp %395 : vector<2x32xf32>
    %cst_140 = arith.constant 1.000000e+00 : f32
    %397 = vector.broadcast %cst_140 : f32 to vector<2x32xf32>
    %398 = arith.addf %397, %396 : vector<2x32xf32>
    %399 = arith.divf %397, %398 : vector<2x32xf32>
    %400 = arith.mulf %391, %310 : vector<2x32xf32>
    %401 = arith.mulf %385, %393 : vector<2x32xf32>
    %402 = arith.addf %400, %401 : vector<2x32xf32>
    %403 = math.tanh %402 : vector<2x32xf32>
    %404 = arith.mulf %399, %403 : vector<2x32xf32>
    %405 = vector.broadcast %379 : vector<2x1xf32> to vector<2x32xf32>
    %406 = arith.mulf %405, %404 : vector<2x32xf32>
    %cst_141 = arith.constant 1.000000e+00 : f32
    %407 = vector.broadcast %cst_141 : f32 to vector<2x1xf32>
    %408 = arith.subf %407, %379 : vector<2x1xf32>
    %409 = vector.broadcast %408 : vector<2x1xf32> to vector<2x32xf32>
    %410 = arith.mulf %409, %303 : vector<2x32xf32>
    %411 = arith.addf %406, %410 : vector<2x32xf32>
    %412 = vector.broadcast %379 : vector<2x1xf32> to vector<2x32xf32>
    %413 = arith.mulf %412, %402 : vector<2x32xf32>
    %cst_142 = arith.constant 1.000000e+00 : f32
    %414 = vector.broadcast %cst_142 : f32 to vector<2x1xf32>
    %415 = arith.subf %414, %379 : vector<2x1xf32>
    %416 = vector.broadcast %415 : vector<2x1xf32> to vector<2x32xf32>
    %417 = arith.mulf %416, %310 : vector<2x32xf32>
    %418 = arith.addf %413, %417 : vector<2x32xf32>
    %419 = vector.broadcast %379 : vector<2x1xf32> to vector<2x32xf32>
    %420 = arith.mulf %419, %404 : vector<2x32xf32>
    %421 = arith.index_cast %c3_i32 : i32 to index
    %c0_143 = arith.constant 0 : index
    %c0_144 = arith.constant 0 : index
    %422 = vector.load %arg3[%421, %c0_143, %c0_144] : memref<16x2x1xf32, #tpu.memory_space<vmem>>, vector<1x2x1xf32>
    %423 = vector.shape_cast %422 : vector<1x2x1xf32> to vector<2x1xf32>
    %424 = vector.extract_strided_slice %376 {offsets = [0, 0], sizes = [2, 32], strides = [1, 1]} : vector<2x128xf32> to vector<2x32xf32>
    %425 = arith.negf %424 : vector<2x32xf32>
    %426 = math.exp %425 : vector<2x32xf32>
    %cst_145 = arith.constant 1.000000e+00 : f32
    %427 = vector.broadcast %cst_145 : f32 to vector<2x32xf32>
    %428 = arith.addf %427, %426 : vector<2x32xf32>
    %429 = arith.divf %427, %428 : vector<2x32xf32>
    %430 = vector.extract_strided_slice %376 {offsets = [0, 32], sizes = [2, 32], strides = [1, 1]} : vector<2x128xf32> to vector<2x32xf32>
    %431 = arith.negf %430 : vector<2x32xf32>
    %432 = math.exp %431 : vector<2x32xf32>
    %cst_146 = arith.constant 1.000000e+00 : f32
    %433 = vector.broadcast %cst_146 : f32 to vector<2x32xf32>
    %434 = arith.addf %433, %432 : vector<2x32xf32>
    %435 = arith.divf %433, %434 : vector<2x32xf32>
    %436 = vector.extract_strided_slice %376 {offsets = [0, 64], sizes = [2, 32], strides = [1, 1]} : vector<2x128xf32> to vector<2x32xf32>
    %437 = math.tanh %436 : vector<2x32xf32>
    %438 = vector.extract_strided_slice %376 {offsets = [0, 96], sizes = [2, 32], strides = [1, 1]} : vector<2x128xf32> to vector<2x32xf32>
    %439 = arith.negf %438 : vector<2x32xf32>
    %440 = math.exp %439 : vector<2x32xf32>
    %cst_147 = arith.constant 1.000000e+00 : f32
    %441 = vector.broadcast %cst_147 : f32 to vector<2x32xf32>
    %442 = arith.addf %441, %440 : vector<2x32xf32>
    %443 = arith.divf %441, %442 : vector<2x32xf32>
    %444 = arith.mulf %435, %354 : vector<2x32xf32>
    %445 = arith.mulf %429, %437 : vector<2x32xf32>
    %446 = arith.addf %444, %445 : vector<2x32xf32>
    %447 = math.tanh %446 : vector<2x32xf32>
    %448 = arith.mulf %443, %447 : vector<2x32xf32>
    %449 = vector.broadcast %423 : vector<2x1xf32> to vector<2x32xf32>
    %450 = arith.mulf %449, %448 : vector<2x32xf32>
    %cst_148 = arith.constant 1.000000e+00 : f32
    %451 = vector.broadcast %cst_148 : f32 to vector<2x1xf32>
    %452 = arith.subf %451, %423 : vector<2x1xf32>
    %453 = vector.broadcast %452 : vector<2x1xf32> to vector<2x32xf32>
    %454 = arith.mulf %453, %347 : vector<2x32xf32>
    %455 = arith.addf %450, %454 : vector<2x32xf32>
    %456 = vector.broadcast %423 : vector<2x1xf32> to vector<2x32xf32>
    %457 = arith.mulf %456, %446 : vector<2x32xf32>
    %cst_149 = arith.constant 1.000000e+00 : f32
    %458 = vector.broadcast %cst_149 : f32 to vector<2x1xf32>
    %459 = arith.subf %458, %423 : vector<2x1xf32>
    %460 = vector.broadcast %459 : vector<2x1xf32> to vector<2x32xf32>
    %461 = arith.mulf %460, %354 : vector<2x32xf32>
    %462 = arith.addf %457, %461 : vector<2x32xf32>
    %463 = vector.broadcast %423 : vector<2x1xf32> to vector<2x32xf32>
    %464 = arith.mulf %463, %448 : vector<2x32xf32>
    %465 = arith.index_cast %c3_i32 : i32 to index
    %c0_150 = arith.constant 0 : index
    %c0_151 = arith.constant 0 : index
    %466 = vector.load %arg10[%465, %c0_150, %c0_151] : memref<16x2x32xf32, #tpu.memory_space<vmem>>, vector<1x2x32xf32>
    %467 = vector.shape_cast %466 : vector<1x2x32xf32> to vector<2x32xf32>
    %468 = vector.shape_cast %420 : vector<2x32xf32> to vector<1x2x32xf32>
    tpu.vector_store %arg10[%465, %c0_150, %c0_151], %468 {strides = array<i32>} : memref<16x2x32xf32, #tpu.memory_space<vmem>>, vector<1x2x32xf32>,
    %469 = arith.index_cast %c3_i32 : i32 to index
    %c0_152 = arith.constant 0 : index
    %c0_153 = arith.constant 0 : index
    %470 = vector.load %arg11[%469, %c0_152, %c0_153] : memref<16x2x32xf32, #tpu.memory_space<vmem>>, vector<1x2x32xf32>
    %471 = vector.shape_cast %470 : vector<1x2x32xf32> to vector<2x32xf32>
    %472 = vector.shape_cast %464 : vector<2x32xf32> to vector<1x2x32xf32>
    tpu.vector_store %arg11[%469, %c0_152, %c0_153], %472 {strides = array<i32>} : memref<16x2x32xf32, #tpu.memory_space<vmem>>, vector<1x2x32xf32>,
    %c4_i32 = arith.constant 4 : i32
    %473 = arith.index_cast %c4_i32 : i32 to index
    %c0_154 = arith.constant 0 : index
    %c0_155 = arith.constant 0 : index
    %474 = vector.load %arg14[%473, %c0_154, %c0_155] : memref<16x2x128xf32, #tpu.memory_space<vmem>>, vector<1x2x128xf32>
    %475 = vector.shape_cast %474 : vector<1x2x128xf32> to vector<2x128xf32>
    %c0_156 = arith.constant 0 : index
    %c0_157 = arith.constant 0 : index
    %476 = vector.load %arg6[%c0_156, %c0_157] : memref<32x128xf32, #tpu.memory_space<vmem>>, vector<32x128xf32>
    %cst_158 = arith.constant dense<0.000000e+00> : vector<2x128xf32>
    %477 = tpu.matmul %411, %476, %cst_158 {dimension_numbers = #tpu.dot_dimension_numbers<[1], [0], [0], [1], [0, 0, 1, 1], [], []>} : vector<2x32xf32>, vector<32x128xf32>, vector<2x128xf32> -> vector<2x128xf32>
    %478 = arith.addf %475, %477 : vector<2x128xf32>
    %479 = arith.index_cast %c4_i32 : i32 to index
    %c0_159 = arith.constant 0 : index
    %c0_160 = arith.constant 0 : index
    %480 = vector.load %arg15[%479, %c0_159, %c0_160] : memref<16x2x128xf32, #tpu.memory_space<vmem>>, vector<1x2x128xf32>
    %481 = vector.shape_cast %480 : vector<1x2x128xf32> to vector<2x128xf32>
    %c0_161 = arith.constant 0 : index
    %c0_162 = arith.constant 0 : index
    %482 = vector.load %arg7[%c0_161, %c0_162] : memref<32x128xf32, #tpu.memory_space<vmem>>, vector<32x128xf32>
    %cst_163 = arith.constant dense<0.000000e+00> : vector<2x128xf32>
    %483 = tpu.matmul %455, %482, %cst_163 {dimension_numbers = #tpu.dot_dimension_numbers<[1], [0], [0], [1], [0, 0, 1, 1], [], []>} : vector<2x32xf32>, vector<32x128xf32>, vector<2x128xf32> -> vector<2x128xf32>
    %484 = arith.addf %481, %483 : vector<2x128xf32>
    %485 = arith.index_cast %c4_i32 : i32 to index
    %c0_164 = arith.constant 0 : index
    %c0_165 = arith.constant 0 : index
    %486 = vector.load %arg2[%485, %c0_164, %c0_165] : memref<16x2x1xf32, #tpu.memory_space<vmem>>, vector<1x2x1xf32>
    %487 = vector.shape_cast %486 : vector<1x2x1xf32> to vector<2x1xf32>
    %488 = vector.extract_strided_slice %478 {offsets = [0, 0], sizes = [2, 32], strides = [1, 1]} : vector<2x128xf32> to vector<2x32xf32>
    %489 = arith.negf %488 : vector<2x32xf32>
    %490 = math.exp %489 : vector<2x32xf32>
    %cst_166 = arith.constant 1.000000e+00 : f32
    %491 = vector.broadcast %cst_166 : f32 to vector<2x32xf32>
    %492 = arith.addf %491, %490 : vector<2x32xf32>
    %493 = arith.divf %491, %492 : vector<2x32xf32>
    %494 = vector.extract_strided_slice %478 {offsets = [0, 32], sizes = [2, 32], strides = [1, 1]} : vector<2x128xf32> to vector<2x32xf32>
    %495 = arith.negf %494 : vector<2x32xf32>
    %496 = math.exp %495 : vector<2x32xf32>
    %cst_167 = arith.constant 1.000000e+00 : f32
    %497 = vector.broadcast %cst_167 : f32 to vector<2x32xf32>
    %498 = arith.addf %497, %496 : vector<2x32xf32>
    %499 = arith.divf %497, %498 : vector<2x32xf32>
    %500 = vector.extract_strided_slice %478 {offsets = [0, 64], sizes = [2, 32], strides = [1, 1]} : vector<2x128xf32> to vector<2x32xf32>
    %501 = math.tanh %500 : vector<2x32xf32>
    %502 = vector.extract_strided_slice %478 {offsets = [0, 96], sizes = [2, 32], strides = [1, 1]} : vector<2x128xf32> to vector<2x32xf32>
    %503 = arith.negf %502 : vector<2x32xf32>
    %504 = math.exp %503 : vector<2x32xf32>
    %cst_168 = arith.constant 1.000000e+00 : f32
    %505 = vector.broadcast %cst_168 : f32 to vector<2x32xf32>
    %506 = arith.addf %505, %504 : vector<2x32xf32>
    %507 = arith.divf %505, %506 : vector<2x32xf32>
    %508 = arith.mulf %499, %418 : vector<2x32xf32>
    %509 = arith.mulf %493, %501 : vector<2x32xf32>
    %510 = arith.addf %508, %509 : vector<2x32xf32>
    %511 = math.tanh %510 : vector<2x32xf32>
    %512 = arith.mulf %507, %511 : vector<2x32xf32>
    %513 = vector.broadcast %487 : vector<2x1xf32> to vector<2x32xf32>
    %514 = arith.mulf %513, %512 : vector<2x32xf32>
    %cst_169 = arith.constant 1.000000e+00 : f32
    %515 = vector.broadcast %cst_169 : f32 to vector<2x1xf32>
    %516 = arith.subf %515, %487 : vector<2x1xf32>
    %517 = vector.broadcast %516 : vector<2x1xf32> to vector<2x32xf32>
    %518 = arith.mulf %517, %411 : vector<2x32xf32>
    %519 = arith.addf %514, %518 : vector<2x32xf32>
    %520 = vector.broadcast %487 : vector<2x1xf32> to vector<2x32xf32>
    %521 = arith.mulf %520, %510 : vector<2x32xf32>
    %cst_170 = arith.constant 1.000000e+00 : f32
    %522 = vector.broadcast %cst_170 : f32 to vector<2x1xf32>
    %523 = arith.subf %522, %487 : vector<2x1xf32>
    %524 = vector.broadcast %523 : vector<2x1xf32> to vector<2x32xf32>
    %525 = arith.mulf %524, %418 : vector<2x32xf32>
    %526 = arith.addf %521, %525 : vector<2x32xf32>
    %527 = vector.broadcast %487 : vector<2x1xf32> to vector<2x32xf32>
    %528 = arith.mulf %527, %512 : vector<2x32xf32>
    %529 = arith.index_cast %c4_i32 : i32 to index
    %c0_171 = arith.constant 0 : index
    %c0_172 = arith.constant 0 : index
    %530 = vector.load %arg3[%529, %c0_171, %c0_172] : memref<16x2x1xf32, #tpu.memory_space<vmem>>, vector<1x2x1xf32>
    %531 = vector.shape_cast %530 : vector<1x2x1xf32> to vector<2x1xf32>
    %532 = vector.extract_strided_slice %484 {offsets = [0, 0], sizes = [2, 32], strides = [1, 1]} : vector<2x128xf32> to vector<2x32xf32>
    %533 = arith.negf %532 : vector<2x32xf32>
    %534 = math.exp %533 : vector<2x32xf32>
    %cst_173 = arith.constant 1.000000e+00 : f32
    %535 = vector.broadcast %cst_173 : f32 to vector<2x32xf32>
    %536 = arith.addf %535, %534 : vector<2x32xf32>
    %537 = arith.divf %535, %536 : vector<2x32xf32>
    %538 = vector.extract_strided_slice %484 {offsets = [0, 32], sizes = [2, 32], strides = [1, 1]} : vector<2x128xf32> to vector<2x32xf32>
    %539 = arith.negf %538 : vector<2x32xf32>
    %540 = math.exp %539 : vector<2x32xf32>
    %cst_174 = arith.constant 1.000000e+00 : f32
    %541 = vector.broadcast %cst_174 : f32 to vector<2x32xf32>
    %542 = arith.addf %541, %540 : vector<2x32xf32>
    %543 = arith.divf %541, %542 : vector<2x32xf32>
    %544 = vector.extract_strided_slice %484 {offsets = [0, 64], sizes = [2, 32], strides = [1, 1]} : vector<2x128xf32> to vector<2x32xf32>
    %545 = math.tanh %544 : vector<2x32xf32>
    %546 = vector.extract_strided_slice %484 {offsets = [0, 96], sizes = [2, 32], strides = [1, 1]} : vector<2x128xf32> to vector<2x32xf32>
    %547 = arith.negf %546 : vector<2x32xf32>
    %548 = math.exp %547 : vector<2x32xf32>
    %cst_175 = arith.constant 1.000000e+00 : f32
    %549 = vector.broadcast %cst_175 : f32 to vector<2x32xf32>
    %550 = arith.addf %549, %548 : vector<2x32xf32>
    %551 = arith.divf %549, %550 : vector<2x32xf32>
    %552 = arith.mulf %543, %462 : vector<2x32xf32>
    %553 = arith.mulf %537, %545 : vector<2x32xf32>
    %554 = arith.addf %552, %553 : vector<2x32xf32>
    %555 = math.tanh %554 : vector<2x32xf32>
    %556 = arith.mulf %551, %555 : vector<2x32xf32>
    %557 = vector.broadcast %531 : vector<2x1xf32> to vector<2x32xf32>
    %558 = arith.mulf %557, %556 : vector<2x32xf32>
    %cst_176 = arith.constant 1.000000e+00 : f32
    %559 = vector.broadcast %cst_176 : f32 to vector<2x1xf32>
    %560 = arith.subf %559, %531 : vector<2x1xf32>
    %561 = vector.broadcast %560 : vector<2x1xf32> to vector<2x32xf32>
    %562 = arith.mulf %561, %455 : vector<2x32xf32>
    %563 = arith.addf %558, %562 : vector<2x32xf32>
    %564 = vector.broadcast %531 : vector<2x1xf32> to vector<2x32xf32>
    %565 = arith.mulf %564, %554 : vector<2x32xf32>
    %cst_177 = arith.constant 1.000000e+00 : f32
    %566 = vector.broadcast %cst_177 : f32 to vector<2x1xf32>
    %567 = arith.subf %566, %531 : vector<2x1xf32>
    %568 = vector.broadcast %567 : vector<2x1xf32> to vector<2x32xf32>
    %569 = arith.mulf %568, %462 : vector<2x32xf32>
    %570 = arith.addf %565, %569 : vector<2x32xf32>
    %571 = vector.broadcast %531 : vector<2x1xf32> to vector<2x32xf32>
    %572 = arith.mulf %571, %556 : vector<2x32xf32>
    %573 = arith.index_cast %c4_i32 : i32 to index
    %c0_178 = arith.constant 0 : index
    %c0_179 = arith.constant 0 : index
    %574 = vector.load %arg10[%573, %c0_178, %c0_179] : memref<16x2x32xf32, #tpu.memory_space<vmem>>, vector<1x2x32xf32>
    %575 = vector.shape_cast %574 : vector<1x2x32xf32> to vector<2x32xf32>
    %576 = vector.shape_cast %528 : vector<2x32xf32> to vector<1x2x32xf32>
    tpu.vector_store %arg10[%573, %c0_178, %c0_179], %576 {strides = array<i32>} : memref<16x2x32xf32, #tpu.memory_space<vmem>>, vector<1x2x32xf32>,
    %577 = arith.index_cast %c4_i32 : i32 to index
    %c0_180 = arith.constant 0 : index
    %c0_181 = arith.constant 0 : index
    %578 = vector.load %arg11[%577, %c0_180, %c0_181] : memref<16x2x32xf32, #tpu.memory_space<vmem>>, vector<1x2x32xf32>
    %579 = vector.shape_cast %578 : vector<1x2x32xf32> to vector<2x32xf32>
    %580 = vector.shape_cast %572 : vector<2x32xf32> to vector<1x2x32xf32>
    tpu.vector_store %arg11[%577, %c0_180, %c0_181], %580 {strides = array<i32>} : memref<16x2x32xf32, #tpu.memory_space<vmem>>, vector<1x2x32xf32>,
    %c5_i32 = arith.constant 5 : i32
    %581 = arith.index_cast %c5_i32 : i32 to index
    %c0_182 = arith.constant 0 : index
    %c0_183 = arith.constant 0 : index
    %582 = vector.load %arg14[%581, %c0_182, %c0_183] : memref<16x2x128xf32, #tpu.memory_space<vmem>>, vector<1x2x128xf32>
    %583 = vector.shape_cast %582 : vector<1x2x128xf32> to vector<2x128xf32>
    %c0_184 = arith.constant 0 : index
    %c0_185 = arith.constant 0 : index
    %584 = vector.load %arg6[%c0_184, %c0_185] : memref<32x128xf32, #tpu.memory_space<vmem>>, vector<32x128xf32>
    %cst_186 = arith.constant dense<0.000000e+00> : vector<2x128xf32>
    %585 = tpu.matmul %519, %584, %cst_186 {dimension_numbers = #tpu.dot_dimension_numbers<[1], [0], [0], [1], [0, 0, 1, 1], [], []>} : vector<2x32xf32>, vector<32x128xf32>, vector<2x128xf32> -> vector<2x128xf32>
    %586 = arith.addf %583, %585 : vector<2x128xf32>
    %587 = arith.index_cast %c5_i32 : i32 to index
    %c0_187 = arith.constant 0 : index
    %c0_188 = arith.constant 0 : index
    %588 = vector.load %arg15[%587, %c0_187, %c0_188] : memref<16x2x128xf32, #tpu.memory_space<vmem>>, vector<1x2x128xf32>
    %589 = vector.shape_cast %588 : vector<1x2x128xf32> to vector<2x128xf32>
    %c0_189 = arith.constant 0 : index
    %c0_190 = arith.constant 0 : index
    %590 = vector.load %arg7[%c0_189, %c0_190] : memref<32x128xf32, #tpu.memory_space<vmem>>, vector<32x128xf32>
    %cst_191 = arith.constant dense<0.000000e+00> : vector<2x128xf32>
    %591 = tpu.matmul %563, %590, %cst_191 {dimension_numbers = #tpu.dot_dimension_numbers<[1], [0], [0], [1], [0, 0, 1, 1], [], []>} : vector<2x32xf32>, vector<32x128xf32>, vector<2x128xf32> -> vector<2x128xf32>
    %592 = arith.addf %589, %591 : vector<2x128xf32>
    %593 = arith.index_cast %c5_i32 : i32 to index
    %c0_192 = arith.constant 0 : index
    %c0_193 = arith.constant 0 : index
    %594 = vector.load %arg2[%593, %c0_192, %c0_193] : memref<16x2x1xf32, #tpu.memory_space<vmem>>, vector<1x2x1xf32>
    %595 = vector.shape_cast %594 : vector<1x2x1xf32> to vector<2x1xf32>
    %596 = vector.extract_strided_slice %586 {offsets = [0, 0], sizes = [2, 32], strides = [1, 1]} : vector<2x128xf32> to vector<2x32xf32>
    %597 = arith.negf %596 : vector<2x32xf32>
    %598 = math.exp %597 : vector<2x32xf32>
    %cst_194 = arith.constant 1.000000e+00 : f32
    %599 = vector.broadcast %cst_194 : f32 to vector<2x32xf32>
    %600 = arith.addf %599, %598 : vector<2x32xf32>
    %601 = arith.divf %599, %600 : vector<2x32xf32>
    %602 = vector.extract_strided_slice %586 {offsets = [0, 32], sizes = [2, 32], strides = [1, 1]} : vector<2x128xf32> to vector<2x32xf32>
    %603 = arith.negf %602 : vector<2x32xf32>
    %604 = math.exp %603 : vector<2x32xf32>
    %cst_195 = arith.constant 1.000000e+00 : f32
    %605 = vector.broadcast %cst_195 : f32 to vector<2x32xf32>
    %606 = arith.addf %605, %604 : vector<2x32xf32>
    %607 = arith.divf %605, %606 : vector<2x32xf32>
    %608 = vector.extract_strided_slice %586 {offsets = [0, 64], sizes = [2, 32], strides = [1, 1]} : vector<2x128xf32> to vector<2x32xf32>
    %609 = math.tanh %608 : vector<2x32xf32>
    %610 = vector.extract_strided_slice %586 {offsets = [0, 96], sizes = [2, 32], strides = [1, 1]} : vector<2x128xf32> to vector<2x32xf32>
    %611 = arith.negf %610 : vector<2x32xf32>
    %612 = math.exp %611 : vector<2x32xf32>
    %cst_196 = arith.constant 1.000000e+00 : f32
    %613 = vector.broadcast %cst_196 : f32 to vector<2x32xf32>
    %614 = arith.addf %613, %612 : vector<2x32xf32>
    %615 = arith.divf %613, %614 : vector<2x32xf32>
    %616 = arith.mulf %607, %526 : vector<2x32xf32>
    %617 = arith.mulf %601, %609 : vector<2x32xf32>
    %618 = arith.addf %616, %617 : vector<2x32xf32>
    %619 = math.tanh %618 : vector<2x32xf32>
    %620 = arith.mulf %615, %619 : vector<2x32xf32>
    %621 = vector.broadcast %595 : vector<2x1xf32> to vector<2x32xf32>
    %622 = arith.mulf %621, %620 : vector<2x32xf32>
    %cst_197 = arith.constant 1.000000e+00 : f32
    %623 = vector.broadcast %cst_197 : f32 to vector<2x1xf32>
    %624 = arith.subf %623, %595 : vector<2x1xf32>
    %625 = vector.broadcast %624 : vector<2x1xf32> to vector<2x32xf32>
    %626 = arith.mulf %625, %519 : vector<2x32xf32>
    %627 = arith.addf %622, %626 : vector<2x32xf32>
    %628 = vector.broadcast %595 : vector<2x1xf32> to vector<2x32xf32>
    %629 = arith.mulf %628, %618 : vector<2x32xf32>
    %cst_198 = arith.constant 1.000000e+00 : f32
    %630 = vector.broadcast %cst_198 : f32 to vector<2x1xf32>
    %631 = arith.subf %630, %595 : vector<2x1xf32>
    %632 = vector.broadcast %631 : vector<2x1xf32> to vector<2x32xf32>
    %633 = arith.mulf %632, %526 : vector<2x32xf32>
    %634 = arith.addf %629, %633 : vector<2x32xf32>
    %635 = vector.broadcast %595 : vector<2x1xf32> to vector<2x32xf32>
    %636 = arith.mulf %635, %620 : vector<2x32xf32>
    %637 = arith.index_cast %c5_i32 : i32 to index
    %c0_199 = arith.constant 0 : index
    %c0_200 = arith.constant 0 : index
    %638 = vector.load %arg3[%637, %c0_199, %c0_200] : memref<16x2x1xf32, #tpu.memory_space<vmem>>, vector<1x2x1xf32>
    %639 = vector.shape_cast %638 : vector<1x2x1xf32> to vector<2x1xf32>
    %640 = vector.extract_strided_slice %592 {offsets = [0, 0], sizes = [2, 32], strides = [1, 1]} : vector<2x128xf32> to vector<2x32xf32>
    %641 = arith.negf %640 : vector<2x32xf32>
    %642 = math.exp %641 : vector<2x32xf32>
    %cst_201 = arith.constant 1.000000e+00 : f32
    %643 = vector.broadcast %cst_201 : f32 to vector<2x32xf32>
    %644 = arith.addf %643, %642 : vector<2x32xf32>
    %645 = arith.divf %643, %644 : vector<2x32xf32>
    %646 = vector.extract_strided_slice %592 {offsets = [0, 32], sizes = [2, 32], strides = [1, 1]} : vector<2x128xf32> to vector<2x32xf32>
    %647 = arith.negf %646 : vector<2x32xf32>
    %648 = math.exp %647 : vector<2x32xf32>
    %cst_202 = arith.constant 1.000000e+00 : f32
    %649 = vector.broadcast %cst_202 : f32 to vector<2x32xf32>
    %650 = arith.addf %649, %648 : vector<2x32xf32>
    %651 = arith.divf %649, %650 : vector<2x32xf32>
    %652 = vector.extract_strided_slice %592 {offsets = [0, 64], sizes = [2, 32], strides = [1, 1]} : vector<2x128xf32> to vector<2x32xf32>
    %653 = math.tanh %652 : vector<2x32xf32>
    %654 = vector.extract_strided_slice %592 {offsets = [0, 96], sizes = [2, 32], strides = [1, 1]} : vector<2x128xf32> to vector<2x32xf32>
    %655 = arith.negf %654 : vector<2x32xf32>
    %656 = math.exp %655 : vector<2x32xf32>
    %cst_203 = arith.constant 1.000000e+00 : f32
    %657 = vector.broadcast %cst_203 : f32 to vector<2x32xf32>
    %658 = arith.addf %657, %656 : vector<2x32xf32>
    %659 = arith.divf %657, %658 : vector<2x32xf32>
    %660 = arith.mulf %651, %570 : vector<2x32xf32>
    %661 = arith.mulf %645, %653 : vector<2x32xf32>
    %662 = arith.addf %660, %661 : vector<2x32xf32>
    %663 = math.tanh %662 : vector<2x32xf32>
    %664 = arith.mulf %659, %663 : vector<2x32xf32>
    %665 = vector.broadcast %639 : vector<2x1xf32> to vector<2x32xf32>
    %666 = arith.mulf %665, %664 : vector<2x32xf32>
    %cst_204 = arith.constant 1.000000e+00 : f32
    %667 = vector.broadcast %cst_204 : f32 to vector<2x1xf32>
    %668 = arith.subf %667, %639 : vector<2x1xf32>
    %669 = vector.broadcast %668 : vector<2x1xf32> to vector<2x32xf32>
    %670 = arith.mulf %669, %563 : vector<2x32xf32>
    %671 = arith.addf %666, %670 : vector<2x32xf32>
    %672 = vector.broadcast %639 : vector<2x1xf32> to vector<2x32xf32>
    %673 = arith.mulf %672, %662 : vector<2x32xf32>
    %cst_205 = arith.constant 1.000000e+00 : f32
    %674 = vector.broadcast %cst_205 : f32 to vector<2x1xf32>
    %675 = arith.subf %674, %639 : vector<2x1xf32>
    %676 = vector.broadcast %675 : vector<2x1xf32> to vector<2x32xf32>
    %677 = arith.mulf %676, %570 : vector<2x32xf32>
    %678 = arith.addf %673, %677 : vector<2x32xf32>
    %679 = vector.broadcast %639 : vector<2x1xf32> to vector<2x32xf32>
    %680 = arith.mulf %679, %664 : vector<2x32xf32>
    %681 = arith.index_cast %c5_i32 : i32 to index
    %c0_206 = arith.constant 0 : index
    %c0_207 = arith.constant 0 : index
    %682 = vector.load %arg10[%681, %c0_206, %c0_207] : memref<16x2x32xf32, #tpu.memory_space<vmem>>, vector<1x2x32xf32>
    %683 = vector.shape_cast %682 : vector<1x2x32xf32> to vector<2x32xf32>
    %684 = vector.shape_cast %636 : vector<2x32xf32> to vector<1x2x32xf32>
    tpu.vector_store %arg10[%681, %c0_206, %c0_207], %684 {strides = array<i32>} : memref<16x2x32xf32, #tpu.memory_space<vmem>>, vector<1x2x32xf32>,
    %685 = arith.index_cast %c5_i32 : i32 to index
    %c0_208 = arith.constant 0 : index
    %c0_209 = arith.constant 0 : index
    %686 = vector.load %arg11[%685, %c0_208, %c0_209] : memref<16x2x32xf32, #tpu.memory_space<vmem>>, vector<1x2x32xf32>
    %687 = vector.shape_cast %686 : vector<1x2x32xf32> to vector<2x32xf32>
    %688 = vector.shape_cast %680 : vector<2x32xf32> to vector<1x2x32xf32>
    tpu.vector_store %arg11[%685, %c0_208, %c0_209], %688 {strides = array<i32>} : memref<16x2x32xf32, #tpu.memory_space<vmem>>, vector<1x2x32xf32>,
    %c6_i32 = arith.constant 6 : i32
    %689 = arith.index_cast %c6_i32 : i32 to index
    %c0_210 = arith.constant 0 : index
    %c0_211 = arith.constant 0 : index
    %690 = vector.load %arg14[%689, %c0_210, %c0_211] : memref<16x2x128xf32, #tpu.memory_space<vmem>>, vector<1x2x128xf32>
    %691 = vector.shape_cast %690 : vector<1x2x128xf32> to vector<2x128xf32>
    %c0_212 = arith.constant 0 : index
    %c0_213 = arith.constant 0 : index
    %692 = vector.load %arg6[%c0_212, %c0_213] : memref<32x128xf32, #tpu.memory_space<vmem>>, vector<32x128xf32>
    %cst_214 = arith.constant dense<0.000000e+00> : vector<2x128xf32>
    %693 = tpu.matmul %627, %692, %cst_214 {dimension_numbers = #tpu.dot_dimension_numbers<[1], [0], [0], [1], [0, 0, 1, 1], [], []>} : vector<2x32xf32>, vector<32x128xf32>, vector<2x128xf32> -> vector<2x128xf32>
    %694 = arith.addf %691, %693 : vector<2x128xf32>
    %695 = arith.index_cast %c6_i32 : i32 to index
    %c0_215 = arith.constant 0 : index
    %c0_216 = arith.constant 0 : index
    %696 = vector.load %arg15[%695, %c0_215, %c0_216] : memref<16x2x128xf32, #tpu.memory_space<vmem>>, vector<1x2x128xf32>
    %697 = vector.shape_cast %696 : vector<1x2x128xf32> to vector<2x128xf32>
    %c0_217 = arith.constant 0 : index
    %c0_218 = arith.constant 0 : index
    %698 = vector.load %arg7[%c0_217, %c0_218] : memref<32x128xf32, #tpu.memory_space<vmem>>, vector<32x128xf32>
    %cst_219 = arith.constant dense<0.000000e+00> : vector<2x128xf32>
    %699 = tpu.matmul %671, %698, %cst_219 {dimension_numbers = #tpu.dot_dimension_numbers<[1], [0], [0], [1], [0, 0, 1, 1], [], []>} : vector<2x32xf32>, vector<32x128xf32>, vector<2x128xf32> -> vector<2x128xf32>
    %700 = arith.addf %697, %699 : vector<2x128xf32>
    %701 = arith.index_cast %c6_i32 : i32 to index
    %c0_220 = arith.constant 0 : index
    %c0_221 = arith.constant 0 : index
    %702 = vector.load %arg2[%701, %c0_220, %c0_221] : memref<16x2x1xf32, #tpu.memory_space<vmem>>, vector<1x2x1xf32>
    %703 = vector.shape_cast %702 : vector<1x2x1xf32> to vector<2x1xf32>
    %704 = vector.extract_strided_slice %694 {offsets = [0, 0], sizes = [2, 32], strides = [1, 1]} : vector<2x128xf32> to vector<2x32xf32>
    %705 = arith.negf %704 : vector<2x32xf32>
    %706 = math.exp %705 : vector<2x32xf32>
    %cst_222 = arith.constant 1.000000e+00 : f32
    %707 = vector.broadcast %cst_222 : f32 to vector<2x32xf32>
    %708 = arith.addf %707, %706 : vector<2x32xf32>
    %709 = arith.divf %707, %708 : vector<2x32xf32>
    %710 = vector.extract_strided_slice %694 {offsets = [0, 32], sizes = [2, 32], strides = [1, 1]} : vector<2x128xf32> to vector<2x32xf32>
    %711 = arith.negf %710 : vector<2x32xf32>
    %712 = math.exp %711 : vector<2x32xf32>
    %cst_223 = arith.constant 1.000000e+00 : f32
    %713 = vector.broadcast %cst_223 : f32 to vector<2x32xf32>
    %714 = arith.addf %713, %712 : vector<2x32xf32>
    %715 = arith.divf %713, %714 : vector<2x32xf32>
    %716 = vector.extract_strided_slice %694 {offsets = [0, 64], sizes = [2, 32], strides = [1, 1]} : vector<2x128xf32> to vector<2x32xf32>
    %717 = math.tanh %716 : vector<2x32xf32>
    %718 = vector.extract_strided_slice %694 {offsets = [0, 96], sizes = [2, 32], strides = [1, 1]} : vector<2x128xf32> to vector<2x32xf32>
    %719 = arith.negf %718 : vector<2x32xf32>
    %720 = math.exp %719 : vector<2x32xf32>
    %cst_224 = arith.constant 1.000000e+00 : f32
    %721 = vector.broadcast %cst_224 : f32 to vector<2x32xf32>
    %722 = arith.addf %721, %720 : vector<2x32xf32>
    %723 = arith.divf %721, %722 : vector<2x32xf32>
    %724 = arith.mulf %715, %634 : vector<2x32xf32>
    %725 = arith.mulf %709, %717 : vector<2x32xf32>
    %726 = arith.addf %724, %725 : vector<2x32xf32>
    %727 = math.tanh %726 : vector<2x32xf32>
    %728 = arith.mulf %723, %727 : vector<2x32xf32>
    %729 = vector.broadcast %703 : vector<2x1xf32> to vector<2x32xf32>
    %730 = arith.mulf %729, %728 : vector<2x32xf32>
    %cst_225 = arith.constant 1.000000e+00 : f32
    %731 = vector.broadcast %cst_225 : f32 to vector<2x1xf32>
    %732 = arith.subf %731, %703 : vector<2x1xf32>
    %733 = vector.broadcast %732 : vector<2x1xf32> to vector<2x32xf32>
    %734 = arith.mulf %733, %627 : vector<2x32xf32>
    %735 = arith.addf %730, %734 : vector<2x32xf32>
    %736 = vector.broadcast %703 : vector<2x1xf32> to vector<2x32xf32>
    %737 = arith.mulf %736, %726 : vector<2x32xf32>
    %cst_226 = arith.constant 1.000000e+00 : f32
    %738 = vector.broadcast %cst_226 : f32 to vector<2x1xf32>
    %739 = arith.subf %738, %703 : vector<2x1xf32>
    %740 = vector.broadcast %739 : vector<2x1xf32> to vector<2x32xf32>
    %741 = arith.mulf %740, %634 : vector<2x32xf32>
    %742 = arith.addf %737, %741 : vector<2x32xf32>
    %743 = vector.broadcast %703 : vector<2x1xf32> to vector<2x32xf32>
    %744 = arith.mulf %743, %728 : vector<2x32xf32>
    %745 = arith.index_cast %c6_i32 : i32 to index
    %c0_227 = arith.constant 0 : index
    %c0_228 = arith.constant 0 : index
    %746 = vector.load %arg3[%745, %c0_227, %c0_228] : memref<16x2x1xf32, #tpu.memory_space<vmem>>, vector<1x2x1xf32>
    %747 = vector.shape_cast %746 : vector<1x2x1xf32> to vector<2x1xf32>
    %748 = vector.extract_strided_slice %700 {offsets = [0, 0], sizes = [2, 32], strides = [1, 1]} : vector<2x128xf32> to vector<2x32xf32>
    %749 = arith.negf %748 : vector<2x32xf32>
    %750 = math.exp %749 : vector<2x32xf32>
    %cst_229 = arith.constant 1.000000e+00 : f32
    %751 = vector.broadcast %cst_229 : f32 to vector<2x32xf32>
    %752 = arith.addf %751, %750 : vector<2x32xf32>
    %753 = arith.divf %751, %752 : vector<2x32xf32>
    %754 = vector.extract_strided_slice %700 {offsets = [0, 32], sizes = [2, 32], strides = [1, 1]} : vector<2x128xf32> to vector<2x32xf32>
    %755 = arith.negf %754 : vector<2x32xf32>
    %756 = math.exp %755 : vector<2x32xf32>
    %cst_230 = arith.constant 1.000000e+00 : f32
    %757 = vector.broadcast %cst_230 : f32 to vector<2x32xf32>
    %758 = arith.addf %757, %756 : vector<2x32xf32>
    %759 = arith.divf %757, %758 : vector<2x32xf32>
    %760 = vector.extract_strided_slice %700 {offsets = [0, 64], sizes = [2, 32], strides = [1, 1]} : vector<2x128xf32> to vector<2x32xf32>
    %761 = math.tanh %760 : vector<2x32xf32>
    %762 = vector.extract_strided_slice %700 {offsets = [0, 96], sizes = [2, 32], strides = [1, 1]} : vector<2x128xf32> to vector<2x32xf32>
    %763 = arith.negf %762 : vector<2x32xf32>
    %764 = math.exp %763 : vector<2x32xf32>
    %cst_231 = arith.constant 1.000000e+00 : f32
    %765 = vector.broadcast %cst_231 : f32 to vector<2x32xf32>
    %766 = arith.addf %765, %764 : vector<2x32xf32>
    %767 = arith.divf %765, %766 : vector<2x32xf32>
    %768 = arith.mulf %759, %678 : vector<2x32xf32>
    %769 = arith.mulf %753, %761 : vector<2x32xf32>
    %770 = arith.addf %768, %769 : vector<2x32xf32>
    %771 = math.tanh %770 : vector<2x32xf32>
    %772 = arith.mulf %767, %771 : vector<2x32xf32>
    %773 = vector.broadcast %747 : vector<2x1xf32> to vector<2x32xf32>
    %774 = arith.mulf %773, %772 : vector<2x32xf32>
    %cst_232 = arith.constant 1.000000e+00 : f32
    %775 = vector.broadcast %cst_232 : f32 to vector<2x1xf32>
    %776 = arith.subf %775, %747 : vector<2x1xf32>
    %777 = vector.broadcast %776 : vector<2x1xf32> to vector<2x32xf32>
    %778 = arith.mulf %777, %671 : vector<2x32xf32>
    %779 = arith.addf %774, %778 : vector<2x32xf32>
    %780 = vector.broadcast %747 : vector<2x1xf32> to vector<2x32xf32>
    %781 = arith.mulf %780, %770 : vector<2x32xf32>
    %cst_233 = arith.constant 1.000000e+00 : f32
    %782 = vector.broadcast %cst_233 : f32 to vector<2x1xf32>
    %783 = arith.subf %782, %747 : vector<2x1xf32>
    %784 = vector.broadcast %783 : vector<2x1xf32> to vector<2x32xf32>
    %785 = arith.mulf %784, %678 : vector<2x32xf32>
    %786 = arith.addf %781, %785 : vector<2x32xf32>
    %787 = vector.broadcast %747 : vector<2x1xf32> to vector<2x32xf32>
    %788 = arith.mulf %787, %772 : vector<2x32xf32>
    %789 = arith.index_cast %c6_i32 : i32 to index
    %c0_234 = arith.constant 0 : index
    %c0_235 = arith.constant 0 : index
    %790 = vector.load %arg10[%789, %c0_234, %c0_235] : memref<16x2x32xf32, #tpu.memory_space<vmem>>, vector<1x2x32xf32>
    %791 = vector.shape_cast %790 : vector<1x2x32xf32> to vector<2x32xf32>
    %792 = vector.shape_cast %744 : vector<2x32xf32> to vector<1x2x32xf32>
    tpu.vector_store %arg10[%789, %c0_234, %c0_235], %792 {strides = array<i32>} : memref<16x2x32xf32, #tpu.memory_space<vmem>>, vector<1x2x32xf32>,
    %793 = arith.index_cast %c6_i32 : i32 to index
    %c0_236 = arith.constant 0 : index
    %c0_237 = arith.constant 0 : index
    %794 = vector.load %arg11[%793, %c0_236, %c0_237] : memref<16x2x32xf32, #tpu.memory_space<vmem>>, vector<1x2x32xf32>
    %795 = vector.shape_cast %794 : vector<1x2x32xf32> to vector<2x32xf32>
    %796 = vector.shape_cast %788 : vector<2x32xf32> to vector<1x2x32xf32>
    tpu.vector_store %arg11[%793, %c0_236, %c0_237], %796 {strides = array<i32>} : memref<16x2x32xf32, #tpu.memory_space<vmem>>, vector<1x2x32xf32>,
    %c7_i32 = arith.constant 7 : i32
    %797 = arith.index_cast %c7_i32 : i32 to index
    %c0_238 = arith.constant 0 : index
    %c0_239 = arith.constant 0 : index
    %798 = vector.load %arg14[%797, %c0_238, %c0_239] : memref<16x2x128xf32, #tpu.memory_space<vmem>>, vector<1x2x128xf32>
    %799 = vector.shape_cast %798 : vector<1x2x128xf32> to vector<2x128xf32>
    %c0_240 = arith.constant 0 : index
    %c0_241 = arith.constant 0 : index
    %800 = vector.load %arg6[%c0_240, %c0_241] : memref<32x128xf32, #tpu.memory_space<vmem>>, vector<32x128xf32>
    %cst_242 = arith.constant dense<0.000000e+00> : vector<2x128xf32>
    %801 = tpu.matmul %735, %800, %cst_242 {dimension_numbers = #tpu.dot_dimension_numbers<[1], [0], [0], [1], [0, 0, 1, 1], [], []>} : vector<2x32xf32>, vector<32x128xf32>, vector<2x128xf32> -> vector<2x128xf32>
    %802 = arith.addf %799, %801 : vector<2x128xf32>
    %803 = arith.index_cast %c7_i32 : i32 to index
    %c0_243 = arith.constant 0 : index
    %c0_244 = arith.constant 0 : index
    %804 = vector.load %arg15[%803, %c0_243, %c0_244] : memref<16x2x128xf32, #tpu.memory_space<vmem>>, vector<1x2x128xf32>
    %805 = vector.shape_cast %804 : vector<1x2x128xf32> to vector<2x128xf32>
    %c0_245 = arith.constant 0 : index
    %c0_246 = arith.constant 0 : index
    %806 = vector.load %arg7[%c0_245, %c0_246] : memref<32x128xf32, #tpu.memory_space<vmem>>, vector<32x128xf32>
    %cst_247 = arith.constant dense<0.000000e+00> : vector<2x128xf32>
    %807 = tpu.matmul %779, %806, %cst_247 {dimension_numbers = #tpu.dot_dimension_numbers<[1], [0], [0], [1], [0, 0, 1, 1], [], []>} : vector<2x32xf32>, vector<32x128xf32>, vector<2x128xf32> -> vector<2x128xf32>
    %808 = arith.addf %805, %807 : vector<2x128xf32>
    %809 = arith.index_cast %c7_i32 : i32 to index
    %c0_248 = arith.constant 0 : index
    %c0_249 = arith.constant 0 : index
    %810 = vector.load %arg2[%809, %c0_248, %c0_249] : memref<16x2x1xf32, #tpu.memory_space<vmem>>, vector<1x2x1xf32>
    %811 = vector.shape_cast %810 : vector<1x2x1xf32> to vector<2x1xf32>
    %812 = vector.extract_strided_slice %802 {offsets = [0, 0], sizes = [2, 32], strides = [1, 1]} : vector<2x128xf32> to vector<2x32xf32>
    %813 = arith.negf %812 : vector<2x32xf32>
    %814 = math.exp %813 : vector<2x32xf32>
    %cst_250 = arith.constant 1.000000e+00 : f32
    %815 = vector.broadcast %cst_250 : f32 to vector<2x32xf32>
    %816 = arith.addf %815, %814 : vector<2x32xf32>
    %817 = arith.divf %815, %816 : vector<2x32xf32>
    %818 = vector.extract_strided_slice %802 {offsets = [0, 32], sizes = [2, 32], strides = [1, 1]} : vector<2x128xf32> to vector<2x32xf32>
    %819 = arith.negf %818 : vector<2x32xf32>
    %820 = math.exp %819 : vector<2x32xf32>
    %cst_251 = arith.constant 1.000000e+00 : f32
    %821 = vector.broadcast %cst_251 : f32 to vector<2x32xf32>
    %822 = arith.addf %821, %820 : vector<2x32xf32>
    %823 = arith.divf %821, %822 : vector<2x32xf32>
    %824 = vector.extract_strided_slice %802 {offsets = [0, 64], sizes = [2, 32], strides = [1, 1]} : vector<2x128xf32> to vector<2x32xf32>
    %825 = math.tanh %824 : vector<2x32xf32>
    %826 = vector.extract_strided_slice %802 {offsets = [0, 96], sizes = [2, 32], strides = [1, 1]} : vector<2x128xf32> to vector<2x32xf32>
    %827 = arith.negf %826 : vector<2x32xf32>
    %828 = math.exp %827 : vector<2x32xf32>
    %cst_252 = arith.constant 1.000000e+00 : f32
    %829 = vector.broadcast %cst_252 : f32 to vector<2x32xf32>
    %830 = arith.addf %829, %828 : vector<2x32xf32>
    %831 = arith.divf %829, %830 : vector<2x32xf32>
    %832 = arith.mulf %823, %742 : vector<2x32xf32>
    %833 = arith.mulf %817, %825 : vector<2x32xf32>
    %834 = arith.addf %832, %833 : vector<2x32xf32>
    %835 = math.tanh %834 : vector<2x32xf32>
    %836 = arith.mulf %831, %835 : vector<2x32xf32>
    %837 = vector.broadcast %811 : vector<2x1xf32> to vector<2x32xf32>
    %838 = arith.mulf %837, %836 : vector<2x32xf32>
    %cst_253 = arith.constant 1.000000e+00 : f32
    %839 = vector.broadcast %cst_253 : f32 to vector<2x1xf32>
    %840 = arith.subf %839, %811 : vector<2x1xf32>
    %841 = vector.broadcast %840 : vector<2x1xf32> to vector<2x32xf32>
    %842 = arith.mulf %841, %735 : vector<2x32xf32>
    %843 = arith.addf %838, %842 : vector<2x32xf32>
    %844 = vector.broadcast %811 : vector<2x1xf32> to vector<2x32xf32>
    %845 = arith.mulf %844, %834 : vector<2x32xf32>
    %cst_254 = arith.constant 1.000000e+00 : f32
    %846 = vector.broadcast %cst_254 : f32 to vector<2x1xf32>
    %847 = arith.subf %846, %811 : vector<2x1xf32>
    %848 = vector.broadcast %847 : vector<2x1xf32> to vector<2x32xf32>
    %849 = arith.mulf %848, %742 : vector<2x32xf32>
    %850 = arith.addf %845, %849 : vector<2x32xf32>
    %851 = vector.broadcast %811 : vector<2x1xf32> to vector<2x32xf32>
    %852 = arith.mulf %851, %836 : vector<2x32xf32>
    %853 = arith.index_cast %c7_i32 : i32 to index
    %c0_255 = arith.constant 0 : index
    %c0_256 = arith.constant 0 : index
    %854 = vector.load %arg3[%853, %c0_255, %c0_256] : memref<16x2x1xf32, #tpu.memory_space<vmem>>, vector<1x2x1xf32>
    %855 = vector.shape_cast %854 : vector<1x2x1xf32> to vector<2x1xf32>
    %856 = vector.extract_strided_slice %808 {offsets = [0, 0], sizes = [2, 32], strides = [1, 1]} : vector<2x128xf32> to vector<2x32xf32>
    %857 = arith.negf %856 : vector<2x32xf32>
    %858 = math.exp %857 : vector<2x32xf32>
    %cst_257 = arith.constant 1.000000e+00 : f32
    %859 = vector.broadcast %cst_257 : f32 to vector<2x32xf32>
    %860 = arith.addf %859, %858 : vector<2x32xf32>
    %861 = arith.divf %859, %860 : vector<2x32xf32>
    %862 = vector.extract_strided_slice %808 {offsets = [0, 32], sizes = [2, 32], strides = [1, 1]} : vector<2x128xf32> to vector<2x32xf32>
    %863 = arith.negf %862 : vector<2x32xf32>
    %864 = math.exp %863 : vector<2x32xf32>
    %cst_258 = arith.constant 1.000000e+00 : f32
    %865 = vector.broadcast %cst_258 : f32 to vector<2x32xf32>
    %866 = arith.addf %865, %864 : vector<2x32xf32>
    %867 = arith.divf %865, %866 : vector<2x32xf32>
    %868 = vector.extract_strided_slice %808 {offsets = [0, 64], sizes = [2, 32], strides = [1, 1]} : vector<2x128xf32> to vector<2x32xf32>
    %869 = math.tanh %868 : vector<2x32xf32>
    %870 = vector.extract_strided_slice %808 {offsets = [0, 96], sizes = [2, 32], strides = [1, 1]} : vector<2x128xf32> to vector<2x32xf32>
    %871 = arith.negf %870 : vector<2x32xf32>
    %872 = math.exp %871 : vector<2x32xf32>
    %cst_259 = arith.constant 1.000000e+00 : f32
    %873 = vector.broadcast %cst_259 : f32 to vector<2x32xf32>
    %874 = arith.addf %873, %872 : vector<2x32xf32>
    %875 = arith.divf %873, %874 : vector<2x32xf32>
    %876 = arith.mulf %867, %786 : vector<2x32xf32>
    %877 = arith.mulf %861, %869 : vector<2x32xf32>
    %878 = arith.addf %876, %877 : vector<2x32xf32>
    %879 = math.tanh %878 : vector<2x32xf32>
    %880 = arith.mulf %875, %879 : vector<2x32xf32>
    %881 = vector.broadcast %855 : vector<2x1xf32> to vector<2x32xf32>
    %882 = arith.mulf %881, %880 : vector<2x32xf32>
    %cst_260 = arith.constant 1.000000e+00 : f32
    %883 = vector.broadcast %cst_260 : f32 to vector<2x1xf32>
    %884 = arith.subf %883, %855 : vector<2x1xf32>
    %885 = vector.broadcast %884 : vector<2x1xf32> to vector<2x32xf32>
    %886 = arith.mulf %885, %779 : vector<2x32xf32>
    %887 = arith.addf %882, %886 : vector<2x32xf32>
    %888 = vector.broadcast %855 : vector<2x1xf32> to vector<2x32xf32>
    %889 = arith.mulf %888, %878 : vector<2x32xf32>
    %cst_261 = arith.constant 1.000000e+00 : f32
    %890 = vector.broadcast %cst_261 : f32 to vector<2x1xf32>
    %891 = arith.subf %890, %855 : vector<2x1xf32>
    %892 = vector.broadcast %891 : vector<2x1xf32> to vector<2x32xf32>
    %893 = arith.mulf %892, %786 : vector<2x32xf32>
    %894 = arith.addf %889, %893 : vector<2x32xf32>
    %895 = vector.broadcast %855 : vector<2x1xf32> to vector<2x32xf32>
    %896 = arith.mulf %895, %880 : vector<2x32xf32>
    %897 = arith.index_cast %c7_i32 : i32 to index
    %c0_262 = arith.constant 0 : index
    %c0_263 = arith.constant 0 : index
    %898 = vector.load %arg10[%897, %c0_262, %c0_263] : memref<16x2x32xf32, #tpu.memory_space<vmem>>, vector<1x2x32xf32>
    %899 = vector.shape_cast %898 : vector<1x2x32xf32> to vector<2x32xf32>
    %900 = vector.shape_cast %852 : vector<2x32xf32> to vector<1x2x32xf32>
    tpu.vector_store %arg10[%897, %c0_262, %c0_263], %900 {strides = array<i32>} : memref<16x2x32xf32, #tpu.memory_space<vmem>>, vector<1x2x32xf32>,
    %901 = arith.index_cast %c7_i32 : i32 to index
    %c0_264 = arith.constant 0 : index
    %c0_265 = arith.constant 0 : index
    %902 = vector.load %arg11[%901, %c0_264, %c0_265] : memref<16x2x32xf32, #tpu.memory_space<vmem>>, vector<1x2x32xf32>
    %903 = vector.shape_cast %902 : vector<1x2x32xf32> to vector<2x32xf32>
    %904 = vector.shape_cast %896 : vector<2x32xf32> to vector<1x2x32xf32>
    tpu.vector_store %arg11[%901, %c0_264, %c0_265], %904 {strides = array<i32>} : memref<16x2x32xf32, #tpu.memory_space<vmem>>, vector<1x2x32xf32>,
    %c8_i32 = arith.constant 8 : i32
    %905 = arith.index_cast %c8_i32 : i32 to index
    %c0_266 = arith.constant 0 : index
    %c0_267 = arith.constant 0 : index
    %906 = vector.load %arg14[%905, %c0_266, %c0_267] : memref<16x2x128xf32, #tpu.memory_space<vmem>>, vector<1x2x128xf32>
    %907 = vector.shape_cast %906 : vector<1x2x128xf32> to vector<2x128xf32>
    %c0_268 = arith.constant 0 : index
    %c0_269 = arith.constant 0 : index
    %908 = vector.load %arg6[%c0_268, %c0_269] : memref<32x128xf32, #tpu.memory_space<vmem>>, vector<32x128xf32>
    %cst_270 = arith.constant dense<0.000000e+00> : vector<2x128xf32>
    %909 = tpu.matmul %843, %908, %cst_270 {dimension_numbers = #tpu.dot_dimension_numbers<[1], [0], [0], [1], [0, 0, 1, 1], [], []>} : vector<2x32xf32>, vector<32x128xf32>, vector<2x128xf32> -> vector<2x128xf32>
    %910 = arith.addf %907, %909 : vector<2x128xf32>
    %911 = arith.index_cast %c8_i32 : i32 to index
    %c0_271 = arith.constant 0 : index
    %c0_272 = arith.constant 0 : index
    %912 = vector.load %arg15[%911, %c0_271, %c0_272] : memref<16x2x128xf32, #tpu.memory_space<vmem>>, vector<1x2x128xf32>
    %913 = vector.shape_cast %912 : vector<1x2x128xf32> to vector<2x128xf32>
    %c0_273 = arith.constant 0 : index
    %c0_274 = arith.constant 0 : index
    %914 = vector.load %arg7[%c0_273, %c0_274] : memref<32x128xf32, #tpu.memory_space<vmem>>, vector<32x128xf32>
    %cst_275 = arith.constant dense<0.000000e+00> : vector<2x128xf32>
    %915 = tpu.matmul %887, %914, %cst_275 {dimension_numbers = #tpu.dot_dimension_numbers<[1], [0], [0], [1], [0, 0, 1, 1], [], []>} : vector<2x32xf32>, vector<32x128xf32>, vector<2x128xf32> -> vector<2x128xf32>
    %916 = arith.addf %913, %915 : vector<2x128xf32>
    %917 = arith.index_cast %c8_i32 : i32 to index
    %c0_276 = arith.constant 0 : index
    %c0_277 = arith.constant 0 : index
    %918 = vector.load %arg2[%917, %c0_276, %c0_277] : memref<16x2x1xf32, #tpu.memory_space<vmem>>, vector<1x2x1xf32>
    %919 = vector.shape_cast %918 : vector<1x2x1xf32> to vector<2x1xf32>
    %920 = vector.extract_strided_slice %910 {offsets = [0, 0], sizes = [2, 32], strides = [1, 1]} : vector<2x128xf32> to vector<2x32xf32>
    %921 = arith.negf %920 : vector<2x32xf32>
    %922 = math.exp %921 : vector<2x32xf32>
    %cst_278 = arith.constant 1.000000e+00 : f32
    %923 = vector.broadcast %cst_278 : f32 to vector<2x32xf32>
    %924 = arith.addf %923, %922 : vector<2x32xf32>
    %925 = arith.divf %923, %924 : vector<2x32xf32>
    %926 = vector.extract_strided_slice %910 {offsets = [0, 32], sizes = [2, 32], strides = [1, 1]} : vector<2x128xf32> to vector<2x32xf32>
    %927 = arith.negf %926 : vector<2x32xf32>
    %928 = math.exp %927 : vector<2x32xf32>
    %cst_279 = arith.constant 1.000000e+00 : f32
    %929 = vector.broadcast %cst_279 : f32 to vector<2x32xf32>
    %930 = arith.addf %929, %928 : vector<2x32xf32>
    %931 = arith.divf %929, %930 : vector<2x32xf32>
    %932 = vector.extract_strided_slice %910 {offsets = [0, 64], sizes = [2, 32], strides = [1, 1]} : vector<2x128xf32> to vector<2x32xf32>
    %933 = math.tanh %932 : vector<2x32xf32>
    %934 = vector.extract_strided_slice %910 {offsets = [0, 96], sizes = [2, 32], strides = [1, 1]} : vector<2x128xf32> to vector<2x32xf32>
    %935 = arith.negf %934 : vector<2x32xf32>
    %936 = math.exp %935 : vector<2x32xf32>
    %cst_280 = arith.constant 1.000000e+00 : f32
    %937 = vector.broadcast %cst_280 : f32 to vector<2x32xf32>
    %938 = arith.addf %937, %936 : vector<2x32xf32>
    %939 = arith.divf %937, %938 : vector<2x32xf32>
    %940 = arith.mulf %931, %850 : vector<2x32xf32>
    %941 = arith.mulf %925, %933 : vector<2x32xf32>
    %942 = arith.addf %940, %941 : vector<2x32xf32>
    %943 = math.tanh %942 : vector<2x32xf32>
    %944 = arith.mulf %939, %943 : vector<2x32xf32>
    %945 = vector.broadcast %919 : vector<2x1xf32> to vector<2x32xf32>
    %946 = arith.mulf %945, %944 : vector<2x32xf32>
    %cst_281 = arith.constant 1.000000e+00 : f32
    %947 = vector.broadcast %cst_281 : f32 to vector<2x1xf32>
    %948 = arith.subf %947, %919 : vector<2x1xf32>
    %949 = vector.broadcast %948 : vector<2x1xf32> to vector<2x32xf32>
    %950 = arith.mulf %949, %843 : vector<2x32xf32>
    %951 = arith.addf %946, %950 : vector<2x32xf32>
    %952 = vector.broadcast %919 : vector<2x1xf32> to vector<2x32xf32>
    %953 = arith.mulf %952, %942 : vector<2x32xf32>
    %cst_282 = arith.constant 1.000000e+00 : f32
    %954 = vector.broadcast %cst_282 : f32 to vector<2x1xf32>
    %955 = arith.subf %954, %919 : vector<2x1xf32>
    %956 = vector.broadcast %955 : vector<2x1xf32> to vector<2x32xf32>
    %957 = arith.mulf %956, %850 : vector<2x32xf32>
    %958 = arith.addf %953, %957 : vector<2x32xf32>
    %959 = vector.broadcast %919 : vector<2x1xf32> to vector<2x32xf32>
    %960 = arith.mulf %959, %944 : vector<2x32xf32>
    %961 = arith.index_cast %c8_i32 : i32 to index
    %c0_283 = arith.constant 0 : index
    %c0_284 = arith.constant 0 : index
    %962 = vector.load %arg3[%961, %c0_283, %c0_284] : memref<16x2x1xf32, #tpu.memory_space<vmem>>, vector<1x2x1xf32>
    %963 = vector.shape_cast %962 : vector<1x2x1xf32> to vector<2x1xf32>
    %964 = vector.extract_strided_slice %916 {offsets = [0, 0], sizes = [2, 32], strides = [1, 1]} : vector<2x128xf32> to vector<2x32xf32>
    %965 = arith.negf %964 : vector<2x32xf32>
    %966 = math.exp %965 : vector<2x32xf32>
    %cst_285 = arith.constant 1.000000e+00 : f32
    %967 = vector.broadcast %cst_285 : f32 to vector<2x32xf32>
    %968 = arith.addf %967, %966 : vector<2x32xf32>
    %969 = arith.divf %967, %968 : vector<2x32xf32>
    %970 = vector.extract_strided_slice %916 {offsets = [0, 32], sizes = [2, 32], strides = [1, 1]} : vector<2x128xf32> to vector<2x32xf32>
    %971 = arith.negf %970 : vector<2x32xf32>
    %972 = math.exp %971 : vector<2x32xf32>
    %cst_286 = arith.constant 1.000000e+00 : f32
    %973 = vector.broadcast %cst_286 : f32 to vector<2x32xf32>
    %974 = arith.addf %973, %972 : vector<2x32xf32>
    %975 = arith.divf %973, %974 : vector<2x32xf32>
    %976 = vector.extract_strided_slice %916 {offsets = [0, 64], sizes = [2, 32], strides = [1, 1]} : vector<2x128xf32> to vector<2x32xf32>
    %977 = math.tanh %976 : vector<2x32xf32>
    %978 = vector.extract_strided_slice %916 {offsets = [0, 96], sizes = [2, 32], strides = [1, 1]} : vector<2x128xf32> to vector<2x32xf32>
    %979 = arith.negf %978 : vector<2x32xf32>
    %980 = math.exp %979 : vector<2x32xf32>
    %cst_287 = arith.constant 1.000000e+00 : f32
    %981 = vector.broadcast %cst_287 : f32 to vector<2x32xf32>
    %982 = arith.addf %981, %980 : vector<2x32xf32>
    %983 = arith.divf %981, %982 : vector<2x32xf32>
    %984 = arith.mulf %975, %894 : vector<2x32xf32>
    %985 = arith.mulf %969, %977 : vector<2x32xf32>
    %986 = arith.addf %984, %985 : vector<2x32xf32>
    %987 = math.tanh %986 : vector<2x32xf32>
    %988 = arith.mulf %983, %987 : vector<2x32xf32>
    %989 = vector.broadcast %963 : vector<2x1xf32> to vector<2x32xf32>
    %990 = arith.mulf %989, %988 : vector<2x32xf32>
    %cst_288 = arith.constant 1.000000e+00 : f32
    %991 = vector.broadcast %cst_288 : f32 to vector<2x1xf32>
    %992 = arith.subf %991, %963 : vector<2x1xf32>
    %993 = vector.broadcast %992 : vector<2x1xf32> to vector<2x32xf32>
    %994 = arith.mulf %993, %887 : vector<2x32xf32>
    %995 = arith.addf %990, %994 : vector<2x32xf32>
    %996 = vector.broadcast %963 : vector<2x1xf32> to vector<2x32xf32>
    %997 = arith.mulf %996, %986 : vector<2x32xf32>
    %cst_289 = arith.constant 1.000000e+00 : f32
    %998 = vector.broadcast %cst_289 : f32 to vector<2x1xf32>
    %999 = arith.subf %998, %963 : vector<2x1xf32>
    %1000 = vector.broadcast %999 : vector<2x1xf32> to vector<2x32xf32>
    %1001 = arith.mulf %1000, %894 : vector<2x32xf32>
    %1002 = arith.addf %997, %1001 : vector<2x32xf32>
    %1003 = vector.broadcast %963 : vector<2x1xf32> to vector<2x32xf32>
    %1004 = arith.mulf %1003, %988 : vector<2x32xf32>
    %1005 = arith.index_cast %c8_i32 : i32 to index
    %c0_290 = arith.constant 0 : index
    %c0_291 = arith.constant 0 : index
    %1006 = vector.load %arg10[%1005, %c0_290, %c0_291] : memref<16x2x32xf32, #tpu.memory_space<vmem>>, vector<1x2x32xf32>
    %1007 = vector.shape_cast %1006 : vector<1x2x32xf32> to vector<2x32xf32>
    %1008 = vector.shape_cast %960 : vector<2x32xf32> to vector<1x2x32xf32>
    tpu.vector_store %arg10[%1005, %c0_290, %c0_291], %1008 {strides = array<i32>} : memref<16x2x32xf32, #tpu.memory_space<vmem>>, vector<1x2x32xf32>,
    %1009 = arith.index_cast %c8_i32 : i32 to index
    %c0_292 = arith.constant 0 : index
    %c0_293 = arith.constant 0 : index
    %1010 = vector.load %arg11[%1009, %c0_292, %c0_293] : memref<16x2x32xf32, #tpu.memory_space<vmem>>, vector<1x2x32xf32>
    %1011 = vector.shape_cast %1010 : vector<1x2x32xf32> to vector<2x32xf32>
    %1012 = vector.shape_cast %1004 : vector<2x32xf32> to vector<1x2x32xf32>
    tpu.vector_store %arg11[%1009, %c0_292, %c0_293], %1012 {strides = array<i32>} : memref<16x2x32xf32, #tpu.memory_space<vmem>>, vector<1x2x32xf32>,
    %c9_i32 = arith.constant 9 : i32
    %1013 = arith.index_cast %c9_i32 : i32 to index
    %c0_294 = arith.constant 0 : index
    %c0_295 = arith.constant 0 : index
    %1014 = vector.load %arg14[%1013, %c0_294, %c0_295] : memref<16x2x128xf32, #tpu.memory_space<vmem>>, vector<1x2x128xf32>
    %1015 = vector.shape_cast %1014 : vector<1x2x128xf32> to vector<2x128xf32>
    %c0_296 = arith.constant 0 : index
    %c0_297 = arith.constant 0 : index
    %1016 = vector.load %arg6[%c0_296, %c0_297] : memref<32x128xf32, #tpu.memory_space<vmem>>, vector<32x128xf32>
    %cst_298 = arith.constant dense<0.000000e+00> : vector<2x128xf32>
    %1017 = tpu.matmul %951, %1016, %cst_298 {dimension_numbers = #tpu.dot_dimension_numbers<[1], [0], [0], [1], [0, 0, 1, 1], [], []>} : vector<2x32xf32>, vector<32x128xf32>, vector<2x128xf32> -> vector<2x128xf32>
    %1018 = arith.addf %1015, %1017 : vector<2x128xf32>
    %1019 = arith.index_cast %c9_i32 : i32 to index
    %c0_299 = arith.constant 0 : index
    %c0_300 = arith.constant 0 : index
    %1020 = vector.load %arg15[%1019, %c0_299, %c0_300] : memref<16x2x128xf32, #tpu.memory_space<vmem>>, vector<1x2x128xf32>
    %1021 = vector.shape_cast %1020 : vector<1x2x128xf32> to vector<2x128xf32>
    %c0_301 = arith.constant 0 : index
    %c0_302 = arith.constant 0 : index
    %1022 = vector.load %arg7[%c0_301, %c0_302] : memref<32x128xf32, #tpu.memory_space<vmem>>, vector<32x128xf32>
    %cst_303 = arith.constant dense<0.000000e+00> : vector<2x128xf32>
    %1023 = tpu.matmul %995, %1022, %cst_303 {dimension_numbers = #tpu.dot_dimension_numbers<[1], [0], [0], [1], [0, 0, 1, 1], [], []>} : vector<2x32xf32>, vector<32x128xf32>, vector<2x128xf32> -> vector<2x128xf32>
    %1024 = arith.addf %1021, %1023 : vector<2x128xf32>
    %1025 = arith.index_cast %c9_i32 : i32 to index
    %c0_304 = arith.constant 0 : index
    %c0_305 = arith.constant 0 : index
    %1026 = vector.load %arg2[%1025, %c0_304, %c0_305] : memref<16x2x1xf32, #tpu.memory_space<vmem>>, vector<1x2x1xf32>
    %1027 = vector.shape_cast %1026 : vector<1x2x1xf32> to vector<2x1xf32>
    %1028 = vector.extract_strided_slice %1018 {offsets = [0, 0], sizes = [2, 32], strides = [1, 1]} : vector<2x128xf32> to vector<2x32xf32>
    %1029 = arith.negf %1028 : vector<2x32xf32>
    %1030 = math.exp %1029 : vector<2x32xf32>
    %cst_306 = arith.constant 1.000000e+00 : f32
    %1031 = vector.broadcast %cst_306 : f32 to vector<2x32xf32>
    %1032 = arith.addf %1031, %1030 : vector<2x32xf32>
    %1033 = arith.divf %1031, %1032 : vector<2x32xf32>
    %1034 = vector.extract_strided_slice %1018 {offsets = [0, 32], sizes = [2, 32], strides = [1, 1]} : vector<2x128xf32> to vector<2x32xf32>
    %1035 = arith.negf %1034 : vector<2x32xf32>
    %1036 = math.exp %1035 : vector<2x32xf32>
    %cst_307 = arith.constant 1.000000e+00 : f32
    %1037 = vector.broadcast %cst_307 : f32 to vector<2x32xf32>
    %1038 = arith.addf %1037, %1036 : vector<2x32xf32>
    %1039 = arith.divf %1037, %1038 : vector<2x32xf32>
    %1040 = vector.extract_strided_slice %1018 {offsets = [0, 64], sizes = [2, 32], strides = [1, 1]} : vector<2x128xf32> to vector<2x32xf32>
    %1041 = math.tanh %1040 : vector<2x32xf32>
    %1042 = vector.extract_strided_slice %1018 {offsets = [0, 96], sizes = [2, 32], strides = [1, 1]} : vector<2x128xf32> to vector<2x32xf32>
    %1043 = arith.negf %1042 : vector<2x32xf32>
    %1044 = math.exp %1043 : vector<2x32xf32>
    %cst_308 = arith.constant 1.000000e+00 : f32
    %1045 = vector.broadcast %cst_308 : f32 to vector<2x32xf32>
    %1046 = arith.addf %1045, %1044 : vector<2x32xf32>
    %1047 = arith.divf %1045, %1046 : vector<2x32xf32>
    %1048 = arith.mulf %1039, %958 : vector<2x32xf32>
    %1049 = arith.mulf %1033, %1041 : vector<2x32xf32>
    %1050 = arith.addf %1048, %1049 : vector<2x32xf32>
    %1051 = math.tanh %1050 : vector<2x32xf32>
    %1052 = arith.mulf %1047, %1051 : vector<2x32xf32>
    %1053 = vector.broadcast %1027 : vector<2x1xf32> to vector<2x32xf32>
    %1054 = arith.mulf %1053, %1052 : vector<2x32xf32>
    %cst_309 = arith.constant 1.000000e+00 : f32
    %1055 = vector.broadcast %cst_309 : f32 to vector<2x1xf32>
    %1056 = arith.subf %1055, %1027 : vector<2x1xf32>
    %1057 = vector.broadcast %1056 : vector<2x1xf32> to vector<2x32xf32>
    %1058 = arith.mulf %1057, %951 : vector<2x32xf32>
    %1059 = arith.addf %1054, %1058 : vector<2x32xf32>
    %1060 = vector.broadcast %1027 : vector<2x1xf32> to vector<2x32xf32>
    %1061 = arith.mulf %1060, %1050 : vector<2x32xf32>
    %cst_310 = arith.constant 1.000000e+00 : f32
    %1062 = vector.broadcast %cst_310 : f32 to vector<2x1xf32>
    %1063 = arith.subf %1062, %1027 : vector<2x1xf32>
    %1064 = vector.broadcast %1063 : vector<2x1xf32> to vector<2x32xf32>
    %1065 = arith.mulf %1064, %958 : vector<2x32xf32>
    %1066 = arith.addf %1061, %1065 : vector<2x32xf32>
    %1067 = vector.broadcast %1027 : vector<2x1xf32> to vector<2x32xf32>
    %1068 = arith.mulf %1067, %1052 : vector<2x32xf32>
    %1069 = arith.index_cast %c9_i32 : i32 to index
    %c0_311 = arith.constant 0 : index
    %c0_312 = arith.constant 0 : index
    %1070 = vector.load %arg3[%1069, %c0_311, %c0_312] : memref<16x2x1xf32, #tpu.memory_space<vmem>>, vector<1x2x1xf32>
    %1071 = vector.shape_cast %1070 : vector<1x2x1xf32> to vector<2x1xf32>
    %1072 = vector.extract_strided_slice %1024 {offsets = [0, 0], sizes = [2, 32], strides = [1, 1]} : vector<2x128xf32> to vector<2x32xf32>
    %1073 = arith.negf %1072 : vector<2x32xf32>
    %1074 = math.exp %1073 : vector<2x32xf32>
    %cst_313 = arith.constant 1.000000e+00 : f32
    %1075 = vector.broadcast %cst_313 : f32 to vector<2x32xf32>
    %1076 = arith.addf %1075, %1074 : vector<2x32xf32>
    %1077 = arith.divf %1075, %1076 : vector<2x32xf32>
    %1078 = vector.extract_strided_slice %1024 {offsets = [0, 32], sizes = [2, 32], strides = [1, 1]} : vector<2x128xf32> to vector<2x32xf32>
    %1079 = arith.negf %1078 : vector<2x32xf32>
    %1080 = math.exp %1079 : vector<2x32xf32>
    %cst_314 = arith.constant 1.000000e+00 : f32
    %1081 = vector.broadcast %cst_314 : f32 to vector<2x32xf32>
    %1082 = arith.addf %1081, %1080 : vector<2x32xf32>
    %1083 = arith.divf %1081, %1082 : vector<2x32xf32>
    %1084 = vector.extract_strided_slice %1024 {offsets = [0, 64], sizes = [2, 32], strides = [1, 1]} : vector<2x128xf32> to vector<2x32xf32>
    %1085 = math.tanh %1084 : vector<2x32xf32>
    %1086 = vector.extract_strided_slice %1024 {offsets = [0, 96], sizes = [2, 32], strides = [1, 1]} : vector<2x128xf32> to vector<2x32xf32>
    %1087 = arith.negf %1086 : vector<2x32xf32>
    %1088 = math.exp %1087 : vector<2x32xf32>
    %cst_315 = arith.constant 1.000000e+00 : f32
    %1089 = vector.broadcast %cst_315 : f32 to vector<2x32xf32>
    %1090 = arith.addf %1089, %1088 : vector<2x32xf32>
    %1091 = arith.divf %1089, %1090 : vector<2x32xf32>
    %1092 = arith.mulf %1083, %1002 : vector<2x32xf32>
    %1093 = arith.mulf %1077, %1085 : vector<2x32xf32>
    %1094 = arith.addf %1092, %1093 : vector<2x32xf32>
    %1095 = math.tanh %1094 : vector<2x32xf32>
    %1096 = arith.mulf %1091, %1095 : vector<2x32xf32>
    %1097 = vector.broadcast %1071 : vector<2x1xf32> to vector<2x32xf32>
    %1098 = arith.mulf %1097, %1096 : vector<2x32xf32>
    %cst_316 = arith.constant 1.000000e+00 : f32
    %1099 = vector.broadcast %cst_316 : f32 to vector<2x1xf32>
    %1100 = arith.subf %1099, %1071 : vector<2x1xf32>
    %1101 = vector.broadcast %1100 : vector<2x1xf32> to vector<2x32xf32>
    %1102 = arith.mulf %1101, %995 : vector<2x32xf32>
    %1103 = arith.addf %1098, %1102 : vector<2x32xf32>
    %1104 = vector.broadcast %1071 : vector<2x1xf32> to vector<2x32xf32>
    %1105 = arith.mulf %1104, %1094 : vector<2x32xf32>
    %cst_317 = arith.constant 1.000000e+00 : f32
    %1106 = vector.broadcast %cst_317 : f32 to vector<2x1xf32>
    %1107 = arith.subf %1106, %1071 : vector<2x1xf32>
    %1108 = vector.broadcast %1107 : vector<2x1xf32> to vector<2x32xf32>
    %1109 = arith.mulf %1108, %1002 : vector<2x32xf32>
    %1110 = arith.addf %1105, %1109 : vector<2x32xf32>
    %1111 = vector.broadcast %1071 : vector<2x1xf32> to vector<2x32xf32>
    %1112 = arith.mulf %1111, %1096 : vector<2x32xf32>
    %1113 = arith.index_cast %c9_i32 : i32 to index
    %c0_318 = arith.constant 0 : index
    %c0_319 = arith.constant 0 : index
    %1114 = vector.load %arg10[%1113, %c0_318, %c0_319] : memref<16x2x32xf32, #tpu.memory_space<vmem>>, vector<1x2x32xf32>
    %1115 = vector.shape_cast %1114 : vector<1x2x32xf32> to vector<2x32xf32>
    %1116 = vector.shape_cast %1068 : vector<2x32xf32> to vector<1x2x32xf32>
    tpu.vector_store %arg10[%1113, %c0_318, %c0_319], %1116 {strides = array<i32>} : memref<16x2x32xf32, #tpu.memory_space<vmem>>, vector<1x2x32xf32>,
    %1117 = arith.index_cast %c9_i32 : i32 to index
    %c0_320 = arith.constant 0 : index
    %c0_321 = arith.constant 0 : index
    %1118 = vector.load %arg11[%1117, %c0_320, %c0_321] : memref<16x2x32xf32, #tpu.memory_space<vmem>>, vector<1x2x32xf32>
    %1119 = vector.shape_cast %1118 : vector<1x2x32xf32> to vector<2x32xf32>
    %1120 = vector.shape_cast %1112 : vector<2x32xf32> to vector<1x2x32xf32>
    tpu.vector_store %arg11[%1117, %c0_320, %c0_321], %1120 {strides = array<i32>} : memref<16x2x32xf32, #tpu.memory_space<vmem>>, vector<1x2x32xf32>,
    %c10_i32 = arith.constant 10 : i32
    %1121 = arith.index_cast %c10_i32 : i32 to index
    %c0_322 = arith.constant 0 : index
    %c0_323 = arith.constant 0 : index
    %1122 = vector.load %arg14[%1121, %c0_322, %c0_323] : memref<16x2x128xf32, #tpu.memory_space<vmem>>, vector<1x2x128xf32>
    %1123 = vector.shape_cast %1122 : vector<1x2x128xf32> to vector<2x128xf32>
    %c0_324 = arith.constant 0 : index
    %c0_325 = arith.constant 0 : index
    %1124 = vector.load %arg6[%c0_324, %c0_325] : memref<32x128xf32, #tpu.memory_space<vmem>>, vector<32x128xf32>
    %cst_326 = arith.constant dense<0.000000e+00> : vector<2x128xf32>
    %1125 = tpu.matmul %1059, %1124, %cst_326 {dimension_numbers = #tpu.dot_dimension_numbers<[1], [0], [0], [1], [0, 0, 1, 1], [], []>} : vector<2x32xf32>, vector<32x128xf32>, vector<2x128xf32> -> vector<2x128xf32>
    %1126 = arith.addf %1123, %1125 : vector<2x128xf32>
    %1127 = arith.index_cast %c10_i32 : i32 to index
    %c0_327 = arith.constant 0 : index
    %c0_328 = arith.constant 0 : index
    %1128 = vector.load %arg15[%1127, %c0_327, %c0_328] : memref<16x2x128xf32, #tpu.memory_space<vmem>>, vector<1x2x128xf32>
    %1129 = vector.shape_cast %1128 : vector<1x2x128xf32> to vector<2x128xf32>
    %c0_329 = arith.constant 0 : index
    %c0_330 = arith.constant 0 : index
    %1130 = vector.load %arg7[%c0_329, %c0_330] : memref<32x128xf32, #tpu.memory_space<vmem>>, vector<32x128xf32>
    %cst_331 = arith.constant dense<0.000000e+00> : vector<2x128xf32>
    %1131 = tpu.matmul %1103, %1130, %cst_331 {dimension_numbers = #tpu.dot_dimension_numbers<[1], [0], [0], [1], [0, 0, 1, 1], [], []>} : vector<2x32xf32>, vector<32x128xf32>, vector<2x128xf32> -> vector<2x128xf32>
    %1132 = arith.addf %1129, %1131 : vector<2x128xf32>
    %1133 = arith.index_cast %c10_i32 : i32 to index
    %c0_332 = arith.constant 0 : index
    %c0_333 = arith.constant 0 : index
    %1134 = vector.load %arg2[%1133, %c0_332, %c0_333] : memref<16x2x1xf32, #tpu.memory_space<vmem>>, vector<1x2x1xf32>
    %1135 = vector.shape_cast %1134 : vector<1x2x1xf32> to vector<2x1xf32>
    %1136 = vector.extract_strided_slice %1126 {offsets = [0, 0], sizes = [2, 32], strides = [1, 1]} : vector<2x128xf32> to vector<2x32xf32>
    %1137 = arith.negf %1136 : vector<2x32xf32>
    %1138 = math.exp %1137 : vector<2x32xf32>
    %cst_334 = arith.constant 1.000000e+00 : f32
    %1139 = vector.broadcast %cst_334 : f32 to vector<2x32xf32>
    %1140 = arith.addf %1139, %1138 : vector<2x32xf32>
    %1141 = arith.divf %1139, %1140 : vector<2x32xf32>
    %1142 = vector.extract_strided_slice %1126 {offsets = [0, 32], sizes = [2, 32], strides = [1, 1]} : vector<2x128xf32> to vector<2x32xf32>
    %1143 = arith.negf %1142 : vector<2x32xf32>
    %1144 = math.exp %1143 : vector<2x32xf32>
    %cst_335 = arith.constant 1.000000e+00 : f32
    %1145 = vector.broadcast %cst_335 : f32 to vector<2x32xf32>
    %1146 = arith.addf %1145, %1144 : vector<2x32xf32>
    %1147 = arith.divf %1145, %1146 : vector<2x32xf32>
    %1148 = vector.extract_strided_slice %1126 {offsets = [0, 64], sizes = [2, 32], strides = [1, 1]} : vector<2x128xf32> to vector<2x32xf32>
    %1149 = math.tanh %1148 : vector<2x32xf32>
    %1150 = vector.extract_strided_slice %1126 {offsets = [0, 96], sizes = [2, 32], strides = [1, 1]} : vector<2x128xf32> to vector<2x32xf32>
    %1151 = arith.negf %1150 : vector<2x32xf32>
    %1152 = math.exp %1151 : vector<2x32xf32>
    %cst_336 = arith.constant 1.000000e+00 : f32
    %1153 = vector.broadcast %cst_336 : f32 to vector<2x32xf32>
    %1154 = arith.addf %1153, %1152 : vector<2x32xf32>
    %1155 = arith.divf %1153, %1154 : vector<2x32xf32>
    %1156 = arith.mulf %1147, %1066 : vector<2x32xf32>
    %1157 = arith.mulf %1141, %1149 : vector<2x32xf32>
    %1158 = arith.addf %1156, %1157 : vector<2x32xf32>
    %1159 = math.tanh %1158 : vector<2x32xf32>
    %1160 = arith.mulf %1155, %1159 : vector<2x32xf32>
    %1161 = vector.broadcast %1135 : vector<2x1xf32> to vector<2x32xf32>
    %1162 = arith.mulf %1161, %1160 : vector<2x32xf32>
    %cst_337 = arith.constant 1.000000e+00 : f32
    %1163 = vector.broadcast %cst_337 : f32 to vector<2x1xf32>
    %1164 = arith.subf %1163, %1135 : vector<2x1xf32>
    %1165 = vector.broadcast %1164 : vector<2x1xf32> to vector<2x32xf32>
    %1166 = arith.mulf %1165, %1059 : vector<2x32xf32>
    %1167 = arith.addf %1162, %1166 : vector<2x32xf32>
    %1168 = vector.broadcast %1135 : vector<2x1xf32> to vector<2x32xf32>
    %1169 = arith.mulf %1168, %1158 : vector<2x32xf32>
    %cst_338 = arith.constant 1.000000e+00 : f32
    %1170 = vector.broadcast %cst_338 : f32 to vector<2x1xf32>
    %1171 = arith.subf %1170, %1135 : vector<2x1xf32>
    %1172 = vector.broadcast %1171 : vector<2x1xf32> to vector<2x32xf32>
    %1173 = arith.mulf %1172, %1066 : vector<2x32xf32>
    %1174 = arith.addf %1169, %1173 : vector<2x32xf32>
    %1175 = vector.broadcast %1135 : vector<2x1xf32> to vector<2x32xf32>
    %1176 = arith.mulf %1175, %1160 : vector<2x32xf32>
    %1177 = arith.index_cast %c10_i32 : i32 to index
    %c0_339 = arith.constant 0 : index
    %c0_340 = arith.constant 0 : index
    %1178 = vector.load %arg3[%1177, %c0_339, %c0_340] : memref<16x2x1xf32, #tpu.memory_space<vmem>>, vector<1x2x1xf32>
    %1179 = vector.shape_cast %1178 : vector<1x2x1xf32> to vector<2x1xf32>
    %1180 = vector.extract_strided_slice %1132 {offsets = [0, 0], sizes = [2, 32], strides = [1, 1]} : vector<2x128xf32> to vector<2x32xf32>
    %1181 = arith.negf %1180 : vector<2x32xf32>
    %1182 = math.exp %1181 : vector<2x32xf32>
    %cst_341 = arith.constant 1.000000e+00 : f32
    %1183 = vector.broadcast %cst_341 : f32 to vector<2x32xf32>
    %1184 = arith.addf %1183, %1182 : vector<2x32xf32>
    %1185 = arith.divf %1183, %1184 : vector<2x32xf32>
    %1186 = vector.extract_strided_slice %1132 {offsets = [0, 32], sizes = [2, 32], strides = [1, 1]} : vector<2x128xf32> to vector<2x32xf32>
    %1187 = arith.negf %1186 : vector<2x32xf32>
    %1188 = math.exp %1187 : vector<2x32xf32>
    %cst_342 = arith.constant 1.000000e+00 : f32
    %1189 = vector.broadcast %cst_342 : f32 to vector<2x32xf32>
    %1190 = arith.addf %1189, %1188 : vector<2x32xf32>
    %1191 = arith.divf %1189, %1190 : vector<2x32xf32>
    %1192 = vector.extract_strided_slice %1132 {offsets = [0, 64], sizes = [2, 32], strides = [1, 1]} : vector<2x128xf32> to vector<2x32xf32>
    %1193 = math.tanh %1192 : vector<2x32xf32>
    %1194 = vector.extract_strided_slice %1132 {offsets = [0, 96], sizes = [2, 32], strides = [1, 1]} : vector<2x128xf32> to vector<2x32xf32>
    %1195 = arith.negf %1194 : vector<2x32xf32>
    %1196 = math.exp %1195 : vector<2x32xf32>
    %cst_343 = arith.constant 1.000000e+00 : f32
    %1197 = vector.broadcast %cst_343 : f32 to vector<2x32xf32>
    %1198 = arith.addf %1197, %1196 : vector<2x32xf32>
    %1199 = arith.divf %1197, %1198 : vector<2x32xf32>
    %1200 = arith.mulf %1191, %1110 : vector<2x32xf32>
    %1201 = arith.mulf %1185, %1193 : vector<2x32xf32>
    %1202 = arith.addf %1200, %1201 : vector<2x32xf32>
    %1203 = math.tanh %1202 : vector<2x32xf32>
    %1204 = arith.mulf %1199, %1203 : vector<2x32xf32>
    %1205 = vector.broadcast %1179 : vector<2x1xf32> to vector<2x32xf32>
    %1206 = arith.mulf %1205, %1204 : vector<2x32xf32>
    %cst_344 = arith.constant 1.000000e+00 : f32
    %1207 = vector.broadcast %cst_344 : f32 to vector<2x1xf32>
    %1208 = arith.subf %1207, %1179 : vector<2x1xf32>
    %1209 = vector.broadcast %1208 : vector<2x1xf32> to vector<2x32xf32>
    %1210 = arith.mulf %1209, %1103 : vector<2x32xf32>
    %1211 = arith.addf %1206, %1210 : vector<2x32xf32>
    %1212 = vector.broadcast %1179 : vector<2x1xf32> to vector<2x32xf32>
    %1213 = arith.mulf %1212, %1202 : vector<2x32xf32>
    %cst_345 = arith.constant 1.000000e+00 : f32
    %1214 = vector.broadcast %cst_345 : f32 to vector<2x1xf32>
    %1215 = arith.subf %1214, %1179 : vector<2x1xf32>
    %1216 = vector.broadcast %1215 : vector<2x1xf32> to vector<2x32xf32>
    %1217 = arith.mulf %1216, %1110 : vector<2x32xf32>
    %1218 = arith.addf %1213, %1217 : vector<2x32xf32>
    %1219 = vector.broadcast %1179 : vector<2x1xf32> to vector<2x32xf32>
    %1220 = arith.mulf %1219, %1204 : vector<2x32xf32>
    %1221 = arith.index_cast %c10_i32 : i32 to index
    %c0_346 = arith.constant 0 : index
    %c0_347 = arith.constant 0 : index
    %1222 = vector.load %arg10[%1221, %c0_346, %c0_347] : memref<16x2x32xf32, #tpu.memory_space<vmem>>, vector<1x2x32xf32>
    %1223 = vector.shape_cast %1222 : vector<1x2x32xf32> to vector<2x32xf32>
    %1224 = vector.shape_cast %1176 : vector<2x32xf32> to vector<1x2x32xf32>
    tpu.vector_store %arg10[%1221, %c0_346, %c0_347], %1224 {strides = array<i32>} : memref<16x2x32xf32, #tpu.memory_space<vmem>>, vector<1x2x32xf32>,
    %1225 = arith.index_cast %c10_i32 : i32 to index
    %c0_348 = arith.constant 0 : index
    %c0_349 = arith.constant 0 : index
    %1226 = vector.load %arg11[%1225, %c0_348, %c0_349] : memref<16x2x32xf32, #tpu.memory_space<vmem>>, vector<1x2x32xf32>
    %1227 = vector.shape_cast %1226 : vector<1x2x32xf32> to vector<2x32xf32>
    %1228 = vector.shape_cast %1220 : vector<2x32xf32> to vector<1x2x32xf32>
    tpu.vector_store %arg11[%1225, %c0_348, %c0_349], %1228 {strides = array<i32>} : memref<16x2x32xf32, #tpu.memory_space<vmem>>, vector<1x2x32xf32>,
    %c11_i32 = arith.constant 11 : i32
    %1229 = arith.index_cast %c11_i32 : i32 to index
    %c0_350 = arith.constant 0 : index
    %c0_351 = arith.constant 0 : index
    %1230 = vector.load %arg14[%1229, %c0_350, %c0_351] : memref<16x2x128xf32, #tpu.memory_space<vmem>>, vector<1x2x128xf32>
    %1231 = vector.shape_cast %1230 : vector<1x2x128xf32> to vector<2x128xf32>
    %c0_352 = arith.constant 0 : index
    %c0_353 = arith.constant 0 : index
    %1232 = vector.load %arg6[%c0_352, %c0_353] : memref<32x128xf32, #tpu.memory_space<vmem>>, vector<32x128xf32>
    %cst_354 = arith.constant dense<0.000000e+00> : vector<2x128xf32>
    %1233 = tpu.matmul %1167, %1232, %cst_354 {dimension_numbers = #tpu.dot_dimension_numbers<[1], [0], [0], [1], [0, 0, 1, 1], [], []>} : vector<2x32xf32>, vector<32x128xf32>, vector<2x128xf32> -> vector<2x128xf32>
    %1234 = arith.addf %1231, %1233 : vector<2x128xf32>
    %1235 = arith.index_cast %c11_i32 : i32 to index
    %c0_355 = arith.constant 0 : index
    %c0_356 = arith.constant 0 : index
    %1236 = vector.load %arg15[%1235, %c0_355, %c0_356] : memref<16x2x128xf32, #tpu.memory_space<vmem>>, vector<1x2x128xf32>
    %1237 = vector.shape_cast %1236 : vector<1x2x128xf32> to vector<2x128xf32>
    %c0_357 = arith.constant 0 : index
    %c0_358 = arith.constant 0 : index
    %1238 = vector.load %arg7[%c0_357, %c0_358] : memref<32x128xf32, #tpu.memory_space<vmem>>, vector<32x128xf32>
    %cst_359 = arith.constant dense<0.000000e+00> : vector<2x128xf32>
    %1239 = tpu.matmul %1211, %1238, %cst_359 {dimension_numbers = #tpu.dot_dimension_numbers<[1], [0], [0], [1], [0, 0, 1, 1], [], []>} : vector<2x32xf32>, vector<32x128xf32>, vector<2x128xf32> -> vector<2x128xf32>
    %1240 = arith.addf %1237, %1239 : vector<2x128xf32>
    %1241 = arith.index_cast %c11_i32 : i32 to index
    %c0_360 = arith.constant 0 : index
    %c0_361 = arith.constant 0 : index
    %1242 = vector.load %arg2[%1241, %c0_360, %c0_361] : memref<16x2x1xf32, #tpu.memory_space<vmem>>, vector<1x2x1xf32>
    %1243 = vector.shape_cast %1242 : vector<1x2x1xf32> to vector<2x1xf32>
    %1244 = vector.extract_strided_slice %1234 {offsets = [0, 0], sizes = [2, 32], strides = [1, 1]} : vector<2x128xf32> to vector<2x32xf32>
    %1245 = arith.negf %1244 : vector<2x32xf32>
    %1246 = math.exp %1245 : vector<2x32xf32>
    %cst_362 = arith.constant 1.000000e+00 : f32
    %1247 = vector.broadcast %cst_362 : f32 to vector<2x32xf32>
    %1248 = arith.addf %1247, %1246 : vector<2x32xf32>
    %1249 = arith.divf %1247, %1248 : vector<2x32xf32>
    %1250 = vector.extract_strided_slice %1234 {offsets = [0, 32], sizes = [2, 32], strides = [1, 1]} : vector<2x128xf32> to vector<2x32xf32>
    %1251 = arith.negf %1250 : vector<2x32xf32>
    %1252 = math.exp %1251 : vector<2x32xf32>
    %cst_363 = arith.constant 1.000000e+00 : f32
    %1253 = vector.broadcast %cst_363 : f32 to vector<2x32xf32>
    %1254 = arith.addf %1253, %1252 : vector<2x32xf32>
    %1255 = arith.divf %1253, %1254 : vector<2x32xf32>
    %1256 = vector.extract_strided_slice %1234 {offsets = [0, 64], sizes = [2, 32], strides = [1, 1]} : vector<2x128xf32> to vector<2x32xf32>
    %1257 = math.tanh %1256 : vector<2x32xf32>
    %1258 = vector.extract_strided_slice %1234 {offsets = [0, 96], sizes = [2, 32], strides = [1, 1]} : vector<2x128xf32> to vector<2x32xf32>
    %1259 = arith.negf %1258 : vector<2x32xf32>
    %1260 = math.exp %1259 : vector<2x32xf32>
    %cst_364 = arith.constant 1.000000e+00 : f32
    %1261 = vector.broadcast %cst_364 : f32 to vector<2x32xf32>
    %1262 = arith.addf %1261, %1260 : vector<2x32xf32>
    %1263 = arith.divf %1261, %1262 : vector<2x32xf32>
    %1264 = arith.mulf %1255, %1174 : vector<2x32xf32>
    %1265 = arith.mulf %1249, %1257 : vector<2x32xf32>
    %1266 = arith.addf %1264, %1265 : vector<2x32xf32>
    %1267 = math.tanh %1266 : vector<2x32xf32>
    %1268 = arith.mulf %1263, %1267 : vector<2x32xf32>
    %1269 = vector.broadcast %1243 : vector<2x1xf32> to vector<2x32xf32>
    %1270 = arith.mulf %1269, %1268 : vector<2x32xf32>
    %cst_365 = arith.constant 1.000000e+00 : f32
    %1271 = vector.broadcast %cst_365 : f32 to vector<2x1xf32>
    %1272 = arith.subf %1271, %1243 : vector<2x1xf32>
    %1273 = vector.broadcast %1272 : vector<2x1xf32> to vector<2x32xf32>
    %1274 = arith.mulf %1273, %1167 : vector<2x32xf32>
    %1275 = arith.addf %1270, %1274 : vector<2x32xf32>
    %1276 = vector.broadcast %1243 : vector<2x1xf32> to vector<2x32xf32>
    %1277 = arith.mulf %1276, %1266 : vector<2x32xf32>
    %cst_366 = arith.constant 1.000000e+00 : f32
    %1278 = vector.broadcast %cst_366 : f32 to vector<2x1xf32>
    %1279 = arith.subf %1278, %1243 : vector<2x1xf32>
    %1280 = vector.broadcast %1279 : vector<2x1xf32> to vector<2x32xf32>
    %1281 = arith.mulf %1280, %1174 : vector<2x32xf32>
    %1282 = arith.addf %1277, %1281 : vector<2x32xf32>
    %1283 = vector.broadcast %1243 : vector<2x1xf32> to vector<2x32xf32>
    %1284 = arith.mulf %1283, %1268 : vector<2x32xf32>
    %1285 = arith.index_cast %c11_i32 : i32 to index
    %c0_367 = arith.constant 0 : index
    %c0_368 = arith.constant 0 : index
    %1286 = vector.load %arg3[%1285, %c0_367, %c0_368] : memref<16x2x1xf32, #tpu.memory_space<vmem>>, vector<1x2x1xf32>
    %1287 = vector.shape_cast %1286 : vector<1x2x1xf32> to vector<2x1xf32>
    %1288 = vector.extract_strided_slice %1240 {offsets = [0, 0], sizes = [2, 32], strides = [1, 1]} : vector<2x128xf32> to vector<2x32xf32>
    %1289 = arith.negf %1288 : vector<2x32xf32>
    %1290 = math.exp %1289 : vector<2x32xf32>
    %cst_369 = arith.constant 1.000000e+00 : f32
    %1291 = vector.broadcast %cst_369 : f32 to vector<2x32xf32>
    %1292 = arith.addf %1291, %1290 : vector<2x32xf32>
    %1293 = arith.divf %1291, %1292 : vector<2x32xf32>
    %1294 = vector.extract_strided_slice %1240 {offsets = [0, 32], sizes = [2, 32], strides = [1, 1]} : vector<2x128xf32> to vector<2x32xf32>
    %1295 = arith.negf %1294 : vector<2x32xf32>
    %1296 = math.exp %1295 : vector<2x32xf32>
    %cst_370 = arith.constant 1.000000e+00 : f32
    %1297 = vector.broadcast %cst_370 : f32 to vector<2x32xf32>
    %1298 = arith.addf %1297, %1296 : vector<2x32xf32>
    %1299 = arith.divf %1297, %1298 : vector<2x32xf32>
    %1300 = vector.extract_strided_slice %1240 {offsets = [0, 64], sizes = [2, 32], strides = [1, 1]} : vector<2x128xf32> to vector<2x32xf32>
    %1301 = math.tanh %1300 : vector<2x32xf32>
    %1302 = vector.extract_strided_slice %1240 {offsets = [0, 96], sizes = [2, 32], strides = [1, 1]} : vector<2x128xf32> to vector<2x32xf32>
    %1303 = arith.negf %1302 : vector<2x32xf32>
    %1304 = math.exp %1303 : vector<2x32xf32>
    %cst_371 = arith.constant 1.000000e+00 : f32
    %1305 = vector.broadcast %cst_371 : f32 to vector<2x32xf32>
    %1306 = arith.addf %1305, %1304 : vector<2x32xf32>
    %1307 = arith.divf %1305, %1306 : vector<2x32xf32>
    %1308 = arith.mulf %1299, %1218 : vector<2x32xf32>
    %1309 = arith.mulf %1293, %1301 : vector<2x32xf32>
    %1310 = arith.addf %1308, %1309 : vector<2x32xf32>
    %1311 = math.tanh %1310 : vector<2x32xf32>
    %1312 = arith.mulf %1307, %1311 : vector<2x32xf32>
    %1313 = vector.broadcast %1287 : vector<2x1xf32> to vector<2x32xf32>
    %1314 = arith.mulf %1313, %1312 : vector<2x32xf32>
    %cst_372 = arith.constant 1.000000e+00 : f32
    %1315 = vector.broadcast %cst_372 : f32 to vector<2x1xf32>
    %1316 = arith.subf %1315, %1287 : vector<2x1xf32>
    %1317 = vector.broadcast %1316 : vector<2x1xf32> to vector<2x32xf32>
    %1318 = arith.mulf %1317, %1211 : vector<2x32xf32>
    %1319 = arith.addf %1314, %1318 : vector<2x32xf32>
    %1320 = vector.broadcast %1287 : vector<2x1xf32> to vector<2x32xf32>
    %1321 = arith.mulf %1320, %1310 : vector<2x32xf32>
    %cst_373 = arith.constant 1.000000e+00 : f32
    %1322 = vector.broadcast %cst_373 : f32 to vector<2x1xf32>
    %1323 = arith.subf %1322, %1287 : vector<2x1xf32>
    %1324 = vector.broadcast %1323 : vector<2x1xf32> to vector<2x32xf32>
    %1325 = arith.mulf %1324, %1218 : vector<2x32xf32>
    %1326 = arith.addf %1321, %1325 : vector<2x32xf32>
    %1327 = vector.broadcast %1287 : vector<2x1xf32> to vector<2x32xf32>
    %1328 = arith.mulf %1327, %1312 : vector<2x32xf32>
    %1329 = arith.index_cast %c11_i32 : i32 to index
    %c0_374 = arith.constant 0 : index
    %c0_375 = arith.constant 0 : index
    %1330 = vector.load %arg10[%1329, %c0_374, %c0_375] : memref<16x2x32xf32, #tpu.memory_space<vmem>>, vector<1x2x32xf32>
    %1331 = vector.shape_cast %1330 : vector<1x2x32xf32> to vector<2x32xf32>
    %1332 = vector.shape_cast %1284 : vector<2x32xf32> to vector<1x2x32xf32>
    tpu.vector_store %arg10[%1329, %c0_374, %c0_375], %1332 {strides = array<i32>} : memref<16x2x32xf32, #tpu.memory_space<vmem>>, vector<1x2x32xf32>,
    %1333 = arith.index_cast %c11_i32 : i32 to index
    %c0_376 = arith.constant 0 : index
    %c0_377 = arith.constant 0 : index
    %1334 = vector.load %arg11[%1333, %c0_376, %c0_377] : memref<16x2x32xf32, #tpu.memory_space<vmem>>, vector<1x2x32xf32>
    %1335 = vector.shape_cast %1334 : vector<1x2x32xf32> to vector<2x32xf32>
    %1336 = vector.shape_cast %1328 : vector<2x32xf32> to vector<1x2x32xf32>
    tpu.vector_store %arg11[%1333, %c0_376, %c0_377], %1336 {strides = array<i32>} : memref<16x2x32xf32, #tpu.memory_space<vmem>>, vector<1x2x32xf32>,
    %c12_i32 = arith.constant 12 : i32
    %1337 = arith.index_cast %c12_i32 : i32 to index
    %c0_378 = arith.constant 0 : index
    %c0_379 = arith.constant 0 : index
    %1338 = vector.load %arg14[%1337, %c0_378, %c0_379] : memref<16x2x128xf32, #tpu.memory_space<vmem>>, vector<1x2x128xf32>
    %1339 = vector.shape_cast %1338 : vector<1x2x128xf32> to vector<2x128xf32>
    %c0_380 = arith.constant 0 : index
    %c0_381 = arith.constant 0 : index
    %1340 = vector.load %arg6[%c0_380, %c0_381] : memref<32x128xf32, #tpu.memory_space<vmem>>, vector<32x128xf32>
    %cst_382 = arith.constant dense<0.000000e+00> : vector<2x128xf32>
    %1341 = tpu.matmul %1275, %1340, %cst_382 {dimension_numbers = #tpu.dot_dimension_numbers<[1], [0], [0], [1], [0, 0, 1, 1], [], []>} : vector<2x32xf32>, vector<32x128xf32>, vector<2x128xf32> -> vector<2x128xf32>
    %1342 = arith.addf %1339, %1341 : vector<2x128xf32>
    %1343 = arith.index_cast %c12_i32 : i32 to index
    %c0_383 = arith.constant 0 : index
    %c0_384 = arith.constant 0 : index
    %1344 = vector.load %arg15[%1343, %c0_383, %c0_384] : memref<16x2x128xf32, #tpu.memory_space<vmem>>, vector<1x2x128xf32>
    %1345 = vector.shape_cast %1344 : vector<1x2x128xf32> to vector<2x128xf32>
    %c0_385 = arith.constant 0 : index
    %c0_386 = arith.constant 0 : index
    %1346 = vector.load %arg7[%c0_385, %c0_386] : memref<32x128xf32, #tpu.memory_space<vmem>>, vector<32x128xf32>
    %cst_387 = arith.constant dense<0.000000e+00> : vector<2x128xf32>
    %1347 = tpu.matmul %1319, %1346, %cst_387 {dimension_numbers = #tpu.dot_dimension_numbers<[1], [0], [0], [1], [0, 0, 1, 1], [], []>} : vector<2x32xf32>, vector<32x128xf32>, vector<2x128xf32> -> vector<2x128xf32>
    %1348 = arith.addf %1345, %1347 : vector<2x128xf32>
    %1349 = arith.index_cast %c12_i32 : i32 to index
    %c0_388 = arith.constant 0 : index
    %c0_389 = arith.constant 0 : index
    %1350 = vector.load %arg2[%1349, %c0_388, %c0_389] : memref<16x2x1xf32, #tpu.memory_space<vmem>>, vector<1x2x1xf32>
    %1351 = vector.shape_cast %1350 : vector<1x2x1xf32> to vector<2x1xf32>
    %1352 = vector.extract_strided_slice %1342 {offsets = [0, 0], sizes = [2, 32], strides = [1, 1]} : vector<2x128xf32> to vector<2x32xf32>
    %1353 = arith.negf %1352 : vector<2x32xf32>
    %1354 = math.exp %1353 : vector<2x32xf32>
    %cst_390 = arith.constant 1.000000e+00 : f32
    %1355 = vector.broadcast %cst_390 : f32 to vector<2x32xf32>
    %1356 = arith.addf %1355, %1354 : vector<2x32xf32>
    %1357 = arith.divf %1355, %1356 : vector<2x32xf32>
    %1358 = vector.extract_strided_slice %1342 {offsets = [0, 32], sizes = [2, 32], strides = [1, 1]} : vector<2x128xf32> to vector<2x32xf32>
    %1359 = arith.negf %1358 : vector<2x32xf32>
    %1360 = math.exp %1359 : vector<2x32xf32>
    %cst_391 = arith.constant 1.000000e+00 : f32
    %1361 = vector.broadcast %cst_391 : f32 to vector<2x32xf32>
    %1362 = arith.addf %1361, %1360 : vector<2x32xf32>
    %1363 = arith.divf %1361, %1362 : vector<2x32xf32>
    %1364 = vector.extract_strided_slice %1342 {offsets = [0, 64], sizes = [2, 32], strides = [1, 1]} : vector<2x128xf32> to vector<2x32xf32>
    %1365 = math.tanh %1364 : vector<2x32xf32>
    %1366 = vector.extract_strided_slice %1342 {offsets = [0, 96], sizes = [2, 32], strides = [1, 1]} : vector<2x128xf32> to vector<2x32xf32>
    %1367 = arith.negf %1366 : vector<2x32xf32>
    %1368 = math.exp %1367 : vector<2x32xf32>
    %cst_392 = arith.constant 1.000000e+00 : f32
    %1369 = vector.broadcast %cst_392 : f32 to vector<2x32xf32>
    %1370 = arith.addf %1369, %1368 : vector<2x32xf32>
    %1371 = arith.divf %1369, %1370 : vector<2x32xf32>
    %1372 = arith.mulf %1363, %1282 : vector<2x32xf32>
    %1373 = arith.mulf %1357, %1365 : vector<2x32xf32>
    %1374 = arith.addf %1372, %1373 : vector<2x32xf32>
    %1375 = math.tanh %1374 : vector<2x32xf32>
    %1376 = arith.mulf %1371, %1375 : vector<2x32xf32>
    %1377 = vector.broadcast %1351 : vector<2x1xf32> to vector<2x32xf32>
    %1378 = arith.mulf %1377, %1376 : vector<2x32xf32>
    %cst_393 = arith.constant 1.000000e+00 : f32
    %1379 = vector.broadcast %cst_393 : f32 to vector<2x1xf32>
    %1380 = arith.subf %1379, %1351 : vector<2x1xf32>
    %1381 = vector.broadcast %1380 : vector<2x1xf32> to vector<2x32xf32>
    %1382 = arith.mulf %1381, %1275 : vector<2x32xf32>
    %1383 = arith.addf %1378, %1382 : vector<2x32xf32>
    %1384 = vector.broadcast %1351 : vector<2x1xf32> to vector<2x32xf32>
    %1385 = arith.mulf %1384, %1374 : vector<2x32xf32>
    %cst_394 = arith.constant 1.000000e+00 : f32
    %1386 = vector.broadcast %cst_394 : f32 to vector<2x1xf32>
    %1387 = arith.subf %1386, %1351 : vector<2x1xf32>
    %1388 = vector.broadcast %1387 : vector<2x1xf32> to vector<2x32xf32>
    %1389 = arith.mulf %1388, %1282 : vector<2x32xf32>
    %1390 = arith.addf %1385, %1389 : vector<2x32xf32>
    %1391 = vector.broadcast %1351 : vector<2x1xf32> to vector<2x32xf32>
    %1392 = arith.mulf %1391, %1376 : vector<2x32xf32>
    %1393 = arith.index_cast %c12_i32 : i32 to index
    %c0_395 = arith.constant 0 : index
    %c0_396 = arith.constant 0 : index
    %1394 = vector.load %arg3[%1393, %c0_395, %c0_396] : memref<16x2x1xf32, #tpu.memory_space<vmem>>, vector<1x2x1xf32>
    %1395 = vector.shape_cast %1394 : vector<1x2x1xf32> to vector<2x1xf32>
    %1396 = vector.extract_strided_slice %1348 {offsets = [0, 0], sizes = [2, 32], strides = [1, 1]} : vector<2x128xf32> to vector<2x32xf32>
    %1397 = arith.negf %1396 : vector<2x32xf32>
    %1398 = math.exp %1397 : vector<2x32xf32>
    %cst_397 = arith.constant 1.000000e+00 : f32
    %1399 = vector.broadcast %cst_397 : f32 to vector<2x32xf32>
    %1400 = arith.addf %1399, %1398 : vector<2x32xf32>
    %1401 = arith.divf %1399, %1400 : vector<2x32xf32>
    %1402 = vector.extract_strided_slice %1348 {offsets = [0, 32], sizes = [2, 32], strides = [1, 1]} : vector<2x128xf32> to vector<2x32xf32>
    %1403 = arith.negf %1402 : vector<2x32xf32>
    %1404 = math.exp %1403 : vector<2x32xf32>
    %cst_398 = arith.constant 1.000000e+00 : f32
    %1405 = vector.broadcast %cst_398 : f32 to vector<2x32xf32>
    %1406 = arith.addf %1405, %1404 : vector<2x32xf32>
    %1407 = arith.divf %1405, %1406 : vector<2x32xf32>
    %1408 = vector.extract_strided_slice %1348 {offsets = [0, 64], sizes = [2, 32], strides = [1, 1]} : vector<2x128xf32> to vector<2x32xf32>
    %1409 = math.tanh %1408 : vector<2x32xf32>
    %1410 = vector.extract_strided_slice %1348 {offsets = [0, 96], sizes = [2, 32], strides = [1, 1]} : vector<2x128xf32> to vector<2x32xf32>
    %1411 = arith.negf %1410 : vector<2x32xf32>
    %1412 = math.exp %1411 : vector<2x32xf32>
    %cst_399 = arith.constant 1.000000e+00 : f32
    %1413 = vector.broadcast %cst_399 : f32 to vector<2x32xf32>
    %1414 = arith.addf %1413, %1412 : vector<2x32xf32>
    %1415 = arith.divf %1413, %1414 : vector<2x32xf32>
    %1416 = arith.mulf %1407, %1326 : vector<2x32xf32>
    %1417 = arith.mulf %1401, %1409 : vector<2x32xf32>
    %1418 = arith.addf %1416, %1417 : vector<2x32xf32>
    %1419 = math.tanh %1418 : vector<2x32xf32>
    %1420 = arith.mulf %1415, %1419 : vector<2x32xf32>
    %1421 = vector.broadcast %1395 : vector<2x1xf32> to vector<2x32xf32>
    %1422 = arith.mulf %1421, %1420 : vector<2x32xf32>
    %cst_400 = arith.constant 1.000000e+00 : f32
    %1423 = vector.broadcast %cst_400 : f32 to vector<2x1xf32>
    %1424 = arith.subf %1423, %1395 : vector<2x1xf32>
    %1425 = vector.broadcast %1424 : vector<2x1xf32> to vector<2x32xf32>
    %1426 = arith.mulf %1425, %1319 : vector<2x32xf32>
    %1427 = arith.addf %1422, %1426 : vector<2x32xf32>
    %1428 = vector.broadcast %1395 : vector<2x1xf32> to vector<2x32xf32>
    %1429 = arith.mulf %1428, %1418 : vector<2x32xf32>
    %cst_401 = arith.constant 1.000000e+00 : f32
    %1430 = vector.broadcast %cst_401 : f32 to vector<2x1xf32>
    %1431 = arith.subf %1430, %1395 : vector<2x1xf32>
    %1432 = vector.broadcast %1431 : vector<2x1xf32> to vector<2x32xf32>
    %1433 = arith.mulf %1432, %1326 : vector<2x32xf32>
    %1434 = arith.addf %1429, %1433 : vector<2x32xf32>
    %1435 = vector.broadcast %1395 : vector<2x1xf32> to vector<2x32xf32>
    %1436 = arith.mulf %1435, %1420 : vector<2x32xf32>
    %1437 = arith.index_cast %c12_i32 : i32 to index
    %c0_402 = arith.constant 0 : index
    %c0_403 = arith.constant 0 : index
    %1438 = vector.load %arg10[%1437, %c0_402, %c0_403] : memref<16x2x32xf32, #tpu.memory_space<vmem>>, vector<1x2x32xf32>
    %1439 = vector.shape_cast %1438 : vector<1x2x32xf32> to vector<2x32xf32>
    %1440 = vector.shape_cast %1392 : vector<2x32xf32> to vector<1x2x32xf32>
    tpu.vector_store %arg10[%1437, %c0_402, %c0_403], %1440 {strides = array<i32>} : memref<16x2x32xf32, #tpu.memory_space<vmem>>, vector<1x2x32xf32>,
    %1441 = arith.index_cast %c12_i32 : i32 to index
    %c0_404 = arith.constant 0 : index
    %c0_405 = arith.constant 0 : index
    %1442 = vector.load %arg11[%1441, %c0_404, %c0_405] : memref<16x2x32xf32, #tpu.memory_space<vmem>>, vector<1x2x32xf32>
    %1443 = vector.shape_cast %1442 : vector<1x2x32xf32> to vector<2x32xf32>
    %1444 = vector.shape_cast %1436 : vector<2x32xf32> to vector<1x2x32xf32>
    tpu.vector_store %arg11[%1441, %c0_404, %c0_405], %1444 {strides = array<i32>} : memref<16x2x32xf32, #tpu.memory_space<vmem>>, vector<1x2x32xf32>,
    %c13_i32 = arith.constant 13 : i32
    %1445 = arith.index_cast %c13_i32 : i32 to index
    %c0_406 = arith.constant 0 : index
    %c0_407 = arith.constant 0 : index
    %1446 = vector.load %arg14[%1445, %c0_406, %c0_407] : memref<16x2x128xf32, #tpu.memory_space<vmem>>, vector<1x2x128xf32>
    %1447 = vector.shape_cast %1446 : vector<1x2x128xf32> to vector<2x128xf32>
    %c0_408 = arith.constant 0 : index
    %c0_409 = arith.constant 0 : index
    %1448 = vector.load %arg6[%c0_408, %c0_409] : memref<32x128xf32, #tpu.memory_space<vmem>>, vector<32x128xf32>
    %cst_410 = arith.constant dense<0.000000e+00> : vector<2x128xf32>
    %1449 = tpu.matmul %1383, %1448, %cst_410 {dimension_numbers = #tpu.dot_dimension_numbers<[1], [0], [0], [1], [0, 0, 1, 1], [], []>} : vector<2x32xf32>, vector<32x128xf32>, vector<2x128xf32> -> vector<2x128xf32>
    %1450 = arith.addf %1447, %1449 : vector<2x128xf32>
    %1451 = arith.index_cast %c13_i32 : i32 to index
    %c0_411 = arith.constant 0 : index
    %c0_412 = arith.constant 0 : index
    %1452 = vector.load %arg15[%1451, %c0_411, %c0_412] : memref<16x2x128xf32, #tpu.memory_space<vmem>>, vector<1x2x128xf32>
    %1453 = vector.shape_cast %1452 : vector<1x2x128xf32> to vector<2x128xf32>
    %c0_413 = arith.constant 0 : index
    %c0_414 = arith.constant 0 : index
    %1454 = vector.load %arg7[%c0_413, %c0_414] : memref<32x128xf32, #tpu.memory_space<vmem>>, vector<32x128xf32>
    %cst_415 = arith.constant dense<0.000000e+00> : vector<2x128xf32>
    %1455 = tpu.matmul %1427, %1454, %cst_415 {dimension_numbers = #tpu.dot_dimension_numbers<[1], [0], [0], [1], [0, 0, 1, 1], [], []>} : vector<2x32xf32>, vector<32x128xf32>, vector<2x128xf32> -> vector<2x128xf32>
    %1456 = arith.addf %1453, %1455 : vector<2x128xf32>
    %1457 = arith.index_cast %c13_i32 : i32 to index
    %c0_416 = arith.constant 0 : index
    %c0_417 = arith.constant 0 : index
    %1458 = vector.load %arg2[%1457, %c0_416, %c0_417] : memref<16x2x1xf32, #tpu.memory_space<vmem>>, vector<1x2x1xf32>
    %1459 = vector.shape_cast %1458 : vector<1x2x1xf32> to vector<2x1xf32>
    %1460 = vector.extract_strided_slice %1450 {offsets = [0, 0], sizes = [2, 32], strides = [1, 1]} : vector<2x128xf32> to vector<2x32xf32>
    %1461 = arith.negf %1460 : vector<2x32xf32>
    %1462 = math.exp %1461 : vector<2x32xf32>
    %cst_418 = arith.constant 1.000000e+00 : f32
    %1463 = vector.broadcast %cst_418 : f32 to vector<2x32xf32>
    %1464 = arith.addf %1463, %1462 : vector<2x32xf32>
    %1465 = arith.divf %1463, %1464 : vector<2x32xf32>
    %1466 = vector.extract_strided_slice %1450 {offsets = [0, 32], sizes = [2, 32], strides = [1, 1]} : vector<2x128xf32> to vector<2x32xf32>
    %1467 = arith.negf %1466 : vector<2x32xf32>
    %1468 = math.exp %1467 : vector<2x32xf32>
    %cst_419 = arith.constant 1.000000e+00 : f32
    %1469 = vector.broadcast %cst_419 : f32 to vector<2x32xf32>
    %1470 = arith.addf %1469, %1468 : vector<2x32xf32>
    %1471 = arith.divf %1469, %1470 : vector<2x32xf32>
    %1472 = vector.extract_strided_slice %1450 {offsets = [0, 64], sizes = [2, 32], strides = [1, 1]} : vector<2x128xf32> to vector<2x32xf32>
    %1473 = math.tanh %1472 : vector<2x32xf32>
    %1474 = vector.extract_strided_slice %1450 {offsets = [0, 96], sizes = [2, 32], strides = [1, 1]} : vector<2x128xf32> to vector<2x32xf32>
    %1475 = arith.negf %1474 : vector<2x32xf32>
    %1476 = math.exp %1475 : vector<2x32xf32>
    %cst_420 = arith.constant 1.000000e+00 : f32
    %1477 = vector.broadcast %cst_420 : f32 to vector<2x32xf32>
    %1478 = arith.addf %1477, %1476 : vector<2x32xf32>
    %1479 = arith.divf %1477, %1478 : vector<2x32xf32>
    %1480 = arith.mulf %1471, %1390 : vector<2x32xf32>
    %1481 = arith.mulf %1465, %1473 : vector<2x32xf32>
    %1482 = arith.addf %1480, %1481 : vector<2x32xf32>
    %1483 = math.tanh %1482 : vector<2x32xf32>
    %1484 = arith.mulf %1479, %1483 : vector<2x32xf32>
    %1485 = vector.broadcast %1459 : vector<2x1xf32> to vector<2x32xf32>
    %1486 = arith.mulf %1485, %1484 : vector<2x32xf32>
    %cst_421 = arith.constant 1.000000e+00 : f32
    %1487 = vector.broadcast %cst_421 : f32 to vector<2x1xf32>
    %1488 = arith.subf %1487, %1459 : vector<2x1xf32>
    %1489 = vector.broadcast %1488 : vector<2x1xf32> to vector<2x32xf32>
    %1490 = arith.mulf %1489, %1383 : vector<2x32xf32>
    %1491 = arith.addf %1486, %1490 : vector<2x32xf32>
    %1492 = vector.broadcast %1459 : vector<2x1xf32> to vector<2x32xf32>
    %1493 = arith.mulf %1492, %1482 : vector<2x32xf32>
    %cst_422 = arith.constant 1.000000e+00 : f32
    %1494 = vector.broadcast %cst_422 : f32 to vector<2x1xf32>
    %1495 = arith.subf %1494, %1459 : vector<2x1xf32>
    %1496 = vector.broadcast %1495 : vector<2x1xf32> to vector<2x32xf32>
    %1497 = arith.mulf %1496, %1390 : vector<2x32xf32>
    %1498 = arith.addf %1493, %1497 : vector<2x32xf32>
    %1499 = vector.broadcast %1459 : vector<2x1xf32> to vector<2x32xf32>
    %1500 = arith.mulf %1499, %1484 : vector<2x32xf32>
    %1501 = arith.index_cast %c13_i32 : i32 to index
    %c0_423 = arith.constant 0 : index
    %c0_424 = arith.constant 0 : index
    %1502 = vector.load %arg3[%1501, %c0_423, %c0_424] : memref<16x2x1xf32, #tpu.memory_space<vmem>>, vector<1x2x1xf32>
    %1503 = vector.shape_cast %1502 : vector<1x2x1xf32> to vector<2x1xf32>
    %1504 = vector.extract_strided_slice %1456 {offsets = [0, 0], sizes = [2, 32], strides = [1, 1]} : vector<2x128xf32> to vector<2x32xf32>
    %1505 = arith.negf %1504 : vector<2x32xf32>
    %1506 = math.exp %1505 : vector<2x32xf32>
    %cst_425 = arith.constant 1.000000e+00 : f32
    %1507 = vector.broadcast %cst_425 : f32 to vector<2x32xf32>
    %1508 = arith.addf %1507, %1506 : vector<2x32xf32>
    %1509 = arith.divf %1507, %1508 : vector<2x32xf32>
    %1510 = vector.extract_strided_slice %1456 {offsets = [0, 32], sizes = [2, 32], strides = [1, 1]} : vector<2x128xf32> to vector<2x32xf32>
    %1511 = arith.negf %1510 : vector<2x32xf32>
    %1512 = math.exp %1511 : vector<2x32xf32>
    %cst_426 = arith.constant 1.000000e+00 : f32
    %1513 = vector.broadcast %cst_426 : f32 to vector<2x32xf32>
    %1514 = arith.addf %1513, %1512 : vector<2x32xf32>
    %1515 = arith.divf %1513, %1514 : vector<2x32xf32>
    %1516 = vector.extract_strided_slice %1456 {offsets = [0, 64], sizes = [2, 32], strides = [1, 1]} : vector<2x128xf32> to vector<2x32xf32>
    %1517 = math.tanh %1516 : vector<2x32xf32>
    %1518 = vector.extract_strided_slice %1456 {offsets = [0, 96], sizes = [2, 32], strides = [1, 1]} : vector<2x128xf32> to vector<2x32xf32>
    %1519 = arith.negf %1518 : vector<2x32xf32>
    %1520 = math.exp %1519 : vector<2x32xf32>
    %cst_427 = arith.constant 1.000000e+00 : f32
    %1521 = vector.broadcast %cst_427 : f32 to vector<2x32xf32>
    %1522 = arith.addf %1521, %1520 : vector<2x32xf32>
    %1523 = arith.divf %1521, %1522 : vector<2x32xf32>
    %1524 = arith.mulf %1515, %1434 : vector<2x32xf32>
    %1525 = arith.mulf %1509, %1517 : vector<2x32xf32>
    %1526 = arith.addf %1524, %1525 : vector<2x32xf32>
    %1527 = math.tanh %1526 : vector<2x32xf32>
    %1528 = arith.mulf %1523, %1527 : vector<2x32xf32>
    %1529 = vector.broadcast %1503 : vector<2x1xf32> to vector<2x32xf32>
    %1530 = arith.mulf %1529, %1528 : vector<2x32xf32>
    %cst_428 = arith.constant 1.000000e+00 : f32
    %1531 = vector.broadcast %cst_428 : f32 to vector<2x1xf32>
    %1532 = arith.subf %1531, %1503 : vector<2x1xf32>
    %1533 = vector.broadcast %1532 : vector<2x1xf32> to vector<2x32xf32>
    %1534 = arith.mulf %1533, %1427 : vector<2x32xf32>
    %1535 = arith.addf %1530, %1534 : vector<2x32xf32>
    %1536 = vector.broadcast %1503 : vector<2x1xf32> to vector<2x32xf32>
    %1537 = arith.mulf %1536, %1526 : vector<2x32xf32>
    %cst_429 = arith.constant 1.000000e+00 : f32
    %1538 = vector.broadcast %cst_429 : f32 to vector<2x1xf32>
    %1539 = arith.subf %1538, %1503 : vector<2x1xf32>
    %1540 = vector.broadcast %1539 : vector<2x1xf32> to vector<2x32xf32>
    %1541 = arith.mulf %1540, %1434 : vector<2x32xf32>
    %1542 = arith.addf %1537, %1541 : vector<2x32xf32>
    %1543 = vector.broadcast %1503 : vector<2x1xf32> to vector<2x32xf32>
    %1544 = arith.mulf %1543, %1528 : vector<2x32xf32>
    %1545 = arith.index_cast %c13_i32 : i32 to index
    %c0_430 = arith.constant 0 : index
    %c0_431 = arith.constant 0 : index
    %1546 = vector.load %arg10[%1545, %c0_430, %c0_431] : memref<16x2x32xf32, #tpu.memory_space<vmem>>, vector<1x2x32xf32>
    %1547 = vector.shape_cast %1546 : vector<1x2x32xf32> to vector<2x32xf32>
    %1548 = vector.shape_cast %1500 : vector<2x32xf32> to vector<1x2x32xf32>
    tpu.vector_store %arg10[%1545, %c0_430, %c0_431], %1548 {strides = array<i32>} : memref<16x2x32xf32, #tpu.memory_space<vmem>>, vector<1x2x32xf32>,
    %1549 = arith.index_cast %c13_i32 : i32 to index
    %c0_432 = arith.constant 0 : index
    %c0_433 = arith.constant 0 : index
    %1550 = vector.load %arg11[%1549, %c0_432, %c0_433] : memref<16x2x32xf32, #tpu.memory_space<vmem>>, vector<1x2x32xf32>
    %1551 = vector.shape_cast %1550 : vector<1x2x32xf32> to vector<2x32xf32>
    %1552 = vector.shape_cast %1544 : vector<2x32xf32> to vector<1x2x32xf32>
    tpu.vector_store %arg11[%1549, %c0_432, %c0_433], %1552 {strides = array<i32>} : memref<16x2x32xf32, #tpu.memory_space<vmem>>, vector<1x2x32xf32>,
    %c14_i32 = arith.constant 14 : i32
    %1553 = arith.index_cast %c14_i32 : i32 to index
    %c0_434 = arith.constant 0 : index
    %c0_435 = arith.constant 0 : index
    %1554 = vector.load %arg14[%1553, %c0_434, %c0_435] : memref<16x2x128xf32, #tpu.memory_space<vmem>>, vector<1x2x128xf32>
    %1555 = vector.shape_cast %1554 : vector<1x2x128xf32> to vector<2x128xf32>
    %c0_436 = arith.constant 0 : index
    %c0_437 = arith.constant 0 : index
    %1556 = vector.load %arg6[%c0_436, %c0_437] : memref<32x128xf32, #tpu.memory_space<vmem>>, vector<32x128xf32>
    %cst_438 = arith.constant dense<0.000000e+00> : vector<2x128xf32>
    %1557 = tpu.matmul %1491, %1556, %cst_438 {dimension_numbers = #tpu.dot_dimension_numbers<[1], [0], [0], [1], [0, 0, 1, 1], [], []>} : vector<2x32xf32>, vector<32x128xf32>, vector<2x128xf32> -> vector<2x128xf32>
    %1558 = arith.addf %1555, %1557 : vector<2x128xf32>
    %1559 = arith.index_cast %c14_i32 : i32 to index
    %c0_439 = arith.constant 0 : index
    %c0_440 = arith.constant 0 : index
    %1560 = vector.load %arg15[%1559, %c0_439, %c0_440] : memref<16x2x128xf32, #tpu.memory_space<vmem>>, vector<1x2x128xf32>
    %1561 = vector.shape_cast %1560 : vector<1x2x128xf32> to vector<2x128xf32>
    %c0_441 = arith.constant 0 : index
    %c0_442 = arith.constant 0 : index
    %1562 = vector.load %arg7[%c0_441, %c0_442] : memref<32x128xf32, #tpu.memory_space<vmem>>, vector<32x128xf32>
    %cst_443 = arith.constant dense<0.000000e+00> : vector<2x128xf32>
    %1563 = tpu.matmul %1535, %1562, %cst_443 {dimension_numbers = #tpu.dot_dimension_numbers<[1], [0], [0], [1], [0, 0, 1, 1], [], []>} : vector<2x32xf32>, vector<32x128xf32>, vector<2x128xf32> -> vector<2x128xf32>
    %1564 = arith.addf %1561, %1563 : vector<2x128xf32>
    %1565 = arith.index_cast %c14_i32 : i32 to index
    %c0_444 = arith.constant 0 : index
    %c0_445 = arith.constant 0 : index
    %1566 = vector.load %arg2[%1565, %c0_444, %c0_445] : memref<16x2x1xf32, #tpu.memory_space<vmem>>, vector<1x2x1xf32>
    %1567 = vector.shape_cast %1566 : vector<1x2x1xf32> to vector<2x1xf32>
    %1568 = vector.extract_strided_slice %1558 {offsets = [0, 0], sizes = [2, 32], strides = [1, 1]} : vector<2x128xf32> to vector<2x32xf32>
    %1569 = arith.negf %1568 : vector<2x32xf32>
    %1570 = math.exp %1569 : vector<2x32xf32>
    %cst_446 = arith.constant 1.000000e+00 : f32
    %1571 = vector.broadcast %cst_446 : f32 to vector<2x32xf32>
    %1572 = arith.addf %1571, %1570 : vector<2x32xf32>
    %1573 = arith.divf %1571, %1572 : vector<2x32xf32>
    %1574 = vector.extract_strided_slice %1558 {offsets = [0, 32], sizes = [2, 32], strides = [1, 1]} : vector<2x128xf32> to vector<2x32xf32>
    %1575 = arith.negf %1574 : vector<2x32xf32>
    %1576 = math.exp %1575 : vector<2x32xf32>
    %cst_447 = arith.constant 1.000000e+00 : f32
    %1577 = vector.broadcast %cst_447 : f32 to vector<2x32xf32>
    %1578 = arith.addf %1577, %1576 : vector<2x32xf32>
    %1579 = arith.divf %1577, %1578 : vector<2x32xf32>
    %1580 = vector.extract_strided_slice %1558 {offsets = [0, 64], sizes = [2, 32], strides = [1, 1]} : vector<2x128xf32> to vector<2x32xf32>
    %1581 = math.tanh %1580 : vector<2x32xf32>
    %1582 = vector.extract_strided_slice %1558 {offsets = [0, 96], sizes = [2, 32], strides = [1, 1]} : vector<2x128xf32> to vector<2x32xf32>
    %1583 = arith.negf %1582 : vector<2x32xf32>
    %1584 = math.exp %1583 : vector<2x32xf32>
    %cst_448 = arith.constant 1.000000e+00 : f32
    %1585 = vector.broadcast %cst_448 : f32 to vector<2x32xf32>
    %1586 = arith.addf %1585, %1584 : vector<2x32xf32>
    %1587 = arith.divf %1585, %1586 : vector<2x32xf32>
    %1588 = arith.mulf %1579, %1498 : vector<2x32xf32>
    %1589 = arith.mulf %1573, %1581 : vector<2x32xf32>
    %1590 = arith.addf %1588, %1589 : vector<2x32xf32>
    %1591 = math.tanh %1590 : vector<2x32xf32>
    %1592 = arith.mulf %1587, %1591 : vector<2x32xf32>
    %1593 = vector.broadcast %1567 : vector<2x1xf32> to vector<2x32xf32>
    %1594 = arith.mulf %1593, %1592 : vector<2x32xf32>
    %cst_449 = arith.constant 1.000000e+00 : f32
    %1595 = vector.broadcast %cst_449 : f32 to vector<2x1xf32>
    %1596 = arith.subf %1595, %1567 : vector<2x1xf32>
    %1597 = vector.broadcast %1596 : vector<2x1xf32> to vector<2x32xf32>
    %1598 = arith.mulf %1597, %1491 : vector<2x32xf32>
    %1599 = arith.addf %1594, %1598 : vector<2x32xf32>
    %1600 = vector.broadcast %1567 : vector<2x1xf32> to vector<2x32xf32>
    %1601 = arith.mulf %1600, %1590 : vector<2x32xf32>
    %cst_450 = arith.constant 1.000000e+00 : f32
    %1602 = vector.broadcast %cst_450 : f32 to vector<2x1xf32>
    %1603 = arith.subf %1602, %1567 : vector<2x1xf32>
    %1604 = vector.broadcast %1603 : vector<2x1xf32> to vector<2x32xf32>
    %1605 = arith.mulf %1604, %1498 : vector<2x32xf32>
    %1606 = arith.addf %1601, %1605 : vector<2x32xf32>
    %1607 = vector.broadcast %1567 : vector<2x1xf32> to vector<2x32xf32>
    %1608 = arith.mulf %1607, %1592 : vector<2x32xf32>
    %1609 = arith.index_cast %c14_i32 : i32 to index
    %c0_451 = arith.constant 0 : index
    %c0_452 = arith.constant 0 : index
    %1610 = vector.load %arg3[%1609, %c0_451, %c0_452] : memref<16x2x1xf32, #tpu.memory_space<vmem>>, vector<1x2x1xf32>
    %1611 = vector.shape_cast %1610 : vector<1x2x1xf32> to vector<2x1xf32>
    %1612 = vector.extract_strided_slice %1564 {offsets = [0, 0], sizes = [2, 32], strides = [1, 1]} : vector<2x128xf32> to vector<2x32xf32>
    %1613 = arith.negf %1612 : vector<2x32xf32>
    %1614 = math.exp %1613 : vector<2x32xf32>
    %cst_453 = arith.constant 1.000000e+00 : f32
    %1615 = vector.broadcast %cst_453 : f32 to vector<2x32xf32>
    %1616 = arith.addf %1615, %1614 : vector<2x32xf32>
    %1617 = arith.divf %1615, %1616 : vector<2x32xf32>
    %1618 = vector.extract_strided_slice %1564 {offsets = [0, 32], sizes = [2, 32], strides = [1, 1]} : vector<2x128xf32> to vector<2x32xf32>
    %1619 = arith.negf %1618 : vector<2x32xf32>
    %1620 = math.exp %1619 : vector<2x32xf32>
    %cst_454 = arith.constant 1.000000e+00 : f32
    %1621 = vector.broadcast %cst_454 : f32 to vector<2x32xf32>
    %1622 = arith.addf %1621, %1620 : vector<2x32xf32>
    %1623 = arith.divf %1621, %1622 : vector<2x32xf32>
    %1624 = vector.extract_strided_slice %1564 {offsets = [0, 64], sizes = [2, 32], strides = [1, 1]} : vector<2x128xf32> to vector<2x32xf32>
    %1625 = math.tanh %1624 : vector<2x32xf32>
    %1626 = vector.extract_strided_slice %1564 {offsets = [0, 96], sizes = [2, 32], strides = [1, 1]} : vector<2x128xf32> to vector<2x32xf32>
    %1627 = arith.negf %1626 : vector<2x32xf32>
    %1628 = math.exp %1627 : vector<2x32xf32>
    %cst_455 = arith.constant 1.000000e+00 : f32
    %1629 = vector.broadcast %cst_455 : f32 to vector<2x32xf32>
    %1630 = arith.addf %1629, %1628 : vector<2x32xf32>
    %1631 = arith.divf %1629, %1630 : vector<2x32xf32>
    %1632 = arith.mulf %1623, %1542 : vector<2x32xf32>
    %1633 = arith.mulf %1617, %1625 : vector<2x32xf32>
    %1634 = arith.addf %1632, %1633 : vector<2x32xf32>
    %1635 = math.tanh %1634 : vector<2x32xf32>
    %1636 = arith.mulf %1631, %1635 : vector<2x32xf32>
    %1637 = vector.broadcast %1611 : vector<2x1xf32> to vector<2x32xf32>
    %1638 = arith.mulf %1637, %1636 : vector<2x32xf32>
    %cst_456 = arith.constant 1.000000e+00 : f32
    %1639 = vector.broadcast %cst_456 : f32 to vector<2x1xf32>
    %1640 = arith.subf %1639, %1611 : vector<2x1xf32>
    %1641 = vector.broadcast %1640 : vector<2x1xf32> to vector<2x32xf32>
    %1642 = arith.mulf %1641, %1535 : vector<2x32xf32>
    %1643 = arith.addf %1638, %1642 : vector<2x32xf32>
    %1644 = vector.broadcast %1611 : vector<2x1xf32> to vector<2x32xf32>
    %1645 = arith.mulf %1644, %1634 : vector<2x32xf32>
    %cst_457 = arith.constant 1.000000e+00 : f32
    %1646 = vector.broadcast %cst_457 : f32 to vector<2x1xf32>
    %1647 = arith.subf %1646, %1611 : vector<2x1xf32>
    %1648 = vector.broadcast %1647 : vector<2x1xf32> to vector<2x32xf32>
    %1649 = arith.mulf %1648, %1542 : vector<2x32xf32>
    %1650 = arith.addf %1645, %1649 : vector<2x32xf32>
    %1651 = vector.broadcast %1611 : vector<2x1xf32> to vector<2x32xf32>
    %1652 = arith.mulf %1651, %1636 : vector<2x32xf32>
    %1653 = arith.index_cast %c14_i32 : i32 to index
    %c0_458 = arith.constant 0 : index
    %c0_459 = arith.constant 0 : index
    %1654 = vector.load %arg10[%1653, %c0_458, %c0_459] : memref<16x2x32xf32, #tpu.memory_space<vmem>>, vector<1x2x32xf32>
    %1655 = vector.shape_cast %1654 : vector<1x2x32xf32> to vector<2x32xf32>
    %1656 = vector.shape_cast %1608 : vector<2x32xf32> to vector<1x2x32xf32>
    tpu.vector_store %arg10[%1653, %c0_458, %c0_459], %1656 {strides = array<i32>} : memref<16x2x32xf32, #tpu.memory_space<vmem>>, vector<1x2x32xf32>,
    %1657 = arith.index_cast %c14_i32 : i32 to index
    %c0_460 = arith.constant 0 : index
    %c0_461 = arith.constant 0 : index
    %1658 = vector.load %arg11[%1657, %c0_460, %c0_461] : memref<16x2x32xf32, #tpu.memory_space<vmem>>, vector<1x2x32xf32>
    %1659 = vector.shape_cast %1658 : vector<1x2x32xf32> to vector<2x32xf32>
    %1660 = vector.shape_cast %1652 : vector<2x32xf32> to vector<1x2x32xf32>
    tpu.vector_store %arg11[%1657, %c0_460, %c0_461], %1660 {strides = array<i32>} : memref<16x2x32xf32, #tpu.memory_space<vmem>>, vector<1x2x32xf32>,
    %c15_i32 = arith.constant 15 : i32
    %1661 = arith.index_cast %c15_i32 : i32 to index
    %c0_462 = arith.constant 0 : index
    %c0_463 = arith.constant 0 : index
    %1662 = vector.load %arg14[%1661, %c0_462, %c0_463] : memref<16x2x128xf32, #tpu.memory_space<vmem>>, vector<1x2x128xf32>
    %1663 = vector.shape_cast %1662 : vector<1x2x128xf32> to vector<2x128xf32>
    %c0_464 = arith.constant 0 : index
    %c0_465 = arith.constant 0 : index
    %1664 = vector.load %arg6[%c0_464, %c0_465] : memref<32x128xf32, #tpu.memory_space<vmem>>, vector<32x128xf32>
    %cst_466 = arith.constant dense<0.000000e+00> : vector<2x128xf32>
    %1665 = tpu.matmul %1599, %1664, %cst_466 {dimension_numbers = #tpu.dot_dimension_numbers<[1], [0], [0], [1], [0, 0, 1, 1], [], []>} : vector<2x32xf32>, vector<32x128xf32>, vector<2x128xf32> -> vector<2x128xf32>
    %1666 = arith.addf %1663, %1665 : vector<2x128xf32>
    %1667 = arith.index_cast %c15_i32 : i32 to index
    %c0_467 = arith.constant 0 : index
    %c0_468 = arith.constant 0 : index
    %1668 = vector.load %arg15[%1667, %c0_467, %c0_468] : memref<16x2x128xf32, #tpu.memory_space<vmem>>, vector<1x2x128xf32>
    %1669 = vector.shape_cast %1668 : vector<1x2x128xf32> to vector<2x128xf32>
    %c0_469 = arith.constant 0 : index
    %c0_470 = arith.constant 0 : index
    %1670 = vector.load %arg7[%c0_469, %c0_470] : memref<32x128xf32, #tpu.memory_space<vmem>>, vector<32x128xf32>
    %cst_471 = arith.constant dense<0.000000e+00> : vector<2x128xf32>
    %1671 = tpu.matmul %1643, %1670, %cst_471 {dimension_numbers = #tpu.dot_dimension_numbers<[1], [0], [0], [1], [0, 0, 1, 1], [], []>} : vector<2x32xf32>, vector<32x128xf32>, vector<2x128xf32> -> vector<2x128xf32>
    %1672 = arith.addf %1669, %1671 : vector<2x128xf32>
    %1673 = arith.index_cast %c15_i32 : i32 to index
    %c0_472 = arith.constant 0 : index
    %c0_473 = arith.constant 0 : index
    %1674 = vector.load %arg2[%1673, %c0_472, %c0_473] : memref<16x2x1xf32, #tpu.memory_space<vmem>>, vector<1x2x1xf32>
    %1675 = vector.shape_cast %1674 : vector<1x2x1xf32> to vector<2x1xf32>
    %1676 = vector.extract_strided_slice %1666 {offsets = [0, 0], sizes = [2, 32], strides = [1, 1]} : vector<2x128xf32> to vector<2x32xf32>
    %1677 = arith.negf %1676 : vector<2x32xf32>
    %1678 = math.exp %1677 : vector<2x32xf32>
    %cst_474 = arith.constant 1.000000e+00 : f32
    %1679 = vector.broadcast %cst_474 : f32 to vector<2x32xf32>
    %1680 = arith.addf %1679, %1678 : vector<2x32xf32>
    %1681 = arith.divf %1679, %1680 : vector<2x32xf32>
    %1682 = vector.extract_strided_slice %1666 {offsets = [0, 32], sizes = [2, 32], strides = [1, 1]} : vector<2x128xf32> to vector<2x32xf32>
    %1683 = arith.negf %1682 : vector<2x32xf32>
    %1684 = math.exp %1683 : vector<2x32xf32>
    %cst_475 = arith.constant 1.000000e+00 : f32
    %1685 = vector.broadcast %cst_475 : f32 to vector<2x32xf32>
    %1686 = arith.addf %1685, %1684 : vector<2x32xf32>
    %1687 = arith.divf %1685, %1686 : vector<2x32xf32>
    %1688 = vector.extract_strided_slice %1666 {offsets = [0, 64], sizes = [2, 32], strides = [1, 1]} : vector<2x128xf32> to vector<2x32xf32>
    %1689 = math.tanh %1688 : vector<2x32xf32>
    %1690 = vector.extract_strided_slice %1666 {offsets = [0, 96], sizes = [2, 32], strides = [1, 1]} : vector<2x128xf32> to vector<2x32xf32>
    %1691 = arith.negf %1690 : vector<2x32xf32>
    %1692 = math.exp %1691 : vector<2x32xf32>
    %cst_476 = arith.constant 1.000000e+00 : f32
    %1693 = vector.broadcast %cst_476 : f32 to vector<2x32xf32>
    %1694 = arith.addf %1693, %1692 : vector<2x32xf32>
    %1695 = arith.divf %1693, %1694 : vector<2x32xf32>
    %1696 = arith.mulf %1687, %1606 : vector<2x32xf32>
    %1697 = arith.mulf %1681, %1689 : vector<2x32xf32>
    %1698 = arith.addf %1696, %1697 : vector<2x32xf32>
    %1699 = math.tanh %1698 : vector<2x32xf32>
    %1700 = arith.mulf %1695, %1699 : vector<2x32xf32>
    %1701 = vector.broadcast %1675 : vector<2x1xf32> to vector<2x32xf32>
    %1702 = arith.mulf %1701, %1700 : vector<2x32xf32>
    %cst_477 = arith.constant 1.000000e+00 : f32
    %1703 = vector.broadcast %cst_477 : f32 to vector<2x1xf32>
    %1704 = arith.subf %1703, %1675 : vector<2x1xf32>
    %1705 = vector.broadcast %1704 : vector<2x1xf32> to vector<2x32xf32>
    %1706 = arith.mulf %1705, %1599 : vector<2x32xf32>
    %1707 = arith.addf %1702, %1706 : vector<2x32xf32>
    %1708 = vector.broadcast %1675 : vector<2x1xf32> to vector<2x32xf32>
    %1709 = arith.mulf %1708, %1698 : vector<2x32xf32>
    %cst_478 = arith.constant 1.000000e+00 : f32
    %1710 = vector.broadcast %cst_478 : f32 to vector<2x1xf32>
    %1711 = arith.subf %1710, %1675 : vector<2x1xf32>
    %1712 = vector.broadcast %1711 : vector<2x1xf32> to vector<2x32xf32>
    %1713 = arith.mulf %1712, %1606 : vector<2x32xf32>
    %1714 = arith.addf %1709, %1713 : vector<2x32xf32>
    %1715 = vector.broadcast %1675 : vector<2x1xf32> to vector<2x32xf32>
    %1716 = arith.mulf %1715, %1700 : vector<2x32xf32>
    %1717 = arith.index_cast %c15_i32 : i32 to index
    %c0_479 = arith.constant 0 : index
    %c0_480 = arith.constant 0 : index
    %1718 = vector.load %arg3[%1717, %c0_479, %c0_480] : memref<16x2x1xf32, #tpu.memory_space<vmem>>, vector<1x2x1xf32>
    %1719 = vector.shape_cast %1718 : vector<1x2x1xf32> to vector<2x1xf32>
    %1720 = vector.extract_strided_slice %1672 {offsets = [0, 0], sizes = [2, 32], strides = [1, 1]} : vector<2x128xf32> to vector<2x32xf32>
    %1721 = arith.negf %1720 : vector<2x32xf32>
    %1722 = math.exp %1721 : vector<2x32xf32>
    %cst_481 = arith.constant 1.000000e+00 : f32
    %1723 = vector.broadcast %cst_481 : f32 to vector<2x32xf32>
    %1724 = arith.addf %1723, %1722 : vector<2x32xf32>
    %1725 = arith.divf %1723, %1724 : vector<2x32xf32>
    %1726 = vector.extract_strided_slice %1672 {offsets = [0, 32], sizes = [2, 32], strides = [1, 1]} : vector<2x128xf32> to vector<2x32xf32>
    %1727 = arith.negf %1726 : vector<2x32xf32>
    %1728 = math.exp %1727 : vector<2x32xf32>
    %cst_482 = arith.constant 1.000000e+00 : f32
    %1729 = vector.broadcast %cst_482 : f32 to vector<2x32xf32>
    %1730 = arith.addf %1729, %1728 : vector<2x32xf32>
    %1731 = arith.divf %1729, %1730 : vector<2x32xf32>
    %1732 = vector.extract_strided_slice %1672 {offsets = [0, 64], sizes = [2, 32], strides = [1, 1]} : vector<2x128xf32> to vector<2x32xf32>
    %1733 = math.tanh %1732 : vector<2x32xf32>
    %1734 = vector.extract_strided_slice %1672 {offsets = [0, 96], sizes = [2, 32], strides = [1, 1]} : vector<2x128xf32> to vector<2x32xf32>
    %1735 = arith.negf %1734 : vector<2x32xf32>
    %1736 = math.exp %1735 : vector<2x32xf32>
    %cst_483 = arith.constant 1.000000e+00 : f32
    %1737 = vector.broadcast %cst_483 : f32 to vector<2x32xf32>
    %1738 = arith.addf %1737, %1736 : vector<2x32xf32>
    %1739 = arith.divf %1737, %1738 : vector<2x32xf32>
    %1740 = arith.mulf %1731, %1650 : vector<2x32xf32>
    %1741 = arith.mulf %1725, %1733 : vector<2x32xf32>
    %1742 = arith.addf %1740, %1741 : vector<2x32xf32>
    %1743 = math.tanh %1742 : vector<2x32xf32>
    %1744 = arith.mulf %1739, %1743 : vector<2x32xf32>
    %1745 = vector.broadcast %1719 : vector<2x1xf32> to vector<2x32xf32>
    %1746 = arith.mulf %1745, %1744 : vector<2x32xf32>
    %cst_484 = arith.constant 1.000000e+00 : f32
    %1747 = vector.broadcast %cst_484 : f32 to vector<2x1xf32>
    %1748 = arith.subf %1747, %1719 : vector<2x1xf32>
    %1749 = vector.broadcast %1748 : vector<2x1xf32> to vector<2x32xf32>
    %1750 = arith.mulf %1749, %1643 : vector<2x32xf32>
    %1751 = arith.addf %1746, %1750 : vector<2x32xf32>
    %1752 = vector.broadcast %1719 : vector<2x1xf32> to vector<2x32xf32>
    %1753 = arith.mulf %1752, %1742 : vector<2x32xf32>
    %cst_485 = arith.constant 1.000000e+00 : f32
    %1754 = vector.broadcast %cst_485 : f32 to vector<2x1xf32>
    %1755 = arith.subf %1754, %1719 : vector<2x1xf32>
    %1756 = vector.broadcast %1755 : vector<2x1xf32> to vector<2x32xf32>
    %1757 = arith.mulf %1756, %1650 : vector<2x32xf32>
    %1758 = arith.addf %1753, %1757 : vector<2x32xf32>
    %1759 = vector.broadcast %1719 : vector<2x1xf32> to vector<2x32xf32>
    %1760 = arith.mulf %1759, %1744 : vector<2x32xf32>
    %1761 = arith.index_cast %c15_i32 : i32 to index
    %c0_486 = arith.constant 0 : index
    %c0_487 = arith.constant 0 : index
    %1762 = vector.load %arg10[%1761, %c0_486, %c0_487] : memref<16x2x32xf32, #tpu.memory_space<vmem>>, vector<1x2x32xf32>
    %1763 = vector.shape_cast %1762 : vector<1x2x32xf32> to vector<2x32xf32>
    %1764 = vector.shape_cast %1716 : vector<2x32xf32> to vector<1x2x32xf32>
    tpu.vector_store %arg10[%1761, %c0_486, %c0_487], %1764 {strides = array<i32>} : memref<16x2x32xf32, #tpu.memory_space<vmem>>, vector<1x2x32xf32>,
    %1765 = arith.index_cast %c15_i32 : i32 to index
    %c0_488 = arith.constant 0 : index
    %c0_489 = arith.constant 0 : index
    %1766 = vector.load %arg11[%1765, %c0_488, %c0_489] : memref<16x2x32xf32, #tpu.memory_space<vmem>>, vector<1x2x32xf32>
    %1767 = vector.shape_cast %1766 : vector<1x2x32xf32> to vector<2x32xf32>
    %1768 = vector.shape_cast %1760 : vector<2x32xf32> to vector<1x2x32xf32>
    tpu.vector_store %arg11[%1765, %c0_488, %c0_489], %1768 {strides = array<i32>} : memref<16x2x32xf32, #tpu.memory_space<vmem>>, vector<1x2x32xf32>,
    %c16_i32 = arith.constant 16 : i32
    %c0_490 = arith.constant 0 : index
    %c0_491 = arith.constant 0 : index
    %c0_492 = arith.constant 0 : index
    %1769 = vector.load %arg12[%c0_490, %c0_491, %c0_492] : memref<2x2x32xf32, #tpu.memory_space<vmem>>, vector<1x2x32xf32>
    %1770 = vector.shape_cast %1769 : vector<1x2x32xf32> to vector<2x32xf32>
    %1771 = vector.shape_cast %1707 : vector<2x32xf32> to vector<1x2x32xf32>
    tpu.vector_store %arg12[%c0_490, %c0_491, %c0_492], %1771 {strides = array<i32>} : memref<2x2x32xf32, #tpu.memory_space<vmem>>, vector<1x2x32xf32>,
    %c1_493 = arith.constant 1 : index
    %c0_494 = arith.constant 0 : index
    %c0_495 = arith.constant 0 : index
    %1772 = vector.load %arg12[%c1_493, %c0_494, %c0_495] : memref<2x2x32xf32, #tpu.memory_space<vmem>>, vector<1x2x32xf32>
    %1773 = vector.shape_cast %1772 : vector<1x2x32xf32> to vector<2x32xf32>
    %1774 = vector.shape_cast %1751 : vector<2x32xf32> to vector<1x2x32xf32>
    tpu.vector_store %arg12[%c1_493, %c0_494, %c0_495], %1774 {strides = array<i32>} : memref<2x2x32xf32, #tpu.memory_space<vmem>>, vector<1x2x32xf32>,
    %c0_496 = arith.constant 0 : index
    %c0_497 = arith.constant 0 : index
    %c0_498 = arith.constant 0 : index
    %1775 = vector.load %arg13[%c0_496, %c0_497, %c0_498] : memref<2x2x32xf32, #tpu.memory_space<vmem>>, vector<1x2x32xf32>
    %1776 = vector.shape_cast %1775 : vector<1x2x32xf32> to vector<2x32xf32>
    %1777 = vector.shape_cast %1714 : vector<2x32xf32> to vector<1x2x32xf32>
    tpu.vector_store %arg13[%c0_496, %c0_497, %c0_498], %1777 {strides = array<i32>} : memref<2x2x32xf32, #tpu.memory_space<vmem>>, vector<1x2x32xf32>,
    %c1_499 = arith.constant 1 : index
    %c0_500 = arith.constant 0 : index
    %c0_501 = arith.constant 0 : index
    %1778 = vector.load %arg13[%c1_499, %c0_500, %c0_501] : memref<2x2x32xf32, #tpu.memory_space<vmem>>, vector<1x2x32xf32>
    %1779 = vector.shape_cast %1778 : vector<1x2x32xf32> to vector<2x32xf32>
    %1780 = vector.shape_cast %1758 : vector<2x32xf32> to vector<1x2x32xf32>
    tpu.vector_store %arg13[%c1_499, %c0_500, %c0_501], %1780 {strides = array<i32>} : memref<2x2x32xf32, #tpu.memory_space<vmem>>, vector<1x2x32xf32>,
    return
  }
}

</mosaic_0001>

<llo_original>
// kernel: reverse
$region0: #{reverse}
  %s0 = inlined_call_operand.vmem [shape: f32[16,2], index: 0, kind: input, shape index: {}]
  %s1 = inlined_call_operand.vmem [shape: f32[16,2], index: 1, kind: output, shape index: {}]
  %v2 = vlaneseq
  %v3 = vsub.s32 15, %v2
  %4 = vset.pattern.permute.xlu0 %v3
  $region1: #{reverse} parent=0
    #allocation0 [shape = 'u8[4096]{0}', space=vmem, size = 0x1000, scoped, tag = 'operand span for operand 0']
    #allocation1 [shape = 'u8[1024]{0}', space=vmem, size = 0x400, scoped, tag = 'packed  for operand 0']
    #allocation2 [shape = 'u8[4096]{0}', space=vmem, size = 0x1000, scoped, tag = 'operand span for operand 1']
    #allocation3 [shape = 'u8[1024]{0}', space=vmem, size = 0x400, scoped, tag = 'packed  for operand 1']
    // Predicated region
    $region2: #{reverse} parent=1 // pred_check
      _
    $region3: #{reverse} parent=1 // pred_check_branch
      %6 = sbr.rel (0) target = $region5
    $region4: #{reverse} parent=1 // pred_region
      // Predicated region
      $region6: #{reverse} parent=4 // pred_check
        _
      $region7: #{reverse} parent=4 // pred_check_branch
        %8 = sbr.rel target = $region9
      $region8: #{reverse} parent=4 // pred_region
        // Predicated region
        $region21: #{reverse} parent=8 // pred_check
          _
        $region22: #{reverse} parent=8 // pred_check_branch
          %24 = sbr.rel (0) target = $region24
        $region23: #{reverse} parent=8 // pred_region
          %s26 = ssub.s32 4, 1
          loop: start=0, step=1, limit=1
          $region25: #{reverse} parent=23 // loop_pre_header
            _
          $region26: #{reverse} parent=23 // loop_header
            %s28 = sphi 0, %s32
            %p29 = scmp.ge.s32.totalorder %s28, 1
            %s33 = sphi %s0, %s0
            %s34 = sphi [#allocation1], [#allocation1]
          $region27: #{reverse} parent=23 // loop_header_branch
            %31 = sbr.rel (%p29) target = $region31
          $region28: #{reverse} parent=23 // loop_body
            %v35 = vld [vmem:[%s33] sm:%s26]
            %36 = vst [vmem:[%s34] sm:%s26] %v35
          $region29: #{reverse} parent=23 // loop_footer
            %s32 = sadd.s32 1, %s28
          $region30: #{reverse} parent=23 // loop_footer_branch
            %27 = sbr.rel target = $region26
          $region31: #{reverse} parent=23 // loop_exit
            _
        $region24: #{reverse} parent=8 // pred_fallthru
          _
      $region9: #{reverse} parent=4 // pred_fallthru
        _
      // Predicated region
      $region10: #{reverse} parent=4 // pred_check
        _
      $region11: #{reverse} parent=4 // pred_check_branch
        %10 = sbr.rel (0) target = $region13
      $region12: #{reverse} parent=4 // pred_region
        %s12 = ssub.s32 4, 1
        loop: start=0, step=1, limit=1
        $region14: #{reverse} parent=12 // loop_pre_header
          _
        $region15: #{reverse} parent=12 // loop_header
          %s14 = sphi 0, %s18
          %p15 = scmp.ge.s32.totalorder %s14, 1
          %s19 = sphi %s0, %s0
          %s20 = sphi [#allocation1], [#allocation1]
        $region16: #{reverse} parent=12 // loop_header_branch
          %17 = sbr.rel (%p15) target = $region20
        $region17: #{reverse} parent=12 // loop_body
          %v21 = vld [vmem:[%s19] sm:%s12]
          %22 = vst [vmem:[%s20] sm:%s12] %v21
        $region18: #{reverse} parent=12 // loop_footer
          %s18 = sadd.s32 1, %s14
        $region19: #{reverse} parent=12 // loop_footer_branch
          %13 = sbr.rel target = $region15
        $region20: #{reverse} parent=12 // loop_exit
          _
      $region13: #{reverse} parent=4 // pred_fallthru
        _
    $region5: #{reverse} parent=1 // pred_fallthru
      _
    %37 = vnop
    %s39 = ssub.s32 4, 1
    %v40 = vld [vmem:[#allocation1] sm:%s39]
    %41 = vst [vmem:[#allocation0] sm:%s39] %v40
    %v42 = vld [vmem:[#allocation0] sm:$0xff]
    %43 = vperm.xlu0 %4, %v42
    %v44 = vpop.permute.xlu0 %43
    %45 = vst [vmem:[#allocation2] sm:$0xff] %v44
    %s47 = ssub.s32 4, 1
    %v48 = vld [vmem:[#allocation2] sm:%s47]
    %s50 = ssub.s32 4, 1
    %51 = vst [vmem:[#allocation3] sm:%s50] %v48
    // Predicated region
    $region32: #{reverse} parent=1 // pred_check
      _
    $region33: #{reverse} parent=1 // pred_check_branch
      %53 = sbr.rel (0) target = $region35
    $region34: #{reverse} parent=1 // pred_region
      // Predicated region
      $region36: #{reverse} parent=34 // pred_check
        _
      $region37: #{reverse} parent=34 // pred_check_branch
        %55 = sbr.rel target = $region39
      $region38: #{reverse} parent=34 // pred_region
        // Predicated region
        $region51: #{reverse} parent=38 // pred_check
          _
        $region52: #{reverse} parent=38 // pred_check_branch
          %71 = sbr.rel (0) target = $region54
        $region53: #{reverse} parent=38 // pred_region
          %s73 = ssub.s32 4, 1
          loop: start=0, step=1, limit=1
          $region55: #{reverse} parent=53 // loop_pre_header
            _
          $region56: #{reverse} parent=53 // loop_header
            %s75 = sphi 0, %s79
            %p76 = scmp.ge.s32.totalorder %s75, 1
            %s80 = sphi [#allocation3], [#allocation3]
            %s81 = sphi %s1, %s1
          $region57: #{reverse} parent=53 // loop_header_branch
            %78 = sbr.rel (%p76) target = $region61
          $region58: #{reverse} parent=53 // loop_body
            %v82 = vld [vmem:[%s80] sm:%s73]
            %83 = vst [vmem:[%s81] sm:%s73] %v82
          $region59: #{reverse} parent=53 // loop_footer
            %s79 = sadd.s32 1, %s75
          $region60: #{reverse} parent=53 // loop_footer_branch
            %74 = sbr.rel target = $region56
          $region61: #{reverse} parent=53 // loop_exit
            _
        $region54: #{reverse} parent=38 // pred_fallthru
          _
      $region39: #{reverse} parent=34 // pred_fallthru
        _
      // Predicated region
      $region40: #{reverse} parent=34 // pred_check
        _
      $region41: #{reverse} parent=34 // pred_check_branch
        %57 = sbr.rel (0) target = $region43
      $region42: #{reverse} parent=34 // pred_region
        %s59 = ssub.s32 4, 1
        loop: start=0, step=1, limit=1
        $region44: #{reverse} parent=42 // loop_pre_header
          _
        $region45: #{reverse} parent=42 // loop_header
          %s61 = sphi 0, %s65
          %p62 = scmp.ge.s32.totalorder %s61, 1
          %s66 = sphi [#allocation3], [#allocation3]
          %s67 = sphi %s1, %s1
        $region46: #{reverse} parent=42 // loop_header_branch
          %64 = sbr.rel (%p62) target = $region50
        $region47: #{reverse} parent=42 // loop_body
          %v68 = vld [vmem:[%s66] sm:%s59]
          %69 = vst [vmem:[%s67] sm:%s59] %v68
        $region48: #{reverse} parent=42 // loop_footer
          %s65 = sadd.s32 1, %s61
        $region49: #{reverse} parent=42 // loop_footer_branch
          %60 = sbr.rel target = $region45
        $region50: #{reverse} parent=42 // loop_exit
          _
      $region43: #{reverse} parent=34 // pred_fallthru
        _
    $region35: #{reverse} parent=1 // pred_fallthru
      _
    %84 = vnop

// kernel: _lambda_.2
$region0: #{_lambda_.2}
  #allocation0 [shape = 'u32[]', space=smem, size = 0x4, offset = 0x4, fixed_abs, tag = 'smem constant byte address 0x4 - core index']
  #allocation1 [shape = 'u32[72,128]{1,0:T(1,128)}', space=vmem, size = 0x9000, scoped, tag = 'internal scratch']
  #allocation2 [shape = 'f32[16,2,128]{2,1,0:T(2,128)}', space=vmem, size = 0x4000, scoped, tag = 'scratch operand']
  #allocation3 [shape = 'f32[16,2,128]{2,1,0:T(2,128)}', space=vmem, size = 0x4000, scoped, tag = 'scratch operand']
  %s0 = inlined_call_operand.vmem [shape: f32[2,16,32], index: 0, kind: input, shape index: {}]
  %s1 = inlined_call_operand.vmem [shape: f32[2,16,32], index: 1, kind: input, shape index: {}]
  %s2 = inlined_call_operand.vmem [shape: f32[16,2,1], index: 2, kind: input, shape index: {}]
  %s3 = inlined_call_operand.vmem [shape: f32[16,2,1], index: 3, kind: input, shape index: {}]
  %s4 = inlined_call_operand.vmem [shape: f32[32,128], index: 4, kind: input, shape index: {}]
  %s5 = inlined_call_operand.vmem [shape: f32[32,128], index: 5, kind: input, shape index: {}]
  %s6 = inlined_call_operand.vmem [shape: f32[32,128], index: 6, kind: input, shape index: {}]
  %s7 = inlined_call_operand.vmem [shape: f32[32,128], index: 7, kind: input, shape index: {}]
  %s8 = inlined_call_operand.vmem [shape: f32[1,128], index: 8, kind: input, shape index: {}]
  %s9 = inlined_call_operand.vmem [shape: f32[1,128], index: 9, kind: input, shape index: {}]
  %s10 = inlined_call_operand.vmem [shape: f32[16,2,32], index: 10, kind: output, shape index: {0}]
  %s11 = inlined_call_operand.vmem [shape: f32[16,2,32], index: 11, kind: output, shape index: {1}]
  %s12 = inlined_call_operand.vmem [shape: f32[2,2,32], index: 12, kind: output, shape index: {2}]
  %s13 = inlined_call_operand.vmem [shape: f32[2,2,32], index: 13, kind: output, shape index: {3}]
  %14 = xla_tuple %s10, %s11, %s12, %s13
  %s15 = sld [smem:[#allocation0]]
  $region74: #{_lambda_.2} parent=0
    _
  %s17 = ssub.s32 1, %s15
  %s18 = scalar_select 0, %s17, %s15
  // Predicated region
  $region2: #{_lambda_.2} parent=0 // pred_check
    _
  $region3: #{_lambda_.2} parent=0 // pred_check_branch
    %20 = sbr.rel (0) target = $region5
  $region4: #{_lambda_.2} parent=0 // pred_region
    _
  $region5: #{_lambda_.2} parent=0 // pred_fallthru
    _
  // Predicated region
  $region6: #{_lambda_.2} parent=0 // pred_check
    _
  $region7: #{_lambda_.2} parent=0 // pred_check_branch
    %22 = sbr.rel (0) target = $region9
  $region8: #{_lambda_.2} parent=0 // pred_region
    _
  $region9: #{_lambda_.2} parent=0 // pred_fallthru
    _
  // Predicated region
  $region10: #{_lambda_.2} parent=0 // pred_check
    _
  $region11: #{_lambda_.2} parent=0 // pred_check_branch
    %24 = sbr.rel (0) target = $region13
  $region12: #{_lambda_.2} parent=0 // pred_region
    _
  $region13: #{_lambda_.2} parent=0 // pred_fallthru
    _
  // Predicated region
  $region14: #{_lambda_.2} parent=0 // pred_check
    _
  $region15: #{_lambda_.2} parent=0 // pred_check_branch
    %26 = sbr.rel (0) target = $region17
  $region16: #{_lambda_.2} parent=0 // pred_region
    _
  $region17: #{_lambda_.2} parent=0 // pred_fallthru
    _
  // Predicated region
  $region18: #{_lambda_.2} parent=0 // pred_check
    _
  $region19: #{_lambda_.2} parent=0 // pred_check_branch
    %28 = sbr.rel (0) target = $region21
  $region20: #{_lambda_.2} parent=0 // pred_region
    _
  $region21: #{_lambda_.2} parent=0 // pred_fallthru
    _
  // Predicated region
  $region22: #{_lambda_.2} parent=0 // pred_check
    _
  $region23: #{_lambda_.2} parent=0 // pred_check_branch
    %30 = sbr.rel (0) target = $region25
  $region24: #{_lambda_.2} parent=0 // pred_region
    _
  $region25: #{_lambda_.2} parent=0 // pred_fallthru
    _
  // Predicated region
  $region26: #{_lambda_.2} parent=0 // pred_check
    _
  $region27: #{_lambda_.2} parent=0 // pred_check_branch
    %32 = sbr.rel (0) target = $region29
  $region28: #{_lambda_.2} parent=0 // pred_region
    _
  $region29: #{_lambda_.2} parent=0 // pred_fallthru
    _
  // Predicated region
  $region30: #{_lambda_.2} parent=0 // pred_check
    _
  $region31: #{_lambda_.2} parent=0 // pred_check_branch
    %34 = sbr.rel (0) target = $region33
  $region32: #{_lambda_.2} parent=0 // pred_region
    _
  $region33: #{_lambda_.2} parent=0 // pred_fallthru
    _
  // Predicated region
  $region34: #{_lambda_.2} parent=0 // pred_check
    _
  $region35: #{_lambda_.2} parent=0 // pred_check_branch
    %36 = sbr.rel (0) target = $region37
  $region36: #{_lambda_.2} parent=0 // pred_region
    _
  $region37: #{_lambda_.2} parent=0 // pred_fallthru
    _
  // Predicated region
  $region38: #{_lambda_.2} parent=0 // pred_check
    _
  $region39: #{_lambda_.2} parent=0 // pred_check_branch
    %38 = sbr.rel (0) target = $region41
  $region40: #{_lambda_.2} parent=0 // pred_region
    _
  $region41: #{_lambda_.2} parent=0 // pred_fallthru
    _
  %v39 = vld [vmem:[%s0] sm:$0xff]
  %v40 = vld [vmem:[%s0 + $0x8] sm:$0xff]
  %v41 = vld [vmem:[%s4] sm:$0xff]
  %v42 = vld [vmem:[%s4 + $0x8] sm:$0xff]
  %v43 = vld [vmem:[%s4 + $0x10] sm:$0xff]
  %v44 = vld [vmem:[%s4 + $0x18] sm:$0xff]
  %v45 = vld [vmem:[%s8] sm:$0x1]
  %v47 = vperm.slane %v45, 0
  %vm49 = vcmask 261120
  %v51 = vsel %vm49, %v39, 0
  %v54 = vsel %vm49, %v40, 0
  %56 = vmatpush.msra.mxu0 0.0
  %57 = vmatpush.msra.mxu0 0.0
  %58 = vmatpush.msra.mxu0 0.0
  %59 = vmatpush.msra.mxu0 0.0
  %60 = vmatpush.msra.mxu0 0.0
  %61 = vmatpush.msra.mxu0 0.0
  %62 = vmatpush.msra.mxu0 0.0
  %63 = vmatpush.msra.mxu0 0.0
  %64 = vmatpush.msra.mxu0 0.0
  %65 = vmatpush.msra.mxu0 0.0
  %66 = vmatpush.msra.mxu0 0.0
  %67 = vmatpush.msra.mxu0 0.0
  %68 = vmatpush.msra.mxu0 %v44
  %69 = vmatpush.msra.mxu0 %v43
  %70 = vmatpush.msra.mxu0 %v42
  %71 = vmatpush.msra.mxu0 %v41
  %72 = vmatmul.f32.gmra.mxu0 %v51
  %v73 = vpop.f32.mrf.mxu0
  %v74 = vadd.f32 %v47, %v73
  %75 = vmatmul.f32.gmra.mxu0 %v54
  %v76 = vpop.f32.mrf.mxu0
  %v77 = vadd.f32 %v47, %v76
  %78 = vdwg.mxu0
  %v81 = vrot.slane %v74, 1
  %v82 = vrot.slane %v74, 2
  %v83 = vrot.slane %v74, 3
  %v84 = vrot.slane %v74, 4
  %v85 = vrot.slane %v74, 5
  %v86 = vrot.slane %v74, 6
  %v87 = vrot.slane %v74, 7
  %v88 = vrot.slane %v77, 1
  %v89 = vrot.slane %v77, 2
  %v90 = vrot.slane %v77, 3
  %v91 = vrot.slane %v77, 4
  %v92 = vrot.slane %v77, 5
  %v93 = vrot.slane %v77, 6
  %v94 = vrot.slane %v77, 7
  %109 = vst [vmem:[#allocation2] sm:$0x1] %v74
  %110 = vst [vmem:[#allocation2 + $0x2] sm:$0x1] %v81
  %111 = vst [vmem:[#allocation2 + $0x4] sm:$0x1] %v82
  %112 = vst [vmem:[#allocation2 + $0x6] sm:$0x1] %v83
  %113 = vst [vmem:[#allocation2 + $0x8] sm:$0x1] %v84
  %114 = vst [vmem:[#allocation2 + $0xa] sm:$0x1] %v85
  %115 = vst [vmem:[#allocation2 + $0xc] sm:$0x1] %v86
  %116 = vst [vmem:[#allocation2 + $0xe] sm:$0x1] %v87
  %117 = vst [vmem:[#allocation2 + $0x10] sm:$0x1] %v77
  %118 = vst [vmem:[#allocation2 + $0x12] sm:$0x1] %v88
  %119 = vst [vmem:[#allocation2 + $0x14] sm:$0x1] %v89
  %120 = vst [vmem:[#allocation2 + $0x16] sm:$0x1] %v90
  %121 = vst [vmem:[#allocation2 + $0x18] sm:$0x1] %v91
  %122 = vst [vmem:[#allocation2 + $0x1a] sm:$0x1] %v92
  %123 = vst [vmem:[#allocation2 + $0x1c] sm:$0x1] %v93
  %124 = vst [vmem:[#allocation2 + $0x1e] sm:$0x1] %v94
  %v125 = vld [vmem:[%s1] sm:$0xff]
  %v126 = vld [vmem:[%s1 + $0x8] sm:$0xff]
  %v127 = vld [vmem:[%s5] sm:$0xff]
  %v128 = vld [vmem:[%s5 + $0x8] sm:$0xff]
  %v129 = vld [vmem:[%s5 + $0x10] sm:$0xff]
  %v130 = vld [vmem:[%s5 + $0x18] sm:$0xff]
  %v131 = vld [vmem:[%s9] sm:$0x1]
  %v133 = vperm.slane %v131, 0
  %v136 = vsel %vm49, %v125, 0
  %v139 = vsel %vm49, %v126, 0
  %141 = vmatpush.msra.mxu0 0.0
  %142 = vmatpush.msra.mxu0 0.0
  %143 = vmatpush.msra.mxu0 0.0
  %144 = vmatpush.msra.mxu0 0.0
  %145 = vmatpush.msra.mxu0 0.0
  %146 = vmatpush.msra.mxu0 0.0
  %147 = vmatpush.msra.mxu0 0.0
  %148 = vmatpush.msra.mxu0 0.0
  %149 = vmatpush.msra.mxu0 0.0
  %150 = vmatpush.msra.mxu0 0.0
  %151 = vmatpush.msra.mxu0 0.0
  %152 = vmatpush.msra.mxu0 0.0
  %153 = vmatpush.msra.mxu0 %v130
  %154 = vmatpush.msra.mxu0 %v129
  %155 = vmatpush.msra.mxu0 %v128
  %156 = vmatpush.msra.mxu0 %v127
  %157 = vmatmul.f32.gmra.mxu0 %v136
  %v158 = vpop.f32.mrf.mxu0
  %v159 = vadd.f32 %v133, %v158
  %160 = vmatmul.f32.gmra.mxu0 %v139
  %v161 = vpop.f32.mrf.mxu0
  %v162 = vadd.f32 %v133, %v161
  %163 = vdwg.mxu0
  %v166 = vrot.slane %v159, 1
  %v167 = vrot.slane %v159, 2
  %v168 = vrot.slane %v159, 3
  %v169 = vrot.slane %v159, 4
  %v170 = vrot.slane %v159, 5
  %v171 = vrot.slane %v159, 6
  %v172 = vrot.slane %v159, 7
  %v173 = vrot.slane %v162, 1
  %v174 = vrot.slane %v162, 2
  %v175 = vrot.slane %v162, 3
  %v176 = vrot.slane %v162, 4
  %v177 = vrot.slane %v162, 5
  %v178 = vrot.slane %v162, 6
  %v179 = vrot.slane %v162, 7
  %194 = vst [vmem:[#allocation3] sm:$0x1] %v159
  %195 = vst [vmem:[#allocation3 + $0x2] sm:$0x1] %v166
  %196 = vst [vmem:[#allocation3 + $0x4] sm:$0x1] %v167
  %197 = vst [vmem:[#allocation3 + $0x6] sm:$0x1] %v168
  %198 = vst [vmem:[#allocation3 + $0x8] sm:$0x1] %v169
  %199 = vst [vmem:[#allocation3 + $0xa] sm:$0x1] %v170
  %200 = vst [vmem:[#allocation3 + $0xc] sm:$0x1] %v171
  %201 = vst [vmem:[#allocation3 + $0xe] sm:$0x1] %v172
  %202 = vst [vmem:[#allocation3 + $0x10] sm:$0x1] %v162
  %203 = vst [vmem:[#allocation3 + $0x12] sm:$0x1] %v173
  %204 = vst [vmem:[#allocation3 + $0x14] sm:$0x1] %v174
  %205 = vst [vmem:[#allocation3 + $0x16] sm:$0x1] %v175
  %206 = vst [vmem:[#allocation3 + $0x18] sm:$0x1] %v176
  %207 = vst [vmem:[#allocation3 + $0x1a] sm:$0x1] %v177
  %208 = vst [vmem:[#allocation3 + $0x1c] sm:$0x1] %v178
  %209 = vst [vmem:[#allocation3 + $0x1e] sm:$0x1] %v179
  %s210 = scalar_lea.vmem %s0, 16
  %v211 = vld [vmem:[%s210] sm:$0xff]
  %v212 = vld [vmem:[%s210 + $0x8] sm:$0xff]
  %v213 = vld [vmem:[%s4] sm:$0xff]
  %v214 = vld [vmem:[%s4 + $0x8] sm:$0xff]
  %v215 = vld [vmem:[%s4 + $0x10] sm:$0xff]
  %v216 = vld [vmem:[%s4 + $0x18] sm:$0xff]
  %v217 = vld [vmem:[%s8] sm:$0x1]
  %v219 = vperm.slane %v217, 0
  %v222 = vsel %vm49, %v211, 0
  %v225 = vsel %vm49, %v212, 0
  %227 = vmatpush.msra.mxu0 0.0
  %228 = vmatpush.msra.mxu0 0.0
  %229 = vmatpush.msra.mxu0 0.0
  %230 = vmatpush.msra.mxu0 0.0
  %231 = vmatpush.msra.mxu0 0.0
  %232 = vmatpush.msra.mxu0 0.0
  %233 = vmatpush.msra.mxu0 0.0
  %234 = vmatpush.msra.mxu0 0.0
  %235 = vmatpush.msra.mxu0 0.0
  %236 = vmatpush.msra.mxu0 0.0
  %237 = vmatpush.msra.mxu0 0.0
  %238 = vmatpush.msra.mxu0 0.0
  %239 = vmatpush.msra.mxu0 %v216
  %240 = vmatpush.msra.mxu0 %v215
  %241 = vmatpush.msra.mxu0 %v214
  %242 = vmatpush.msra.mxu0 %v213
  %243 = vmatmul.f32.gmra.mxu0 %v222
  %v244 = vpop.f32.mrf.mxu0
  %v245 = vadd.f32 %v219, %v244
  %246 = vmatmul.f32.gmra.mxu0 %v225
  %v247 = vpop.f32.mrf.mxu0
  %v248 = vadd.f32 %v219, %v247
  %249 = vdwg.mxu0
  %v252 = vrot.slane %v245, 1
  %v253 = vrot.slane %v245, 2
  %v254 = vrot.slane %v245, 3
  %v255 = vrot.slane %v245, 4
  %v256 = vrot.slane %v245, 5
  %v257 = vrot.slane %v245, 6
  %v258 = vrot.slane %v245, 7
  %v259 = vrot.slane %v248, 1
  %v260 = vrot.slane %v248, 2
  %v261 = vrot.slane %v248, 3
  %v262 = vrot.slane %v248, 4
  %v263 = vrot.slane %v248, 5
  %v264 = vrot.slane %v248, 6
  %v265 = vrot.slane %v248, 7
  %280 = vst [vmem:[#allocation2 + $0x1] sm:$0x1] %v245
  %281 = vst [vmem:[#allocation2 + $0x3] sm:$0x1] %v252
  %282 = vst [vmem:[#allocation2 + $0x5] sm:$0x1] %v253
  %283 = vst [vmem:[#allocation2 + $0x7] sm:$0x1] %v254
  %284 = vst [vmem:[#allocation2 + $0x9] sm:$0x1] %v255
  %285 = vst [vmem:[#allocation2 + $0xb] sm:$0x1] %v256
  %286 = vst [vmem:[#allocation2 + $0xd] sm:$0x1] %v257
  %287 = vst [vmem:[#allocation2 + $0xf] sm:$0x1] %v258
  %288 = vst [vmem:[#allocation2 + $0x11] sm:$0x1] %v248
  %289 = vst [vmem:[#allocation2 + $0x13] sm:$0x1] %v259
  %290 = vst [vmem:[#allocation2 + $0x15] sm:$0x1] %v260
  %291 = vst [vmem:[#allocation2 + $0x17] sm:$0x1] %v261
  %292 = vst [vmem:[#allocation2 + $0x19] sm:$0x1] %v262
  %293 = vst [vmem:[#allocation2 + $0x1b] sm:$0x1] %v263
  %294 = vst [vmem:[#allocation2 + $0x1d] sm:$0x1] %v264
  %295 = vst [vmem:[#allocation2 + $0x1f] sm:$0x1] %v265
  %s296 = scalar_lea.vmem %s1, 16
  %v297 = vld [vmem:[%s296] sm:$0xff]
  %v298 = vld [vmem:[%s296 + $0x8] sm:$0xff]
  %v299 = vld [vmem:[%s5] sm:$0xff]
  %v300 = vld [vmem:[%s5 + $0x8] sm:$0xff]
  %v301 = vld [vmem:[%s5 + $0x10] sm:$0xff]
  %v302 = vld [vmem:[%s5 + $0x18] sm:$0xff]
  %v303 = vld [vmem:[%s9] sm:$0x1]
  %v305 = vperm.slane %v303, 0
  %v308 = vsel %vm49, %v297, 0
  %v311 = vsel %vm49, %v298, 0
  %313 = vmatpush.msra.mxu0 0.0
  %314 = vmatpush.msra.mxu0 0.0
  %315 = vmatpush.msra.mxu0 0.0
  %316 = vmatpush.msra.mxu0 0.0
  %317 = vmatpush.msra.mxu0 0.0
  %318 = vmatpush.msra.mxu0 0.0
  %319 = vmatpush.msra.mxu0 0.0
  %320 = vmatpush.msra.mxu0 0.0
  %321 = vmatpush.msra.mxu0 0.0
  %322 = vmatpush.msra.mxu0 0.0
  %323 = vmatpush.msra.mxu0 0.0
  %324 = vmatpush.msra.mxu0 0.0
  %325 = vmatpush.msra.mxu0 %v302
  %326 = vmatpush.msra.mxu0 %v301
  %327 = vmatpush.msra.mxu0 %v300
  %328 = vmatpush.msra.mxu0 %v299
  %329 = vmatmul.f32.gmra.mxu0 %v308
  %v330 = vpop.f32.mrf.mxu0
  %v331 = vadd.f32 %v305, %v330
  %332 = vmatmul.f32.gmra.mxu0 %v311
  %v333 = vpop.f32.mrf.mxu0
  %v334 = vadd.f32 %v305, %v333
  %335 = vdwg.mxu0
  %v338 = vrot.slane %v331, 1
  %v339 = vrot.slane %v331, 2
  %v340 = vrot.slane %v331, 3
  %v341 = vrot.slane %v331, 4
  %v342 = vrot.slane %v331, 5
  %v343 = vrot.slane %v331, 6
  %v344 = vrot.slane %v331, 7
  %v345 = vrot.slane %v334, 1
  %v346 = vrot.slane %v334, 2
  %v347 = vrot.slane %v334, 3
  %v348 = vrot.slane %v334, 4
  %v349 = vrot.slane %v334, 5
  %v350 = vrot.slane %v334, 6
  %v351 = vrot.slane %v334, 7
  %366 = vst [vmem:[#allocation3 + $0x1] sm:$0x1] %v331
  %367 = vst [vmem:[#allocation3 + $0x3] sm:$0x1] %v338
  %368 = vst [vmem:[#allocation3 + $0x5] sm:$0x1] %v339
  %369 = vst [vmem:[#allocation3 + $0x7] sm:$0x1] %v340
  %370 = vst [vmem:[#allocation3 + $0x9] sm:$0x1] %v341
  %371 = vst [vmem:[#allocation3 + $0xb] sm:$0x1] %v342
  %372 = vst [vmem:[#allocation3 + $0xd] sm:$0x1] %v343
  %373 = vst [vmem:[#allocation3 + $0xf] sm:$0x1] %v344
  %374 = vst [vmem:[#allocation3 + $0x11] sm:$0x1] %v334
  %375 = vst [vmem:[#allocation3 + $0x13] sm:$0x1] %v345
  %376 = vst [vmem:[#allocation3 + $0x15] sm:$0x1] %v346
  %377 = vst [vmem:[#allocation3 + $0x17] sm:$0x1] %v347
  %378 = vst [vmem:[#allocation3 + $0x19] sm:$0x1] %v348
  %379 = vst [vmem:[#allocation3 + $0x1b] sm:$0x1] %v349
  %380 = vst [vmem:[#allocation3 + $0x1d] sm:$0x1] %v350
  %381 = vst [vmem:[#allocation3 + $0x1f] sm:$0x1] %v351
  %v382 = vld [vmem:[#allocation2] sm:$0x3]
  %v383 = vld [vmem:[%s6] sm:$0xff]
  %v384 = vld [vmem:[%s6 + $0x8] sm:$0xff]
  %v385 = vld [vmem:[%s6 + $0x10] sm:$0xff]
  %v386 = vld [vmem:[%s6 + $0x18] sm:$0xff]
  %v388 = vsel %vm49, 0.0, 0
  %390 = vmatpush.msra.mxu0 0.0
  %391 = vmatpush.msra.mxu0 0.0
  %392 = vmatpush.msra.mxu0 0.0
  %393 = vmatpush.msra.mxu0 0.0
  %394 = vmatpush.msra.mxu0 0.0
  %395 = vmatpush.msra.mxu0 0.0
  %396 = vmatpush.msra.mxu0 0.0
  %397 = vmatpush.msra.mxu0 0.0
  %398 = vmatpush.msra.mxu0 0.0
  %399 = vmatpush.msra.mxu0 0.0
  %400 = vmatpush.msra.mxu0 0.0
  %401 = vmatpush.msra.mxu0 0.0
  %402 = vmatpush.msra.mxu0 %v386
  %403 = vmatpush.msra.mxu0 %v385
  %404 = vmatpush.msra.mxu0 %v384
  %405 = vmatpush.msra.mxu0 %v383
  %406 = vmatmul.f32.gmra.mxu0 %v388
  %v407 = vpop.f32.mrf.mxu0
  %v408 = vadd.f32 0.0, %v407
  %409 = vdwg.mxu0
  %v410 = vadd.f32 %v382, %v408
  %v411 = vld [vmem:[#allocation3] sm:$0x3]
  %v412 = vld [vmem:[%s7] sm:$0xff]
  %v413 = vld [vmem:[%s7 + $0x8] sm:$0xff]
  %v414 = vld [vmem:[%s7 + $0x10] sm:$0xff]
  %v415 = vld [vmem:[%s7 + $0x18] sm:$0xff]
  %416 = vmatpush.msra.mxu0 0.0
  %417 = vmatpush.msra.mxu0 0.0
  %418 = vmatpush.msra.mxu0 0.0
  %419 = vmatpush.msra.mxu0 0.0
  %420 = vmatpush.msra.mxu0 0.0
  %421 = vmatpush.msra.mxu0 0.0
  %422 = vmatpush.msra.mxu0 0.0
  %423 = vmatpush.msra.mxu0 0.0
  %424 = vmatpush.msra.mxu0 0.0
  %425 = vmatpush.msra.mxu0 0.0
  %426 = vmatpush.msra.mxu0 0.0
  %427 = vmatpush.msra.mxu0 0.0
  %428 = vmatpush.msra.mxu0 %v415
  %429 = vmatpush.msra.mxu0 %v414
  %430 = vmatpush.msra.mxu0 %v413
  %431 = vmatpush.msra.mxu0 %v412
  %432 = vmatmul.f32.gmra.mxu0 %v388
  %v433 = vpop.f32.mrf.mxu0
  %v434 = vadd.f32 0.0, %v433
  %435 = vdwg.mxu0
  %v436 = vadd.f32 %v411, %v434
  %v437 = vld [vmem:[%s2] sm:$0x3]
  %v438 = vxor.u32 %v410, 2147483648
  %v439 = vmul.f32 %v438, 1.442695
  %v440 = vpow.pop %v439
  %v441 = vadd.f32 %v440, 1.0
  %v442 = vrcp.pop %v441
  %v443 = vmul.f32 %v441, %v442
  %v444 = vsub.f32 1.0, %v443
  %v445 = vmul.f32 %v442, %v444
  %v446 = vadd.f32 %v442, %v445
  %vm447 = vweird.f32 %v441
  %vm448 = vweird.f32 %v442
  %vm449 = vmor %vm447, %vm448
  %v450 = vsel %vm449, %v442, %v446
  %v451 = vand.u32 2147483647, %v441
  %vm452 = vcmp.eq.f32.partialorder %v451, 8.507059e+37
  %v453 = vand.u32 %v441, 2147483648
  %v454 = vor.u32 1.1754944e-38, %v453
  %v455 = vsel %vm452, %v454, %v450
  %v456 = vmul.f32 1.0, %v455
  %v457 = vtanh.pop %v410
  %v458 = vmul.f32 %v456, 0.0
  %460 = vrot.lane.b32.xlu0 %v457, 64
  %v461 = vpop.permute.xlu0 %460
  %v463 = vmul.f32 %v456, %v461
  %465 = vrot.lane.b32.xlu0 %v463, 32
  %v466 = vpop.permute.xlu0 %465
  %v468 = vadd.f32 %v458, %v466
  %v469 = vtanh.pop %v468
  %471 = vrot.lane.b32.xlu0 %v469, 64
  %v472 = vpop.permute.xlu0 %471
  %v474 = vmul.f32 %v456, %v472
  %476 = vset.pattern.permute.xlu0 0
  %477 = vperm.xlu0 %476, %v437
  %v478 = vpop.permute.xlu0 %477
  %v480 = vmul.f32 %v478, %v474
  %v481 = vsub.f32 1.0, %v437
  %483 = vset.pattern.permute.xlu0 0
  %484 = vperm.xlu0 %483, %v481
  %v485 = vpop.permute.xlu0 %484
  %v487 = vmul.f32 %v485, 0.0
  %v488 = vadd.f32 %v480, %v487
  %v489 = vmul.f32 %v478, %v468
  %v490 = vadd.f32 %v489, %v487
  %v491 = vld [vmem:[%s3] sm:$0x3]
  %v492 = vxor.u32 %v436, 2147483648
  %v493 = vmul.f32 %v492, 1.442695
  %v494 = vpow.pop %v493
  %v495 = vadd.f32 %v494, 1.0
  %v496 = vrcp.pop %v495
  %v497 = vmul.f32 %v495, %v496
  %v498 = vsub.f32 1.0, %v497
  %v499 = vmul.f32 %v496, %v498
  %v500 = vadd.f32 %v496, %v499
  %vm501 = vweird.f32 %v495
  %vm502 = vweird.f32 %v496
  %vm503 = vmor %vm501, %vm502
  %v504 = vsel %vm503, %v496, %v500
  %v505 = vand.u32 2147483647, %v495
  %vm506 = vcmp.eq.f32.partialorder %v505, 8.507059e+37
  %v507 = vand.u32 %v495, 2147483648
  %v508 = vor.u32 1.1754944e-38, %v507
  %v509 = vsel %vm506, %v508, %v504
  %v510 = vmul.f32 1.0, %v509
  %v511 = vtanh.pop %v436
  %v512 = vmul.f32 %v510, 0.0
  %514 = vrot.lane.b32.xlu0 %v511, 64
  %v515 = vpop.permute.xlu0 %514
  %v517 = vmul.f32 %v510, %v515
  %519 = vrot.lane.b32.xlu0 %v517, 32
  %v520 = vpop.permute.xlu0 %519
  %v522 = vadd.f32 %v512, %v520
  %v523 = vtanh.pop %v522
  %525 = vrot.lane.b32.xlu0 %v523, 64
  %v526 = vpop.permute.xlu0 %525
  %v528 = vmul.f32 %v510, %v526
  %530 = vset.pattern.permute.xlu0 0
  %531 = vperm.xlu0 %530, %v491
  %v532 = vpop.permute.xlu0 %531
  %v534 = vmul.f32 %v532, %v528
  %v535 = vsub.f32 1.0, %v491
  %537 = vset.pattern.permute.xlu0 0
  %538 = vperm.xlu0 %537, %v535
  %v539 = vpop.permute.xlu0 %538
  %v541 = vmul.f32 %v539, 0.0
  %v542 = vadd.f32 %v534, %v541
  %v543 = vmul.f32 %v532, %v522
  %v544 = vadd.f32 %v543, %v541
  %546 = vrot.lane.b32.xlu0 %v480, 32
  %v547 = vpop.permute.xlu0 %546
  %vm549 = vcmask 254976
  %550 = vst.msk [vmem:[%s10] sm:$0x3] %vm549, %v547
  %552 = vrot.lane.b32.xlu0 %v534, 32
  %v553 = vpop.permute.xlu0 %552
  %555 = vst.msk [vmem:[%s11] sm:$0x3] %vm549, %v553
  %s556 = scalar_lea.vmem [#allocation2], 2
  %v557 = vld [vmem:[%s556] sm:$0x3]
  %v558 = vld [vmem:[%s6] sm:$0xff]
  %v559 = vld [vmem:[%s6 + $0x8] sm:$0xff]
  %v560 = vld [vmem:[%s6 + $0x10] sm:$0xff]
  %v561 = vld [vmem:[%s6 + $0x18] sm:$0xff]
  %563 = vrot.lane.b32.xlu0 %v488, 32
  %v564 = vpop.permute.xlu0 %563
  %v565 = vsel %vm49, %v564, 0
  %567 = vmatpush.msra.mxu0 0.0
  %568 = vmatpush.msra.mxu0 0.0
  %569 = vmatpush.msra.mxu0 0.0
  %570 = vmatpush.msra.mxu0 0.0
  %571 = vmatpush.msra.mxu0 0.0
  %572 = vmatpush.msra.mxu0 0.0
  %573 = vmatpush.msra.mxu0 0.0
  %574 = vmatpush.msra.mxu0 0.0
  %575 = vmatpush.msra.mxu0 0.0
  %576 = vmatpush.msra.mxu0 0.0
  %577 = vmatpush.msra.mxu0 0.0
  %578 = vmatpush.msra.mxu0 0.0
  %579 = vmatpush.msra.mxu0 %v561
  %580 = vmatpush.msra.mxu0 %v560
  %581 = vmatpush.msra.mxu0 %v559
  %582 = vmatpush.msra.mxu0 %v558
  %583 = vmatmul.f32.gmra.mxu0 %v565
  %v584 = vpop.f32.mrf.mxu0
  %v585 = vadd.f32 0.0, %v584
  %586 = vdwg.mxu0
  %v587 = vadd.f32 %v557, %v585
  %s588 = scalar_lea.vmem [#allocation3], 2
  %v589 = vld [vmem:[%s588] sm:$0x3]
  %v590 = vld [vmem:[%s7] sm:$0xff]
  %v591 = vld [vmem:[%s7 + $0x8] sm:$0xff]
  %v592 = vld [vmem:[%s7 + $0x10] sm:$0xff]
  %v593 = vld [vmem:[%s7 + $0x18] sm:$0xff]
  %595 = vrot.lane.b32.xlu0 %v542, 32
  %v596 = vpop.permute.xlu0 %595
  %v597 = vsel %vm49, %v596, 0
  %599 = vmatpush.msra.mxu0 0.0
  %600 = vmatpush.msra.mxu0 0.0
  %601 = vmatpush.msra.mxu0 0.0
  %602 = vmatpush.msra.mxu0 0.0
  %603 = vmatpush.msra.mxu0 0.0
  %604 = vmatpush.msra.mxu0 0.0
  %605 = vmatpush.msra.mxu0 0.0
  %606 = vmatpush.msra.mxu0 0.0
  %607 = vmatpush.msra.mxu0 0.0
  %608 = vmatpush.msra.mxu0 0.0
  %609 = vmatpush.msra.mxu0 0.0
  %610 = vmatpush.msra.mxu0 0.0
  %611 = vmatpush.msra.mxu0 %v593
  %612 = vmatpush.msra.mxu0 %v592
  %613 = vmatpush.msra.mxu0 %v591
  %614 = vmatpush.msra.mxu0 %v590
  %615 = vmatmul.f32.gmra.mxu0 %v597
  %v616 = vpop.f32.mrf.mxu0
  %v617 = vadd.f32 0.0, %v616
  %618 = vdwg.mxu0
  %v619 = vadd.f32 %v589, %v617
  %s620 = scalar_lea.vmem %s2, 2
  %v621 = vld [vmem:[%s620] sm:$0x3]
  %v622 = vxor.u32 %v587, 2147483648
  %v623 = vmul.f32 %v622, 1.442695
  %v624 = vpow.pop %v623
  %v625 = vadd.f32 %v624, 1.0
  %v626 = vrcp.pop %v625
  %v627 = vmul.f32 %v625, %v626
  %v628 = vsub.f32 1.0, %v627
  %v629 = vmul.f32 %v626, %v628
  %v630 = vadd.f32 %v626, %v629
  %vm631 = vweird.f32 %v625
  %vm632 = vweird.f32 %v626
  %vm633 = vmor %vm631, %vm632
  %v634 = vsel %vm633, %v626, %v630
  %v635 = vand.u32 2147483647, %v625
  %vm636 = vcmp.eq.f32.partialorder %v635, 8.507059e+37
  %v637 = vand.u32 %v625, 2147483648
  %v638 = vor.u32 1.1754944e-38, %v637
  %v639 = vsel %vm636, %v638, %v634
  %v640 = vmul.f32 1.0, %v639
  %v641 = vtanh.pop %v587
  %v642 = vmul.f32 %v640, %v490
  %644 = vrot.lane.b32.xlu0 %v641, 64
  %v645 = vpop.permute.xlu0 %644
  %v647 = vmul.f32 %v640, %v645
  %649 = vrot.lane.b32.xlu0 %v647, 32
  %v650 = vpop.permute.xlu0 %649
  %v652 = vadd.f32 %v642, %v650
  %v653 = vtanh.pop %v652
  %655 = vrot.lane.b32.xlu0 %v653, 64
  %v656 = vpop.permute.xlu0 %655
  %v658 = vmul.f32 %v640, %v656
  %660 = vset.pattern.permute.xlu0 0
  %661 = vperm.xlu0 %660, %v621
  %v662 = vpop.permute.xlu0 %661
  %v664 = vmul.f32 %v662, %v658
  %v665 = vsub.f32 1.0, %v621
  %667 = vset.pattern.permute.xlu0 0
  %668 = vperm.xlu0 %667, %v665
  %v669 = vpop.permute.xlu0 %668
  %v671 = vmul.f32 %v669, %v488
  %v672 = vadd.f32 %v664, %v671
  %v673 = vmul.f32 %v662, %v652
  %v674 = vmul.f32 %v669, %v490
  %v675 = vadd.f32 %v673, %v674
  %s676 = scalar_lea.vmem %s3, 2
  %v677 = vld [vmem:[%s676] sm:$0x3]
  %v678 = vxor.u32 %v619, 2147483648
  %v679 = vmul.f32 %v678, 1.442695
  %v680 = vpow.pop %v679
  %v681 = vadd.f32 %v680, 1.0
  %v682 = vrcp.pop %v681
  %v683 = vmul.f32 %v681, %v682
  %v684 = vsub.f32 1.0, %v683
  %v685 = vmul.f32 %v682, %v684
  %v686 = vadd.f32 %v682, %v685
  %vm687 = vweird.f32 %v681
  %vm688 = vweird.f32 %v682
  %vm689 = vmor %vm687, %vm688
  %v690 = vsel %vm689, %v682, %v686
  %v691 = vand.u32 2147483647, %v681
  %vm692 = vcmp.eq.f32.partialorder %v691, 8.507059e+37
  %v693 = vand.u32 %v681, 2147483648
  %v694 = vor.u32 1.1754944e-38, %v693
  %v695 = vsel %vm692, %v694, %v690
  %v696 = vmul.f32 1.0, %v695
  %v697 = vtanh.pop %v619
  %v698 = vmul.f32 %v696, %v544
  %700 = vrot.lane.b32.xlu0 %v697, 64
  %v701 = vpop.permute.xlu0 %700
  %v703 = vmul.f32 %v696, %v701
  %705 = vrot.lane.b32.xlu0 %v703, 32
  %v706 = vpop.permute.xlu0 %705
  %v708 = vadd.f32 %v698, %v706
  %v709 = vtanh.pop %v708
  %711 = vrot.lane.b32.xlu0 %v709, 64
  %v712 = vpop.permute.xlu0 %711
  %v714 = vmul.f32 %v696, %v712
  %716 = vset.pattern.permute.xlu0 0
  %717 = vperm.xlu0 %716, %v677
  %v718 = vpop.permute.xlu0 %717
  %v720 = vmul.f32 %v718, %v714
  %v721 = vsub.f32 1.0, %v677
  %723 = vset.pattern.permute.xlu0 0
  %724 = vperm.xlu0 %723, %v721
  %v725 = vpop.permute.xlu0 %724
  %v727 = vmul.f32 %v725, %v542
  %v728 = vadd.f32 %v720, %v727
  %v729 = vmul.f32 %v718, %v708
  %v730 = vmul.f32 %v725, %v544
  %v731 = vadd.f32 %v729, %v730
  %733 = vrot.lane.b32.xlu0 %v664, 32
  %v734 = vpop.permute.xlu0 %733
  %s736 = scalar_lea.vmem %s10, 2
  %737 = vst.msk [vmem:[%s736] sm:$0x3] %vm549, %v734
  %739 = vrot.lane.b32.xlu0 %v720, 32
  %v740 = vpop.permute.xlu0 %739
  %s742 = scalar_lea.vmem %s11, 2
  %743 = vst.msk [vmem:[%s742] sm:$0x3] %vm549, %v740
  %s744 = scalar_lea.vmem [#allocation2], 4
  %v745 = vld [vmem:[%s744] sm:$0x3]
  %v746 = vld [vmem:[%s6] sm:$0xff]
  %v747 = vld [vmem:[%s6 + $0x8] sm:$0xff]
  %v748 = vld [vmem:[%s6 + $0x10] sm:$0xff]
  %v749 = vld [vmem:[%s6 + $0x18] sm:$0xff]
  %751 = vrot.lane.b32.xlu0 %v672, 32
  %v752 = vpop.permute.xlu0 %751
  %v753 = vsel %vm49, %v752, 0
  %755 = vmatpush.msra.mxu0 0.0
  %756 = vmatpush.msra.mxu0 0.0
  %757 = vmatpush.msra.mxu0 0.0
  %758 = vmatpush.msra.mxu0 0.0
  %759 = vmatpush.msra.mxu0 0.0
  %760 = vmatpush.msra.mxu0 0.0
  %761 = vmatpush.msra.mxu0 0.0
  %762 = vmatpush.msra.mxu0 0.0
  %763 = vmatpush.msra.mxu0 0.0
  %764 = vmatpush.msra.mxu0 0.0
  %765 = vmatpush.msra.mxu0 0.0
  %766 = vmatpush.msra.mxu0 0.0
  %767 = vmatpush.msra.mxu0 %v749
  %768 = vmatpush.msra.mxu0 %v748
  %769 = vmatpush.msra.mxu0 %v747
  %770 = vmatpush.msra.mxu0 %v746
  %771 = vmatmul.f32.gmra.mxu0 %v753
  %v772 = vpop.f32.mrf.mxu0
  %v773 = vadd.f32 0.0, %v772
  %774 = vdwg.mxu0
  %v775 = vadd.f32 %v745, %v773
  %s776 = scalar_lea.vmem [#allocation3], 4
  %v777 = vld [vmem:[%s776] sm:$0x3]
  %v778 = vld [vmem:[%s7] sm:$0xff]
  %v779 = vld [vmem:[%s7 + $0x8] sm:$0xff]
  %v780 = vld [vmem:[%s7 + $0x10] sm:$0xff]
  %v781 = vld [vmem:[%s7 + $0x18] sm:$0xff]
  %783 = vrot.lane.b32.xlu0 %v728, 32
  %v784 = vpop.permute.xlu0 %783
  %v785 = vsel %vm49, %v784, 0
  %787 = vmatpush.msra.mxu0 0.0
  %788 = vmatpush.msra.mxu0 0.0
  %789 = vmatpush.msra.mxu0 0.0
  %790 = vmatpush.msra.mxu0 0.0
  %791 = vmatpush.msra.mxu0 0.0
  %792 = vmatpush.msra.mxu0 0.0
  %793 = vmatpush.msra.mxu0 0.0
  %794 = vmatpush.msra.mxu0 0.0
  %795 = vmatpush.msra.mxu0 0.0
  %796 = vmatpush.msra.mxu0 0.0
  %797 = vmatpush.msra.mxu0 0.0
  %798 = vmatpush.msra.mxu0 0.0
  %799 = vmatpush.msra.mxu0 %v781
  %800 = vmatpush.msra.mxu0 %v780
  %801 = vmatpush.msra.mxu0 %v779
  %802 = vmatpush.msra.mxu0 %v778
  %803 = vmatmul.f32.gmra.mxu0 %v785
  %v804 = vpop.f32.mrf.mxu0
  %v805 = vadd.f32 0.0, %v804
  %806 = vdwg.mxu0
  %v807 = vadd.f32 %v777, %v805
  %s808 = scalar_lea.vmem %s2, 4
  %v809 = vld [vmem:[%s808] sm:$0x3]
  %v810 = vxor.u32 %v775, 2147483648
  %v811 = vmul.f32 %v810, 1.442695
  %v812 = vpow.pop %v811
  %v813 = vadd.f32 %v812, 1.0
  %v814 = vrcp.pop %v813
  %v815 = vmul.f32 %v813, %v814
  %v816 = vsub.f32 1.0, %v815
  %v817 = vmul.f32 %v814, %v816
  %v818 = vadd.f32 %v814, %v817
  %vm819 = vweird.f32 %v813
  %vm820 = vweird.f32 %v814
  %vm821 = vmor %vm819, %vm820
  %v822 = vsel %vm821, %v814, %v818
  %v823 = vand.u32 2147483647, %v813
  %vm824 = vcmp.eq.f32.partialorder %v823, 8.507059e+37
  %v825 = vand.u32 %v813, 2147483648
  %v826 = vor.u32 1.1754944e-38, %v825
  %v827 = vsel %vm824, %v826, %v822
  %v828 = vmul.f32 1.0, %v827
  %v829 = vtanh.pop %v775
  %v830 = vmul.f32 %v828, %v675
  %832 = vrot.lane.b32.xlu0 %v829, 64
  %v833 = vpop.permute.xlu0 %832
  %v835 = vmul.f32 %v828, %v833
  %837 = vrot.lane.b32.xlu0 %v835, 32
  %v838 = vpop.permute.xlu0 %837
  %v840 = vadd.f32 %v830, %v838
  %v841 = vtanh.pop %v840
  %843 = vrot.lane.b32.xlu0 %v841, 64
  %v844 = vpop.permute.xlu0 %843
  %v846 = vmul.f32 %v828, %v844
  %848 = vset.pattern.permute.xlu0 0
  %849 = vperm.xlu0 %848, %v809
  %v850 = vpop.permute.xlu0 %849
  %v852 = vmul.f32 %v850, %v846
  %v853 = vsub.f32 1.0, %v809
  %855 = vset.pattern.permute.xlu0 0
  %856 = vperm.xlu0 %855, %v853
  %v857 = vpop.permute.xlu0 %856
  %v859 = vmul.f32 %v857, %v672
  %v860 = vadd.f32 %v852, %v859
  %v861 = vmul.f32 %v850, %v840
  %v862 = vmul.f32 %v857, %v675
  %v863 = vadd.f32 %v861, %v862
  %s864 = scalar_lea.vmem %s3, 4
  %v865 = vld [vmem:[%s864] sm:$0x3]
  %v866 = vxor.u32 %v807, 2147483648
  %v867 = vmul.f32 %v866, 1.442695
  %v868 = vpow.pop %v867
  %v869 = vadd.f32 %v868, 1.0
  %v870 = vrcp.pop %v869
  %v871 = vmul.f32 %v869, %v870
  %v872 = vsub.f32 1.0, %v871
  %v873 = vmul.f32 %v870, %v872
  %v874 = vadd.f32 %v870, %v873
  %vm875 = vweird.f32 %v869
  %vm876 = vweird.f32 %v870
  %vm877 = vmor %vm875, %vm876
  %v878 = vsel %vm877, %v870, %v874
  %v879 = vand.u32 2147483647, %v869
  %vm880 = vcmp.eq.f32.partialorder %v879, 8.507059e+37
  %v881 = vand.u32 %v869, 2147483648
  %v882 = vor.u32 1.1754944e-38, %v881
  %v883 = vsel %vm880, %v882, %v878
  %v884 = vmul.f32 1.0, %v883
  %v885 = vtanh.pop %v807
  %v886 = vmul.f32 %v884, %v731
  %888 = vrot.lane.b32.xlu0 %v885, 64
  %v889 = vpop.permute.xlu0 %888
  %v891 = vmul.f32 %v884, %v889
  %893 = vrot.lane.b32.xlu0 %v891, 32
  %v894 = vpop.permute.xlu0 %893
  %v896 = vadd.f32 %v886, %v894
  %v897 = vtanh.pop %v896
  %899 = vrot.lane.b32.xlu0 %v897, 64
  %v900 = vpop.permute.xlu0 %899
  %v902 = vmul.f32 %v884, %v900
  %904 = vset.pattern.permute.xlu0 0
  %905 = vperm.xlu0 %904, %v865
  %v906 = vpop.permute.xlu0 %905
  %v908 = vmul.f32 %v906, %v902
  %v909 = vsub.f32 1.0, %v865
  %911 = vset.pattern.permute.xlu0 0
  %912 = vperm.xlu0 %911, %v909
  %v913 = vpop.permute.xlu0 %912
  %v915 = vmul.f32 %v913, %v728
  %v916 = vadd.f32 %v908, %v915
  %v917 = vmul.f32 %v906, %v896
  %v918 = vmul.f32 %v913, %v731
  %v919 = vadd.f32 %v917, %v918
  %921 = vrot.lane.b32.xlu0 %v852, 32
  %v922 = vpop.permute.xlu0 %921
  %s924 = scalar_lea.vmem %s10, 4
  %925 = vst.msk [vmem:[%s924] sm:$0x3] %vm549, %v922
  %927 = vrot.lane.b32.xlu0 %v908, 32
  %v928 = vpop.permute.xlu0 %927
  %s930 = scalar_lea.vmem %s11, 4
  %931 = vst.msk [vmem:[%s930] sm:$0x3] %vm549, %v928
  %s932 = scalar_lea.vmem [#allocation2], 6
  %v933 = vld [vmem:[%s932] sm:$0x3]
  %v934 = vld [vmem:[%s6] sm:$0xff]
  %v935 = vld [vmem:[%s6 + $0x8] sm:$0xff]
  %v936 = vld [vmem:[%s6 + $0x10] sm:$0xff]
  %v937 = vld [vmem:[%s6 + $0x18] sm:$0xff]
  %939 = vrot.lane.b32.xlu0 %v860, 32
  %v940 = vpop.permute.xlu0 %939
  %v941 = vsel %vm49, %v940, 0
  %943 = vmatpush.msra.mxu0 0.0
  %944 = vmatpush.msra.mxu0 0.0
  %945 = vmatpush.msra.mxu0 0.0
  %946 = vmatpush.msra.mxu0 0.0
  %947 = vmatpush.msra.mxu0 0.0
  %948 = vmatpush.msra.mxu0 0.0
  %949 = vmatpush.msra.mxu0 0.0
  %950 = vmatpush.msra.mxu0 0.0
  %951 = vmatpush.msra.mxu0 0.0
  %952 = vmatpush.msra.mxu0 0.0
  %953 = vmatpush.msra.mxu0 0.0
  %954 = vmatpush.msra.mxu0 0.0
  %955 = vmatpush.msra.mxu0 %v937
  %956 = vmatpush.msra.mxu0 %v936
  %957 = vmatpush.msra.mxu0 %v935
  %958 = vmatpush.msra.mxu0 %v934
  %959 = vmatmul.f32.gmra.mxu0 %v941
  %v960 = vpop.f32.mrf.mxu0
  %v961 = vadd.f32 0.0, %v960
  %962 = vdwg.mxu0
  %v963 = vadd.f32 %v933, %v961
  %s964 = scalar_lea.vmem [#allocation3], 6
  %v965 = vld [vmem:[%s964] sm:$0x3]
  %v966 = vld [vmem:[%s7] sm:$0xff]
  %v967 = vld [vmem:[%s7 + $0x8] sm:$0xff]
  %v968 = vld [vmem:[%s7 + $0x10] sm:$0xff]
  %v969 = vld [vmem:[%s7 + $0x18] sm:$0xff]
  %971 = vrot.lane.b32.xlu0 %v916, 32
  %v972 = vpop.permute.xlu0 %971
  %v973 = vsel %vm49, %v972, 0
  %975 = vmatpush.msra.mxu0 0.0
  %976 = vmatpush.msra.mxu0 0.0
  %977 = vmatpush.msra.mxu0 0.0
  %978 = vmatpush.msra.mxu0 0.0
  %979 = vmatpush.msra.mxu0 0.0
  %980 = vmatpush.msra.mxu0 0.0
  %981 = vmatpush.msra.mxu0 0.0
  %982 = vmatpush.msra.mxu0 0.0
  %983 = vmatpush.msra.mxu0 0.0
  %984 = vmatpush.msra.mxu0 0.0
  %985 = vmatpush.msra.mxu0 0.0
  %986 = vmatpush.msra.mxu0 0.0
  %987 = vmatpush.msra.mxu0 %v969
  %988 = vmatpush.msra.mxu0 %v968
  %989 = vmatpush.msra.mxu0 %v967
  %990 = vmatpush.msra.mxu0 %v966
  %991 = vmatmul.f32.gmra.mxu0 %v973
  %v992 = vpop.f32.mrf.mxu0
  %v993 = vadd.f32 0.0, %v992
  %994 = vdwg.mxu0
  %v995 = vadd.f32 %v965, %v993
  %s996 = scalar_lea.vmem %s2, 6
  %v997 = vld [vmem:[%s996] sm:$0x3]
  %v998 = vxor.u32 %v963, 2147483648
  %v999 = vmul.f32 %v998, 1.442695
  %v1000 = vpow.pop %v999
  %v1001 = vadd.f32 %v1000, 1.0
  %v1002 = vrcp.pop %v1001
  %v1003 = vmul.f32 %v1001, %v1002
  %v1004 = vsub.f32 1.0, %v1003
  %v1005 = vmul.f32 %v1002, %v1004
  %v1006 = vadd.f32 %v1002, %v1005
  %vm1007 = vweird.f32 %v1001
  %vm1008 = vweird.f32 %v1002
  %vm1009 = vmor %vm1007, %vm1008
  %v1010 = vsel %vm1009, %v1002, %v1006
  %v1011 = vand.u32 2147483647, %v1001
  %vm1012 = vcmp.eq.f32.partialorder %v1011, 8.507059e+37
  %v1013 = vand.u32 %v1001, 2147483648
  %v1014 = vor.u32 1.1754944e-38, %v1013
  %v1015 = vsel %vm1012, %v1014, %v1010
  %v1016 = vmul.f32 1.0, %v1015
  %v1017 = vtanh.pop %v963
  %v1018 = vmul.f32 %v1016, %v863
  %1020 = vrot.lane.b32.xlu0 %v1017, 64
  %v1021 = vpop.permute.xlu0 %1020
  %v1023 = vmul.f32 %v1016, %v1021
  %1025 = vrot.lane.b32.xlu0 %v1023, 32
  %v1026 = vpop.permute.xlu0 %1025
  %v1028 = vadd.f32 %v1018, %v1026
  %v1029 = vtanh.pop %v1028
  %1031 = vrot.lane.b32.xlu0 %v1029, 64
  %v1032 = vpop.permute.xlu0 %1031
  %v1034 = vmul.f32 %v1016, %v1032
  %1036 = vset.pattern.permute.xlu0 0
  %1037 = vperm.xlu0 %1036, %v997
  %v1038 = vpop.permute.xlu0 %1037
  %v1040 = vmul.f32 %v1038, %v1034
  %v1041 = vsub.f32 1.0, %v997
  %1043 = vset.pattern.permute.xlu0 0
  %1044 = vperm.xlu0 %1043, %v1041
  %v1045 = vpop.permute.xlu0 %1044
  %v1047 = vmul.f32 %v1045, %v860
  %v1048 = vadd.f32 %v1040, %v1047
  %v1049 = vmul.f32 %v1038, %v1028
  %v1050 = vmul.f32 %v1045, %v863
  %v1051 = vadd.f32 %v1049, %v1050
  %s1052 = scalar_lea.vmem %s3, 6
  %v1053 = vld [vmem:[%s1052] sm:$0x3]
  %v1054 = vxor.u32 %v995, 2147483648
  %v1055 = vmul.f32 %v1054, 1.442695
  %v1056 = vpow.pop %v1055
  %v1057 = vadd.f32 %v1056, 1.0
  %v1058 = vrcp.pop %v1057
  %v1059 = vmul.f32 %v1057, %v1058
  %v1060 = vsub.f32 1.0, %v1059
  %v1061 = vmul.f32 %v1058, %v1060
  %v1062 = vadd.f32 %v1058, %v1061
  %vm1063 = vweird.f32 %v1057
  %vm1064 = vweird.f32 %v1058
  %vm1065 = vmor %vm1063, %vm1064
  %v1066 = vsel %vm1065, %v1058, %v1062
  %v1067 = vand.u32 2147483647, %v1057
  %vm1068 = vcmp.eq.f32.partialorder %v1067, 8.507059e+37
  %v1069 = vand.u32 %v1057, 2147483648
  %v1070 = vor.u32 1.1754944e-38, %v1069
  %v1071 = vsel %vm1068, %v1070, %v1066
  %v1072 = vmul.f32 1.0, %v1071
  %v1073 = vtanh.pop %v995
  %v1074 = vmul.f32 %v1072, %v919
  %1076 = vrot.lane.b32.xlu0 %v1073, 64
  %v1077 = vpop.permute.xlu0 %1076
  %v1079 = vmul.f32 %v1072, %v1077
  %1081 = vrot.lane.b32.xlu0 %v1079, 32
  %v1082 = vpop.permute.xlu0 %1081
  %v1084 = vadd.f32 %v1074, %v1082
  %v1085 = vtanh.pop %v1084
  %1087 = vrot.lane.b32.xlu0 %v1085, 64
  %v1088 = vpop.permute.xlu0 %1087
  %v1090 = vmul.f32 %v1072, %v1088
  %1092 = vset.pattern.permute.xlu0 0
  %1093 = vperm.xlu0 %1092, %v1053
  %v1094 = vpop.permute.xlu0 %1093
  %v1096 = vmul.f32 %v1094, %v1090
  %v1097 = vsub.f32 1.0, %v1053
  %1099 = vset.pattern.permute.xlu0 0
  %1100 = vperm.xlu0 %1099, %v1097
  %v1101 = vpop.permute.xlu0 %1100
  %v1103 = vmul.f32 %v1101, %v916
  %v1104 = vadd.f32 %v1096, %v1103
  %v1105 = vmul.f32 %v1094, %v1084
  %v1106 = vmul.f32 %v1101, %v919
  %v1107 = vadd.f32 %v1105, %v1106
  %1109 = vrot.lane.b32.xlu0 %v1040, 32
  %v1110 = vpop.permute.xlu0 %1109
  %s1112 = scalar_lea.vmem %s10, 6
  %1113 = vst.msk [vmem:[%s1112] sm:$0x3] %vm549, %v1110
  %1115 = vrot.lane.b32.xlu0 %v1096, 32
  %v1116 = vpop.permute.xlu0 %1115
  %s1118 = scalar_lea.vmem %s11, 6
  %1119 = vst.msk [vmem:[%s1118] sm:$0x3] %vm549, %v1116
  %s1120 = scalar_lea.vmem [#allocation2], 8
  %v1121 = vld [vmem:[%s1120] sm:$0x3]
  %v1122 = vld [vmem:[%s6] sm:$0xff]
  %v1123 = vld [vmem:[%s6 + $0x8] sm:$0xff]
  %v1124 = vld [vmem:[%s6 + $0x10] sm:$0xff]
  %v1125 = vld [vmem:[%s6 + $0x18] sm:$0xff]
  %1127 = vrot.lane.b32.xlu0 %v1048, 32
  %v1128 = vpop.permute.xlu0 %1127
  %v1129 = vsel %vm49, %v1128, 0
  %1131 = vmatpush.msra.mxu0 0.0
  %1132 = vmatpush.msra.mxu0 0.0
  %1133 = vmatpush.msra.mxu0 0.0
  %1134 = vmatpush.msra.mxu0 0.0
  %1135 = vmatpush.msra.mxu0 0.0
  %1136 = vmatpush.msra.mxu0 0.0
  %1137 = vmatpush.msra.mxu0 0.0
  %1138 = vmatpush.msra.mxu0 0.0
  %1139 = vmatpush.msra.mxu0 0.0
  %1140 = vmatpush.msra.mxu0 0.0
  %1141 = vmatpush.msra.mxu0 0.0
  %1142 = vmatpush.msra.mxu0 0.0
  %1143 = vmatpush.msra.mxu0 %v1125
  %1144 = vmatpush.msra.mxu0 %v1124
  %1145 = vmatpush.msra.mxu0 %v1123
  %1146 = vmatpush.msra.mxu0 %v1122
  %1147 = vmatmul.f32.gmra.mxu0 %v1129
  %v1148 = vpop.f32.mrf.mxu0
  %v1149 = vadd.f32 0.0, %v1148
  %1150 = vdwg.mxu0
  %v1151 = vadd.f32 %v1121, %v1149
  %s1152 = scalar_lea.vmem [#allocation3], 8
  %v1153 = vld [vmem:[%s1152] sm:$0x3]
  %v1154 = vld [vmem:[%s7] sm:$0xff]
  %v1155 = vld [vmem:[%s7 + $0x8] sm:$0xff]
  %v1156 = vld [vmem:[%s7 + $0x10] sm:$0xff]
  %v1157 = vld [vmem:[%s7 + $0x18] sm:$0xff]
  %1159 = vrot.lane.b32.xlu0 %v1104, 32
  %v1160 = vpop.permute.xlu0 %1159
  %v1161 = vsel %vm49, %v1160, 0
  %1163 = vmatpush.msra.mxu0 0.0
  %1164 = vmatpush.msra.mxu0 0.0
  %1165 = vmatpush.msra.mxu0 0.0
  %1166 = vmatpush.msra.mxu0 0.0
  %1167 = vmatpush.msra.mxu0 0.0
  %1168 = vmatpush.msra.mxu0 0.0
  %1169 = vmatpush.msra.mxu0 0.0
  %1170 = vmatpush.msra.mxu0 0.0
  %1171 = vmatpush.msra.mxu0 0.0
  %1172 = vmatpush.msra.mxu0 0.0
  %1173 = vmatpush.msra.mxu0 0.0
  %1174 = vmatpush.msra.mxu0 0.0
  %1175 = vmatpush.msra.mxu0 %v1157
  %1176 = vmatpush.msra.mxu0 %v1156
  %1177 = vmatpush.msra.mxu0 %v1155
  %1178 = vmatpush.msra.mxu0 %v1154
  %1179 = vmatmul.f32.gmra.mxu0 %v1161
  %v1180 = vpop.f32.mrf.mxu0
  %v1181 = vadd.f32 0.0, %v1180
  %1182 = vdwg.mxu0
  %v1183 = vadd.f32 %v1153, %v1181
  %s1184 = scalar_lea.vmem %s2, 8
  %v1185 = vld [vmem:[%s1184] sm:$0x3]
  %v1186 = vxor.u32 %v1151, 2147483648
  %v1187 = vmul.f32 %v1186, 1.442695
  %v1188 = vpow.pop %v1187
  %v1189 = vadd.f32 %v1188, 1.0
  %v1190 = vrcp.pop %v1189
  %v1191 = vmul.f32 %v1189, %v1190
  %v1192 = vsub.f32 1.0, %v1191
  %v1193 = vmul.f32 %v1190, %v1192
  %v1194 = vadd.f32 %v1190, %v1193
  %vm1195 = vweird.f32 %v1189
  %vm1196 = vweird.f32 %v1190
  %vm1197 = vmor %vm1195, %vm1196
  %v1198 = vsel %vm1197, %v1190, %v1194
  %v1199 = vand.u32 2147483647, %v1189
  %vm1200 = vcmp.eq.f32.partialorder %v1199, 8.507059e+37
  %v1201 = vand.u32 %v1189, 2147483648
  %v1202 = vor.u32 1.1754944e-38, %v1201
  %v1203 = vsel %vm1200, %v1202, %v1198
  %v1204 = vmul.f32 1.0, %v1203
  %v1205 = vtanh.pop %v1151
  %v1206 = vmul.f32 %v1204, %v1051
  %1208 = vrot.lane.b32.xlu0 %v1205, 64
  %v1209 = vpop.permute.xlu0 %1208
  %v1211 = vmul.f32 %v1204, %v1209
  %1213 = vrot.lane.b32.xlu0 %v1211, 32
  %v1214 = vpop.permute.xlu0 %1213
  %v1216 = vadd.f32 %v1206, %v1214
  %v1217 = vtanh.pop %v1216
  %1219 = vrot.lane.b32.xlu0 %v1217, 64
  %v1220 = vpop.permute.xlu0 %1219
  %v1222 = vmul.f32 %v1204, %v1220
  %1224 = vset.pattern.permute.xlu0 0
  %1225 = vperm.xlu0 %1224, %v1185
  %v1226 = vpop.permute.xlu0 %1225
  %v1228 = vmul.f32 %v1226, %v1222
  %v1229 = vsub.f32 1.0, %v1185
  %1231 = vset.pattern.permute.xlu0 0
  %1232 = vperm.xlu0 %1231, %v1229
  %v1233 = vpop.permute.xlu0 %1232
  %v1235 = vmul.f32 %v1233, %v1048
  %v1236 = vadd.f32 %v1228, %v1235
  %v1237 = vmul.f32 %v1226, %v1216
  %v1238 = vmul.f32 %v1233, %v1051
  %v1239 = vadd.f32 %v1237, %v1238
  %s1240 = scalar_lea.vmem %s3, 8
  %v1241 = vld [vmem:[%s1240] sm:$0x3]
  %v1242 = vxor.u32 %v1183, 2147483648
  %v1243 = vmul.f32 %v1242, 1.442695
  %v1244 = vpow.pop %v1243
  %v1245 = vadd.f32 %v1244, 1.0
  %v1246 = vrcp.pop %v1245
  %v1247 = vmul.f32 %v1245, %v1246
  %v1248 = vsub.f32 1.0, %v1247
  %v1249 = vmul.f32 %v1246, %v1248
  %v1250 = vadd.f32 %v1246, %v1249
  %vm1251 = vweird.f32 %v1245
  %vm1252 = vweird.f32 %v1246
  %vm1253 = vmor %vm1251, %vm1252
  %v1254 = vsel %vm1253, %v1246, %v1250
  %v1255 = vand.u32 2147483647, %v1245
  %vm1256 = vcmp.eq.f32.partialorder %v1255, 8.507059e+37
  %v1257 = vand.u32 %v1245, 2147483648
  %v1258 = vor.u32 1.1754944e-38, %v1257
  %v1259 = vsel %vm1256, %v1258, %v1254
  %v1260 = vmul.f32 1.0, %v1259
  %v1261 = vtanh.pop %v1183
  %v1262 = vmul.f32 %v1260, %v1107
  %1264 = vrot.lane.b32.xlu0 %v1261, 64
  %v1265 = vpop.permute.xlu0 %1264
  %v1267 = vmul.f32 %v1260, %v1265
  %1269 = vrot.lane.b32.xlu0 %v1267, 32
  %v1270 = vpop.permute.xlu0 %1269
  %v1272 = vadd.f32 %v1262, %v1270
  %v1273 = vtanh.pop %v1272
  %1275 = vrot.lane.b32.xlu0 %v1273, 64
  %v1276 = vpop.permute.xlu0 %1275
  %v1278 = vmul.f32 %v1260, %v1276
  %1280 = vset.pattern.permute.xlu0 0
  %1281 = vperm.xlu0 %1280, %v1241
  %v1282 = vpop.permute.xlu0 %1281
  %v1284 = vmul.f32 %v1282, %v1278
  %v1285 = vsub.f32 1.0, %v1241
  %1287 = vset.pattern.permute.xlu0 0
  %1288 = vperm.xlu0 %1287, %v1285
  %v1289 = vpop.permute.xlu0 %1288
  %v1291 = vmul.f32 %v1289, %v1104
  %v1292 = vadd.f32 %v1284, %v1291
  %v1293 = vmul.f32 %v1282, %v1272
  %v1294 = vmul.f32 %v1289, %v1107
  %v1295 = vadd.f32 %v1293, %v1294
  %1297 = vrot.lane.b32.xlu0 %v1228, 32
  %v1298 = vpop.permute.xlu0 %1297
  %s1300 = scalar_lea.vmem %s10, 8
  %1301 = vst.msk [vmem:[%s1300] sm:$0x3] %vm549, %v1298
  %1303 = vrot.lane.b32.xlu0 %v1284, 32
  %v1304 = vpop.permute.xlu0 %1303
  %s1306 = scalar_lea.vmem %s11, 8
  %1307 = vst.msk [vmem:[%s1306] sm:$0x3] %vm549, %v1304
  %s1308 = scalar_lea.vmem [#allocation2], 10
  %v1309 = vld [vmem:[%s1308] sm:$0x3]
  %v1310 = vld [vmem:[%s6] sm:$0xff]
  %v1311 = vld [vmem:[%s6 + $0x8] sm:$0xff]
  %v1312 = vld [vmem:[%s6 + $0x10] sm:$0xff]
  %v1313 = vld [vmem:[%s6 + $0x18] sm:$0xff]
  %1315 = vrot.lane.b32.xlu0 %v1236, 32
  %v1316 = vpop.permute.xlu0 %1315
  %v1317 = vsel %vm49, %v1316, 0
  %1319 = vmatpush.msra.mxu0 0.0
  %1320 = vmatpush.msra.mxu0 0.0
  %1321 = vmatpush.msra.mxu0 0.0
  %1322 = vmatpush.msra.mxu0 0.0
  %1323 = vmatpush.msra.mxu0 0.0
  %1324 = vmatpush.msra.mxu0 0.0
  %1325 = vmatpush.msra.mxu0 0.0
  %1326 = vmatpush.msra.mxu0 0.0
  %1327 = vmatpush.msra.mxu0 0.0
  %1328 = vmatpush.msra.mxu0 0.0
  %1329 = vmatpush.msra.mxu0 0.0
  %1330 = vmatpush.msra.mxu0 0.0
  %1331 = vmatpush.msra.mxu0 %v1313
  %1332 = vmatpush.msra.mxu0 %v1312
  %1333 = vmatpush.msra.mxu0 %v1311
  %1334 = vmatpush.msra.mxu0 %v1310
  %1335 = vmatmul.f32.gmra.mxu0 %v1317
  %v1336 = vpop.f32.mrf.mxu0
  %v1337 = vadd.f32 0.0, %v1336
  %1338 = vdwg.mxu0
  %v1339 = vadd.f32 %v1309, %v1337
  %s1340 = scalar_lea.vmem [#allocation3], 10
  %v1341 = vld [vmem:[%s1340] sm:$0x3]
  %v1342 = vld [vmem:[%s7] sm:$0xff]
  %v1343 = vld [vmem:[%s7 + $0x8] sm:$0xff]
  %v1344 = vld [vmem:[%s7 + $0x10] sm:$0xff]
  %v1345 = vld [vmem:[%s7 + $0x18] sm:$0xff]
  %1347 = vrot.lane.b32.xlu0 %v1292, 32
  %v1348 = vpop.permute.xlu0 %1347
  %v1349 = vsel %vm49, %v1348, 0
  %1351 = vmatpush.msra.mxu0 0.0
  %1352 = vmatpush.msra.mxu0 0.0
  %1353 = vmatpush.msra.mxu0 0.0
  %1354 = vmatpush.msra.mxu0 0.0
  %1355 = vmatpush.msra.mxu0 0.0
  %1356 = vmatpush.msra.mxu0 0.0
  %1357 = vmatpush.msra.mxu0 0.0
  %1358 = vmatpush.msra.mxu0 0.0
  %1359 = vmatpush.msra.mxu0 0.0
  %1360 = vmatpush.msra.mxu0 0.0
  %1361 = vmatpush.msra.mxu0 0.0
  %1362 = vmatpush.msra.mxu0 0.0
  %1363 = vmatpush.msra.mxu0 %v1345
  %1364 = vmatpush.msra.mxu0 %v1344
  %1365 = vmatpush.msra.mxu0 %v1343
  %1366 = vmatpush.msra.mxu0 %v1342
  %1367 = vmatmul.f32.gmra.mxu0 %v1349
  %v1368 = vpop.f32.mrf.mxu0
  %v1369 = vadd.f32 0.0, %v1368
  %1370 = vdwg.mxu0
  %v1371 = vadd.f32 %v1341, %v1369
  %s1372 = scalar_lea.vmem %s2, 10
  %v1373 = vld [vmem:[%s1372] sm:$0x3]
  %v1374 = vxor.u32 %v1339, 2147483648
  %v1375 = vmul.f32 %v1374, 1.442695
  %v1376 = vpow.pop %v1375
  %v1377 = vadd.f32 %v1376, 1.0
  %v1378 = vrcp.pop %v1377
  %v1379 = vmul.f32 %v1377, %v1378
  %v1380 = vsub.f32 1.0, %v1379
  %v1381 = vmul.f32 %v1378, %v1380
  %v1382 = vadd.f32 %v1378, %v1381
  %vm1383 = vweird.f32 %v1377
  %vm1384 = vweird.f32 %v1378
  %vm1385 = vmor %vm1383, %vm1384
  %v1386 = vsel %vm1385, %v1378, %v1382
  %v1387 = vand.u32 2147483647, %v1377
  %vm1388 = vcmp.eq.f32.partialorder %v1387, 8.507059e+37
  %v1389 = vand.u32 %v1377, 2147483648
  %v1390 = vor.u32 1.1754944e-38, %v1389
  %v1391 = vsel %vm1388, %v1390, %v1386
  %v1392 = vmul.f32 1.0, %v1391
  %v1393 = vtanh.pop %v1339
  %v1394 = vmul.f32 %v1392, %v1239
  %1396 = vrot.lane.b32.xlu0 %v1393, 64
  %v1397 = vpop.permute.xlu0 %1396
  %v1399 = vmul.f32 %v1392, %v1397
  %1401 = vrot.lane.b32.xlu0 %v1399, 32
  %v1402 = vpop.permute.xlu0 %1401
  %v1404 = vadd.f32 %v1394, %v1402
  %v1405 = vtanh.pop %v1404
  %1407 = vrot.lane.b32.xlu0 %v1405, 64
  %v1408 = vpop.permute.xlu0 %1407
  %v1410 = vmul.f32 %v1392, %v1408
  %1412 = vset.pattern.permute.xlu0 0
  %1413 = vperm.xlu0 %1412, %v1373
  %v1414 = vpop.permute.xlu0 %1413
  %v1416 = vmul.f32 %v1414, %v1410
  %v1417 = vsub.f32 1.0, %v1373
  %1419 = vset.pattern.permute.xlu0 0
  %1420 = vperm.xlu0 %1419, %v1417
  %v1421 = vpop.permute.xlu0 %1420
  %v1423 = vmul.f32 %v1421, %v1236
  %v1424 = vadd.f32 %v1416, %v1423
  %v1425 = vmul.f32 %v1414, %v1404
  %v1426 = vmul.f32 %v1421, %v1239
  %v1427 = vadd.f32 %v1425, %v1426
  %s1428 = scalar_lea.vmem %s3, 10
  %v1429 = vld [vmem:[%s1428] sm:$0x3]
  %v1430 = vxor.u32 %v1371, 2147483648
  %v1431 = vmul.f32 %v1430, 1.442695
  %v1432 = vpow.pop %v1431
  %v1433 = vadd.f32 %v1432, 1.0
  %v1434 = vrcp.pop %v1433
  %v1435 = vmul.f32 %v1433, %v1434
  %v1436 = vsub.f32 1.0, %v1435
  %v1437 = vmul.f32 %v1434, %v1436
  %v1438 = vadd.f32 %v1434, %v1437
  %vm1439 = vweird.f32 %v1433
  %vm1440 = vweird.f32 %v1434
  %vm1441 = vmor %vm1439, %vm1440
  %v1442 = vsel %vm1441, %v1434, %v1438
  %v1443 = vand.u32 2147483647, %v1433
  %vm1444 = vcmp.eq.f32.partialorder %v1443, 8.507059e+37
  %v1445 = vand.u32 %v1433, 2147483648
  %v1446 = vor.u32 1.1754944e-38, %v1445
  %v1447 = vsel %vm1444, %v1446, %v1442
  %v1448 = vmul.f32 1.0, %v1447
  %v1449 = vtanh.pop %v1371
  %v1450 = vmul.f32 %v1448, %v1295
  %1452 = vrot.lane.b32.xlu0 %v1449, 64
  %v1453 = vpop.permute.xlu0 %1452
  %v1455 = vmul.f32 %v1448, %v1453
  %1457 = vrot.lane.b32.xlu0 %v1455, 32
  %v1458 = vpop.permute.xlu0 %1457
  %v1460 = vadd.f32 %v1450, %v1458
  %v1461 = vtanh.pop %v1460
  %1463 = vrot.lane.b32.xlu0 %v1461, 64
  %v1464 = vpop.permute.xlu0 %1463
  %v1466 = vmul.f32 %v1448, %v1464
  %1468 = vset.pattern.permute.xlu0 0
  %1469 = vperm.xlu0 %1468, %v1429
  %v1470 = vpop.permute.xlu0 %1469
  %v1472 = vmul.f32 %v1470, %v1466
  %v1473 = vsub.f32 1.0, %v1429
  %1475 = vset.pattern.permute.xlu0 0
  %1476 = vperm.xlu0 %1475, %v1473
  %v1477 = vpop.permute.xlu0 %1476
  %v1479 = vmul.f32 %v1477, %v1292
  %v1480 = vadd.f32 %v1472, %v1479
  %v1481 = vmul.f32 %v1470, %v1460
  %v1482 = vmul.f32 %v1477, %v1295
  %v1483 = vadd.f32 %v1481, %v1482
  %1485 = vrot.lane.b32.xlu0 %v1416, 32
  %v1486 = vpop.permute.xlu0 %1485
  %s1488 = scalar_lea.vmem %s10, 10
  %1489 = vst.msk [vmem:[%s1488] sm:$0x3] %vm549, %v1486
  %1491 = vrot.lane.b32.xlu0 %v1472, 32
  %v1492 = vpop.permute.xlu0 %1491
  %s1494 = scalar_lea.vmem %s11, 10
  %1495 = vst.msk [vmem:[%s1494] sm:$0x3] %vm549, %v1492
  %s1496 = scalar_lea.vmem [#allocation2], 12
  %v1497 = vld [vmem:[%s1496] sm:$0x3]
  %v1498 = vld [vmem:[%s6] sm:$0xff]
  %v1499 = vld [vmem:[%s6 + $0x8] sm:$0xff]
  %v1500 = vld [vmem:[%s6 + $0x10] sm:$0xff]
  %v1501 = vld [vmem:[%s6 + $0x18] sm:$0xff]
  %1503 = vrot.lane.b32.xlu0 %v1424, 32
  %v1504 = vpop.permute.xlu0 %1503
  %v1505 = vsel %vm49, %v1504, 0
  %1507 = vmatpush.msra.mxu0 0.0
  %1508 = vmatpush.msra.mxu0 0.0
  %1509 = vmatpush.msra.mxu0 0.0
  %1510 = vmatpush.msra.mxu0 0.0
  %1511 = vmatpush.msra.mxu0 0.0
  %1512 = vmatpush.msra.mxu0 0.0
  %1513 = vmatpush.msra.mxu0 0.0
  %1514 = vmatpush.msra.mxu0 0.0
  %1515 = vmatpush.msra.mxu0 0.0
  %1516 = vmatpush.msra.mxu0 0.0
  %1517 = vmatpush.msra.mxu0 0.0
  %1518 = vmatpush.msra.mxu0 0.0
  %1519 = vmatpush.msra.mxu0 %v1501
  %1520 = vmatpush.msra.mxu0 %v1500
  %1521 = vmatpush.msra.mxu0 %v1499
  %1522 = vmatpush.msra.mxu0 %v1498
  %1523 = vmatmul.f32.gmra.mxu0 %v1505
  %v1524 = vpop.f32.mrf.mxu0
  %v1525 = vadd.f32 0.0, %v1524
  %1526 = vdwg.mxu0
  %v1527 = vadd.f32 %v1497, %v1525
  %s1528 = scalar_lea.vmem [#allocation3], 12
  %v1529 = vld [vmem:[%s1528] sm:$0x3]
  %v1530 = vld [vmem:[%s7] sm:$0xff]
  %v1531 = vld [vmem:[%s7 + $0x8] sm:$0xff]
  %v1532 = vld [vmem:[%s7 + $0x10] sm:$0xff]
  %v1533 = vld [vmem:[%s7 + $0x18] sm:$0xff]
  %1535 = vrot.lane.b32.xlu0 %v1480, 32
  %v1536 = vpop.permute.xlu0 %1535
  %v1537 = vsel %vm49, %v1536, 0
  %1539 = vmatpush.msra.mxu0 0.0
  %1540 = vmatpush.msra.mxu0 0.0
  %1541 = vmatpush.msra.mxu0 0.0
  %1542 = vmatpush.msra.mxu0 0.0
  %1543 = vmatpush.msra.mxu0 0.0
  %1544 = vmatpush.msra.mxu0 0.0
  %1545 = vmatpush.msra.mxu0 0.0
  %1546 = vmatpush.msra.mxu0 0.0
  %1547 = vmatpush.msra.mxu0 0.0
  %1548 = vmatpush.msra.mxu0 0.0
  %1549 = vmatpush.msra.mxu0 0.0
  %1550 = vmatpush.msra.mxu0 0.0
  %1551 = vmatpush.msra.mxu0 %v1533
  %1552 = vmatpush.msra.mxu0 %v1532
  %1553 = vmatpush.msra.mxu0 %v1531
  %1554 = vmatpush.msra.mxu0 %v1530
  %1555 = vmatmul.f32.gmra.mxu0 %v1537
  %v1556 = vpop.f32.mrf.mxu0
  %v1557 = vadd.f32 0.0, %v1556
  %1558 = vdwg.mxu0
  %v1559 = vadd.f32 %v1529, %v1557
  %s1560 = scalar_lea.vmem %s2, 12
  %v1561 = vld [vmem:[%s1560] sm:$0x3]
  %v1562 = vxor.u32 %v1527, 2147483648
  %v1563 = vmul.f32 %v1562, 1.442695
  %v1564 = vpow.pop %v1563
  %v1565 = vadd.f32 %v1564, 1.0
  %v1566 = vrcp.pop %v1565
  %v1567 = vmul.f32 %v1565, %v1566
  %v1568 = vsub.f32 1.0, %v1567
  %v1569 = vmul.f32 %v1566, %v1568
  %v1570 = vadd.f32 %v1566, %v1569
  %vm1571 = vweird.f32 %v1565
  %vm1572 = vweird.f32 %v1566
  %vm1573 = vmor %vm1571, %vm1572
  %v1574 = vsel %vm1573, %v1566, %v1570
  %v1575 = vand.u32 2147483647, %v1565
  %vm1576 = vcmp.eq.f32.partialorder %v1575, 8.507059e+37
  %v1577 = vand.u32 %v1565, 2147483648
  %v1578 = vor.u32 1.1754944e-38, %v1577
  %v1579 = vsel %vm1576, %v1578, %v1574
  %v1580 = vmul.f32 1.0, %v1579
  %v1581 = vtanh.pop %v1527
  %v1582 = vmul.f32 %v1580, %v1427
  %1584 = vrot.lane.b32.xlu0 %v1581, 64
  %v1585 = vpop.permute.xlu0 %1584
  %v1587 = vmul.f32 %v1580, %v1585
  %1589 = vrot.lane.b32.xlu0 %v1587, 32
  %v1590 = vpop.permute.xlu0 %1589
  %v1592 = vadd.f32 %v1582, %v1590
  %v1593 = vtanh.pop %v1592
  %1595 = vrot.lane.b32.xlu0 %v1593, 64
  %v1596 = vpop.permute.xlu0 %1595
  %v1598 = vmul.f32 %v1580, %v1596
  %1600 = vset.pattern.permute.xlu0 0
  %1601 = vperm.xlu0 %1600, %v1561
  %v1602 = vpop.permute.xlu0 %1601
  %v1604 = vmul.f32 %v1602, %v1598
  %v1605 = vsub.f32 1.0, %v1561
  %1607 = vset.pattern.permute.xlu0 0
  %1608 = vperm.xlu0 %1607, %v1605
  %v1609 = vpop.permute.xlu0 %1608
  %v1611 = vmul.f32 %v1609, %v1424
  %v1612 = vadd.f32 %v1604, %v1611
  %v1613 = vmul.f32 %v1602, %v1592
  %v1614 = vmul.f32 %v1609, %v1427
  %v1615 = vadd.f32 %v1613, %v1614
  %s1616 = scalar_lea.vmem %s3, 12
  %v1617 = vld [vmem:[%s1616] sm:$0x3]
  %v1618 = vxor.u32 %v1559, 2147483648
  %v1619 = vmul.f32 %v1618, 1.442695
  %v1620 = vpow.pop %v1619
  %v1621 = vadd.f32 %v1620, 1.0
  %v1622 = vrcp.pop %v1621
  %v1623 = vmul.f32 %v1621, %v1622
  %v1624 = vsub.f32 1.0, %v1623
  %v1625 = vmul.f32 %v1622, %v1624
  %v1626 = vadd.f32 %v1622, %v1625
  %vm1627 = vweird.f32 %v1621
  %vm1628 = vweird.f32 %v1622
  %vm1629 = vmor %vm1627, %vm1628
  %v1630 = vsel %vm1629, %v1622, %v1626
  %v1631 = vand.u32 2147483647, %v1621
  %vm1632 = vcmp.eq.f32.partialorder %v1631, 8.507059e+37
  %v1633 = vand.u32 %v1621, 2147483648
  %v1634 = vor.u32 1.1754944e-38, %v1633
  %v1635 = vsel %vm1632, %v1634, %v1630
  %v1636 = vmul.f32 1.0, %v1635
  %v1637 = vtanh.pop %v1559
  %v1638 = vmul.f32 %v1636, %v1483
  %1640 = vrot.lane.b32.xlu0 %v1637, 64
  %v1641 = vpop.permute.xlu0 %1640
  %v1643 = vmul.f32 %v1636, %v1641
  %1645 = vrot.lane.b32.xlu0 %v1643, 32
  %v1646 = vpop.permute.xlu0 %1645
  %v1648 = vadd.f32 %v1638, %v1646
  %v1649 = vtanh.pop %v1648
  %1651 = vrot.lane.b32.xlu0 %v1649, 64
  %v1652 = vpop.permute.xlu0 %1651
  %v1654 = vmul.f32 %v1636, %v1652
  %1656 = vset.pattern.permute.xlu0 0
  %1657 = vperm.xlu0 %1656, %v1617
  %v1658 = vpop.permute.xlu0 %1657
  %v1660 = vmul.f32 %v1658, %v1654
  %v1661 = vsub.f32 1.0, %v1617
  %1663 = vset.pattern.permute.xlu0 0
  %1664 = vperm.xlu0 %1663, %v1661
  %v1665 = vpop.permute.xlu0 %1664
  %v1667 = vmul.f32 %v1665, %v1480
  %v1668 = vadd.f32 %v1660, %v1667
  %v1669 = vmul.f32 %v1658, %v1648
  %v1670 = vmul.f32 %v1665, %v1483
  %v1671 = vadd.f32 %v1669, %v1670
  %1673 = vrot.lane.b32.xlu0 %v1604, 32
  %v1674 = vpop.permute.xlu0 %1673
  %s1676 = scalar_lea.vmem %s10, 12
  %1677 = vst.msk [vmem:[%s1676] sm:$0x3] %vm549, %v1674
  %1679 = vrot.lane.b32.xlu0 %v1660, 32
  %v1680 = vpop.permute.xlu0 %1679
  %s1682 = scalar_lea.vmem %s11, 12
  %1683 = vst.msk [vmem:[%s1682] sm:$0x3] %vm549, %v1680
  %s1684 = scalar_lea.vmem [#allocation2], 14
  %v1685 = vld [vmem:[%s1684] sm:$0x3]
  %v1686 = vld [vmem:[%s6] sm:$0xff]
  %v1687 = vld [vmem:[%s6 + $0x8] sm:$0xff]
  %v1688 = vld [vmem:[%s6 + $0x10] sm:$0xff]
  %v1689 = vld [vmem:[%s6 + $0x18] sm:$0xff]
  %1691 = vrot.lane.b32.xlu0 %v1612, 32
  %v1692 = vpop.permute.xlu0 %1691
  %v1693 = vsel %vm49, %v1692, 0
  %1695 = vmatpush.msra.mxu0 0.0
  %1696 = vmatpush.msra.mxu0 0.0
  %1697 = vmatpush.msra.mxu0 0.0
  %1698 = vmatpush.msra.mxu0 0.0
  %1699 = vmatpush.msra.mxu0 0.0
  %1700 = vmatpush.msra.mxu0 0.0
  %1701 = vmatpush.msra.mxu0 0.0
  %1702 = vmatpush.msra.mxu0 0.0
  %1703 = vmatpush.msra.mxu0 0.0
  %1704 = vmatpush.msra.mxu0 0.0
  %1705 = vmatpush.msra.mxu0 0.0
  %1706 = vmatpush.msra.mxu0 0.0
  %1707 = vmatpush.msra.mxu0 %v1689
  %1708 = vmatpush.msra.mxu0 %v1688
  %1709 = vmatpush.msra.mxu0 %v1687
  %1710 = vmatpush.msra.mxu0 %v1686
  %1711 = vmatmul.f32.gmra.mxu0 %v1693
  %v1712 = vpop.f32.mrf.mxu0
  %v1713 = vadd.f32 0.0, %v1712
  %1714 = vdwg.mxu0
  %v1715 = vadd.f32 %v1685, %v1713
  %s1716 = scalar_lea.vmem [#allocation3], 14
  %v1717 = vld [vmem:[%s1716] sm:$0x3]
  %v1718 = vld [vmem:[%s7] sm:$0xff]
  %v1719 = vld [vmem:[%s7 + $0x8] sm:$0xff]
  %v1720 = vld [vmem:[%s7 + $0x10] sm:$0xff]
  %v1721 = vld [vmem:[%s7 + $0x18] sm:$0xff]
  %1723 = vrot.lane.b32.xlu0 %v1668, 32
  %v1724 = vpop.permute.xlu0 %1723
  %v1725 = vsel %vm49, %v1724, 0
  %1727 = vmatpush.msra.mxu0 0.0
  %1728 = vmatpush.msra.mxu0 0.0
  %1729 = vmatpush.msra.mxu0 0.0
  %1730 = vmatpush.msra.mxu0 0.0
  %1731 = vmatpush.msra.mxu0 0.0
  %1732 = vmatpush.msra.mxu0 0.0
  %1733 = vmatpush.msra.mxu0 0.0
  %1734 = vmatpush.msra.mxu0 0.0
  %1735 = vmatpush.msra.mxu0 0.0
  %1736 = vmatpush.msra.mxu0 0.0
  %1737 = vmatpush.msra.mxu0 0.0
  %1738 = vmatpush.msra.mxu0 0.0
  %1739 = vmatpush.msra.mxu0 %v1721
  %1740 = vmatpush.msra.mxu0 %v1720
  %1741 = vmatpush.msra.mxu0 %v1719
  %1742 = vmatpush.msra.mxu0 %v1718
  %1743 = vmatmul.f32.gmra.mxu0 %v1725
  %v1744 = vpop.f32.mrf.mxu0
  %v1745 = vadd.f32 0.0, %v1744
  %1746 = vdwg.mxu0
  %v1747 = vadd.f32 %v1717, %v1745
  %s1748 = scalar_lea.vmem %s2, 14
  %v1749 = vld [vmem:[%s1748] sm:$0x3]
  %v1750 = vxor.u32 %v1715, 2147483648
  %v1751 = vmul.f32 %v1750, 1.442695
  %v1752 = vpow.pop %v1751
  %v1753 = vadd.f32 %v1752, 1.0
  %v1754 = vrcp.pop %v1753
  %v1755 = vmul.f32 %v1753, %v1754
  %v1756 = vsub.f32 1.0, %v1755
  %v1757 = vmul.f32 %v1754, %v1756
  %v1758 = vadd.f32 %v1754, %v1757
  %vm1759 = vweird.f32 %v1753
  %vm1760 = vweird.f32 %v1754
  %vm1761 = vmor %vm1759, %vm1760
  %v1762 = vsel %vm1761, %v1754, %v1758
  %v1763 = vand.u32 2147483647, %v1753
  %vm1764 = vcmp.eq.f32.partialorder %v1763, 8.507059e+37
  %v1765 = vand.u32 %v1753, 2147483648
  %v1766 = vor.u32 1.1754944e-38, %v1765
  %v1767 = vsel %vm1764, %v1766, %v1762
  %v1768 = vmul.f32 1.0, %v1767
  %v1769 = vtanh.pop %v1715
  %v1770 = vmul.f32 %v1768, %v1615
  %1772 = vrot.lane.b32.xlu0 %v1769, 64
  %v1773 = vpop.permute.xlu0 %1772
  %v1775 = vmul.f32 %v1768, %v1773
  %1777 = vrot.lane.b32.xlu0 %v1775, 32
  %v1778 = vpop.permute.xlu0 %1777
  %v1780 = vadd.f32 %v1770, %v1778
  %v1781 = vtanh.pop %v1780
  %1783 = vrot.lane.b32.xlu0 %v1781, 64
  %v1784 = vpop.permute.xlu0 %1783
  %v1786 = vmul.f32 %v1768, %v1784
  %1788 = vset.pattern.permute.xlu0 0
  %1789 = vperm.xlu0 %1788, %v1749
  %v1790 = vpop.permute.xlu0 %1789
  %v1792 = vmul.f32 %v1790, %v1786
  %v1793 = vsub.f32 1.0, %v1749
  %1795 = vset.pattern.permute.xlu0 0
  %1796 = vperm.xlu0 %1795, %v1793
  %v1797 = vpop.permute.xlu0 %1796
  %v1799 = vmul.f32 %v1797, %v1612
  %v1800 = vadd.f32 %v1792, %v1799
  %v1801 = vmul.f32 %v1790, %v1780
  %v1802 = vmul.f32 %v1797, %v1615
  %v1803 = vadd.f32 %v1801, %v1802
  %s1804 = scalar_lea.vmem %s3, 14
  %v1805 = vld [vmem:[%s1804] sm:$0x3]
  %v1806 = vxor.u32 %v1747, 2147483648
  %v1807 = vmul.f32 %v1806, 1.442695
  %v1808 = vpow.pop %v1807
  %v1809 = vadd.f32 %v1808, 1.0
  %v1810 = vrcp.pop %v1809
  %v1811 = vmul.f32 %v1809, %v1810
  %v1812 = vsub.f32 1.0, %v1811
  %v1813 = vmul.f32 %v1810, %v1812
  %v1814 = vadd.f32 %v1810, %v1813
  %vm1815 = vweird.f32 %v1809
  %vm1816 = vweird.f32 %v1810
  %vm1817 = vmor %vm1815, %vm1816
  %v1818 = vsel %vm1817, %v1810, %v1814
  %v1819 = vand.u32 2147483647, %v1809
  %vm1820 = vcmp.eq.f32.partialorder %v1819, 8.507059e+37
  %v1821 = vand.u32 %v1809, 2147483648
  %v1822 = vor.u32 1.1754944e-38, %v1821
  %v1823 = vsel %vm1820, %v1822, %v1818
  %v1824 = vmul.f32 1.0, %v1823
  %v1825 = vtanh.pop %v1747
  %v1826 = vmul.f32 %v1824, %v1671
  %1828 = vrot.lane.b32.xlu0 %v1825, 64
  %v1829 = vpop.permute.xlu0 %1828
  %v1831 = vmul.f32 %v1824, %v1829
  %1833 = vrot.lane.b32.xlu0 %v1831, 32
  %v1834 = vpop.permute.xlu0 %1833
  %v1836 = vadd.f32 %v1826, %v1834
  %v1837 = vtanh.pop %v1836
  %1839 = vrot.lane.b32.xlu0 %v1837, 64
  %v1840 = vpop.permute.xlu0 %1839
  %v1842 = vmul.f32 %v1824, %v1840
  %1844 = vset.pattern.permute.xlu0 0
  %1845 = vperm.xlu0 %1844, %v1805
  %v1846 = vpop.permute.xlu0 %1845
  %v1848 = vmul.f32 %v1846, %v1842
  %v1849 = vsub.f32 1.0, %v1805
  %1851 = vset.pattern.permute.xlu0 0
  %1852 = vperm.xlu0 %1851, %v1849
  %v1853 = vpop.permute.xlu0 %1852
  %v1855 = vmul.f32 %v1853, %v1668
  %v1856 = vadd.f32 %v1848, %v1855
  %v1857 = vmul.f32 %v1846, %v1836
  %v1858 = vmul.f32 %v1853, %v1671
  %v1859 = vadd.f32 %v1857, %v1858
  %1861 = vrot.lane.b32.xlu0 %v1792, 32
  %v1862 = vpop.permute.xlu0 %1861
  %s1864 = scalar_lea.vmem %s10, 14
  %1865 = vst.msk [vmem:[%s1864] sm:$0x3] %vm549, %v1862
  %1867 = vrot.lane.b32.xlu0 %v1848, 32
  %v1868 = vpop.permute.xlu0 %1867
  %s1870 = scalar_lea.vmem %s11, 14
  %1871 = vst.msk [vmem:[%s1870] sm:$0x3] %vm549, %v1868
  %s1872 = scalar_lea.vmem [#allocation2], 16
  %v1873 = vld [vmem:[%s1872] sm:$0x3]
  %v1874 = vld [vmem:[%s6] sm:$0xff]
  %v1875 = vld [vmem:[%s6 + $0x8] sm:$0xff]
  %v1876 = vld [vmem:[%s6 + $0x10] sm:$0xff]
  %v1877 = vld [vmem:[%s6 + $0x18] sm:$0xff]
  %1879 = vrot.lane.b32.xlu0 %v1800, 32
  %v1880 = vpop.permute.xlu0 %1879
  %v1881 = vsel %vm49, %v1880, 0
  %1883 = vmatpush.msra.mxu0 0.0
  %1884 = vmatpush.msra.mxu0 0.0
  %1885 = vmatpush.msra.mxu0 0.0
  %1886 = vmatpush.msra.mxu0 0.0
  %1887 = vmatpush.msra.mxu0 0.0
  %1888 = vmatpush.msra.mxu0 0.0
  %1889 = vmatpush.msra.mxu0 0.0
  %1890 = vmatpush.msra.mxu0 0.0
  %1891 = vmatpush.msra.mxu0 0.0
  %1892 = vmatpush.msra.mxu0 0.0
  %1893 = vmatpush.msra.mxu0 0.0
  %1894 = vmatpush.msra.mxu0 0.0
  %1895 = vmatpush.msra.mxu0 %v1877
  %1896 = vmatpush.msra.mxu0 %v1876
  %1897 = vmatpush.msra.mxu0 %v1875
  %1898 = vmatpush.msra.mxu0 %v1874
  %1899 = vmatmul.f32.gmra.mxu0 %v1881
  %v1900 = vpop.f32.mrf.mxu0
  %v1901 = vadd.f32 0.0, %v1900
  %1902 = vdwg.mxu0
  %v1903 = vadd.f32 %v1873, %v1901
  %s1904 = scalar_lea.vmem [#allocation3], 16
  %v1905 = vld [vmem:[%s1904] sm:$0x3]
  %v1906 = vld [vmem:[%s7] sm:$0xff]
  %v1907 = vld [vmem:[%s7 + $0x8] sm:$0xff]
  %v1908 = vld [vmem:[%s7 + $0x10] sm:$0xff]
  %v1909 = vld [vmem:[%s7 + $0x18] sm:$0xff]
  %1911 = vrot.lane.b32.xlu0 %v1856, 32
  %v1912 = vpop.permute.xlu0 %1911
  %v1913 = vsel %vm49, %v1912, 0
  %1915 = vmatpush.msra.mxu0 0.0
  %1916 = vmatpush.msra.mxu0 0.0
  %1917 = vmatpush.msra.mxu0 0.0
  %1918 = vmatpush.msra.mxu0 0.0
  %1919 = vmatpush.msra.mxu0 0.0
  %1920 = vmatpush.msra.mxu0 0.0
  %1921 = vmatpush.msra.mxu0 0.0
  %1922 = vmatpush.msra.mxu0 0.0
  %1923 = vmatpush.msra.mxu0 0.0
  %1924 = vmatpush.msra.mxu0 0.0
  %1925 = vmatpush.msra.mxu0 0.0
  %1926 = vmatpush.msra.mxu0 0.0
  %1927 = vmatpush.msra.mxu0 %v1909
  %1928 = vmatpush.msra.mxu0 %v1908
  %1929 = vmatpush.msra.mxu0 %v1907
  %1930 = vmatpush.msra.mxu0 %v1906
  %1931 = vmatmul.f32.gmra.mxu0 %v1913
  %v1932 = vpop.f32.mrf.mxu0
  %v1933 = vadd.f32 0.0, %v1932
  %1934 = vdwg.mxu0
  %v1935 = vadd.f32 %v1905, %v1933
  %s1936 = scalar_lea.vmem %s2, 16
  %v1937 = vld [vmem:[%s1936] sm:$0x3]
  %v1938 = vxor.u32 %v1903, 2147483648
  %v1939 = vmul.f32 %v1938, 1.442695
  %v1940 = vpow.pop %v1939
  %v1941 = vadd.f32 %v1940, 1.0
  %v1942 = vrcp.pop %v1941
  %v1943 = vmul.f32 %v1941, %v1942
  %v1944 = vsub.f32 1.0, %v1943
  %v1945 = vmul.f32 %v1942, %v1944
  %v1946 = vadd.f32 %v1942, %v1945
  %vm1947 = vweird.f32 %v1941
  %vm1948 = vweird.f32 %v1942
  %vm1949 = vmor %vm1947, %vm1948
  %v1950 = vsel %vm1949, %v1942, %v1946
  %v1951 = vand.u32 2147483647, %v1941
  %vm1952 = vcmp.eq.f32.partialorder %v1951, 8.507059e+37
  %v1953 = vand.u32 %v1941, 2147483648
  %v1954 = vor.u32 1.1754944e-38, %v1953
  %v1955 = vsel %vm1952, %v1954, %v1950
  %v1956 = vmul.f32 1.0, %v1955
  %v1957 = vtanh.pop %v1903
  %v1958 = vmul.f32 %v1956, %v1803
  %1960 = vrot.lane.b32.xlu0 %v1957, 64
  %v1961 = vpop.permute.xlu0 %1960
  %v1963 = vmul.f32 %v1956, %v1961
  %1965 = vrot.lane.b32.xlu0 %v1963, 32
  %v1966 = vpop.permute.xlu0 %1965
  %v1968 = vadd.f32 %v1958, %v1966
  %v1969 = vtanh.pop %v1968
  %1971 = vrot.lane.b32.xlu0 %v1969, 64
  %v1972 = vpop.permute.xlu0 %1971
  %v1974 = vmul.f32 %v1956, %v1972
  %1976 = vset.pattern.permute.xlu0 0
  %1977 = vperm.xlu0 %1976, %v1937
  %v1978 = vpop.permute.xlu0 %1977
  %v1980 = vmul.f32 %v1978, %v1974
  %v1981 = vsub.f32 1.0, %v1937
  %1983 = vset.pattern.permute.xlu0 0
  %1984 = vperm.xlu0 %1983, %v1981
  %v1985 = vpop.permute.xlu0 %1984
  %v1987 = vmul.f32 %v1985, %v1800
  %v1988 = vadd.f32 %v1980, %v1987
  %v1989 = vmul.f32 %v1978, %v1968
  %v1990 = vmul.f32 %v1985, %v1803
  %v1991 = vadd.f32 %v1989, %v1990
  %s1992 = scalar_lea.vmem %s3, 16
  %v1993 = vld [vmem:[%s1992] sm:$0x3]
  %v1994 = vxor.u32 %v1935, 2147483648
  %v1995 = vmul.f32 %v1994, 1.442695
  %v1996 = vpow.pop %v1995
  %v1997 = vadd.f32 %v1996, 1.0
  %v1998 = vrcp.pop %v1997
  %v1999 = vmul.f32 %v1997, %v1998
  %v2000 = vsub.f32 1.0, %v1999
  %v2001 = vmul.f32 %v1998, %v2000
  %v2002 = vadd.f32 %v1998, %v2001
  %vm2003 = vweird.f32 %v1997
  %vm2004 = vweird.f32 %v1998
  %vm2005 = vmor %vm2003, %vm2004
  %v2006 = vsel %vm2005, %v1998, %v2002
  %v2007 = vand.u32 2147483647, %v1997
  %vm2008 = vcmp.eq.f32.partialorder %v2007, 8.507059e+37
  %v2009 = vand.u32 %v1997, 2147483648
  %v2010 = vor.u32 1.1754944e-38, %v2009
  %v2011 = vsel %vm2008, %v2010, %v2006
  %v2012 = vmul.f32 1.0, %v2011
  %v2013 = vtanh.pop %v1935
  %v2014 = vmul.f32 %v2012, %v1859
  %2016 = vrot.lane.b32.xlu0 %v2013, 64
  %v2017 = vpop.permute.xlu0 %2016
  %v2019 = vmul.f32 %v2012, %v2017
  %2021 = vrot.lane.b32.xlu0 %v2019, 32
  %v2022 = vpop.permute.xlu0 %2021
  %v2024 = vadd.f32 %v2014, %v2022
  %v2025 = vtanh.pop %v2024
  %2027 = vrot.lane.b32.xlu0 %v2025, 64
  %v2028 = vpop.permute.xlu0 %2027
  %v2030 = vmul.f32 %v2012, %v2028
  %2032 = vset.pattern.permute.xlu0 0
  %2033 = vperm.xlu0 %2032, %v1993
  %v2034 = vpop.permute.xlu0 %2033
  %v2036 = vmul.f32 %v2034, %v2030
  %v2037 = vsub.f32 1.0, %v1993
  %2039 = vset.pattern.permute.xlu0 0
  %2040 = vperm.xlu0 %2039, %v2037
  %v2041 = vpop.permute.xlu0 %2040
  %v2043 = vmul.f32 %v2041, %v1856
  %v2044 = vadd.f32 %v2036, %v2043
  %v2045 = vmul.f32 %v2034, %v2024
  %v2046 = vmul.f32 %v2041, %v1859
  %v2047 = vadd.f32 %v2045, %v2046
  %2049 = vrot.lane.b32.xlu0 %v1980, 32
  %v2050 = vpop.permute.xlu0 %2049
  %s2052 = scalar_lea.vmem %s10, 16
  %2053 = vst.msk [vmem:[%s2052] sm:$0x3] %vm549, %v2050
  %2055 = vrot.lane.b32.xlu0 %v2036, 32
  %v2056 = vpop.permute.xlu0 %2055
  %s2058 = scalar_lea.vmem %s11, 16
  %2059 = vst.msk [vmem:[%s2058] sm:$0x3] %vm549, %v2056
  %s2060 = scalar_lea.vmem [#allocation2], 18
  %v2061 = vld [vmem:[%s2060] sm:$0x3]
  %v2062 = vld [vmem:[%s6] sm:$0xff]
  %v2063 = vld [vmem:[%s6 + $0x8] sm:$0xff]
  %v2064 = vld [vmem:[%s6 + $0x10] sm:$0xff]
  %v2065 = vld [vmem:[%s6 + $0x18] sm:$0xff]
  %2067 = vrot.lane.b32.xlu0 %v1988, 32
  %v2068 = vpop.permute.xlu0 %2067
  %v2069 = vsel %vm49, %v2068, 0
  %2071 = vmatpush.msra.mxu0 0.0
  %2072 = vmatpush.msra.mxu0 0.0
  %2073 = vmatpush.msra.mxu0 0.0
  %2074 = vmatpush.msra.mxu0 0.0
  %2075 = vmatpush.msra.mxu0 0.0
  %2076 = vmatpush.msra.mxu0 0.0
  %2077 = vmatpush.msra.mxu0 0.0
  %2078 = vmatpush.msra.mxu0 0.0
  %2079 = vmatpush.msra.mxu0 0.0
  %2080 = vmatpush.msra.mxu0 0.0
  %2081 = vmatpush.msra.mxu0 0.0
  %2082 = vmatpush.msra.mxu0 0.0
  %2083 = vmatpush.msra.mxu0 %v2065
  %2084 = vmatpush.msra.mxu0 %v2064
  %2085 = vmatpush.msra.mxu0 %v2063
  %2086 = vmatpush.msra.mxu0 %v2062
  %2087 = vmatmul.f32.gmra.mxu0 %v2069
  %v2088 = vpop.f32.mrf.mxu0
  %v2089 = vadd.f32 0.0, %v2088
  %2090 = vdwg.mxu0
  %v2091 = vadd.f32 %v2061, %v2089
  %s2092 = scalar_lea.vmem [#allocation3], 18
  %v2093 = vld [vmem:[%s2092] sm:$0x3]
  %v2094 = vld [vmem:[%s7] sm:$0xff]
  %v2095 = vld [vmem:[%s7 + $0x8] sm:$0xff]
  %v2096 = vld [vmem:[%s7 + $0x10] sm:$0xff]
  %v2097 = vld [vmem:[%s7 + $0x18] sm:$0xff]
  %2099 = vrot.lane.b32.xlu0 %v2044, 32
  %v2100 = vpop.permute.xlu0 %2099
  %v2101 = vsel %vm49, %v2100, 0
  %2103 = vmatpush.msra.mxu0 0.0
  %2104 = vmatpush.msra.mxu0 0.0
  %2105 = vmatpush.msra.mxu0 0.0
  %2106 = vmatpush.msra.mxu0 0.0
  %2107 = vmatpush.msra.mxu0 0.0
  %2108 = vmatpush.msra.mxu0 0.0
  %2109 = vmatpush.msra.mxu0 0.0
  %2110 = vmatpush.msra.mxu0 0.0
  %2111 = vmatpush.msra.mxu0 0.0
  %2112 = vmatpush.msra.mxu0 0.0
  %2113 = vmatpush.msra.mxu0 0.0
  %2114 = vmatpush.msra.mxu0 0.0
  %2115 = vmatpush.msra.mxu0 %v2097
  %2116 = vmatpush.msra.mxu0 %v2096
  %2117 = vmatpush.msra.mxu0 %v2095
  %2118 = vmatpush.msra.mxu0 %v2094
  %2119 = vmatmul.f32.gmra.mxu0 %v2101
  %v2120 = vpop.f32.mrf.mxu0
  %v2121 = vadd.f32 0.0, %v2120
  %2122 = vdwg.mxu0
  %v2123 = vadd.f32 %v2093, %v2121
  %s2124 = scalar_lea.vmem %s2, 18
  %v2125 = vld [vmem:[%s2124] sm:$0x3]
  %v2126 = vxor.u32 %v2091, 2147483648
  %v2127 = vmul.f32 %v2126, 1.442695
  %v2128 = vpow.pop %v2127
  %v2129 = vadd.f32 %v2128, 1.0
  %v2130 = vrcp.pop %v2129
  %v2131 = vmul.f32 %v2129, %v2130
  %v2132 = vsub.f32 1.0, %v2131
  %v2133 = vmul.f32 %v2130, %v2132
  %v2134 = vadd.f32 %v2130, %v2133
  %vm2135 = vweird.f32 %v2129
  %vm2136 = vweird.f32 %v2130
  %vm2137 = vmor %vm2135, %vm2136
  %v2138 = vsel %vm2137, %v2130, %v2134
  %v2139 = vand.u32 2147483647, %v2129
  %vm2140 = vcmp.eq.f32.partialorder %v2139, 8.507059e+37
  %v2141 = vand.u32 %v2129, 2147483648
  %v2142 = vor.u32 1.1754944e-38, %v2141
  %v2143 = vsel %vm2140, %v2142, %v2138
  %v2144 = vmul.f32 1.0, %v2143
  %v2145 = vtanh.pop %v2091
  %v2146 = vmul.f32 %v2144, %v1991
  %2148 = vrot.lane.b32.xlu0 %v2145, 64
  %v2149 = vpop.permute.xlu0 %2148
  %v2151 = vmul.f32 %v2144, %v2149
  %2153 = vrot.lane.b32.xlu0 %v2151, 32
  %v2154 = vpop.permute.xlu0 %2153
  %v2156 = vadd.f32 %v2146, %v2154
  %v2157 = vtanh.pop %v2156
  %2159 = vrot.lane.b32.xlu0 %v2157, 64
  %v2160 = vpop.permute.xlu0 %2159
  %v2162 = vmul.f32 %v2144, %v2160
  %2164 = vset.pattern.permute.xlu0 0
  %2165 = vperm.xlu0 %2164, %v2125
  %v2166 = vpop.permute.xlu0 %2165
  %v2168 = vmul.f32 %v2166, %v2162
  %v2169 = vsub.f32 1.0, %v2125
  %2171 = vset.pattern.permute.xlu0 0
  %2172 = vperm.xlu0 %2171, %v2169
  %v2173 = vpop.permute.xlu0 %2172
  %v2175 = vmul.f32 %v2173, %v1988
  %v2176 = vadd.f32 %v2168, %v2175
  %v2177 = vmul.f32 %v2166, %v2156
  %v2178 = vmul.f32 %v2173, %v1991
  %v2179 = vadd.f32 %v2177, %v2178
  %s2180 = scalar_lea.vmem %s3, 18
  %v2181 = vld [vmem:[%s2180] sm:$0x3]
  %v2182 = vxor.u32 %v2123, 2147483648
  %v2183 = vmul.f32 %v2182, 1.442695
  %v2184 = vpow.pop %v2183
  %v2185 = vadd.f32 %v2184, 1.0
  %v2186 = vrcp.pop %v2185
  %v2187 = vmul.f32 %v2185, %v2186
  %v2188 = vsub.f32 1.0, %v2187
  %v2189 = vmul.f32 %v2186, %v2188
  %v2190 = vadd.f32 %v2186, %v2189
  %vm2191 = vweird.f32 %v2185
  %vm2192 = vweird.f32 %v2186
  %vm2193 = vmor %vm2191, %vm2192
  %v2194 = vsel %vm2193, %v2186, %v2190
  %v2195 = vand.u32 2147483647, %v2185
  %vm2196 = vcmp.eq.f32.partialorder %v2195, 8.507059e+37
  %v2197 = vand.u32 %v2185, 2147483648
  %v2198 = vor.u32 1.1754944e-38, %v2197
  %v2199 = vsel %vm2196, %v2198, %v2194
  %v2200 = vmul.f32 1.0, %v2199
  %v2201 = vtanh.pop %v2123
  %v2202 = vmul.f32 %v2200, %v2047
  %2204 = vrot.lane.b32.xlu0 %v2201, 64
  %v2205 = vpop.permute.xlu0 %2204
  %v2207 = vmul.f32 %v2200, %v2205
  %2209 = vrot.lane.b32.xlu0 %v2207, 32
  %v2210 = vpop.permute.xlu0 %2209
  %v2212 = vadd.f32 %v2202, %v2210
  %v2213 = vtanh.pop %v2212
  %2215 = vrot.lane.b32.xlu0 %v2213, 64
  %v2216 = vpop.permute.xlu0 %2215
  %v2218 = vmul.f32 %v2200, %v2216
  %2220 = vset.pattern.permute.xlu0 0
  %2221 = vperm.xlu0 %2220, %v2181
  %v2222 = vpop.permute.xlu0 %2221
  %v2224 = vmul.f32 %v2222, %v2218
  %v2225 = vsub.f32 1.0, %v2181
  %2227 = vset.pattern.permute.xlu0 0
  %2228 = vperm.xlu0 %2227, %v2225
  %v2229 = vpop.permute.xlu0 %2228
  %v2231 = vmul.f32 %v2229, %v2044
  %v2232 = vadd.f32 %v2224, %v2231
  %v2233 = vmul.f32 %v2222, %v2212
  %v2234 = vmul.f32 %v2229, %v2047
  %v2235 = vadd.f32 %v2233, %v2234
  %2237 = vrot.lane.b32.xlu0 %v2168, 32
  %v2238 = vpop.permute.xlu0 %2237
  %s2240 = scalar_lea.vmem %s10, 18
  %2241 = vst.msk [vmem:[%s2240] sm:$0x3] %vm549, %v2238
  %2243 = vrot.lane.b32.xlu0 %v2224, 32
  %v2244 = vpop.permute.xlu0 %2243
  %s2246 = scalar_lea.vmem %s11, 18
  %2247 = vst.msk [vmem:[%s2246] sm:$0x3] %vm549, %v2244
  %s2248 = scalar_lea.vmem [#allocation2], 20
  %v2249 = vld [vmem:[%s2248] sm:$0x3]
  %v2250 = vld [vmem:[%s6] sm:$0xff]
  %v2251 = vld [vmem:[%s6 + $0x8] sm:$0xff]
  %v2252 = vld [vmem:[%s6 + $0x10] sm:$0xff]
  %v2253 = vld [vmem:[%s6 + $0x18] sm:$0xff]
  %2255 = vrot.lane.b32.xlu0 %v2176, 32
  %v2256 = vpop.permute.xlu0 %2255
  %v2257 = vsel %vm49, %v2256, 0
  %2259 = vmatpush.msra.mxu0 0.0
  %2260 = vmatpush.msra.mxu0 0.0
  %2261 = vmatpush.msra.mxu0 0.0
  %2262 = vmatpush.msra.mxu0 0.0
  %2263 = vmatpush.msra.mxu0 0.0
  %2264 = vmatpush.msra.mxu0 0.0
  %2265 = vmatpush.msra.mxu0 0.0
  %2266 = vmatpush.msra.mxu0 0.0
  %2267 = vmatpush.msra.mxu0 0.0
  %2268 = vmatpush.msra.mxu0 0.0
  %2269 = vmatpush.msra.mxu0 0.0
  %2270 = vmatpush.msra.mxu0 0.0
  %2271 = vmatpush.msra.mxu0 %v2253
  %2272 = vmatpush.msra.mxu0 %v2252
  %2273 = vmatpush.msra.mxu0 %v2251
  %2274 = vmatpush.msra.mxu0 %v2250
  %2275 = vmatmul.f32.gmra.mxu0 %v2257
  %v2276 = vpop.f32.mrf.mxu0
  %v2277 = vadd.f32 0.0, %v2276
  %2278 = vdwg.mxu0
  %v2279 = vadd.f32 %v2249, %v2277
  %s2280 = scalar_lea.vmem [#allocation3], 20
  %v2281 = vld [vmem:[%s2280] sm:$0x3]
  %v2282 = vld [vmem:[%s7] sm:$0xff]
  %v2283 = vld [vmem:[%s7 + $0x8] sm:$0xff]
  %v2284 = vld [vmem:[%s7 + $0x10] sm:$0xff]
  %v2285 = vld [vmem:[%s7 + $0x18] sm:$0xff]
  %2287 = vrot.lane.b32.xlu0 %v2232, 32
  %v2288 = vpop.permute.xlu0 %2287
  %v2289 = vsel %vm49, %v2288, 0
  %2291 = vmatpush.msra.mxu0 0.0
  %2292 = vmatpush.msra.mxu0 0.0
  %2293 = vmatpush.msra.mxu0 0.0
  %2294 = vmatpush.msra.mxu0 0.0
  %2295 = vmatpush.msra.mxu0 0.0
  %2296 = vmatpush.msra.mxu0 0.0
  %2297 = vmatpush.msra.mxu0 0.0
  %2298 = vmatpush.msra.mxu0 0.0
  %2299 = vmatpush.msra.mxu0 0.0
  %2300 = vmatpush.msra.mxu0 0.0
  %2301 = vmatpush.msra.mxu0 0.0
  %2302 = vmatpush.msra.mxu0 0.0
  %2303 = vmatpush.msra.mxu0 %v2285
  %2304 = vmatpush.msra.mxu0 %v2284
  %2305 = vmatpush.msra.mxu0 %v2283
  %2306 = vmatpush.msra.mxu0 %v2282
  %2307 = vmatmul.f32.gmra.mxu0 %v2289
  %v2308 = vpop.f32.mrf.mxu0
  %v2309 = vadd.f32 0.0, %v2308
  %2310 = vdwg.mxu0
  %v2311 = vadd.f32 %v2281, %v2309
  %s2312 = scalar_lea.vmem %s2, 20
  %v2313 = vld [vmem:[%s2312] sm:$0x3]
  %v2314 = vxor.u32 %v2279, 2147483648
  %v2315 = vmul.f32 %v2314, 1.442695
  %v2316 = vpow.pop %v2315
  %v2317 = vadd.f32 %v2316, 1.0
  %v2318 = vrcp.pop %v2317
  %v2319 = vmul.f32 %v2317, %v2318
  %v2320 = vsub.f32 1.0, %v2319
  %v2321 = vmul.f32 %v2318, %v2320
  %v2322 = vadd.f32 %v2318, %v2321
  %vm2323 = vweird.f32 %v2317
  %vm2324 = vweird.f32 %v2318
  %vm2325 = vmor %vm2323, %vm2324
  %v2326 = vsel %vm2325, %v2318, %v2322
  %v2327 = vand.u32 2147483647, %v2317
  %vm2328 = vcmp.eq.f32.partialorder %v2327, 8.507059e+37
  %v2329 = vand.u32 %v2317, 2147483648
  %v2330 = vor.u32 1.1754944e-38, %v2329
  %v2331 = vsel %vm2328, %v2330, %v2326
  %v2332 = vmul.f32 1.0, %v2331
  %v2333 = vtanh.pop %v2279
  %v2334 = vmul.f32 %v2332, %v2179
  %2336 = vrot.lane.b32.xlu0 %v2333, 64
  %v2337 = vpop.permute.xlu0 %2336
  %v2339 = vmul.f32 %v2332, %v2337
  %2341 = vrot.lane.b32.xlu0 %v2339, 32
  %v2342 = vpop.permute.xlu0 %2341
  %v2344 = vadd.f32 %v2334, %v2342
  %v2345 = vtanh.pop %v2344
  %2347 = vrot.lane.b32.xlu0 %v2345, 64
  %v2348 = vpop.permute.xlu0 %2347
  %v2350 = vmul.f32 %v2332, %v2348
  %2352 = vset.pattern.permute.xlu0 0
  %2353 = vperm.xlu0 %2352, %v2313
  %v2354 = vpop.permute.xlu0 %2353
  %v2356 = vmul.f32 %v2354, %v2350
  %v2357 = vsub.f32 1.0, %v2313
  %2359 = vset.pattern.permute.xlu0 0
  %2360 = vperm.xlu0 %2359, %v2357
  %v2361 = vpop.permute.xlu0 %2360
  %v2363 = vmul.f32 %v2361, %v2176
  %v2364 = vadd.f32 %v2356, %v2363
  %v2365 = vmul.f32 %v2354, %v2344
  %v2366 = vmul.f32 %v2361, %v2179
  %v2367 = vadd.f32 %v2365, %v2366
  %s2368 = scalar_lea.vmem %s3, 20
  %v2369 = vld [vmem:[%s2368] sm:$0x3]
  %v2370 = vxor.u32 %v2311, 2147483648
  %v2371 = vmul.f32 %v2370, 1.442695
  %v2372 = vpow.pop %v2371
  %v2373 = vadd.f32 %v2372, 1.0
  %v2374 = vrcp.pop %v2373
  %v2375 = vmul.f32 %v2373, %v2374
  %v2376 = vsub.f32 1.0, %v2375
  %v2377 = vmul.f32 %v2374, %v2376
  %v2378 = vadd.f32 %v2374, %v2377
  %vm2379 = vweird.f32 %v2373
  %vm2380 = vweird.f32 %v2374
  %vm2381 = vmor %vm2379, %vm2380
  %v2382 = vsel %vm2381, %v2374, %v2378
  %v2383 = vand.u32 2147483647, %v2373
  %vm2384 = vcmp.eq.f32.partialorder %v2383, 8.507059e+37
  %v2385 = vand.u32 %v2373, 2147483648
  %v2386 = vor.u32 1.1754944e-38, %v2385
  %v2387 = vsel %vm2384, %v2386, %v2382
  %v2388 = vmul.f32 1.0, %v2387
  %v2389 = vtanh.pop %v2311
  %v2390 = vmul.f32 %v2388, %v2235
  %2392 = vrot.lane.b32.xlu0 %v2389, 64
  %v2393 = vpop.permute.xlu0 %2392
  %v2395 = vmul.f32 %v2388, %v2393
  %2397 = vrot.lane.b32.xlu0 %v2395, 32
  %v2398 = vpop.permute.xlu0 %2397
  %v2400 = vadd.f32 %v2390, %v2398
  %v2401 = vtanh.pop %v2400
  %2403 = vrot.lane.b32.xlu0 %v2401, 64
  %v2404 = vpop.permute.xlu0 %2403
  %v2406 = vmul.f32 %v2388, %v2404
  %2408 = vset.pattern.permute.xlu0 0
  %2409 = vperm.xlu0 %2408, %v2369
  %v2410 = vpop.permute.xlu0 %2409
  %v2412 = vmul.f32 %v2410, %v2406
  %v2413 = vsub.f32 1.0, %v2369
  %2415 = vset.pattern.permute.xlu0 0
  %2416 = vperm.xlu0 %2415, %v2413
  %v2417 = vpop.permute.xlu0 %2416
  %v2419 = vmul.f32 %v2417, %v2232
  %v2420 = vadd.f32 %v2412, %v2419
  %v2421 = vmul.f32 %v2410, %v2400
  %v2422 = vmul.f32 %v2417, %v2235
  %v2423 = vadd.f32 %v2421, %v2422
  %2425 = vrot.lane.b32.xlu0 %v2356, 32
  %v2426 = vpop.permute.xlu0 %2425
  %s2428 = scalar_lea.vmem %s10, 20
  %2429 = vst.msk [vmem:[%s2428] sm:$0x3] %vm549, %v2426
  %2431 = vrot.lane.b32.xlu0 %v2412, 32
  %v2432 = vpop.permute.xlu0 %2431
  %s2434 = scalar_lea.vmem %s11, 20
  %2435 = vst.msk [vmem:[%s2434] sm:$0x3] %vm549, %v2432
  %s2436 = scalar_lea.vmem [#allocation2], 22
  %v2437 = vld [vmem:[%s2436] sm:$0x3]
  %v2438 = vld [vmem:[%s6] sm:$0xff]
  %v2439 = vld [vmem:[%s6 + $0x8] sm:$0xff]
  %v2440 = vld [vmem:[%s6 + $0x10] sm:$0xff]
  %v2441 = vld [vmem:[%s6 + $0x18] sm:$0xff]
  %2443 = vrot.lane.b32.xlu0 %v2364, 32
  %v2444 = vpop.permute.xlu0 %2443
  %v2445 = vsel %vm49, %v2444, 0
  %2447 = vmatpush.msra.mxu0 0.0
  %2448 = vmatpush.msra.mxu0 0.0
  %2449 = vmatpush.msra.mxu0 0.0
  %2450 = vmatpush.msra.mxu0 0.0
  %2451 = vmatpush.msra.mxu0 0.0
  %2452 = vmatpush.msra.mxu0 0.0
  %2453 = vmatpush.msra.mxu0 0.0
  %2454 = vmatpush.msra.mxu0 0.0
  %2455 = vmatpush.msra.mxu0 0.0
  %2456 = vmatpush.msra.mxu0 0.0
  %2457 = vmatpush.msra.mxu0 0.0
  %2458 = vmatpush.msra.mxu0 0.0
  %2459 = vmatpush.msra.mxu0 %v2441
  %2460 = vmatpush.msra.mxu0 %v2440
  %2461 = vmatpush.msra.mxu0 %v2439
  %2462 = vmatpush.msra.mxu0 %v2438
  %2463 = vmatmul.f32.gmra.mxu0 %v2445
  %v2464 = vpop.f32.mrf.mxu0
  %v2465 = vadd.f32 0.0, %v2464
  %2466 = vdwg.mxu0
  %v2467 = vadd.f32 %v2437, %v2465
  %s2468 = scalar_lea.vmem [#allocation3], 22
  %v2469 = vld [vmem:[%s2468] sm:$0x3]
  %v2470 = vld [vmem:[%s7] sm:$0xff]
  %v2471 = vld [vmem:[%s7 + $0x8] sm:$0xff]
  %v2472 = vld [vmem:[%s7 + $0x10] sm:$0xff]
  %v2473 = vld [vmem:[%s7 + $0x18] sm:$0xff]
  %2475 = vrot.lane.b32.xlu0 %v2420, 32
  %v2476 = vpop.permute.xlu0 %2475
  %v2477 = vsel %vm49, %v2476, 0
  %2479 = vmatpush.msra.mxu0 0.0
  %2480 = vmatpush.msra.mxu0 0.0
  %2481 = vmatpush.msra.mxu0 0.0
  %2482 = vmatpush.msra.mxu0 0.0
  %2483 = vmatpush.msra.mxu0 0.0
  %2484 = vmatpush.msra.mxu0 0.0
  %2485 = vmatpush.msra.mxu0 0.0
  %2486 = vmatpush.msra.mxu0 0.0
  %2487 = vmatpush.msra.mxu0 0.0
  %2488 = vmatpush.msra.mxu0 0.0
  %2489 = vmatpush.msra.mxu0 0.0
  %2490 = vmatpush.msra.mxu0 0.0
  %2491 = vmatpush.msra.mxu0 %v2473
  %2492 = vmatpush.msra.mxu0 %v2472
  %2493 = vmatpush.msra.mxu0 %v2471
  %2494 = vmatpush.msra.mxu0 %v2470
  %2495 = vmatmul.f32.gmra.mxu0 %v2477
  %v2496 = vpop.f32.mrf.mxu0
  %v2497 = vadd.f32 0.0, %v2496
  %2498 = vdwg.mxu0
  %v2499 = vadd.f32 %v2469, %v2497
  %s2500 = scalar_lea.vmem %s2, 22
  %v2501 = vld [vmem:[%s2500] sm:$0x3]
  %v2502 = vxor.u32 %v2467, 2147483648
  %v2503 = vmul.f32 %v2502, 1.442695
  %v2504 = vpow.pop %v2503
  %v2505 = vadd.f32 %v2504, 1.0
  %v2506 = vrcp.pop %v2505
  %v2507 = vmul.f32 %v2505, %v2506
  %v2508 = vsub.f32 1.0, %v2507
  %v2509 = vmul.f32 %v2506, %v2508
  %v2510 = vadd.f32 %v2506, %v2509
  %vm2511 = vweird.f32 %v2505
  %vm2512 = vweird.f32 %v2506
  %vm2513 = vmor %vm2511, %vm2512
  %v2514 = vsel %vm2513, %v2506, %v2510
  %v2515 = vand.u32 2147483647, %v2505
  %vm2516 = vcmp.eq.f32.partialorder %v2515, 8.507059e+37
  %v2517 = vand.u32 %v2505, 2147483648
  %v2518 = vor.u32 1.1754944e-38, %v2517
  %v2519 = vsel %vm2516, %v2518, %v2514
  %v2520 = vmul.f32 1.0, %v2519
  %v2521 = vtanh.pop %v2467
  %v2522 = vmul.f32 %v2520, %v2367
  %2524 = vrot.lane.b32.xlu0 %v2521, 64
  %v2525 = vpop.permute.xlu0 %2524
  %v2527 = vmul.f32 %v2520, %v2525
  %2529 = vrot.lane.b32.xlu0 %v2527, 32
  %v2530 = vpop.permute.xlu0 %2529
  %v2532 = vadd.f32 %v2522, %v2530
  %v2533 = vtanh.pop %v2532
  %2535 = vrot.lane.b32.xlu0 %v2533, 64
  %v2536 = vpop.permute.xlu0 %2535
  %v2538 = vmul.f32 %v2520, %v2536
  %2540 = vset.pattern.permute.xlu0 0
  %2541 = vperm.xlu0 %2540, %v2501
  %v2542 = vpop.permute.xlu0 %2541
  %v2544 = vmul.f32 %v2542, %v2538
  %v2545 = vsub.f32 1.0, %v2501
  %2547 = vset.pattern.permute.xlu0 0
  %2548 = vperm.xlu0 %2547, %v2545
  %v2549 = vpop.permute.xlu0 %2548
  %v2551 = vmul.f32 %v2549, %v2364
  %v2552 = vadd.f32 %v2544, %v2551
  %v2553 = vmul.f32 %v2542, %v2532
  %v2554 = vmul.f32 %v2549, %v2367
  %v2555 = vadd.f32 %v2553, %v2554
  %s2556 = scalar_lea.vmem %s3, 22
  %v2557 = vld [vmem:[%s2556] sm:$0x3]
  %v2558 = vxor.u32 %v2499, 2147483648
  %v2559 = vmul.f32 %v2558, 1.442695
  %v2560 = vpow.pop %v2559
  %v2561 = vadd.f32 %v2560, 1.0
  %v2562 = vrcp.pop %v2561
  %v2563 = vmul.f32 %v2561, %v2562
  %v2564 = vsub.f32 1.0, %v2563
  %v2565 = vmul.f32 %v2562, %v2564
  %v2566 = vadd.f32 %v2562, %v2565
  %vm2567 = vweird.f32 %v2561
  %vm2568 = vweird.f32 %v2562
  %vm2569 = vmor %vm2567, %vm2568
  %v2570 = vsel %vm2569, %v2562, %v2566
  %v2571 = vand.u32 2147483647, %v2561
  %vm2572 = vcmp.eq.f32.partialorder %v2571, 8.507059e+37
  %v2573 = vand.u32 %v2561, 2147483648
  %v2574 = vor.u32 1.1754944e-38, %v2573
  %v2575 = vsel %vm2572, %v2574, %v2570
  %v2576 = vmul.f32 1.0, %v2575
  %v2577 = vtanh.pop %v2499
  %v2578 = vmul.f32 %v2576, %v2423
  %2580 = vrot.lane.b32.xlu0 %v2577, 64
  %v2581 = vpop.permute.xlu0 %2580
  %v2583 = vmul.f32 %v2576, %v2581
  %2585 = vrot.lane.b32.xlu0 %v2583, 32
  %v2586 = vpop.permute.xlu0 %2585
  %v2588 = vadd.f32 %v2578, %v2586
  %v2589 = vtanh.pop %v2588
  %2591 = vrot.lane.b32.xlu0 %v2589, 64
  %v2592 = vpop.permute.xlu0 %2591
  %v2594 = vmul.f32 %v2576, %v2592
  %2596 = vset.pattern.permute.xlu0 0
  %2597 = vperm.xlu0 %2596, %v2557
  %v2598 = vpop.permute.xlu0 %2597
  %v2600 = vmul.f32 %v2598, %v2594
  %v2601 = vsub.f32 1.0, %v2557
  %2603 = vset.pattern.permute.xlu0 0
  %2604 = vperm.xlu0 %2603, %v2601
  %v2605 = vpop.permute.xlu0 %2604
  %v2607 = vmul.f32 %v2605, %v2420
  %v2608 = vadd.f32 %v2600, %v2607
  %v2609 = vmul.f32 %v2598, %v2588
  %v2610 = vmul.f32 %v2605, %v2423
  %v2611 = vadd.f32 %v2609, %v2610
  %2613 = vrot.lane.b32.xlu0 %v2544, 32
  %v2614 = vpop.permute.xlu0 %2613
  %s2616 = scalar_lea.vmem %s10, 22
  %2617 = vst.msk [vmem:[%s2616] sm:$0x3] %vm549, %v2614
  %2619 = vrot.lane.b32.xlu0 %v2600, 32
  %v2620 = vpop.permute.xlu0 %2619
  %s2622 = scalar_lea.vmem %s11, 22
  %2623 = vst.msk [vmem:[%s2622] sm:$0x3] %vm549, %v2620
  %s2624 = scalar_lea.vmem [#allocation2], 24
  %v2625 = vld [vmem:[%s2624] sm:$0x3]
  %v2626 = vld [vmem:[%s6] sm:$0xff]
  %v2627 = vld [vmem:[%s6 + $0x8] sm:$0xff]
  %v2628 = vld [vmem:[%s6 + $0x10] sm:$0xff]
  %v2629 = vld [vmem:[%s6 + $0x18] sm:$0xff]
  %2631 = vrot.lane.b32.xlu0 %v2552, 32
  %v2632 = vpop.permute.xlu0 %2631
  %v2633 = vsel %vm49, %v2632, 0
  %2635 = vmatpush.msra.mxu0 0.0
  %2636 = vmatpush.msra.mxu0 0.0
  %2637 = vmatpush.msra.mxu0 0.0
  %2638 = vmatpush.msra.mxu0 0.0
  %2639 = vmatpush.msra.mxu0 0.0
  %2640 = vmatpush.msra.mxu0 0.0
  %2641 = vmatpush.msra.mxu0 0.0
  %2642 = vmatpush.msra.mxu0 0.0
  %2643 = vmatpush.msra.mxu0 0.0
  %2644 = vmatpush.msra.mxu0 0.0
  %2645 = vmatpush.msra.mxu0 0.0
  %2646 = vmatpush.msra.mxu0 0.0
  %2647 = vmatpush.msra.mxu0 %v2629
  %2648 = vmatpush.msra.mxu0 %v2628
  %2649 = vmatpush.msra.mxu0 %v2627
  %2650 = vmatpush.msra.mxu0 %v2626
  %2651 = vmatmul.f32.gmra.mxu0 %v2633
  %v2652 = vpop.f32.mrf.mxu0
  %v2653 = vadd.f32 0.0, %v2652
  %2654 = vdwg.mxu0
  %v2655 = vadd.f32 %v2625, %v2653
  %s2656 = scalar_lea.vmem [#allocation3], 24
  %v2657 = vld [vmem:[%s2656] sm:$0x3]
  %v2658 = vld [vmem:[%s7] sm:$0xff]
  %v2659 = vld [vmem:[%s7 + $0x8] sm:$0xff]
  %v2660 = vld [vmem:[%s7 + $0x10] sm:$0xff]
  %v2661 = vld [vmem:[%s7 + $0x18] sm:$0xff]
  %2663 = vrot.lane.b32.xlu0 %v2608, 32
  %v2664 = vpop.permute.xlu0 %2663
  %v2665 = vsel %vm49, %v2664, 0
  %2667 = vmatpush.msra.mxu0 0.0
  %2668 = vmatpush.msra.mxu0 0.0
  %2669 = vmatpush.msra.mxu0 0.0
  %2670 = vmatpush.msra.mxu0 0.0
  %2671 = vmatpush.msra.mxu0 0.0
  %2672 = vmatpush.msra.mxu0 0.0
  %2673 = vmatpush.msra.mxu0 0.0
  %2674 = vmatpush.msra.mxu0 0.0
  %2675 = vmatpush.msra.mxu0 0.0
  %2676 = vmatpush.msra.mxu0 0.0
  %2677 = vmatpush.msra.mxu0 0.0
  %2678 = vmatpush.msra.mxu0 0.0
  %2679 = vmatpush.msra.mxu0 %v2661
  %2680 = vmatpush.msra.mxu0 %v2660
  %2681 = vmatpush.msra.mxu0 %v2659
  %2682 = vmatpush.msra.mxu0 %v2658
  %2683 = vmatmul.f32.gmra.mxu0 %v2665
  %v2684 = vpop.f32.mrf.mxu0
  %v2685 = vadd.f32 0.0, %v2684
  %2686 = vdwg.mxu0
  %v2687 = vadd.f32 %v2657, %v2685
  %s2688 = scalar_lea.vmem %s2, 24
  %v2689 = vld [vmem:[%s2688] sm:$0x3]
  %v2690 = vxor.u32 %v2655, 2147483648
  %v2691 = vmul.f32 %v2690, 1.442695
  %v2692 = vpow.pop %v2691
  %v2693 = vadd.f32 %v2692, 1.0
  %v2694 = vrcp.pop %v2693
  %v2695 = vmul.f32 %v2693, %v2694
  %v2696 = vsub.f32 1.0, %v2695
  %v2697 = vmul.f32 %v2694, %v2696
  %v2698 = vadd.f32 %v2694, %v2697
  %vm2699 = vweird.f32 %v2693
  %vm2700 = vweird.f32 %v2694
  %vm2701 = vmor %vm2699, %vm2700
  %v2702 = vsel %vm2701, %v2694, %v2698
  %v2703 = vand.u32 2147483647, %v2693
  %vm2704 = vcmp.eq.f32.partialorder %v2703, 8.507059e+37
  %v2705 = vand.u32 %v2693, 2147483648
  %v2706 = vor.u32 1.1754944e-38, %v2705
  %v2707 = vsel %vm2704, %v2706, %v2702
  %v2708 = vmul.f32 1.0, %v2707
  %v2709 = vtanh.pop %v2655
  %v2710 = vmul.f32 %v2708, %v2555
  %2712 = vrot.lane.b32.xlu0 %v2709, 64
  %v2713 = vpop.permute.xlu0 %2712
  %v2715 = vmul.f32 %v2708, %v2713
  %2717 = vrot.lane.b32.xlu0 %v2715, 32
  %v2718 = vpop.permute.xlu0 %2717
  %v2720 = vadd.f32 %v2710, %v2718
  %v2721 = vtanh.pop %v2720
  %2723 = vrot.lane.b32.xlu0 %v2721, 64
  %v2724 = vpop.permute.xlu0 %2723
  %v2726 = vmul.f32 %v2708, %v2724
  %2728 = vset.pattern.permute.xlu0 0
  %2729 = vperm.xlu0 %2728, %v2689
  %v2730 = vpop.permute.xlu0 %2729
  %v2732 = vmul.f32 %v2730, %v2726
  %v2733 = vsub.f32 1.0, %v2689
  %2735 = vset.pattern.permute.xlu0 0
  %2736 = vperm.xlu0 %2735, %v2733
  %v2737 = vpop.permute.xlu0 %2736
  %v2739 = vmul.f32 %v2737, %v2552
  %v2740 = vadd.f32 %v2732, %v2739
  %v2741 = vmul.f32 %v2730, %v2720
  %v2742 = vmul.f32 %v2737, %v2555
  %v2743 = vadd.f32 %v2741, %v2742
  %s2744 = scalar_lea.vmem %s3, 24
  %v2745 = vld [vmem:[%s2744] sm:$0x3]
  %v2746 = vxor.u32 %v2687, 2147483648
  %v2747 = vmul.f32 %v2746, 1.442695
  %v2748 = vpow.pop %v2747
  %v2749 = vadd.f32 %v2748, 1.0
  %v2750 = vrcp.pop %v2749
  %v2751 = vmul.f32 %v2749, %v2750
  %v2752 = vsub.f32 1.0, %v2751
  %v2753 = vmul.f32 %v2750, %v2752
  %v2754 = vadd.f32 %v2750, %v2753
  %vm2755 = vweird.f32 %v2749
  %vm2756 = vweird.f32 %v2750
  %vm2757 = vmor %vm2755, %vm2756
  %v2758 = vsel %vm2757, %v2750, %v2754
  %v2759 = vand.u32 2147483647, %v2749
  %vm2760 = vcmp.eq.f32.partialorder %v2759, 8.507059e+37
  %v2761 = vand.u32 %v2749, 2147483648
  %v2762 = vor.u32 1.1754944e-38, %v2761
  %v2763 = vsel %vm2760, %v2762, %v2758
  %v2764 = vmul.f32 1.0, %v2763
  %v2765 = vtanh.pop %v2687
  %v2766 = vmul.f32 %v2764, %v2611
  %2768 = vrot.lane.b32.xlu0 %v2765, 64
  %v2769 = vpop.permute.xlu0 %2768
  %v2771 = vmul.f32 %v2764, %v2769
  %2773 = vrot.lane.b32.xlu0 %v2771, 32
  %v2774 = vpop.permute.xlu0 %2773
  %v2776 = vadd.f32 %v2766, %v2774
  %v2777 = vtanh.pop %v2776
  %2779 = vrot.lane.b32.xlu0 %v2777, 64
  %v2780 = vpop.permute.xlu0 %2779
  %v2782 = vmul.f32 %v2764, %v2780
  %2784 = vset.pattern.permute.xlu0 0
  %2785 = vperm.xlu0 %2784, %v2745
  %v2786 = vpop.permute.xlu0 %2785
  %v2788 = vmul.f32 %v2786, %v2782
  %v2789 = vsub.f32 1.0, %v2745
  %2791 = vset.pattern.permute.xlu0 0
  %2792 = vperm.xlu0 %2791, %v2789
  %v2793 = vpop.permute.xlu0 %2792
  %v2795 = vmul.f32 %v2793, %v2608
  %v2796 = vadd.f32 %v2788, %v2795
  %v2797 = vmul.f32 %v2786, %v2776
  %v2798 = vmul.f32 %v2793, %v2611
  %v2799 = vadd.f32 %v2797, %v2798
  %2801 = vrot.lane.b32.xlu0 %v2732, 32
  %v2802 = vpop.permute.xlu0 %2801
  %s2804 = scalar_lea.vmem %s10, 24
  %2805 = vst.msk [vmem:[%s2804] sm:$0x3] %vm549, %v2802
  %2807 = vrot.lane.b32.xlu0 %v2788, 32
  %v2808 = vpop.permute.xlu0 %2807
  %s2810 = scalar_lea.vmem %s11, 24
  %2811 = vst.msk [vmem:[%s2810] sm:$0x3] %vm549, %v2808
  %s2812 = scalar_lea.vmem [#allocation2], 26
  %v2813 = vld [vmem:[%s2812] sm:$0x3]
  %v2814 = vld [vmem:[%s6] sm:$0xff]
  %v2815 = vld [vmem:[%s6 + $0x8] sm:$0xff]
  %v2816 = vld [vmem:[%s6 + $0x10] sm:$0xff]
  %v2817 = vld [vmem:[%s6 + $0x18] sm:$0xff]
  %2819 = vrot.lane.b32.xlu0 %v2740, 32
  %v2820 = vpop.permute.xlu0 %2819
  %v2821 = vsel %vm49, %v2820, 0
  %2823 = vmatpush.msra.mxu0 0.0
  %2824 = vmatpush.msra.mxu0 0.0
  %2825 = vmatpush.msra.mxu0 0.0
  %2826 = vmatpush.msra.mxu0 0.0
  %2827 = vmatpush.msra.mxu0 0.0
  %2828 = vmatpush.msra.mxu0 0.0
  %2829 = vmatpush.msra.mxu0 0.0
  %2830 = vmatpush.msra.mxu0 0.0
  %2831 = vmatpush.msra.mxu0 0.0
  %2832 = vmatpush.msra.mxu0 0.0
  %2833 = vmatpush.msra.mxu0 0.0
  %2834 = vmatpush.msra.mxu0 0.0
  %2835 = vmatpush.msra.mxu0 %v2817
  %2836 = vmatpush.msra.mxu0 %v2816
  %2837 = vmatpush.msra.mxu0 %v2815
  %2838 = vmatpush.msra.mxu0 %v2814
  %2839 = vmatmul.f32.gmra.mxu0 %v2821
  %v2840 = vpop.f32.mrf.mxu0
  %v2841 = vadd.f32 0.0, %v2840
  %2842 = vdwg.mxu0
  %v2843 = vadd.f32 %v2813, %v2841
  %s2844 = scalar_lea.vmem [#allocation3], 26
  %v2845 = vld [vmem:[%s2844] sm:$0x3]
  %v2846 = vld [vmem:[%s7] sm:$0xff]
  %v2847 = vld [vmem:[%s7 + $0x8] sm:$0xff]
  %v2848 = vld [vmem:[%s7 + $0x10] sm:$0xff]
  %v2849 = vld [vmem:[%s7 + $0x18] sm:$0xff]
  %2851 = vrot.lane.b32.xlu0 %v2796, 32
  %v2852 = vpop.permute.xlu0 %2851
  %v2853 = vsel %vm49, %v2852, 0
  %2855 = vmatpush.msra.mxu0 0.0
  %2856 = vmatpush.msra.mxu0 0.0
  %2857 = vmatpush.msra.mxu0 0.0
  %2858 = vmatpush.msra.mxu0 0.0
  %2859 = vmatpush.msra.mxu0 0.0
  %2860 = vmatpush.msra.mxu0 0.0
  %2861 = vmatpush.msra.mxu0 0.0
  %2862 = vmatpush.msra.mxu0 0.0
  %2863 = vmatpush.msra.mxu0 0.0
  %2864 = vmatpush.msra.mxu0 0.0
  %2865 = vmatpush.msra.mxu0 0.0
  %2866 = vmatpush.msra.mxu0 0.0
  %2867 = vmatpush.msra.mxu0 %v2849
  %2868 = vmatpush.msra.mxu0 %v2848
  %2869 = vmatpush.msra.mxu0 %v2847
  %2870 = vmatpush.msra.mxu0 %v2846
  %2871 = vmatmul.f32.gmra.mxu0 %v2853
  %v2872 = vpop.f32.mrf.mxu0
  %v2873 = vadd.f32 0.0, %v2872
  %2874 = vdwg.mxu0
  %v2875 = vadd.f32 %v2845, %v2873
  %s2876 = scalar_lea.vmem %s2, 26
  %v2877 = vld [vmem:[%s2876] sm:$0x3]
  %v2878 = vxor.u32 %v2843, 2147483648
  %v2879 = vmul.f32 %v2878, 1.442695
  %v2880 = vpow.pop %v2879
  %v2881 = vadd.f32 %v2880, 1.0
  %v2882 = vrcp.pop %v2881
  %v2883 = vmul.f32 %v2881, %v2882
  %v2884 = vsub.f32 1.0, %v2883
  %v2885 = vmul.f32 %v2882, %v2884
  %v2886 = vadd.f32 %v2882, %v2885
  %vm2887 = vweird.f32 %v2881
  %vm2888 = vweird.f32 %v2882
  %vm2889 = vmor %vm2887, %vm2888
  %v2890 = vsel %vm2889, %v2882, %v2886
  %v2891 = vand.u32 2147483647, %v2881
  %vm2892 = vcmp.eq.f32.partialorder %v2891, 8.507059e+37
  %v2893 = vand.u32 %v2881, 2147483648
  %v2894 = vor.u32 1.1754944e-38, %v2893
  %v2895 = vsel %vm2892, %v2894, %v2890
  %v2896 = vmul.f32 1.0, %v2895
  %v2897 = vtanh.pop %v2843
  %v2898 = vmul.f32 %v2896, %v2743
  %2900 = vrot.lane.b32.xlu0 %v2897, 64
  %v2901 = vpop.permute.xlu0 %2900
  %v2903 = vmul.f32 %v2896, %v2901
  %2905 = vrot.lane.b32.xlu0 %v2903, 32
  %v2906 = vpop.permute.xlu0 %2905
  %v2908 = vadd.f32 %v2898, %v2906
  %v2909 = vtanh.pop %v2908
  %2911 = vrot.lane.b32.xlu0 %v2909, 64
  %v2912 = vpop.permute.xlu0 %2911
  %v2914 = vmul.f32 %v2896, %v2912
  %2916 = vset.pattern.permute.xlu0 0
  %2917 = vperm.xlu0 %2916, %v2877
  %v2918 = vpop.permute.xlu0 %2917
  %v2920 = vmul.f32 %v2918, %v2914
  %v2921 = vsub.f32 1.0, %v2877
  %2923 = vset.pattern.permute.xlu0 0
  %2924 = vperm.xlu0 %2923, %v2921
  %v2925 = vpop.permute.xlu0 %2924
  %v2927 = vmul.f32 %v2925, %v2740
  %v2928 = vadd.f32 %v2920, %v2927
  %v2929 = vmul.f32 %v2918, %v2908
  %v2930 = vmul.f32 %v2925, %v2743
  %v2931 = vadd.f32 %v2929, %v2930
  %s2932 = scalar_lea.vmem %s3, 26
  %v2933 = vld [vmem:[%s2932] sm:$0x3]
  %v2934 = vxor.u32 %v2875, 2147483648
  %v2935 = vmul.f32 %v2934, 1.442695
  %v2936 = vpow.pop %v2935
  %v2937 = vadd.f32 %v2936, 1.0
  %v2938 = vrcp.pop %v2937
  %v2939 = vmul.f32 %v2937, %v2938
  %v2940 = vsub.f32 1.0, %v2939
  %v2941 = vmul.f32 %v2938, %v2940
  %v2942 = vadd.f32 %v2938, %v2941
  %vm2943 = vweird.f32 %v2937
  %vm2944 = vweird.f32 %v2938
  %vm2945 = vmor %vm2943, %vm2944
  %v2946 = vsel %vm2945, %v2938, %v2942
  %v2947 = vand.u32 2147483647, %v2937
  %vm2948 = vcmp.eq.f32.partialorder %v2947, 8.507059e+37
  %v2949 = vand.u32 %v2937, 2147483648
  %v2950 = vor.u32 1.1754944e-38, %v2949
  %v2951 = vsel %vm2948, %v2950, %v2946
  %v2952 = vmul.f32 1.0, %v2951
  %v2953 = vtanh.pop %v2875
  %v2954 = vmul.f32 %v2952, %v2799
  %2956 = vrot.lane.b32.xlu0 %v2953, 64
  %v2957 = vpop.permute.xlu0 %2956
  %v2959 = vmul.f32 %v2952, %v2957
  %2961 = vrot.lane.b32.xlu0 %v2959, 32
  %v2962 = vpop.permute.xlu0 %2961
  %v2964 = vadd.f32 %v2954, %v2962
  %v2965 = vtanh.pop %v2964
  %2967 = vrot.lane.b32.xlu0 %v2965, 64
  %v2968 = vpop.permute.xlu0 %2967
  %v2970 = vmul.f32 %v2952, %v2968
  %2972 = vset.pattern.permute.xlu0 0
  %2973 = vperm.xlu0 %2972, %v2933
  %v2974 = vpop.permute.xlu0 %2973
  %v2976 = vmul.f32 %v2974, %v2970
  %v2977 = vsub.f32 1.0, %v2933
  %2979 = vset.pattern.permute.xlu0 0
  %2980 = vperm.xlu0 %2979, %v2977
  %v2981 = vpop.permute.xlu0 %2980
  %v2983 = vmul.f32 %v2981, %v2796
  %v2984 = vadd.f32 %v2976, %v2983
  %v2985 = vmul.f32 %v2974, %v2964
  %v2986 = vmul.f32 %v2981, %v2799
  %v2987 = vadd.f32 %v2985, %v2986
  %2989 = vrot.lane.b32.xlu0 %v2920, 32
  %v2990 = vpop.permute.xlu0 %2989
  %s2992 = scalar_lea.vmem %s10, 26
  %2993 = vst.msk [vmem:[%s2992] sm:$0x3] %vm549, %v2990
  %2995 = vrot.lane.b32.xlu0 %v2976, 32
  %v2996 = vpop.permute.xlu0 %2995
  %s2998 = scalar_lea.vmem %s11, 26
  %2999 = vst.msk [vmem:[%s2998] sm:$0x3] %vm549, %v2996
  %s3000 = scalar_lea.vmem [#allocation2], 28
  %v3001 = vld [vmem:[%s3000] sm:$0x3]
  %v3002 = vld [vmem:[%s6] sm:$0xff]
  %v3003 = vld [vmem:[%s6 + $0x8] sm:$0xff]
  %v3004 = vld [vmem:[%s6 + $0x10] sm:$0xff]
  %v3005 = vld [vmem:[%s6 + $0x18] sm:$0xff]
  %3007 = vrot.lane.b32.xlu0 %v2928, 32
  %v3008 = vpop.permute.xlu0 %3007
  %v3009 = vsel %vm49, %v3008, 0
  %3011 = vmatpush.msra.mxu0 0.0
  %3012 = vmatpush.msra.mxu0 0.0
  %3013 = vmatpush.msra.mxu0 0.0
  %3014 = vmatpush.msra.mxu0 0.0
  %3015 = vmatpush.msra.mxu0 0.0
  %3016 = vmatpush.msra.mxu0 0.0
  %3017 = vmatpush.msra.mxu0 0.0
  %3018 = vmatpush.msra.mxu0 0.0
  %3019 = vmatpush.msra.mxu0 0.0
  %3020 = vmatpush.msra.mxu0 0.0
  %3021 = vmatpush.msra.mxu0 0.0
  %3022 = vmatpush.msra.mxu0 0.0
  %3023 = vmatpush.msra.mxu0 %v3005
  %3024 = vmatpush.msra.mxu0 %v3004
  %3025 = vmatpush.msra.mxu0 %v3003
  %3026 = vmatpush.msra.mxu0 %v3002
  %3027 = vmatmul.f32.gmra.mxu0 %v3009
  %v3028 = vpop.f32.mrf.mxu0
  %v3029 = vadd.f32 0.0, %v3028
  %3030 = vdwg.mxu0
  %v3031 = vadd.f32 %v3001, %v3029
  %s3032 = scalar_lea.vmem [#allocation3], 28
  %v3033 = vld [vmem:[%s3032] sm:$0x3]
  %v3034 = vld [vmem:[%s7] sm:$0xff]
  %v3035 = vld [vmem:[%s7 + $0x8] sm:$0xff]
  %v3036 = vld [vmem:[%s7 + $0x10] sm:$0xff]
  %v3037 = vld [vmem:[%s7 + $0x18] sm:$0xff]
  %3039 = vrot.lane.b32.xlu0 %v2984, 32
  %v3040 = vpop.permute.xlu0 %3039
  %v3041 = vsel %vm49, %v3040, 0
  %3043 = vmatpush.msra.mxu0 0.0
  %3044 = vmatpush.msra.mxu0 0.0
  %3045 = vmatpush.msra.mxu0 0.0
  %3046 = vmatpush.msra.mxu0 0.0
  %3047 = vmatpush.msra.mxu0 0.0
  %3048 = vmatpush.msra.mxu0 0.0
  %3049 = vmatpush.msra.mxu0 0.0
  %3050 = vmatpush.msra.mxu0 0.0
  %3051 = vmatpush.msra.mxu0 0.0
  %3052 = vmatpush.msra.mxu0 0.0
  %3053 = vmatpush.msra.mxu0 0.0
  %3054 = vmatpush.msra.mxu0 0.0
  %3055 = vmatpush.msra.mxu0 %v3037
  %3056 = vmatpush.msra.mxu0 %v3036
  %3057 = vmatpush.msra.mxu0 %v3035
  %3058 = vmatpush.msra.mxu0 %v3034
  %3059 = vmatmul.f32.gmra.mxu0 %v3041
  %v3060 = vpop.f32.mrf.mxu0
  %v3061 = vadd.f32 0.0, %v3060
  %3062 = vdwg.mxu0
  %v3063 = vadd.f32 %v3033, %v3061
  %s3064 = scalar_lea.vmem %s2, 28
  %v3065 = vld [vmem:[%s3064] sm:$0x3]
  %v3066 = vxor.u32 %v3031, 2147483648
  %v3067 = vmul.f32 %v3066, 1.442695
  %v3068 = vpow.pop %v3067
  %v3069 = vadd.f32 %v3068, 1.0
  %v3070 = vrcp.pop %v3069
  %v3071 = vmul.f32 %v3069, %v3070
  %v3072 = vsub.f32 1.0, %v3071
  %v3073 = vmul.f32 %v3070, %v3072
  %v3074 = vadd.f32 %v3070, %v3073
  %vm3075 = vweird.f32 %v3069
  %vm3076 = vweird.f32 %v3070
  %vm3077 = vmor %vm3075, %vm3076
  %v3078 = vsel %vm3077, %v3070, %v3074
  %v3079 = vand.u32 2147483647, %v3069
  %vm3080 = vcmp.eq.f32.partialorder %v3079, 8.507059e+37
  %v3081 = vand.u32 %v3069, 2147483648
  %v3082 = vor.u32 1.1754944e-38, %v3081
  %v3083 = vsel %vm3080, %v3082, %v3078
  %v3084 = vmul.f32 1.0, %v3083
  %v3085 = vtanh.pop %v3031
  %v3086 = vmul.f32 %v3084, %v2931
  %3088 = vrot.lane.b32.xlu0 %v3085, 64
  %v3089 = vpop.permute.xlu0 %3088
  %v3091 = vmul.f32 %v3084, %v3089
  %3093 = vrot.lane.b32.xlu0 %v3091, 32
  %v3094 = vpop.permute.xlu0 %3093
  %v3096 = vadd.f32 %v3086, %v3094
  %v3097 = vtanh.pop %v3096
  %3099 = vrot.lane.b32.xlu0 %v3097, 64
  %v3100 = vpop.permute.xlu0 %3099
  %v3102 = vmul.f32 %v3084, %v3100
  %3104 = vset.pattern.permute.xlu0 0
  %3105 = vperm.xlu0 %3104, %v3065
  %v3106 = vpop.permute.xlu0 %3105
  %v3108 = vmul.f32 %v3106, %v3102
  %v3109 = vsub.f32 1.0, %v3065
  %3111 = vset.pattern.permute.xlu0 0
  %3112 = vperm.xlu0 %3111, %v3109
  %v3113 = vpop.permute.xlu0 %3112
  %v3115 = vmul.f32 %v3113, %v2928
  %v3116 = vadd.f32 %v3108, %v3115
  %v3117 = vmul.f32 %v3106, %v3096
  %v3118 = vmul.f32 %v3113, %v2931
  %v3119 = vadd.f32 %v3117, %v3118
  %s3120 = scalar_lea.vmem %s3, 28
  %v3121 = vld [vmem:[%s3120] sm:$0x3]
  %v3122 = vxor.u32 %v3063, 2147483648
  %v3123 = vmul.f32 %v3122, 1.442695
  %v3124 = vpow.pop %v3123
  %v3125 = vadd.f32 %v3124, 1.0
  %v3126 = vrcp.pop %v3125
  %v3127 = vmul.f32 %v3125, %v3126
  %v3128 = vsub.f32 1.0, %v3127
  %v3129 = vmul.f32 %v3126, %v3128
  %v3130 = vadd.f32 %v3126, %v3129
  %vm3131 = vweird.f32 %v3125
  %vm3132 = vweird.f32 %v3126
  %vm3133 = vmor %vm3131, %vm3132
  %v3134 = vsel %vm3133, %v3126, %v3130
  %v3135 = vand.u32 2147483647, %v3125
  %vm3136 = vcmp.eq.f32.partialorder %v3135, 8.507059e+37
  %v3137 = vand.u32 %v3125, 2147483648
  %v3138 = vor.u32 1.1754944e-38, %v3137
  %v3139 = vsel %vm3136, %v3138, %v3134
  %v3140 = vmul.f32 1.0, %v3139
  %v3141 = vtanh.pop %v3063
  %v3142 = vmul.f32 %v3140, %v2987
  %3144 = vrot.lane.b32.xlu0 %v3141, 64
  %v3145 = vpop.permute.xlu0 %3144
  %v3147 = vmul.f32 %v3140, %v3145
  %3149 = vrot.lane.b32.xlu0 %v3147, 32
  %v3150 = vpop.permute.xlu0 %3149
  %v3152 = vadd.f32 %v3142, %v3150
  %v3153 = vtanh.pop %v3152
  %3155 = vrot.lane.b32.xlu0 %v3153, 64
  %v3156 = vpop.permute.xlu0 %3155
  %v3158 = vmul.f32 %v3140, %v3156
  %3160 = vset.pattern.permute.xlu0 0
  %3161 = vperm.xlu0 %3160, %v3121
  %v3162 = vpop.permute.xlu0 %3161
  %v3164 = vmul.f32 %v3162, %v3158
  %v3165 = vsub.f32 1.0, %v3121
  %3167 = vset.pattern.permute.xlu0 0
  %3168 = vperm.xlu0 %3167, %v3165
  %v3169 = vpop.permute.xlu0 %3168
  %v3171 = vmul.f32 %v3169, %v2984
  %v3172 = vadd.f32 %v3164, %v3171
  %v3173 = vmul.f32 %v3162, %v3152
  %v3174 = vmul.f32 %v3169, %v2987
  %v3175 = vadd.f32 %v3173, %v3174
  %3177 = vrot.lane.b32.xlu0 %v3108, 32
  %v3178 = vpop.permute.xlu0 %3177
  %s3180 = scalar_lea.vmem %s10, 28
  %3181 = vst.msk [vmem:[%s3180] sm:$0x3] %vm549, %v3178
  %3183 = vrot.lane.b32.xlu0 %v3164, 32
  %v3184 = vpop.permute.xlu0 %3183
  %s3186 = scalar_lea.vmem %s11, 28
  %3187 = vst.msk [vmem:[%s3186] sm:$0x3] %vm549, %v3184
  %s3188 = scalar_lea.vmem [#allocation2], 30
  %v3189 = vld [vmem:[%s3188] sm:$0x3]
  %v3190 = vld [vmem:[%s6] sm:$0xff]
  %v3191 = vld [vmem:[%s6 + $0x8] sm:$0xff]
  %v3192 = vld [vmem:[%s6 + $0x10] sm:$0xff]
  %v3193 = vld [vmem:[%s6 + $0x18] sm:$0xff]
  %3195 = vrot.lane.b32.xlu0 %v3116, 32
  %v3196 = vpop.permute.xlu0 %3195
  %v3197 = vsel %vm49, %v3196, 0
  %3199 = vmatpush.msra.mxu0 0.0
  %3200 = vmatpush.msra.mxu0 0.0
  %3201 = vmatpush.msra.mxu0 0.0
  %3202 = vmatpush.msra.mxu0 0.0
  %3203 = vmatpush.msra.mxu0 0.0
  %3204 = vmatpush.msra.mxu0 0.0
  %3205 = vmatpush.msra.mxu0 0.0
  %3206 = vmatpush.msra.mxu0 0.0
  %3207 = vmatpush.msra.mxu0 0.0
  %3208 = vmatpush.msra.mxu0 0.0
  %3209 = vmatpush.msra.mxu0 0.0
  %3210 = vmatpush.msra.mxu0 0.0
  %3211 = vmatpush.msra.mxu0 %v3193
  %3212 = vmatpush.msra.mxu0 %v3192
  %3213 = vmatpush.msra.mxu0 %v3191
  %3214 = vmatpush.msra.mxu0 %v3190
  %3215 = vmatmul.f32.gmra.mxu0 %v3197
  %v3216 = vpop.f32.mrf.mxu0
  %v3217 = vadd.f32 0.0, %v3216
  %3218 = vdwg.mxu0
  %v3219 = vadd.f32 %v3189, %v3217
  %s3220 = scalar_lea.vmem [#allocation3], 30
  %v3221 = vld [vmem:[%s3220] sm:$0x3]
  %v3222 = vld [vmem:[%s7] sm:$0xff]
  %v3223 = vld [vmem:[%s7 + $0x8] sm:$0xff]
  %v3224 = vld [vmem:[%s7 + $0x10] sm:$0xff]
  %v3225 = vld [vmem:[%s7 + $0x18] sm:$0xff]
  %3227 = vrot.lane.b32.xlu0 %v3172, 32
  %v3228 = vpop.permute.xlu0 %3227
  %v3229 = vsel %vm49, %v3228, 0
  %3231 = vmatpush.msra.mxu0 0.0
  %3232 = vmatpush.msra.mxu0 0.0
  %3233 = vmatpush.msra.mxu0 0.0
  %3234 = vmatpush.msra.mxu0 0.0
  %3235 = vmatpush.msra.mxu0 0.0
  %3236 = vmatpush.msra.mxu0 0.0
  %3237 = vmatpush.msra.mxu0 0.0
  %3238 = vmatpush.msra.mxu0 0.0
  %3239 = vmatpush.msra.mxu0 0.0
  %3240 = vmatpush.msra.mxu0 0.0
  %3241 = vmatpush.msra.mxu0 0.0
  %3242 = vmatpush.msra.mxu0 0.0
  %3243 = vmatpush.msra.mxu0 %v3225
  %3244 = vmatpush.msra.mxu0 %v3224
  %3245 = vmatpush.msra.mxu0 %v3223
  %3246 = vmatpush.msra.mxu0 %v3222
  %3247 = vmatmul.f32.gmra.mxu0 %v3229
  %v3248 = vpop.f32.mrf.mxu0
  %v3249 = vadd.f32 0.0, %v3248
  %3250 = vdwg.mxu0
  %v3251 = vadd.f32 %v3221, %v3249
  %s3252 = scalar_lea.vmem %s2, 30
  %v3253 = vld [vmem:[%s3252] sm:$0x3]
  %v3254 = vxor.u32 %v3219, 2147483648
  %v3255 = vmul.f32 %v3254, 1.442695
  %v3256 = vpow.pop %v3255
  %v3257 = vadd.f32 %v3256, 1.0
  %v3258 = vrcp.pop %v3257
  %v3259 = vmul.f32 %v3257, %v3258
  %v3260 = vsub.f32 1.0, %v3259
  %v3261 = vmul.f32 %v3258, %v3260
  %v3262 = vadd.f32 %v3258, %v3261
  %vm3263 = vweird.f32 %v3257
  %vm3264 = vweird.f32 %v3258
  %vm3265 = vmor %vm3263, %vm3264
  %v3266 = vsel %vm3265, %v3258, %v3262
  %v3267 = vand.u32 2147483647, %v3257
  %vm3268 = vcmp.eq.f32.partialorder %v3267, 8.507059e+37
  %v3269 = vand.u32 %v3257, 2147483648
  %v3270 = vor.u32 1.1754944e-38, %v3269
  %v3271 = vsel %vm3268, %v3270, %v3266
  %v3272 = vmul.f32 1.0, %v3271
  %v3273 = vtanh.pop %v3219
  %v3274 = vmul.f32 %v3272, %v3119
  %3276 = vrot.lane.b32.xlu0 %v3273, 64
  %v3277 = vpop.permute.xlu0 %3276
  %v3279 = vmul.f32 %v3272, %v3277
  %3281 = vrot.lane.b32.xlu0 %v3279, 32
  %v3282 = vpop.permute.xlu0 %3281
  %v3284 = vadd.f32 %v3274, %v3282
  %v3285 = vtanh.pop %v3284
  %3287 = vrot.lane.b32.xlu0 %v3285, 64
  %v3288 = vpop.permute.xlu0 %3287
  %v3290 = vmul.f32 %v3272, %v3288
  %3292 = vset.pattern.permute.xlu0 0
  %3293 = vperm.xlu0 %3292, %v3253
  %v3294 = vpop.permute.xlu0 %3293
  %v3296 = vmul.f32 %v3294, %v3290
  %v3297 = vsub.f32 1.0, %v3253
  %3299 = vset.pattern.permute.xlu0 0
  %3300 = vperm.xlu0 %3299, %v3297
  %v3301 = vpop.permute.xlu0 %3300
  %v3303 = vmul.f32 %v3301, %v3116
  %v3304 = vadd.f32 %v3296, %v3303
  %v3305 = vmul.f32 %v3294, %v3284
  %v3306 = vmul.f32 %v3301, %v3119
  %v3307 = vadd.f32 %v3305, %v3306
  %s3308 = scalar_lea.vmem %s3, 30
  %v3309 = vld [vmem:[%s3308] sm:$0x3]
  %v3310 = vxor.u32 %v3251, 2147483648
  %v3311 = vmul.f32 %v3310, 1.442695
  %v3312 = vpow.pop %v3311
  %v3313 = vadd.f32 %v3312, 1.0
  %v3314 = vrcp.pop %v3313
  %v3315 = vmul.f32 %v3313, %v3314
  %v3316 = vsub.f32 1.0, %v3315
  %v3317 = vmul.f32 %v3314, %v3316
  %v3318 = vadd.f32 %v3314, %v3317
  %vm3319 = vweird.f32 %v3313
  %vm3320 = vweird.f32 %v3314
  %vm3321 = vmor %vm3319, %vm3320
  %v3322 = vsel %vm3321, %v3314, %v3318
  %v3323 = vand.u32 2147483647, %v3313
  %vm3324 = vcmp.eq.f32.partialorder %v3323, 8.507059e+37
  %v3325 = vand.u32 %v3313, 2147483648
  %v3326 = vor.u32 1.1754944e-38, %v3325
  %v3327 = vsel %vm3324, %v3326, %v3322
  %v3328 = vmul.f32 1.0, %v3327
  %v3329 = vtanh.pop %v3251
  %v3330 = vmul.f32 %v3328, %v3175
  %3332 = vrot.lane.b32.xlu0 %v3329, 64
  %v3333 = vpop.permute.xlu0 %3332
  %v3335 = vmul.f32 %v3328, %v3333
  %3337 = vrot.lane.b32.xlu0 %v3335, 32
  %v3338 = vpop.permute.xlu0 %3337
  %v3340 = vadd.f32 %v3330, %v3338
  %v3341 = vtanh.pop %v3340
  %3343 = vrot.lane.b32.xlu0 %v3341, 64
  %v3344 = vpop.permute.xlu0 %3343
  %v3346 = vmul.f32 %v3328, %v3344
  %3348 = vset.pattern.permute.xlu0 0
  %3349 = vperm.xlu0 %3348, %v3309
  %v3350 = vpop.permute.xlu0 %3349
  %v3352 = vmul.f32 %v3350, %v3346
  %v3353 = vsub.f32 1.0, %v3309
  %3355 = vset.pattern.permute.xlu0 0
  %3356 = vperm.xlu0 %3355, %v3353
  %v3357 = vpop.permute.xlu0 %3356
  %v3359 = vmul.f32 %v3357, %v3172
  %v3360 = vadd.f32 %v3352, %v3359
  %v3361 = vmul.f32 %v3350, %v3340
  %v3362 = vmul.f32 %v3357, %v3175
  %v3363 = vadd.f32 %v3361, %v3362
  %3365 = vrot.lane.b32.xlu0 %v3296, 32
  %v3366 = vpop.permute.xlu0 %3365
  %s3368 = scalar_lea.vmem %s10, 30
  %3369 = vst.msk [vmem:[%s3368] sm:$0x3] %vm549, %v3366
  %3371 = vrot.lane.b32.xlu0 %v3352, 32
  %v3372 = vpop.permute.xlu0 %3371
  %s3374 = scalar_lea.vmem %s11, 30
  %3375 = vst.msk [vmem:[%s3374] sm:$0x3] %vm549, %v3372
  %3377 = vrot.lane.b32.xlu0 %v3304, 32
  %v3378 = vpop.permute.xlu0 %3377
  %3380 = vst.msk [vmem:[%s12] sm:$0x3] %vm549, %v3378
  %3382 = vrot.lane.b32.xlu0 %v3360, 32
  %v3383 = vpop.permute.xlu0 %3382
  %s3385 = scalar_lea.vmem %s12, 2
  %3386 = vst.msk [vmem:[%s3385] sm:$0x3] %vm549, %v3383
  %3388 = vrot.lane.b32.xlu0 %v3307, 96
  %v3389 = vpop.permute.xlu0 %3388
  %3391 = vst.msk [vmem:[%s13] sm:$0x3] %vm549, %v3389
  %3393 = vrot.lane.b32.xlu0 %v3363, 96
  %v3394 = vpop.permute.xlu0 %3393
  %s3396 = scalar_lea.vmem %s13, 2
  %3397 = vst.msk [vmem:[%s3396] sm:$0x3] %vm549, %v3394
  // Predicated region
  $region42: #{_lambda_.2} parent=0 // pred_check
    _
  $region43: #{_lambda_.2} parent=0 // pred_check_branch
    %3399 = sbr.rel (0) target = $region45
  $region44: #{_lambda_.2} parent=0 // pred_region
    _
  $region45: #{_lambda_.2} parent=0 // pred_fallthru
    _
  // Predicated region
  $region46: #{_lambda_.2} parent=0 // pred_check
    _
  $region47: #{_lambda_.2} parent=0 // pred_check_branch
    %3401 = sbr.rel (0) target = $region49
  $region48: #{_lambda_.2} parent=0 // pred_region
    _
  $region49: #{_lambda_.2} parent=0 // pred_fallthru
    _
  // Predicated region
  $region50: #{_lambda_.2} parent=0 // pred_check
    _
  $region51: #{_lambda_.2} parent=0 // pred_check_branch
    %3403 = sbr.rel (0) target = $region53
  $region52: #{_lambda_.2} parent=0 // pred_region
    _
  $region53: #{_lambda_.2} parent=0 // pred_fallthru
    _
  // Predicated region
  $region54: #{_lambda_.2} parent=0 // pred_check
    _
  $region55: #{_lambda_.2} parent=0 // pred_check_branch
    %3405 = sbr.rel (0) target = $region57
  $region56: #{_lambda_.2} parent=0 // pred_region
    _
  $region57: #{_lambda_.2} parent=0 // pred_fallthru
    _
  // Predicated region
  $region58: #{_lambda_.2} parent=0 // pred_check
    _
  $region59: #{_lambda_.2} parent=0 // pred_check_branch
    %3407 = sbr.rel (0) target = $region61
  $region60: #{_lambda_.2} parent=0 // pred_region
    _
  $region61: #{_lambda_.2} parent=0 // pred_fallthru
    _
  // Predicated region
  $region62: #{_lambda_.2} parent=0 // pred_check
    _
  $region63: #{_lambda_.2} parent=0 // pred_check_branch
    %3409 = sbr.rel (0) target = $region65
  $region64: #{_lambda_.2} parent=0 // pred_region
    _
  $region65: #{_lambda_.2} parent=0 // pred_fallthru
    _
  // Predicated region
  $region66: #{_lambda_.2} parent=0 // pred_check
    _
  $region67: #{_lambda_.2} parent=0 // pred_check_branch
    %3411 = sbr.rel (0) target = $region69
  $region68: #{_lambda_.2} parent=0 // pred_region
    _
  $region69: #{_lambda_.2} parent=0 // pred_fallthru
    _
  // Predicated region
  $region70: #{_lambda_.2} parent=0 // pred_check
    _
  $region71: #{_lambda_.2} parent=0 // pred_check_branch
    %3413 = sbr.rel (0) target = $region73
  $region72: #{_lambda_.2} parent=0 // pred_region
    _
  $region73: #{_lambda_.2} parent=0 // pred_fallthru
    _

// kernel: _lambda_.3
$region0: #{_lambda_.3}
  #allocation0 [shape = 'u32[]', space=smem, size = 0x4, offset = 0x4, fixed_abs, tag = 'smem constant byte address 0x4 - core index']
  #allocation1 [shape = 'u32[72,128]{1,0:T(1,128)}', space=vmem, size = 0x9000, scoped, tag = 'internal scratch']
  #allocation2 [shape = 'f32[16,1,128]{2,1,0:T(1,128)}', space=vmem, size = 0x2000, scoped, tag = 'scratch operand']
  #allocation3 [shape = 'f32[16,1,32]{2,1,0:T(1,128)}', space=vmem, size = 0x2000, scoped, tag = 'scratch operand']
  %s0 = inlined_call_operand.vmem [shape: f32[16,32], index: 0, kind: input, shape index: {}]
  %s1 = inlined_call_operand.vmem [shape: f32[2,16,64], index: 1, kind: input, shape index: {}]
  %s2 = inlined_call_operand.vmem [shape: f32[2,1,16], index: 2, kind: input, shape index: {}]
  %s3 = inlined_call_operand.vmem [shape: f32[2,1,64], index: 3, kind: input, shape index: {}]
  %s4 = inlined_call_operand.vmem [shape: f32[2,1,64], index: 4, kind: input, shape index: {}]
  %s5 = inlined_call_operand.vmem [shape: f32[64,32], index: 5, kind: input, shape index: {}]
  %s6 = inlined_call_operand.vmem [shape: f32[64,32], index: 6, kind: input, shape index: {}]
  %s7 = inlined_call_operand.vmem [shape: f32[64,32], index: 7, kind: input, shape index: {}]
  %s8 = inlined_call_operand.vmem [shape: f32[32,128], index: 8, kind: input, shape index: {}]
  %s9 = inlined_call_operand.vmem [shape: f32[32,128], index: 9, kind: input, shape index: {}]
  %s10 = inlined_call_operand.vmem [shape: f32[32,128], index: 10, kind: input, shape index: {}]
  %s11 = inlined_call_operand.vmem [shape: f32[1,128], index: 11, kind: input, shape index: {}]
  %s12 = inlined_call_operand.vmem [shape: f32[32,32], index: 12, kind: input, shape index: {}]
  %s13 = inlined_call_operand.vmem [shape: f32[64,32], index: 13, kind: input, shape index: {}]
  %s14 = inlined_call_operand.vmem [shape: f32[32,128], index: 14, kind: input, shape index: {}]
  %s15 = inlined_call_operand.vmem [shape: f32[1,128], index: 15, kind: input, shape index: {}]
  %s16 = inlined_call_operand.vmem [shape: f32[16,128], index: 16, kind: output, shape index: {}]
  %s17 = sld [smem:[#allocation0]]
  $region74: #{_lambda_.3} parent=0
    _
  %s19 = ssub.s32 1, %s17
  %s20 = scalar_select 0, %s19, %s17
  // Predicated region
  $region2: #{_lambda_.3} parent=0 // pred_check
    _
  $region3: #{_lambda_.3} parent=0 // pred_check_branch
    %22 = sbr.rel (0) target = $region5
  $region4: #{_lambda_.3} parent=0 // pred_region
    _
  $region5: #{_lambda_.3} parent=0 // pred_fallthru
    _
  // Predicated region
  $region6: #{_lambda_.3} parent=0 // pred_check
    _
  $region7: #{_lambda_.3} parent=0 // pred_check_branch
    %24 = sbr.rel (0) target = $region9
  $region8: #{_lambda_.3} parent=0 // pred_region
    _
  $region9: #{_lambda_.3} parent=0 // pred_fallthru
    _
  // Predicated region
  $region10: #{_lambda_.3} parent=0 // pred_check
    _
  $region11: #{_lambda_.3} parent=0 // pred_check_branch
    %26 = sbr.rel (0) target = $region13
  $region12: #{_lambda_.3} parent=0 // pred_region
    _
  $region13: #{_lambda_.3} parent=0 // pred_fallthru
    _
  // Predicated region
  $region14: #{_lambda_.3} parent=0 // pred_check
    _
  $region15: #{_lambda_.3} parent=0 // pred_check_branch
    %28 = sbr.rel (0) target = $region17
  $region16: #{_lambda_.3} parent=0 // pred_region
    _
  $region17: #{_lambda_.3} parent=0 // pred_fallthru
    _
  // Predicated region
  $region18: #{_lambda_.3} parent=0 // pred_check
    _
  $region19: #{_lambda_.3} parent=0 // pred_check_branch
    %30 = sbr.rel (0) target = $region21
  $region20: #{_lambda_.3} parent=0 // pred_region
    _
  $region21: #{_lambda_.3} parent=0 // pred_fallthru
    _
  // Predicated region
  $region22: #{_lambda_.3} parent=0 // pred_check
    _
  $region23: #{_lambda_.3} parent=0 // pred_check_branch
    %32 = sbr.rel (0) target = $region25
  $region24: #{_lambda_.3} parent=0 // pred_region
    _
  $region25: #{_lambda_.3} parent=0 // pred_fallthru
    _
  // Predicated region
  $region26: #{_lambda_.3} parent=0 // pred_check
    _
  $region27: #{_lambda_.3} parent=0 // pred_check_branch
    %34 = sbr.rel (0) target = $region29
  $region28: #{_lambda_.3} parent=0 // pred_region
    _
  $region29: #{_lambda_.3} parent=0 // pred_fallthru
    _
  // Predicated region
  $region30: #{_lambda_.3} parent=0 // pred_check
    _
  $region31: #{_lambda_.3} parent=0 // pred_check_branch
    %36 = sbr.rel (0) target = $region33
  $region32: #{_lambda_.3} parent=0 // pred_region
    _
  $region33: #{_lambda_.3} parent=0 // pred_fallthru
    _
  // Predicated region
  $region34: #{_lambda_.3} parent=0 // pred_check
    _
  $region35: #{_lambda_.3} parent=0 // pred_check_branch
    %38 = sbr.rel (0) target = $region37
  $region36: #{_lambda_.3} parent=0 // pred_region
    _
  $region37: #{_lambda_.3} parent=0 // pred_fallthru
    _
  // Predicated region
  $region38: #{_lambda_.3} parent=0 // pred_check
    _
  $region39: #{_lambda_.3} parent=0 // pred_check_branch
    %40 = sbr.rel (0) target = $region41
  $region40: #{_lambda_.3} parent=0 // pred_region
    _
  $region41: #{_lambda_.3} parent=0 // pred_fallthru
    _
  // Predicated region
  $region42: #{_lambda_.3} parent=0 // pred_check
    _
  $region43: #{_lambda_.3} parent=0 // pred_check_branch
    %42 = sbr.rel (0) target = $region45
  $region44: #{_lambda_.3} parent=0 // pred_region
    _
  $region45: #{_lambda_.3} parent=0 // pred_fallthru
    _
  // Predicated region
  $region46: #{_lambda_.3} parent=0 // pred_check
    _
  $region47: #{_lambda_.3} parent=0 // pred_check_branch
    %44 = sbr.rel (0) target = $region49
  $region48: #{_lambda_.3} parent=0 // pred_region
    _
  $region49: #{_lambda_.3} parent=0 // pred_fallthru
    _
  // Predicated region
  $region50: #{_lambda_.3} parent=0 // pred_check
    _
  $region51: #{_lambda_.3} parent=0 // pred_check_branch
    %46 = sbr.rel (0) target = $region53
  $region52: #{_lambda_.3} parent=0 // pred_region
    _
  $region53: #{_lambda_.3} parent=0 // pred_fallthru
    _
  // Predicated region
  $region54: #{_lambda_.3} parent=0 // pred_check
    _
  $region55: #{_lambda_.3} parent=0 // pred_check_branch
    %48 = sbr.rel (0) target = $region57
  $region56: #{_lambda_.3} parent=0 // pred_region
    _
  $region57: #{_lambda_.3} parent=0 // pred_fallthru
    _
  // Predicated region
  $region58: #{_lambda_.3} parent=0 // pred_check
    _
  $region59: #{_lambda_.3} parent=0 // pred_check_branch
    %50 = sbr.rel (0) target = $region61
  $region60: #{_lambda_.3} parent=0 // pred_region
    _
  $region61: #{_lambda_.3} parent=0 // pred_fallthru
    _
  // Predicated region
  $region62: #{_lambda_.3} parent=0 // pred_check
    _
  $region63: #{_lambda_.3} parent=0 // pred_check_branch
    %52 = sbr.rel (0) target = $region65
  $region64: #{_lambda_.3} parent=0 // pred_region
    _
  $region65: #{_lambda_.3} parent=0 // pred_fallthru
    _
  %v53 = vld [vmem:[%s0] sm:$0xff]
  %v54 = vld [vmem:[%s0 + $0x8] sm:$0xff]
  %v55 = vld [vmem:[%s8] sm:$0xff]
  %v56 = vld [vmem:[%s8 + $0x8] sm:$0xff]
  %v57 = vld [vmem:[%s8 + $0x10] sm:$0xff]
  %v58 = vld [vmem:[%s8 + $0x18] sm:$0xff]
  %v59 = vld [vmem:[%s11] sm:$0x1]
  %v61 = vperm.slane %v59, 0
  %vm63 = vcmask 261120
  %v65 = vsel %vm63, %v53, 0
  %v68 = vsel %vm63, %v54, 0
  %70 = vmatpush.msra.mxu0 0.0
  %71 = vmatpush.msra.mxu0 0.0
  %72 = vmatpush.msra.mxu0 0.0
  %73 = vmatpush.msra.mxu0 0.0
  %74 = vmatpush.msra.mxu0 0.0
  %75 = vmatpush.msra.mxu0 0.0
  %76 = vmatpush.msra.mxu0 0.0
  %77 = vmatpush.msra.mxu0 0.0
  %78 = vmatpush.msra.mxu0 0.0
  %79 = vmatpush.msra.mxu0 0.0
  %80 = vmatpush.msra.mxu0 0.0
  %81 = vmatpush.msra.mxu0 0.0
  %82 = vmatpush.msra.mxu0 %v58
  %83 = vmatpush.msra.mxu0 %v57
  %84 = vmatpush.msra.mxu0 %v56
  %85 = vmatpush.msra.mxu0 %v55
  %86 = vmatmul.f32.gmra.mxu0 %v65
  %v87 = vpop.f32.mrf.mxu0
  %v88 = vadd.f32 %v61, %v87
  %89 = vmatmul.f32.gmra.mxu0 %v68
  %v90 = vpop.f32.mrf.mxu0
  %v91 = vadd.f32 %v61, %v90
  %92 = vdwg.mxu0
  %v95 = vrot.slane %v88, 1
  %v96 = vrot.slane %v88, 2
  %v97 = vrot.slane %v88, 3
  %v98 = vrot.slane %v88, 4
  %v99 = vrot.slane %v88, 5
  %v100 = vrot.slane %v88, 6
  %v101 = vrot.slane %v88, 7
  %v102 = vrot.slane %v91, 1
  %v103 = vrot.slane %v91, 2
  %v104 = vrot.slane %v91, 3
  %v105 = vrot.slane %v91, 4
  %v106 = vrot.slane %v91, 5
  %v107 = vrot.slane %v91, 6
  %v108 = vrot.slane %v91, 7
  %123 = vst [vmem:[#allocation2] sm:$0x1] %v88
  %124 = vst [vmem:[#allocation2 + $0x1] sm:$0x1] %v95
  %125 = vst [vmem:[#allocation2 + $0x2] sm:$0x1] %v96
  %126 = vst [vmem:[#allocation2 + $0x3] sm:$0x1] %v97
  %127 = vst [vmem:[#allocation2 + $0x4] sm:$0x1] %v98
  %128 = vst [vmem:[#allocation2 + $0x5] sm:$0x1] %v99
  %129 = vst [vmem:[#allocation2 + $0x6] sm:$0x1] %v100
  %130 = vst [vmem:[#allocation2 + $0x7] sm:$0x1] %v101
  %131 = vst [vmem:[#allocation2 + $0x8] sm:$0x1] %v91
  %132 = vst [vmem:[#allocation2 + $0x9] sm:$0x1] %v102
  %133 = vst [vmem:[#allocation2 + $0xa] sm:$0x1] %v103
  %134 = vst [vmem:[#allocation2 + $0xb] sm:$0x1] %v104
  %135 = vst [vmem:[#allocation2 + $0xc] sm:$0x1] %v105
  %136 = vst [vmem:[#allocation2 + $0xd] sm:$0x1] %v106
  %137 = vst [vmem:[#allocation2 + $0xe] sm:$0x1] %v107
  %138 = vst [vmem:[#allocation2 + $0xf] sm:$0x1] %v108
  %v139 = vld [vmem:[%s9] sm:$0xff]
  %v140 = vld [vmem:[%s9 + $0x8] sm:$0xff]
  %v141 = vld [vmem:[%s9 + $0x10] sm:$0xff]
  %v142 = vld [vmem:[%s9 + $0x18] sm:$0xff]
  %v143 = vld [vmem:[%s10] sm:$0xff]
  %v144 = vld [vmem:[%s10 + $0x8] sm:$0xff]
  %v145 = vld [vmem:[%s10 + $0x10] sm:$0xff]
  %v146 = vld [vmem:[%s10 + $0x18] sm:$0xff]
  %v147 = vld [vmem:[%s12] sm:$0xff]
  %v148 = vld [vmem:[%s12 + $0x8] sm:$0xff]
  %v149 = vld [vmem:[%s12 + $0x10] sm:$0xff]
  %v150 = vld [vmem:[%s12 + $0x18] sm:$0xff]
  %v151 = vld [vmem:[%s13] sm:$0xff]
  %v152 = vld [vmem:[%s13 + $0x8] sm:$0xff]
  %v153 = vld [vmem:[%s13 + $0x10] sm:$0xff]
  %v154 = vld [vmem:[%s13 + $0x18] sm:$0xff]
  %v155 = vld [vmem:[%s13 + $0x20] sm:$0xff]
  %v156 = vld [vmem:[%s13 + $0x28] sm:$0xff]
  %v157 = vld [vmem:[%s13 + $0x30] sm:$0xff]
  %v158 = vld [vmem:[%s13 + $0x38] sm:$0xff]
  %v159 = vld [vmem:[%s1] sm:$0xff]
  %v160 = vld [vmem:[%s1 + $0x8] sm:$0xff]
  %v161 = vld [vmem:[%s1 + $0x10] sm:$0xff]
  %v162 = vld [vmem:[%s1 + $0x18] sm:$0xff]
  %v163 = vld [vmem:[%s7] sm:$0xff]
  %v164 = vld [vmem:[%s7 + $0x8] sm:$0xff]
  %v165 = vld [vmem:[%s7 + $0x10] sm:$0xff]
  %v166 = vld [vmem:[%s7 + $0x18] sm:$0xff]
  %v167 = vld [vmem:[%s7 + $0x20] sm:$0xff]
  %v168 = vld [vmem:[%s7 + $0x28] sm:$0xff]
  %v169 = vld [vmem:[%s7 + $0x30] sm:$0xff]
  %v170 = vld [vmem:[%s7 + $0x38] sm:$0xff]
  %vm171 = vcmask 523264
  %v173 = vsel %vm171, %v159, 0
  %v176 = vsel %vm171, %v160, 0
  %178 = vmatpush.msra.mxu0 0.0
  %179 = vmatpush.msra.mxu0 0.0
  %180 = vmatpush.msra.mxu0 0.0
  %181 = vmatpush.msra.mxu0 0.0
  %182 = vmatpush.msra.mxu0 0.0
  %183 = vmatpush.msra.mxu0 0.0
  %184 = vmatpush.msra.mxu0 0.0
  %185 = vmatpush.msra.mxu0 0.0
  %186 = vmatpush.msra.mxu0 %v170
  %187 = vmatpush.msra.mxu0 %v169
  %188 = vmatpush.msra.mxu0 %v168
  %189 = vmatpush.msra.mxu0 %v167
  %190 = vmatpush.msra.mxu0 %v166
  %191 = vmatpush.msra.mxu0 %v165
  %192 = vmatpush.msra.mxu0 %v164
  %193 = vmatpush.msra.mxu0 %v163
  %194 = vmatmul.f32.gmra.mxu0 %v173
  %v195 = vpop.f32.mrf.mxu0
  %v196 = vadd.f32 0.0, %v195
  %197 = vmatmul.f32.gmra.mxu0 %v176
  %v198 = vpop.f32.mrf.mxu0
  %v199 = vadd.f32 0.0, %v198
  %200 = vdwg.mxu0
  %v202 = vsel %vm171, %v161, 0
  %v205 = vsel %vm171, %v162, 0
  %207 = vmatpush.msra.mxu0 0.0
  %208 = vmatpush.msra.mxu0 0.0
  %209 = vmatpush.msra.mxu0 0.0
  %210 = vmatpush.msra.mxu0 0.0
  %211 = vmatpush.msra.mxu0 0.0
  %212 = vmatpush.msra.mxu0 0.0
  %213 = vmatpush.msra.mxu0 0.0
  %214 = vmatpush.msra.mxu0 0.0
  %215 = vmatpush.msra.mxu0 %v170
  %216 = vmatpush.msra.mxu0 %v169
  %217 = vmatpush.msra.mxu0 %v168
  %218 = vmatpush.msra.mxu0 %v167
  %219 = vmatpush.msra.mxu0 %v166
  %220 = vmatpush.msra.mxu0 %v165
  %221 = vmatpush.msra.mxu0 %v164
  %222 = vmatpush.msra.mxu0 %v163
  %223 = vmatmul.f32.gmra.mxu0 %v202
  %v224 = vpop.f32.mrf.mxu0
  %v225 = vadd.f32 0.0, %v224
  %226 = vmatmul.f32.gmra.mxu0 %v205
  %v227 = vpop.f32.mrf.mxu0
  %v228 = vadd.f32 0.0, %v227
  %229 = vdwg.mxu0
  %v230 = vld [vmem:[%s2] sm:$0x1]
  %v231 = vld [vmem:[%s2 + $0x1] sm:$0x1]
  %v232 = vld [vmem:[%s3] sm:$0x1]
  %v233 = vld [vmem:[%s3 + $0x1] sm:$0x1]
  %v234 = vld [vmem:[%s5] sm:$0xff]
  %v235 = vld [vmem:[%s5 + $0x8] sm:$0xff]
  %v236 = vld [vmem:[%s5 + $0x10] sm:$0xff]
  %v237 = vld [vmem:[%s5 + $0x18] sm:$0xff]
  %v238 = vld [vmem:[%s5 + $0x20] sm:$0xff]
  %v239 = vld [vmem:[%s5 + $0x28] sm:$0xff]
  %v240 = vld [vmem:[%s5 + $0x30] sm:$0xff]
  %v241 = vld [vmem:[%s5 + $0x38] sm:$0xff]
  %v243 = vsel %vm171, %v232, 0
  %245 = vmatpush.msra.mxu0 0.0
  %246 = vmatpush.msra.mxu0 0.0
  %247 = vmatpush.msra.mxu0 0.0
  %248 = vmatpush.msra.mxu0 0.0
  %249 = vmatpush.msra.mxu0 0.0
  %250 = vmatpush.msra.mxu0 0.0
  %251 = vmatpush.msra.mxu0 0.0
  %252 = vmatpush.msra.mxu0 0.0
  %253 = vmatpush.msra.mxu0 %v241
  %254 = vmatpush.msra.mxu0 %v240
  %255 = vmatpush.msra.mxu0 %v239
  %256 = vmatpush.msra.mxu0 %v238
  %257 = vmatpush.msra.mxu0 %v237
  %258 = vmatpush.msra.mxu0 %v236
  %259 = vmatpush.msra.mxu0 %v235
  %260 = vmatpush.msra.mxu0 %v234
  %261 = vmatmul.f32.gmra.mxu0 %v243
  %v262 = vpop.f32.mrf.mxu0
  %v263 = vadd.f32 0.0, %v262
  %264 = vdwg.mxu0
  %v266 = vsel %vm171, %v233, 0
  %268 = vmatpush.msra.mxu0 0.0
  %269 = vmatpush.msra.mxu0 0.0
  %270 = vmatpush.msra.mxu0 0.0
  %271 = vmatpush.msra.mxu0 0.0
  %272 = vmatpush.msra.mxu0 0.0
  %273 = vmatpush.msra.mxu0 0.0
  %274 = vmatpush.msra.mxu0 0.0
  %275 = vmatpush.msra.mxu0 0.0
  %276 = vmatpush.msra.mxu0 %v241
  %277 = vmatpush.msra.mxu0 %v240
  %278 = vmatpush.msra.mxu0 %v239
  %279 = vmatpush.msra.mxu0 %v238
  %280 = vmatpush.msra.mxu0 %v237
  %281 = vmatpush.msra.mxu0 %v236
  %282 = vmatpush.msra.mxu0 %v235
  %283 = vmatpush.msra.mxu0 %v234
  %284 = vmatmul.f32.gmra.mxu0 %v266
  %v285 = vpop.f32.mrf.mxu0
  %v286 = vadd.f32 0.0, %v285
  %287 = vdwg.mxu0
  %v288 = vld [vmem:[%s4] sm:$0x1]
  %v289 = vld [vmem:[%s4 + $0x1] sm:$0x1]
  %v290 = vld [vmem:[%s6] sm:$0xff]
  %v291 = vld [vmem:[%s6 + $0x8] sm:$0xff]
  %v292 = vld [vmem:[%s6 + $0x10] sm:$0xff]
  %v293 = vld [vmem:[%s6 + $0x18] sm:$0xff]
  %v294 = vld [vmem:[%s6 + $0x20] sm:$0xff]
  %v295 = vld [vmem:[%s6 + $0x28] sm:$0xff]
  %v296 = vld [vmem:[%s6 + $0x30] sm:$0xff]
  %v297 = vld [vmem:[%s6 + $0x38] sm:$0xff]
  %v299 = vsel %vm171, %v288, 0
  %301 = vmatpush.msra.mxu0 0.0
  %302 = vmatpush.msra.mxu0 0.0
  %303 = vmatpush.msra.mxu0 0.0
  %304 = vmatpush.msra.mxu0 0.0
  %305 = vmatpush.msra.mxu0 0.0
  %306 = vmatpush.msra.mxu0 0.0
  %307 = vmatpush.msra.mxu0 0.0
  %308 = vmatpush.msra.mxu0 0.0
  %309 = vmatpush.msra.mxu0 %v297
  %310 = vmatpush.msra.mxu0 %v296
  %311 = vmatpush.msra.mxu0 %v295
  %312 = vmatpush.msra.mxu0 %v294
  %313 = vmatpush.msra.mxu0 %v293
  %314 = vmatpush.msra.mxu0 %v292
  %315 = vmatpush.msra.mxu0 %v291
  %316 = vmatpush.msra.mxu0 %v290
  %317 = vmatmul.f32.gmra.mxu0 %v299
  %v318 = vpop.f32.mrf.mxu0
  %v319 = vadd.f32 0.0, %v318
  %320 = vdwg.mxu0
  %v322 = vsel %vm171, %v289, 0
  %324 = vmatpush.msra.mxu0 0.0
  %325 = vmatpush.msra.mxu0 0.0
  %326 = vmatpush.msra.mxu0 0.0
  %327 = vmatpush.msra.mxu0 0.0
  %328 = vmatpush.msra.mxu0 0.0
  %329 = vmatpush.msra.mxu0 0.0
  %330 = vmatpush.msra.mxu0 0.0
  %331 = vmatpush.msra.mxu0 0.0
  %332 = vmatpush.msra.mxu0 %v297
  %333 = vmatpush.msra.mxu0 %v296
  %334 = vmatpush.msra.mxu0 %v295
  %335 = vmatpush.msra.mxu0 %v294
  %336 = vmatpush.msra.mxu0 %v293
  %337 = vmatpush.msra.mxu0 %v292
  %338 = vmatpush.msra.mxu0 %v291
  %339 = vmatpush.msra.mxu0 %v290
  %340 = vmatmul.f32.gmra.mxu0 %v322
  %v341 = vpop.f32.mrf.mxu0
  %v342 = vadd.f32 0.0, %v341
  %343 = vdwg.mxu0
  %v344 = vld [vmem:[#allocation2] sm:$0x1]
  %v345 = vld [vmem:[#allocation2 + $0x1] sm:$0x1]
  %v347 = vsel %vm63, 0.0, 0
  %349 = vmatpush.msra.mxu0 0.0
  %350 = vmatpush.msra.mxu0 0.0
  %351 = vmatpush.msra.mxu0 0.0
  %352 = vmatpush.msra.mxu0 0.0
  %353 = vmatpush.msra.mxu0 0.0
  %354 = vmatpush.msra.mxu0 0.0
  %355 = vmatpush.msra.mxu0 0.0
  %356 = vmatpush.msra.mxu0 0.0
  %357 = vmatpush.msra.mxu0 0.0
  %358 = vmatpush.msra.mxu0 0.0
  %359 = vmatpush.msra.mxu0 0.0
  %360 = vmatpush.msra.mxu0 0.0
  %361 = vmatpush.msra.mxu0 %v142
  %362 = vmatpush.msra.mxu0 %v141
  %363 = vmatpush.msra.mxu0 %v140
  %364 = vmatpush.msra.mxu0 %v139
  %365 = vmatmul.f32.gmra.mxu0 %v347
  %v366 = vpop.f32.mrf.mxu0
  %v367 = vadd.f32 0.0, %v366
  %368 = vdwg.mxu0
  %v369 = vadd.f32 %v344, %v367
  %v370 = vadd.f32 %v345, %v367
  %v372 = vsel %vm63, %v263, 0
  %374 = vmatpush.msra.mxu0 0.0
  %375 = vmatpush.msra.mxu0 0.0
  %376 = vmatpush.msra.mxu0 0.0
  %377 = vmatpush.msra.mxu0 0.0
  %378 = vmatpush.msra.mxu0 0.0
  %379 = vmatpush.msra.mxu0 0.0
  %380 = vmatpush.msra.mxu0 0.0
  %381 = vmatpush.msra.mxu0 0.0
  %382 = vmatpush.msra.mxu0 0.0
  %383 = vmatpush.msra.mxu0 0.0
  %384 = vmatpush.msra.mxu0 0.0
  %385 = vmatpush.msra.mxu0 0.0
  %386 = vmatpush.msra.mxu0 %v146
  %387 = vmatpush.msra.mxu0 %v145
  %388 = vmatpush.msra.mxu0 %v144
  %389 = vmatpush.msra.mxu0 %v143
  %390 = vmatmul.f32.gmra.mxu0 %v372
  %v391 = vpop.f32.mrf.mxu0
  %v392 = vadd.f32 0.0, %v391
  %393 = vdwg.mxu0
  %v395 = vsel %vm63, %v286, 0
  %397 = vmatpush.msra.mxu0 0.0
  %398 = vmatpush.msra.mxu0 0.0
  %399 = vmatpush.msra.mxu0 0.0
  %400 = vmatpush.msra.mxu0 0.0
  %401 = vmatpush.msra.mxu0 0.0
  %402 = vmatpush.msra.mxu0 0.0
  %403 = vmatpush.msra.mxu0 0.0
  %404 = vmatpush.msra.mxu0 0.0
  %405 = vmatpush.msra.mxu0 0.0
  %406 = vmatpush.msra.mxu0 0.0
  %407 = vmatpush.msra.mxu0 0.0
  %408 = vmatpush.msra.mxu0 0.0
  %409 = vmatpush.msra.mxu0 %v146
  %410 = vmatpush.msra.mxu0 %v145
  %411 = vmatpush.msra.mxu0 %v144
  %412 = vmatpush.msra.mxu0 %v143
  %413 = vmatmul.f32.gmra.mxu0 %v395
  %v414 = vpop.f32.mrf.mxu0
  %v415 = vadd.f32 0.0, %v414
  %416 = vdwg.mxu0
  %v417 = vadd.f32 %v369, %v392
  %v418 = vadd.f32 %v370, %v415
  %v419 = vxor.u32 %v417, 2147483648
  %v420 = vxor.u32 %v418, 2147483648
  %v421 = vmul.f32 %v419, 1.442695
  %v422 = vpow.pop %v421
  %v423 = vmul.f32 %v420, 1.442695
  %v424 = vpow.pop %v423
  %v425 = vadd.f32 %v422, 1.0
  %v426 = vadd.f32 %v424, 1.0
  %v427 = vrcp.pop %v425
  %v428 = vmul.f32 %v425, %v427
  %v429 = vsub.f32 1.0, %v428
  %v430 = vmul.f32 %v427, %v429
  %v431 = vadd.f32 %v427, %v430
  %vm432 = vweird.f32 %v425
  %vm433 = vweird.f32 %v427
  %vm434 = vmor %vm432, %vm433
  %v435 = vsel %vm434, %v427, %v431
  %v436 = vand.u32 2147483647, %v425
  %vm437 = vcmp.eq.f32.partialorder %v436, 8.507059e+37
  %v438 = vand.u32 %v425, 2147483648
  %v439 = vor.u32 1.1754944e-38, %v438
  %v440 = vsel %vm437, %v439, %v435
  %v441 = vmul.f32 1.0, %v440
  %v442 = vrcp.pop %v426
  %v443 = vmul.f32 %v426, %v442
  %v444 = vsub.f32 1.0, %v443
  %v445 = vmul.f32 %v442, %v444
  %v446 = vadd.f32 %v442, %v445
  %vm447 = vweird.f32 %v426
  %vm448 = vweird.f32 %v442
  %vm449 = vmor %vm447, %vm448
  %v450 = vsel %vm449, %v442, %v446
  %v451 = vand.u32 2147483647, %v426
  %vm452 = vcmp.eq.f32.partialorder %v451, 8.507059e+37
  %v453 = vand.u32 %v426, 2147483648
  %v454 = vor.u32 1.1754944e-38, %v453
  %v455 = vsel %vm452, %v454, %v450
  %v456 = vmul.f32 1.0, %v455
  %v457 = vtanh.pop %v417
  %v458 = vtanh.pop %v418
  %461 = vrot.lane.b32.xlu0 %v319, 32
  %v462 = vpop.permute.xlu0 %461
  %463 = vrot.lane.b32.xlu0 %v342, 32
  %v464 = vpop.permute.xlu0 %463
  %v467 = vmul.f32 %v441, %v462
  %v468 = vmul.f32 %v456, %v464
  %471 = vrot.lane.b32.xlu0 %v457, 64
  %v472 = vpop.permute.xlu0 %471
  %473 = vrot.lane.b32.xlu0 %v458, 64
  %v474 = vpop.permute.xlu0 %473
  %v477 = vmul.f32 %v441, %v472
  %v478 = vmul.f32 %v456, %v474
  %481 = vrot.lane.b32.xlu0 %v477, 32
  %v482 = vpop.permute.xlu0 %481
  %483 = vrot.lane.b32.xlu0 %v478, 32
  %v484 = vpop.permute.xlu0 %483
  %v487 = vadd.f32 %v467, %v482
  %v488 = vadd.f32 %v468, %v484
  %v489 = vtanh.pop %v487
  %v490 = vtanh.pop %v488
  %493 = vrot.lane.b32.xlu0 %v489, 64
  %v494 = vpop.permute.xlu0 %493
  %495 = vrot.lane.b32.xlu0 %v490, 64
  %v496 = vpop.permute.xlu0 %495
  %v499 = vmul.f32 %v441, %v494
  %v500 = vmul.f32 %v456, %v496
  %v502 = vperm.slane %v499, 0
  %503 = vrot.lane.b32.xlu0 %v502, 32
  %v504 = vpop.permute.xlu0 %503
  %v505 = vsel %vm63, %v504, 0
  %v508 = vsel %vm63, %v196, 0
  %v511 = vsel %vm63, %v199, 0
  %513 = vmatpush.xpose.msra.mxu0 0.0
  %514 = vmatpush.xpose.msra.mxu0 0.0
  %515 = vmatpush.xpose.msra.mxu0 0.0
  %516 = vmatpush.xpose.msra.mxu0 0.0
  %517 = vmatpush.xpose.msra.mxu0 0.0
  %518 = vmatpush.xpose.msra.mxu0 0.0
  %519 = vmatpush.xpose.msra.mxu0 0.0
  %520 = vmatpush.xpose.msra.mxu0 0.0
  %521 = vmatpush.xpose.msra.mxu0 0.0
  %522 = vmatpush.xpose.msra.mxu0 0.0
  %523 = vmatpush.xpose.msra.mxu0 0.0
  %524 = vmatpush.xpose.msra.mxu0 0.0
  %525 = vmatpush.xpose.msra.mxu0 0.0
  %526 = vmatpush.xpose.msra.mxu0 0.0
  %527 = vmatpush.xpose.msra.mxu0 %v511
  %528 = vmatpush.xpose.msra.mxu0 %v508
  %529 = vmatmul.f32.gmra.mxu0 %v505
  %v530 = vpop.f32.mrf.mxu0
  %v531 = vadd.f32 0.0, %v530
  %532 = vdwg.mxu0
  %v534 = vperm.slane %v500, 0
  %535 = vrot.lane.b32.xlu0 %v534, 32
  %v536 = vpop.permute.xlu0 %535
  %v537 = vsel %vm63, %v536, 0
  %v540 = vsel %vm63, %v225, 0
  %v543 = vsel %vm63, %v228, 0
  %545 = vmatpush.xpose.msra.mxu0 0.0
  %546 = vmatpush.xpose.msra.mxu0 0.0
  %547 = vmatpush.xpose.msra.mxu0 0.0
  %548 = vmatpush.xpose.msra.mxu0 0.0
  %549 = vmatpush.xpose.msra.mxu0 0.0
  %550 = vmatpush.xpose.msra.mxu0 0.0
  %551 = vmatpush.xpose.msra.mxu0 0.0
  %552 = vmatpush.xpose.msra.mxu0 0.0
  %553 = vmatpush.xpose.msra.mxu0 0.0
  %554 = vmatpush.xpose.msra.mxu0 0.0
  %555 = vmatpush.xpose.msra.mxu0 0.0
  %556 = vmatpush.xpose.msra.mxu0 0.0
  %557 = vmatpush.xpose.msra.mxu0 0.0
  %558 = vmatpush.xpose.msra.mxu0 0.0
  %559 = vmatpush.xpose.msra.mxu0 %v543
  %560 = vmatpush.xpose.msra.mxu0 %v540
  %561 = vmatmul.f32.gmra.mxu0 %v537
  %v562 = vpop.f32.mrf.mxu0
  %v563 = vadd.f32 0.0, %v562
  %564 = vdwg.mxu0
  %vm565 = vcmp.gt.f32.partialorder %v230, 0.5
  %vm566 = vcmp.gt.f32.partialorder %v231, 0.5
  %v567 = vsel %vm565, %v531, -1e+30
  %v568 = vsel %vm566, %v563, -1e+30
  %vm569 = vcmask 122880
  %v570 = vsel %vm569, %v567, -inf
  %571 = vmax.xlane.f32.xlu0 %v570
  %v572 = vpop.xlane.xlu0 %571
  %v573 = vsel %vm569, %v568, -inf
  %574 = vmax.xlane.f32.xlu0 %v573
  %v575 = vpop.xlane.xlu0 %574
  %v576 = vsub.f32 %v567, %v572
  %v577 = vsub.f32 %v568, %v575
  %v578 = vmul.f32 %v576, 1.442695
  %v579 = vpow.pop %v578
  %v580 = vmul.f32 %v577, 1.442695
  %v581 = vpow.pop %v580
  %v582 = vsel %vm569, %v579, 0.0
  %583 = vadd.xlane.f32.xlu0 %v582
  %v584 = vpop.xlane.xlu0 %583
  %v585 = vsel %vm569, %v581, 0.0
  %586 = vadd.xlane.f32.xlu0 %v585
  %v587 = vpop.xlane.xlu0 %586
  %v588 = vrcp.pop %v584
  %v589 = vrcp.pop %v587
  %v590 = vmul.f32 %v579, %v588
  %v591 = vmul.f32 %v581, %v589
  %vm592 = vcmask 130048
  %v594 = vsel %vm592, %v590, 0
  %596 = vmatpush.msra.mxu0 0.0
  %597 = vmatpush.msra.mxu0 0.0
  %598 = vmatpush.msra.mxu0 0.0
  %599 = vmatpush.msra.mxu0 0.0
  %600 = vmatpush.msra.mxu0 0.0
  %601 = vmatpush.msra.mxu0 0.0
  %602 = vmatpush.msra.mxu0 0.0
  %603 = vmatpush.msra.mxu0 0.0
  %604 = vmatpush.msra.mxu0 0.0
  %605 = vmatpush.msra.mxu0 0.0
  %606 = vmatpush.msra.mxu0 0.0
  %607 = vmatpush.msra.mxu0 0.0
  %608 = vmatpush.msra.mxu0 0.0
  %609 = vmatpush.msra.mxu0 0.0
  %610 = vmatpush.msra.mxu0 %v160
  %611 = vmatpush.msra.mxu0 %v159
  %612 = vmatmul.f32.gmra.mxu0 %v594
  %v613 = vpop.f32.mrf.mxu0
  %v614 = vadd.f32 0.0, %v613
  %615 = vdwg.mxu0
  %v617 = vsel %vm592, %v591, 0
  %619 = vmatpush.msra.mxu0 0.0
  %620 = vmatpush.msra.mxu0 0.0
  %621 = vmatpush.msra.mxu0 0.0
  %622 = vmatpush.msra.mxu0 0.0
  %623 = vmatpush.msra.mxu0 0.0
  %624 = vmatpush.msra.mxu0 0.0
  %625 = vmatpush.msra.mxu0 0.0
  %626 = vmatpush.msra.mxu0 0.0
  %627 = vmatpush.msra.mxu0 0.0
  %628 = vmatpush.msra.mxu0 0.0
  %629 = vmatpush.msra.mxu0 0.0
  %630 = vmatpush.msra.mxu0 0.0
  %631 = vmatpush.msra.mxu0 0.0
  %632 = vmatpush.msra.mxu0 0.0
  %633 = vmatpush.msra.mxu0 %v162
  %634 = vmatpush.msra.mxu0 %v161
  %635 = vmatmul.f32.gmra.mxu0 %v617
  %v636 = vpop.f32.mrf.mxu0
  %v637 = vadd.f32 0.0, %v636
  %638 = vdwg.mxu0
  %v640 = vsel %vm171, %v614, 0
  %642 = vmatpush.msra.mxu0 0.0
  %643 = vmatpush.msra.mxu0 0.0
  %644 = vmatpush.msra.mxu0 0.0
  %645 = vmatpush.msra.mxu0 0.0
  %646 = vmatpush.msra.mxu0 0.0
  %647 = vmatpush.msra.mxu0 0.0
  %648 = vmatpush.msra.mxu0 0.0
  %649 = vmatpush.msra.mxu0 0.0
  %650 = vmatpush.msra.mxu0 %v158
  %651 = vmatpush.msra.mxu0 %v157
  %652 = vmatpush.msra.mxu0 %v156
  %653 = vmatpush.msra.mxu0 %v155
  %654 = vmatpush.msra.mxu0 %v154
  %655 = vmatpush.msra.mxu0 %v153
  %656 = vmatpush.msra.mxu0 %v152
  %657 = vmatpush.msra.mxu0 %v151
  %658 = vmatmul.f32.gmra.mxu0 %v640
  %v659 = vpop.f32.mrf.mxu0
  %v660 = vadd.f32 0.0, %v659
  %661 = vdwg.mxu0
  %v663 = vsel %vm171, %v637, 0
  %665 = vmatpush.msra.mxu0 0.0
  %666 = vmatpush.msra.mxu0 0.0
  %667 = vmatpush.msra.mxu0 0.0
  %668 = vmatpush.msra.mxu0 0.0
  %669 = vmatpush.msra.mxu0 0.0
  %670 = vmatpush.msra.mxu0 0.0
  %671 = vmatpush.msra.mxu0 0.0
  %672 = vmatpush.msra.mxu0 0.0
  %673 = vmatpush.msra.mxu0 %v158
  %674 = vmatpush.msra.mxu0 %v157
  %675 = vmatpush.msra.mxu0 %v156
  %676 = vmatpush.msra.mxu0 %v155
  %677 = vmatpush.msra.mxu0 %v154
  %678 = vmatpush.msra.mxu0 %v153
  %679 = vmatpush.msra.mxu0 %v152
  %680 = vmatpush.msra.mxu0 %v151
  %681 = vmatmul.f32.gmra.mxu0 %v663
  %v682 = vpop.f32.mrf.mxu0
  %v683 = vadd.f32 0.0, %v682
  %684 = vdwg.mxu0
  %685 = vmatpush.msra.mxu0 0.0
  %686 = vmatpush.msra.mxu0 0.0
  %687 = vmatpush.msra.mxu0 0.0
  %688 = vmatpush.msra.mxu0 0.0
  %689 = vmatpush.msra.mxu0 0.0
  %690 = vmatpush.msra.mxu0 0.0
  %691 = vmatpush.msra.mxu0 0.0
  %692 = vmatpush.msra.mxu0 0.0
  %693 = vmatpush.msra.mxu0 0.0
  %694 = vmatpush.msra.mxu0 0.0
  %695 = vmatpush.msra.mxu0 0.0
  %696 = vmatpush.msra.mxu0 0.0
  %697 = vmatpush.msra.mxu0 %v150
  %698 = vmatpush.msra.mxu0 %v149
  %699 = vmatpush.msra.mxu0 %v148
  %700 = vmatpush.msra.mxu0 %v147
  %701 = vmatmul.f32.gmra.mxu0 %v505
  %v702 = vpop.f32.mrf.mxu0
  %v703 = vadd.f32 %v660, %v702
  %704 = vdwg.mxu0
  %705 = vmatpush.msra.mxu0 0.0
  %706 = vmatpush.msra.mxu0 0.0
  %707 = vmatpush.msra.mxu0 0.0
  %708 = vmatpush.msra.mxu0 0.0
  %709 = vmatpush.msra.mxu0 0.0
  %710 = vmatpush.msra.mxu0 0.0
  %711 = vmatpush.msra.mxu0 0.0
  %712 = vmatpush.msra.mxu0 0.0
  %713 = vmatpush.msra.mxu0 0.0
  %714 = vmatpush.msra.mxu0 0.0
  %715 = vmatpush.msra.mxu0 0.0
  %716 = vmatpush.msra.mxu0 0.0
  %717 = vmatpush.msra.mxu0 %v150
  %718 = vmatpush.msra.mxu0 %v149
  %719 = vmatpush.msra.mxu0 %v148
  %720 = vmatpush.msra.mxu0 %v147
  %721 = vmatmul.f32.gmra.mxu0 %v537
  %v722 = vpop.f32.mrf.mxu0
  %v723 = vadd.f32 %v683, %v722
  %724 = vdwg.mxu0
  %v725 = vtanh.pop %v703
  %v726 = vtanh.pop %v723
  %vm727 = vcmask 253952
  %728 = vst.msk [vmem:[#allocation3] sm:$0x1] %vm727, %v725
  %729 = vst.msk [vmem:[#allocation3 + $0x1] sm:$0x1] %vm727, %v726
  %s730 = scalar_lea.vmem [#allocation2], 2
  %v731 = vld [vmem:[%s730] sm:$0x1]
  %v732 = vld [vmem:[%s730 + $0x1] sm:$0x1]
  %v734 = vsel %vm63, %v725, 0
  %736 = vmatpush.msra.mxu0 0.0
  %737 = vmatpush.msra.mxu0 0.0
  %738 = vmatpush.msra.mxu0 0.0
  %739 = vmatpush.msra.mxu0 0.0
  %740 = vmatpush.msra.mxu0 0.0
  %741 = vmatpush.msra.mxu0 0.0
  %742 = vmatpush.msra.mxu0 0.0
  %743 = vmatpush.msra.mxu0 0.0
  %744 = vmatpush.msra.mxu0 0.0
  %745 = vmatpush.msra.mxu0 0.0
  %746 = vmatpush.msra.mxu0 0.0
  %747 = vmatpush.msra.mxu0 0.0
  %748 = vmatpush.msra.mxu0 %v142
  %749 = vmatpush.msra.mxu0 %v141
  %750 = vmatpush.msra.mxu0 %v140
  %751 = vmatpush.msra.mxu0 %v139
  %752 = vmatmul.f32.gmra.mxu0 %v734
  %v753 = vpop.f32.mrf.mxu0
  %v754 = vadd.f32 0.0, %v753
  %755 = vdwg.mxu0
  %v757 = vsel %vm63, %v726, 0
  %759 = vmatpush.msra.mxu0 0.0
  %760 = vmatpush.msra.mxu0 0.0
  %761 = vmatpush.msra.mxu0 0.0
  %762 = vmatpush.msra.mxu0 0.0
  %763 = vmatpush.msra.mxu0 0.0
  %764 = vmatpush.msra.mxu0 0.0
  %765 = vmatpush.msra.mxu0 0.0
  %766 = vmatpush.msra.mxu0 0.0
  %767 = vmatpush.msra.mxu0 0.0
  %768 = vmatpush.msra.mxu0 0.0
  %769 = vmatpush.msra.mxu0 0.0
  %770 = vmatpush.msra.mxu0 0.0
  %771 = vmatpush.msra.mxu0 %v142
  %772 = vmatpush.msra.mxu0 %v141
  %773 = vmatpush.msra.mxu0 %v140
  %774 = vmatpush.msra.mxu0 %v139
  %775 = vmatmul.f32.gmra.mxu0 %v757
  %v776 = vpop.f32.mrf.mxu0
  %v777 = vadd.f32 0.0, %v776
  %778 = vdwg.mxu0
  %v779 = vadd.f32 %v731, %v754
  %v780 = vadd.f32 %v732, %v777
  %781 = vmatpush.msra.mxu0 0.0
  %782 = vmatpush.msra.mxu0 0.0
  %783 = vmatpush.msra.mxu0 0.0
  %784 = vmatpush.msra.mxu0 0.0
  %785 = vmatpush.msra.mxu0 0.0
  %786 = vmatpush.msra.mxu0 0.0
  %787 = vmatpush.msra.mxu0 0.0
  %788 = vmatpush.msra.mxu0 0.0
  %789 = vmatpush.msra.mxu0 0.0
  %790 = vmatpush.msra.mxu0 0.0
  %791 = vmatpush.msra.mxu0 0.0
  %792 = vmatpush.msra.mxu0 0.0
  %793 = vmatpush.msra.mxu0 %v146
  %794 = vmatpush.msra.mxu0 %v145
  %795 = vmatpush.msra.mxu0 %v144
  %796 = vmatpush.msra.mxu0 %v143
  %797 = vmatmul.f32.gmra.mxu0 %v505
  %v798 = vpop.f32.mrf.mxu0
  %v799 = vadd.f32 0.0, %v798
  %800 = vdwg.mxu0
  %801 = vmatpush.msra.mxu0 0.0
  %802 = vmatpush.msra.mxu0 0.0
  %803 = vmatpush.msra.mxu0 0.0
  %804 = vmatpush.msra.mxu0 0.0
  %805 = vmatpush.msra.mxu0 0.0
  %806 = vmatpush.msra.mxu0 0.0
  %807 = vmatpush.msra.mxu0 0.0
  %808 = vmatpush.msra.mxu0 0.0
  %809 = vmatpush.msra.mxu0 0.0
  %810 = vmatpush.msra.mxu0 0.0
  %811 = vmatpush.msra.mxu0 0.0
  %812 = vmatpush.msra.mxu0 0.0
  %813 = vmatpush.msra.mxu0 %v146
  %814 = vmatpush.msra.mxu0 %v145
  %815 = vmatpush.msra.mxu0 %v144
  %816 = vmatpush.msra.mxu0 %v143
  %817 = vmatmul.f32.gmra.mxu0 %v537
  %v818 = vpop.f32.mrf.mxu0
  %v819 = vadd.f32 0.0, %v818
  %820 = vdwg.mxu0
  %v821 = vadd.f32 %v779, %v799
  %v822 = vadd.f32 %v780, %v819
  %v823 = vxor.u32 %v821, 2147483648
  %v824 = vxor.u32 %v822, 2147483648
  %v825 = vmul.f32 %v823, 1.442695
  %v826 = vpow.pop %v825
  %v827 = vmul.f32 %v824, 1.442695
  %v828 = vpow.pop %v827
  %v829 = vadd.f32 %v826, 1.0
  %v830 = vadd.f32 %v828, 1.0
  %v831 = vrcp.pop %v829
  %v832 = vmul.f32 %v829, %v831
  %v833 = vsub.f32 1.0, %v832
  %v834 = vmul.f32 %v831, %v833
  %v835 = vadd.f32 %v831, %v834
  %vm836 = vweird.f32 %v829
  %vm837 = vweird.f32 %v831
  %vm838 = vmor %vm836, %vm837
  %v839 = vsel %vm838, %v831, %v835
  %v840 = vand.u32 2147483647, %v829
  %vm841 = vcmp.eq.f32.partialorder %v840, 8.507059e+37
  %v842 = vand.u32 %v829, 2147483648
  %v843 = vor.u32 1.1754944e-38, %v842
  %v844 = vsel %vm841, %v843, %v839
  %v845 = vmul.f32 1.0, %v844
  %v846 = vrcp.pop %v830
  %v847 = vmul.f32 %v830, %v846
  %v848 = vsub.f32 1.0, %v847
  %v849 = vmul.f32 %v846, %v848
  %v850 = vadd.f32 %v846, %v849
  %vm851 = vweird.f32 %v830
  %vm852 = vweird.f32 %v846
  %vm853 = vmor %vm851, %vm852
  %v854 = vsel %vm853, %v846, %v850
  %v855 = vand.u32 2147483647, %v830
  %vm856 = vcmp.eq.f32.partialorder %v855, 8.507059e+37
  %v857 = vand.u32 %v830, 2147483648
  %v858 = vor.u32 1.1754944e-38, %v857
  %v859 = vsel %vm856, %v858, %v854
  %v860 = vmul.f32 1.0, %v859
  %v861 = vtanh.pop %v821
  %v862 = vtanh.pop %v822
  %v863 = vmul.f32 %v845, %v487
  %v864 = vmul.f32 %v860, %v488
  %867 = vrot.lane.b32.xlu0 %v861, 64
  %v868 = vpop.permute.xlu0 %867
  %869 = vrot.lane.b32.xlu0 %v862, 64
  %v870 = vpop.permute.xlu0 %869
  %v873 = vmul.f32 %v845, %v868
  %v874 = vmul.f32 %v860, %v870
  %877 = vrot.lane.b32.xlu0 %v873, 32
  %v878 = vpop.permute.xlu0 %877
  %879 = vrot.lane.b32.xlu0 %v874, 32
  %v880 = vpop.permute.xlu0 %879
  %v883 = vadd.f32 %v863, %v878
  %v884 = vadd.f32 %v864, %v880
  %v885 = vtanh.pop %v883
  %v886 = vtanh.pop %v884
  %889 = vrot.lane.b32.xlu0 %v885, 64
  %v890 = vpop.permute.xlu0 %889
  %891 = vrot.lane.b32.xlu0 %v886, 64
  %v892 = vpop.permute.xlu0 %891
  %v895 = vmul.f32 %v845, %v890
  %v896 = vmul.f32 %v860, %v892
  %v898 = vperm.slane %v895, 0
  %899 = vrot.lane.b32.xlu0 %v898, 32
  %v900 = vpop.permute.xlu0 %899
  %v901 = vsel %vm63, %v900, 0
  %903 = vmatpush.xpose.msra.mxu0 0.0
  %904 = vmatpush.xpose.msra.mxu0 0.0
  %905 = vmatpush.xpose.msra.mxu0 0.0
  %906 = vmatpush.xpose.msra.mxu0 0.0
  %907 = vmatpush.xpose.msra.mxu0 0.0
  %908 = vmatpush.xpose.msra.mxu0 0.0
  %909 = vmatpush.xpose.msra.mxu0 0.0
  %910 = vmatpush.xpose.msra.mxu0 0.0
  %911 = vmatpush.xpose.msra.mxu0 0.0
  %912 = vmatpush.xpose.msra.mxu0 0.0
  %913 = vmatpush.xpose.msra.mxu0 0.0
  %914 = vmatpush.xpose.msra.mxu0 0.0
  %915 = vmatpush.xpose.msra.mxu0 0.0
  %916 = vmatpush.xpose.msra.mxu0 0.0
  %917 = vmatpush.xpose.msra.mxu0 %v511
  %918 = vmatpush.xpose.msra.mxu0 %v508
  %919 = vmatmul.f32.gmra.mxu0 %v901
  %v920 = vpop.f32.mrf.mxu0
  %v921 = vadd.f32 0.0, %v920
  %922 = vdwg.mxu0
  %v924 = vperm.slane %v896, 0
  %925 = vrot.lane.b32.xlu0 %v924, 32
  %v926 = vpop.permute.xlu0 %925
  %v927 = vsel %vm63, %v926, 0
  %929 = vmatpush.xpose.msra.mxu0 0.0
  %930 = vmatpush.xpose.msra.mxu0 0.0
  %931 = vmatpush.xpose.msra.mxu0 0.0
  %932 = vmatpush.xpose.msra.mxu0 0.0
  %933 = vmatpush.xpose.msra.mxu0 0.0
  %934 = vmatpush.xpose.msra.mxu0 0.0
  %935 = vmatpush.xpose.msra.mxu0 0.0
  %936 = vmatpush.xpose.msra.mxu0 0.0
  %937 = vmatpush.xpose.msra.mxu0 0.0
  %938 = vmatpush.xpose.msra.mxu0 0.0
  %939 = vmatpush.xpose.msra.mxu0 0.0
  %940 = vmatpush.xpose.msra.mxu0 0.0
  %941 = vmatpush.xpose.msra.mxu0 0.0
  %942 = vmatpush.xpose.msra.mxu0 0.0
  %943 = vmatpush.xpose.msra.mxu0 %v543
  %944 = vmatpush.xpose.msra.mxu0 %v540
  %945 = vmatmul.f32.gmra.mxu0 %v927
  %v946 = vpop.f32.mrf.mxu0
  %v947 = vadd.f32 0.0, %v946
  %948 = vdwg.mxu0
  %v949 = vsel %vm565, %v921, -1e+30
  %v950 = vsel %vm566, %v947, -1e+30
  %v951 = vsel %vm569, %v949, -inf
  %952 = vmax.xlane.f32.xlu0 %v951
  %v953 = vpop.xlane.xlu0 %952
  %v954 = vsel %vm569, %v950, -inf
  %955 = vmax.xlane.f32.xlu0 %v954
  %v956 = vpop.xlane.xlu0 %955
  %v957 = vsub.f32 %v949, %v953
  %v958 = vsub.f32 %v950, %v956
  %v959 = vmul.f32 %v957, 1.442695
  %v960 = vpow.pop %v959
  %v961 = vmul.f32 %v958, 1.442695
  %v962 = vpow.pop %v961
  %v963 = vsel %vm569, %v960, 0.0
  %964 = vadd.xlane.f32.xlu0 %v963
  %v965 = vpop.xlane.xlu0 %964
  %v966 = vsel %vm569, %v962, 0.0
  %967 = vadd.xlane.f32.xlu0 %v966
  %v968 = vpop.xlane.xlu0 %967
  %v969 = vrcp.pop %v965
  %v970 = vrcp.pop %v968
  %v971 = vmul.f32 %v960, %v969
  %v972 = vmul.f32 %v962, %v970
  %v974 = vsel %vm592, %v971, 0
  %976 = vmatpush.msra.mxu0 0.0
  %977 = vmatpush.msra.mxu0 0.0
  %978 = vmatpush.msra.mxu0 0.0
  %979 = vmatpush.msra.mxu0 0.0
  %980 = vmatpush.msra.mxu0 0.0
  %981 = vmatpush.msra.mxu0 0.0
  %982 = vmatpush.msra.mxu0 0.0
  %983 = vmatpush.msra.mxu0 0.0
  %984 = vmatpush.msra.mxu0 0.0
  %985 = vmatpush.msra.mxu0 0.0
  %986 = vmatpush.msra.mxu0 0.0
  %987 = vmatpush.msra.mxu0 0.0
  %988 = vmatpush.msra.mxu0 0.0
  %989 = vmatpush.msra.mxu0 0.0
  %990 = vmatpush.msra.mxu0 %v160
  %991 = vmatpush.msra.mxu0 %v159
  %992 = vmatmul.f32.gmra.mxu0 %v974
  %v993 = vpop.f32.mrf.mxu0
  %v994 = vadd.f32 0.0, %v993
  %995 = vdwg.mxu0
  %v997 = vsel %vm592, %v972, 0
  %999 = vmatpush.msra.mxu0 0.0
  %1000 = vmatpush.msra.mxu0 0.0
  %1001 = vmatpush.msra.mxu0 0.0
  %1002 = vmatpush.msra.mxu0 0.0
  %1003 = vmatpush.msra.mxu0 0.0
  %1004 = vmatpush.msra.mxu0 0.0
  %1005 = vmatpush.msra.mxu0 0.0
  %1006 = vmatpush.msra.mxu0 0.0
  %1007 = vmatpush.msra.mxu0 0.0
  %1008 = vmatpush.msra.mxu0 0.0
  %1009 = vmatpush.msra.mxu0 0.0
  %1010 = vmatpush.msra.mxu0 0.0
  %1011 = vmatpush.msra.mxu0 0.0
  %1012 = vmatpush.msra.mxu0 0.0
  %1013 = vmatpush.msra.mxu0 %v162
  %1014 = vmatpush.msra.mxu0 %v161
  %1015 = vmatmul.f32.gmra.mxu0 %v997
  %v1016 = vpop.f32.mrf.mxu0
  %v1017 = vadd.f32 0.0, %v1016
  %1018 = vdwg.mxu0
  %v1020 = vsel %vm171, %v994, 0
  %1022 = vmatpush.msra.mxu0 0.0
  %1023 = vmatpush.msra.mxu0 0.0
  %1024 = vmatpush.msra.mxu0 0.0
  %1025 = vmatpush.msra.mxu0 0.0
  %1026 = vmatpush.msra.mxu0 0.0
  %1027 = vmatpush.msra.mxu0 0.0
  %1028 = vmatpush.msra.mxu0 0.0
  %1029 = vmatpush.msra.mxu0 0.0
  %1030 = vmatpush.msra.mxu0 %v158
  %1031 = vmatpush.msra.mxu0 %v157
  %1032 = vmatpush.msra.mxu0 %v156
  %1033 = vmatpush.msra.mxu0 %v155
  %1034 = vmatpush.msra.mxu0 %v154
  %1035 = vmatpush.msra.mxu0 %v153
  %1036 = vmatpush.msra.mxu0 %v152
  %1037 = vmatpush.msra.mxu0 %v151
  %1038 = vmatmul.f32.gmra.mxu0 %v1020
  %v1039 = vpop.f32.mrf.mxu0
  %v1040 = vadd.f32 0.0, %v1039
  %1041 = vdwg.mxu0
  %v1043 = vsel %vm171, %v1017, 0
  %1045 = vmatpush.msra.mxu0 0.0
  %1046 = vmatpush.msra.mxu0 0.0
  %1047 = vmatpush.msra.mxu0 0.0
  %1048 = vmatpush.msra.mxu0 0.0
  %1049 = vmatpush.msra.mxu0 0.0
  %1050 = vmatpush.msra.mxu0 0.0
  %1051 = vmatpush.msra.mxu0 0.0
  %1052 = vmatpush.msra.mxu0 0.0
  %1053 = vmatpush.msra.mxu0 %v158
  %1054 = vmatpush.msra.mxu0 %v157
  %1055 = vmatpush.msra.mxu0 %v156
  %1056 = vmatpush.msra.mxu0 %v155
  %1057 = vmatpush.msra.mxu0 %v154
  %1058 = vmatpush.msra.mxu0 %v153
  %1059 = vmatpush.msra.mxu0 %v152
  %1060 = vmatpush.msra.mxu0 %v151
  %1061 = vmatmul.f32.gmra.mxu0 %v1043
  %v1062 = vpop.f32.mrf.mxu0
  %v1063 = vadd.f32 0.0, %v1062
  %1064 = vdwg.mxu0
  %1065 = vmatpush.msra.mxu0 0.0
  %1066 = vmatpush.msra.mxu0 0.0
  %1067 = vmatpush.msra.mxu0 0.0
  %1068 = vmatpush.msra.mxu0 0.0
  %1069 = vmatpush.msra.mxu0 0.0
  %1070 = vmatpush.msra.mxu0 0.0
  %1071 = vmatpush.msra.mxu0 0.0
  %1072 = vmatpush.msra.mxu0 0.0
  %1073 = vmatpush.msra.mxu0 0.0
  %1074 = vmatpush.msra.mxu0 0.0
  %1075 = vmatpush.msra.mxu0 0.0
  %1076 = vmatpush.msra.mxu0 0.0
  %1077 = vmatpush.msra.mxu0 %v150
  %1078 = vmatpush.msra.mxu0 %v149
  %1079 = vmatpush.msra.mxu0 %v148
  %1080 = vmatpush.msra.mxu0 %v147
  %1081 = vmatmul.f32.gmra.mxu0 %v901
  %v1082 = vpop.f32.mrf.mxu0
  %v1083 = vadd.f32 %v1040, %v1082
  %1084 = vdwg.mxu0
  %1085 = vmatpush.msra.mxu0 0.0
  %1086 = vmatpush.msra.mxu0 0.0
  %1087 = vmatpush.msra.mxu0 0.0
  %1088 = vmatpush.msra.mxu0 0.0
  %1089 = vmatpush.msra.mxu0 0.0
  %1090 = vmatpush.msra.mxu0 0.0
  %1091 = vmatpush.msra.mxu0 0.0
  %1092 = vmatpush.msra.mxu0 0.0
  %1093 = vmatpush.msra.mxu0 0.0
  %1094 = vmatpush.msra.mxu0 0.0
  %1095 = vmatpush.msra.mxu0 0.0
  %1096 = vmatpush.msra.mxu0 0.0
  %1097 = vmatpush.msra.mxu0 %v150
  %1098 = vmatpush.msra.mxu0 %v149
  %1099 = vmatpush.msra.mxu0 %v148
  %1100 = vmatpush.msra.mxu0 %v147
  %1101 = vmatmul.f32.gmra.mxu0 %v927
  %v1102 = vpop.f32.mrf.mxu0
  %v1103 = vadd.f32 %v1063, %v1102
  %1104 = vdwg.mxu0
  %v1105 = vtanh.pop %v1083
  %v1106 = vtanh.pop %v1103
  %s1107 = scalar_lea.vmem [#allocation3], 2
  %1108 = vst.msk [vmem:[%s1107] sm:$0x1] %vm727, %v1105
  %1109 = vst.msk [vmem:[%s1107 + $0x1] sm:$0x1] %vm727, %v1106
  %s1110 = scalar_lea.vmem [#allocation2], 4
  %v1111 = vld [vmem:[%s1110] sm:$0x1]
  %v1112 = vld [vmem:[%s1110 + $0x1] sm:$0x1]
  %v1114 = vsel %vm63, %v1105, 0
  %1116 = vmatpush.msra.mxu0 0.0
  %1117 = vmatpush.msra.mxu0 0.0
  %1118 = vmatpush.msra.mxu0 0.0
  %1119 = vmatpush.msra.mxu0 0.0
  %1120 = vmatpush.msra.mxu0 0.0
  %1121 = vmatpush.msra.mxu0 0.0
  %1122 = vmatpush.msra.mxu0 0.0
  %1123 = vmatpush.msra.mxu0 0.0
  %1124 = vmatpush.msra.mxu0 0.0
  %1125 = vmatpush.msra.mxu0 0.0
  %1126 = vmatpush.msra.mxu0 0.0
  %1127 = vmatpush.msra.mxu0 0.0
  %1128 = vmatpush.msra.mxu0 %v142
  %1129 = vmatpush.msra.mxu0 %v141
  %1130 = vmatpush.msra.mxu0 %v140
  %1131 = vmatpush.msra.mxu0 %v139
  %1132 = vmatmul.f32.gmra.mxu0 %v1114
  %v1133 = vpop.f32.mrf.mxu0
  %v1134 = vadd.f32 0.0, %v1133
  %1135 = vdwg.mxu0
  %v1137 = vsel %vm63, %v1106, 0
  %1139 = vmatpush.msra.mxu0 0.0
  %1140 = vmatpush.msra.mxu0 0.0
  %1141 = vmatpush.msra.mxu0 0.0
  %1142 = vmatpush.msra.mxu0 0.0
  %1143 = vmatpush.msra.mxu0 0.0
  %1144 = vmatpush.msra.mxu0 0.0
  %1145 = vmatpush.msra.mxu0 0.0
  %1146 = vmatpush.msra.mxu0 0.0
  %1147 = vmatpush.msra.mxu0 0.0
  %1148 = vmatpush.msra.mxu0 0.0
  %1149 = vmatpush.msra.mxu0 0.0
  %1150 = vmatpush.msra.mxu0 0.0
  %1151 = vmatpush.msra.mxu0 %v142
  %1152 = vmatpush.msra.mxu0 %v141
  %1153 = vmatpush.msra.mxu0 %v140
  %1154 = vmatpush.msra.mxu0 %v139
  %1155 = vmatmul.f32.gmra.mxu0 %v1137
  %v1156 = vpop.f32.mrf.mxu0
  %v1157 = vadd.f32 0.0, %v1156
  %1158 = vdwg.mxu0
  %v1159 = vadd.f32 %v1111, %v1134
  %v1160 = vadd.f32 %v1112, %v1157
  %1161 = vmatpush.msra.mxu0 0.0
  %1162 = vmatpush.msra.mxu0 0.0
  %1163 = vmatpush.msra.mxu0 0.0
  %1164 = vmatpush.msra.mxu0 0.0
  %1165 = vmatpush.msra.mxu0 0.0
  %1166 = vmatpush.msra.mxu0 0.0
  %1167 = vmatpush.msra.mxu0 0.0
  %1168 = vmatpush.msra.mxu0 0.0
  %1169 = vmatpush.msra.mxu0 0.0
  %1170 = vmatpush.msra.mxu0 0.0
  %1171 = vmatpush.msra.mxu0 0.0
  %1172 = vmatpush.msra.mxu0 0.0
  %1173 = vmatpush.msra.mxu0 %v146
  %1174 = vmatpush.msra.mxu0 %v145
  %1175 = vmatpush.msra.mxu0 %v144
  %1176 = vmatpush.msra.mxu0 %v143
  %1177 = vmatmul.f32.gmra.mxu0 %v901
  %v1178 = vpop.f32.mrf.mxu0
  %v1179 = vadd.f32 0.0, %v1178
  %1180 = vdwg.mxu0
  %1181 = vmatpush.msra.mxu0 0.0
  %1182 = vmatpush.msra.mxu0 0.0
  %1183 = vmatpush.msra.mxu0 0.0
  %1184 = vmatpush.msra.mxu0 0.0
  %1185 = vmatpush.msra.mxu0 0.0
  %1186 = vmatpush.msra.mxu0 0.0
  %1187 = vmatpush.msra.mxu0 0.0
  %1188 = vmatpush.msra.mxu0 0.0
  %1189 = vmatpush.msra.mxu0 0.0
  %1190 = vmatpush.msra.mxu0 0.0
  %1191 = vmatpush.msra.mxu0 0.0
  %1192 = vmatpush.msra.mxu0 0.0
  %1193 = vmatpush.msra.mxu0 %v146
  %1194 = vmatpush.msra.mxu0 %v145
  %1195 = vmatpush.msra.mxu0 %v144
  %1196 = vmatpush.msra.mxu0 %v143
  %1197 = vmatmul.f32.gmra.mxu0 %v927
  %v1198 = vpop.f32.mrf.mxu0
  %v1199 = vadd.f32 0.0, %v1198
  %1200 = vdwg.mxu0
  %v1201 = vadd.f32 %v1159, %v1179
  %v1202 = vadd.f32 %v1160, %v1199
  %v1203 = vxor.u32 %v1201, 2147483648
  %v1204 = vxor.u32 %v1202, 2147483648
  %v1205 = vmul.f32 %v1203, 1.442695
  %v1206 = vpow.pop %v1205
  %v1207 = vmul.f32 %v1204, 1.442695
  %v1208 = vpow.pop %v1207
  %v1209 = vadd.f32 %v1206, 1.0
  %v1210 = vadd.f32 %v1208, 1.0
  %v1211 = vrcp.pop %v1209
  %v1212 = vmul.f32 %v1209, %v1211
  %v1213 = vsub.f32 1.0, %v1212
  %v1214 = vmul.f32 %v1211, %v1213
  %v1215 = vadd.f32 %v1211, %v1214
  %vm1216 = vweird.f32 %v1209
  %vm1217 = vweird.f32 %v1211
  %vm1218 = vmor %vm1216, %vm1217
  %v1219 = vsel %vm1218, %v1211, %v1215
  %v1220 = vand.u32 2147483647, %v1209
  %vm1221 = vcmp.eq.f32.partialorder %v1220, 8.507059e+37
  %v1222 = vand.u32 %v1209, 2147483648
  %v1223 = vor.u32 1.1754944e-38, %v1222
  %v1224 = vsel %vm1221, %v1223, %v1219
  %v1225 = vmul.f32 1.0, %v1224
  %v1226 = vrcp.pop %v1210
  %v1227 = vmul.f32 %v1210, %v1226
  %v1228 = vsub.f32 1.0, %v1227
  %v1229 = vmul.f32 %v1226, %v1228
  %v1230 = vadd.f32 %v1226, %v1229
  %vm1231 = vweird.f32 %v1210
  %vm1232 = vweird.f32 %v1226
  %vm1233 = vmor %vm1231, %vm1232
  %v1234 = vsel %vm1233, %v1226, %v1230
  %v1235 = vand.u32 2147483647, %v1210
  %vm1236 = vcmp.eq.f32.partialorder %v1235, 8.507059e+37
  %v1237 = vand.u32 %v1210, 2147483648
  %v1238 = vor.u32 1.1754944e-38, %v1237
  %v1239 = vsel %vm1236, %v1238, %v1234
  %v1240 = vmul.f32 1.0, %v1239
  %v1241 = vtanh.pop %v1201
  %v1242 = vtanh.pop %v1202
  %v1243 = vmul.f32 %v1225, %v883
  %v1244 = vmul.f32 %v1240, %v884
  %1247 = vrot.lane.b32.xlu0 %v1241, 64
  %v1248 = vpop.permute.xlu0 %1247
  %1249 = vrot.lane.b32.xlu0 %v1242, 64
  %v1250 = vpop.permute.xlu0 %1249
  %v1253 = vmul.f32 %v1225, %v1248
  %v1254 = vmul.f32 %v1240, %v1250
  %1257 = vrot.lane.b32.xlu0 %v1253, 32
  %v1258 = vpop.permute.xlu0 %1257
  %1259 = vrot.lane.b32.xlu0 %v1254, 32
  %v1260 = vpop.permute.xlu0 %1259
  %v1263 = vadd.f32 %v1243, %v1258
  %v1264 = vadd.f32 %v1244, %v1260
  %v1265 = vtanh.pop %v1263
  %v1266 = vtanh.pop %v1264
  %1269 = vrot.lane.b32.xlu0 %v1265, 64
  %v1270 = vpop.permute.xlu0 %1269
  %1271 = vrot.lane.b32.xlu0 %v1266, 64
  %v1272 = vpop.permute.xlu0 %1271
  %v1275 = vmul.f32 %v1225, %v1270
  %v1276 = vmul.f32 %v1240, %v1272
  %v1278 = vperm.slane %v1275, 0
  %1279 = vrot.lane.b32.xlu0 %v1278, 32
  %v1280 = vpop.permute.xlu0 %1279
  %v1281 = vsel %vm63, %v1280, 0
  %1283 = vmatpush.xpose.msra.mxu0 0.0
  %1284 = vmatpush.xpose.msra.mxu0 0.0
  %1285 = vmatpush.xpose.msra.mxu0 0.0
  %1286 = vmatpush.xpose.msra.mxu0 0.0
  %1287 = vmatpush.xpose.msra.mxu0 0.0
  %1288 = vmatpush.xpose.msra.mxu0 0.0
  %1289 = vmatpush.xpose.msra.mxu0 0.0
  %1290 = vmatpush.xpose.msra.mxu0 0.0
  %1291 = vmatpush.xpose.msra.mxu0 0.0
  %1292 = vmatpush.xpose.msra.mxu0 0.0
  %1293 = vmatpush.xpose.msra.mxu0 0.0
  %1294 = vmatpush.xpose.msra.mxu0 0.0
  %1295 = vmatpush.xpose.msra.mxu0 0.0
  %1296 = vmatpush.xpose.msra.mxu0 0.0
  %1297 = vmatpush.xpose.msra.mxu0 %v511
  %1298 = vmatpush.xpose.msra.mxu0 %v508
  %1299 = vmatmul.f32.gmra.mxu0 %v1281
  %v1300 = vpop.f32.mrf.mxu0
  %v1301 = vadd.f32 0.0, %v1300
  %1302 = vdwg.mxu0
  %v1304 = vperm.slane %v1276, 0
  %1305 = vrot.lane.b32.xlu0 %v1304, 32
  %v1306 = vpop.permute.xlu0 %1305
  %v1307 = vsel %vm63, %v1306, 0
  %1309 = vmatpush.xpose.msra.mxu0 0.0
  %1310 = vmatpush.xpose.msra.mxu0 0.0
  %1311 = vmatpush.xpose.msra.mxu0 0.0
  %1312 = vmatpush.xpose.msra.mxu0 0.0
  %1313 = vmatpush.xpose.msra.mxu0 0.0
  %1314 = vmatpush.xpose.msra.mxu0 0.0
  %1315 = vmatpush.xpose.msra.mxu0 0.0
  %1316 = vmatpush.xpose.msra.mxu0 0.0
  %1317 = vmatpush.xpose.msra.mxu0 0.0
  %1318 = vmatpush.xpose.msra.mxu0 0.0
  %1319 = vmatpush.xpose.msra.mxu0 0.0
  %1320 = vmatpush.xpose.msra.mxu0 0.0
  %1321 = vmatpush.xpose.msra.mxu0 0.0
  %1322 = vmatpush.xpose.msra.mxu0 0.0
  %1323 = vmatpush.xpose.msra.mxu0 %v543
  %1324 = vmatpush.xpose.msra.mxu0 %v540
  %1325 = vmatmul.f32.gmra.mxu0 %v1307
  %v1326 = vpop.f32.mrf.mxu0
  %v1327 = vadd.f32 0.0, %v1326
  %1328 = vdwg.mxu0
  %v1329 = vsel %vm565, %v1301, -1e+30
  %v1330 = vsel %vm566, %v1327, -1e+30
  %v1331 = vsel %vm569, %v1329, -inf
  %1332 = vmax.xlane.f32.xlu0 %v1331
  %v1333 = vpop.xlane.xlu0 %1332
  %v1334 = vsel %vm569, %v1330, -inf
  %1335 = vmax.xlane.f32.xlu0 %v1334
  %v1336 = vpop.xlane.xlu0 %1335
  %v1337 = vsub.f32 %v1329, %v1333
  %v1338 = vsub.f32 %v1330, %v1336
  %v1339 = vmul.f32 %v1337, 1.442695
  %v1340 = vpow.pop %v1339
  %v1341 = vmul.f32 %v1338, 1.442695
  %v1342 = vpow.pop %v1341
  %v1343 = vsel %vm569, %v1340, 0.0
  %1344 = vadd.xlane.f32.xlu0 %v1343
  %v1345 = vpop.xlane.xlu0 %1344
  %v1346 = vsel %vm569, %v1342, 0.0
  %1347 = vadd.xlane.f32.xlu0 %v1346
  %v1348 = vpop.xlane.xlu0 %1347
  %v1349 = vrcp.pop %v1345
  %v1350 = vrcp.pop %v1348
  %v1351 = vmul.f32 %v1340, %v1349
  %v1352 = vmul.f32 %v1342, %v1350
  %v1354 = vsel %vm592, %v1351, 0
  %1356 = vmatpush.msra.mxu0 0.0
  %1357 = vmatpush.msra.mxu0 0.0
  %1358 = vmatpush.msra.mxu0 0.0
  %1359 = vmatpush.msra.mxu0 0.0
  %1360 = vmatpush.msra.mxu0 0.0
  %1361 = vmatpush.msra.mxu0 0.0
  %1362 = vmatpush.msra.mxu0 0.0
  %1363 = vmatpush.msra.mxu0 0.0
  %1364 = vmatpush.msra.mxu0 0.0
  %1365 = vmatpush.msra.mxu0 0.0
  %1366 = vmatpush.msra.mxu0 0.0
  %1367 = vmatpush.msra.mxu0 0.0
  %1368 = vmatpush.msra.mxu0 0.0
  %1369 = vmatpush.msra.mxu0 0.0
  %1370 = vmatpush.msra.mxu0 %v160
  %1371 = vmatpush.msra.mxu0 %v159
  %1372 = vmatmul.f32.gmra.mxu0 %v1354
  %v1373 = vpop.f32.mrf.mxu0
  %v1374 = vadd.f32 0.0, %v1373
  %1375 = vdwg.mxu0
  %v1377 = vsel %vm592, %v1352, 0
  %1379 = vmatpush.msra.mxu0 0.0
  %1380 = vmatpush.msra.mxu0 0.0
  %1381 = vmatpush.msra.mxu0 0.0
  %1382 = vmatpush.msra.mxu0 0.0
  %1383 = vmatpush.msra.mxu0 0.0
  %1384 = vmatpush.msra.mxu0 0.0
  %1385 = vmatpush.msra.mxu0 0.0
  %1386 = vmatpush.msra.mxu0 0.0
  %1387 = vmatpush.msra.mxu0 0.0
  %1388 = vmatpush.msra.mxu0 0.0
  %1389 = vmatpush.msra.mxu0 0.0
  %1390 = vmatpush.msra.mxu0 0.0
  %1391 = vmatpush.msra.mxu0 0.0
  %1392 = vmatpush.msra.mxu0 0.0
  %1393 = vmatpush.msra.mxu0 %v162
  %1394 = vmatpush.msra.mxu0 %v161
  %1395 = vmatmul.f32.gmra.mxu0 %v1377
  %v1396 = vpop.f32.mrf.mxu0
  %v1397 = vadd.f32 0.0, %v1396
  %1398 = vdwg.mxu0
  %v1400 = vsel %vm171, %v1374, 0
  %1402 = vmatpush.msra.mxu0 0.0
  %1403 = vmatpush.msra.mxu0 0.0
  %1404 = vmatpush.msra.mxu0 0.0
  %1405 = vmatpush.msra.mxu0 0.0
  %1406 = vmatpush.msra.mxu0 0.0
  %1407 = vmatpush.msra.mxu0 0.0
  %1408 = vmatpush.msra.mxu0 0.0
  %1409 = vmatpush.msra.mxu0 0.0
  %1410 = vmatpush.msra.mxu0 %v158
  %1411 = vmatpush.msra.mxu0 %v157
  %1412 = vmatpush.msra.mxu0 %v156
  %1413 = vmatpush.msra.mxu0 %v155
  %1414 = vmatpush.msra.mxu0 %v154
  %1415 = vmatpush.msra.mxu0 %v153
  %1416 = vmatpush.msra.mxu0 %v152
  %1417 = vmatpush.msra.mxu0 %v151
  %1418 = vmatmul.f32.gmra.mxu0 %v1400
  %v1419 = vpop.f32.mrf.mxu0
  %v1420 = vadd.f32 0.0, %v1419
  %1421 = vdwg.mxu0
  %v1423 = vsel %vm171, %v1397, 0
  %1425 = vmatpush.msra.mxu0 0.0
  %1426 = vmatpush.msra.mxu0 0.0
  %1427 = vmatpush.msra.mxu0 0.0
  %1428 = vmatpush.msra.mxu0 0.0
  %1429 = vmatpush.msra.mxu0 0.0
  %1430 = vmatpush.msra.mxu0 0.0
  %1431 = vmatpush.msra.mxu0 0.0
  %1432 = vmatpush.msra.mxu0 0.0
  %1433 = vmatpush.msra.mxu0 %v158
  %1434 = vmatpush.msra.mxu0 %v157
  %1435 = vmatpush.msra.mxu0 %v156
  %1436 = vmatpush.msra.mxu0 %v155
  %1437 = vmatpush.msra.mxu0 %v154
  %1438 = vmatpush.msra.mxu0 %v153
  %1439 = vmatpush.msra.mxu0 %v152
  %1440 = vmatpush.msra.mxu0 %v151
  %1441 = vmatmul.f32.gmra.mxu0 %v1423
  %v1442 = vpop.f32.mrf.mxu0
  %v1443 = vadd.f32 0.0, %v1442
  %1444 = vdwg.mxu0
  %1445 = vmatpush.msra.mxu0 0.0
  %1446 = vmatpush.msra.mxu0 0.0
  %1447 = vmatpush.msra.mxu0 0.0
  %1448 = vmatpush.msra.mxu0 0.0
  %1449 = vmatpush.msra.mxu0 0.0
  %1450 = vmatpush.msra.mxu0 0.0
  %1451 = vmatpush.msra.mxu0 0.0
  %1452 = vmatpush.msra.mxu0 0.0
  %1453 = vmatpush.msra.mxu0 0.0
  %1454 = vmatpush.msra.mxu0 0.0
  %1455 = vmatpush.msra.mxu0 0.0
  %1456 = vmatpush.msra.mxu0 0.0
  %1457 = vmatpush.msra.mxu0 %v150
  %1458 = vmatpush.msra.mxu0 %v149
  %1459 = vmatpush.msra.mxu0 %v148
  %1460 = vmatpush.msra.mxu0 %v147
  %1461 = vmatmul.f32.gmra.mxu0 %v1281
  %v1462 = vpop.f32.mrf.mxu0
  %v1463 = vadd.f32 %v1420, %v1462
  %1464 = vdwg.mxu0
  %1465 = vmatpush.msra.mxu0 0.0
  %1466 = vmatpush.msra.mxu0 0.0
  %1467 = vmatpush.msra.mxu0 0.0
  %1468 = vmatpush.msra.mxu0 0.0
  %1469 = vmatpush.msra.mxu0 0.0
  %1470 = vmatpush.msra.mxu0 0.0
  %1471 = vmatpush.msra.mxu0 0.0
  %1472 = vmatpush.msra.mxu0 0.0
  %1473 = vmatpush.msra.mxu0 0.0
  %1474 = vmatpush.msra.mxu0 0.0
  %1475 = vmatpush.msra.mxu0 0.0
  %1476 = vmatpush.msra.mxu0 0.0
  %1477 = vmatpush.msra.mxu0 %v150
  %1478 = vmatpush.msra.mxu0 %v149
  %1479 = vmatpush.msra.mxu0 %v148
  %1480 = vmatpush.msra.mxu0 %v147
  %1481 = vmatmul.f32.gmra.mxu0 %v1307
  %v1482 = vpop.f32.mrf.mxu0
  %v1483 = vadd.f32 %v1443, %v1482
  %1484 = vdwg.mxu0
  %v1485 = vtanh.pop %v1463
  %v1486 = vtanh.pop %v1483
  %s1487 = scalar_lea.vmem [#allocation3], 4
  %1488 = vst.msk [vmem:[%s1487] sm:$0x1] %vm727, %v1485
  %1489 = vst.msk [vmem:[%s1487 + $0x1] sm:$0x1] %vm727, %v1486
  %s1490 = scalar_lea.vmem [#allocation2], 6
  %v1491 = vld [vmem:[%s1490] sm:$0x1]
  %v1492 = vld [vmem:[%s1490 + $0x1] sm:$0x1]
  %v1494 = vsel %vm63, %v1485, 0
  %1496 = vmatpush.msra.mxu0 0.0
  %1497 = vmatpush.msra.mxu0 0.0
  %1498 = vmatpush.msra.mxu0 0.0
  %1499 = vmatpush.msra.mxu0 0.0
  %1500 = vmatpush.msra.mxu0 0.0
  %1501 = vmatpush.msra.mxu0 0.0
  %1502 = vmatpush.msra.mxu0 0.0
  %1503 = vmatpush.msra.mxu0 0.0
  %1504 = vmatpush.msra.mxu0 0.0
  %1505 = vmatpush.msra.mxu0 0.0
  %1506 = vmatpush.msra.mxu0 0.0
  %1507 = vmatpush.msra.mxu0 0.0
  %1508 = vmatpush.msra.mxu0 %v142
  %1509 = vmatpush.msra.mxu0 %v141
  %1510 = vmatpush.msra.mxu0 %v140
  %1511 = vmatpush.msra.mxu0 %v139
  %1512 = vmatmul.f32.gmra.mxu0 %v1494
  %v1513 = vpop.f32.mrf.mxu0
  %v1514 = vadd.f32 0.0, %v1513
  %1515 = vdwg.mxu0
  %v1517 = vsel %vm63, %v1486, 0
  %1519 = vmatpush.msra.mxu0 0.0
  %1520 = vmatpush.msra.mxu0 0.0
  %1521 = vmatpush.msra.mxu0 0.0
  %1522 = vmatpush.msra.mxu0 0.0
  %1523 = vmatpush.msra.mxu0 0.0
  %1524 = vmatpush.msra.mxu0 0.0
  %1525 = vmatpush.msra.mxu0 0.0
  %1526 = vmatpush.msra.mxu0 0.0
  %1527 = vmatpush.msra.mxu0 0.0
  %1528 = vmatpush.msra.mxu0 0.0
  %1529 = vmatpush.msra.mxu0 0.0
  %1530 = vmatpush.msra.mxu0 0.0
  %1531 = vmatpush.msra.mxu0 %v142
  %1532 = vmatpush.msra.mxu0 %v141
  %1533 = vmatpush.msra.mxu0 %v140
  %1534 = vmatpush.msra.mxu0 %v139
  %1535 = vmatmul.f32.gmra.mxu0 %v1517
  %v1536 = vpop.f32.mrf.mxu0
  %v1537 = vadd.f32 0.0, %v1536
  %1538 = vdwg.mxu0
  %v1539 = vadd.f32 %v1491, %v1514
  %v1540 = vadd.f32 %v1492, %v1537
  %1541 = vmatpush.msra.mxu0 0.0
  %1542 = vmatpush.msra.mxu0 0.0
  %1543 = vmatpush.msra.mxu0 0.0
  %1544 = vmatpush.msra.mxu0 0.0
  %1545 = vmatpush.msra.mxu0 0.0
  %1546 = vmatpush.msra.mxu0 0.0
  %1547 = vmatpush.msra.mxu0 0.0
  %1548 = vmatpush.msra.mxu0 0.0
  %1549 = vmatpush.msra.mxu0 0.0
  %1550 = vmatpush.msra.mxu0 0.0
  %1551 = vmatpush.msra.mxu0 0.0
  %1552 = vmatpush.msra.mxu0 0.0
  %1553 = vmatpush.msra.mxu0 %v146
  %1554 = vmatpush.msra.mxu0 %v145
  %1555 = vmatpush.msra.mxu0 %v144
  %1556 = vmatpush.msra.mxu0 %v143
  %1557 = vmatmul.f32.gmra.mxu0 %v1281
  %v1558 = vpop.f32.mrf.mxu0
  %v1559 = vadd.f32 0.0, %v1558
  %1560 = vdwg.mxu0
  %1561 = vmatpush.msra.mxu0 0.0
  %1562 = vmatpush.msra.mxu0 0.0
  %1563 = vmatpush.msra.mxu0 0.0
  %1564 = vmatpush.msra.mxu0 0.0
  %1565 = vmatpush.msra.mxu0 0.0
  %1566 = vmatpush.msra.mxu0 0.0
  %1567 = vmatpush.msra.mxu0 0.0
  %1568 = vmatpush.msra.mxu0 0.0
  %1569 = vmatpush.msra.mxu0 0.0
  %1570 = vmatpush.msra.mxu0 0.0
  %1571 = vmatpush.msra.mxu0 0.0
  %1572 = vmatpush.msra.mxu0 0.0
  %1573 = vmatpush.msra.mxu0 %v146
  %1574 = vmatpush.msra.mxu0 %v145
  %1575 = vmatpush.msra.mxu0 %v144
  %1576 = vmatpush.msra.mxu0 %v143
  %1577 = vmatmul.f32.gmra.mxu0 %v1307
  %v1578 = vpop.f32.mrf.mxu0
  %v1579 = vadd.f32 0.0, %v1578
  %1580 = vdwg.mxu0
  %v1581 = vadd.f32 %v1539, %v1559
  %v1582 = vadd.f32 %v1540, %v1579
  %v1583 = vxor.u32 %v1581, 2147483648
  %v1584 = vxor.u32 %v1582, 2147483648
  %v1585 = vmul.f32 %v1583, 1.442695
  %v1586 = vpow.pop %v1585
  %v1587 = vmul.f32 %v1584, 1.442695
  %v1588 = vpow.pop %v1587
  %v1589 = vadd.f32 %v1586, 1.0
  %v1590 = vadd.f32 %v1588, 1.0
  %v1591 = vrcp.pop %v1589
  %v1592 = vmul.f32 %v1589, %v1591
  %v1593 = vsub.f32 1.0, %v1592
  %v1594 = vmul.f32 %v1591, %v1593
  %v1595 = vadd.f32 %v1591, %v1594
  %vm1596 = vweird.f32 %v1589
  %vm1597 = vweird.f32 %v1591
  %vm1598 = vmor %vm1596, %vm1597
  %v1599 = vsel %vm1598, %v1591, %v1595
  %v1600 = vand.u32 2147483647, %v1589
  %vm1601 = vcmp.eq.f32.partialorder %v1600, 8.507059e+37
  %v1602 = vand.u32 %v1589, 2147483648
  %v1603 = vor.u32 1.1754944e-38, %v1602
  %v1604 = vsel %vm1601, %v1603, %v1599
  %v1605 = vmul.f32 1.0, %v1604
  %v1606 = vrcp.pop %v1590
  %v1607 = vmul.f32 %v1590, %v1606
  %v1608 = vsub.f32 1.0, %v1607
  %v1609 = vmul.f32 %v1606, %v1608
  %v1610 = vadd.f32 %v1606, %v1609
  %vm1611 = vweird.f32 %v1590
  %vm1612 = vweird.f32 %v1606
  %vm1613 = vmor %vm1611, %vm1612
  %v1614 = vsel %vm1613, %v1606, %v1610
  %v1615 = vand.u32 2147483647, %v1590
  %vm1616 = vcmp.eq.f32.partialorder %v1615, 8.507059e+37
  %v1617 = vand.u32 %v1590, 2147483648
  %v1618 = vor.u32 1.1754944e-38, %v1617
  %v1619 = vsel %vm1616, %v1618, %v1614
  %v1620 = vmul.f32 1.0, %v1619
  %v1621 = vtanh.pop %v1581
  %v1622 = vtanh.pop %v1582
  %v1623 = vmul.f32 %v1605, %v1263
  %v1624 = vmul.f32 %v1620, %v1264
  %1627 = vrot.lane.b32.xlu0 %v1621, 64
  %v1628 = vpop.permute.xlu0 %1627
  %1629 = vrot.lane.b32.xlu0 %v1622, 64
  %v1630 = vpop.permute.xlu0 %1629
  %v1633 = vmul.f32 %v1605, %v1628
  %v1634 = vmul.f32 %v1620, %v1630
  %1637 = vrot.lane.b32.xlu0 %v1633, 32
  %v1638 = vpop.permute.xlu0 %1637
  %1639 = vrot.lane.b32.xlu0 %v1634, 32
  %v1640 = vpop.permute.xlu0 %1639
  %v1643 = vadd.f32 %v1623, %v1638
  %v1644 = vadd.f32 %v1624, %v1640
  %v1645 = vtanh.pop %v1643
  %v1646 = vtanh.pop %v1644
  %1649 = vrot.lane.b32.xlu0 %v1645, 64
  %v1650 = vpop.permute.xlu0 %1649
  %1651 = vrot.lane.b32.xlu0 %v1646, 64
  %v1652 = vpop.permute.xlu0 %1651
  %v1655 = vmul.f32 %v1605, %v1650
  %v1656 = vmul.f32 %v1620, %v1652
  %v1658 = vperm.slane %v1655, 0
  %1659 = vrot.lane.b32.xlu0 %v1658, 32
  %v1660 = vpop.permute.xlu0 %1659
  %v1661 = vsel %vm63, %v1660, 0
  %1663 = vmatpush.xpose.msra.mxu0 0.0
  %1664 = vmatpush.xpose.msra.mxu0 0.0
  %1665 = vmatpush.xpose.msra.mxu0 0.0
  %1666 = vmatpush.xpose.msra.mxu0 0.0
  %1667 = vmatpush.xpose.msra.mxu0 0.0
  %1668 = vmatpush.xpose.msra.mxu0 0.0
  %1669 = vmatpush.xpose.msra.mxu0 0.0
  %1670 = vmatpush.xpose.msra.mxu0 0.0
  %1671 = vmatpush.xpose.msra.mxu0 0.0
  %1672 = vmatpush.xpose.msra.mxu0 0.0
  %1673 = vmatpush.xpose.msra.mxu0 0.0
  %1674 = vmatpush.xpose.msra.mxu0 0.0
  %1675 = vmatpush.xpose.msra.mxu0 0.0
  %1676 = vmatpush.xpose.msra.mxu0 0.0
  %1677 = vmatpush.xpose.msra.mxu0 %v511
  %1678 = vmatpush.xpose.msra.mxu0 %v508
  %1679 = vmatmul.f32.gmra.mxu0 %v1661
  %v1680 = vpop.f32.mrf.mxu0
  %v1681 = vadd.f32 0.0, %v1680
  %1682 = vdwg.mxu0
  %v1684 = vperm.slane %v1656, 0
  %1685 = vrot.lane.b32.xlu0 %v1684, 32
  %v1686 = vpop.permute.xlu0 %1685
  %v1687 = vsel %vm63, %v1686, 0
  %1689 = vmatpush.xpose.msra.mxu0 0.0
  %1690 = vmatpush.xpose.msra.mxu0 0.0
  %1691 = vmatpush.xpose.msra.mxu0 0.0
  %1692 = vmatpush.xpose.msra.mxu0 0.0
  %1693 = vmatpush.xpose.msra.mxu0 0.0
  %1694 = vmatpush.xpose.msra.mxu0 0.0
  %1695 = vmatpush.xpose.msra.mxu0 0.0
  %1696 = vmatpush.xpose.msra.mxu0 0.0
  %1697 = vmatpush.xpose.msra.mxu0 0.0
  %1698 = vmatpush.xpose.msra.mxu0 0.0
  %1699 = vmatpush.xpose.msra.mxu0 0.0
  %1700 = vmatpush.xpose.msra.mxu0 0.0
  %1701 = vmatpush.xpose.msra.mxu0 0.0
  %1702 = vmatpush.xpose.msra.mxu0 0.0
  %1703 = vmatpush.xpose.msra.mxu0 %v543
  %1704 = vmatpush.xpose.msra.mxu0 %v540
  %1705 = vmatmul.f32.gmra.mxu0 %v1687
  %v1706 = vpop.f32.mrf.mxu0
  %v1707 = vadd.f32 0.0, %v1706
  %1708 = vdwg.mxu0
  %v1709 = vsel %vm565, %v1681, -1e+30
  %v1710 = vsel %vm566, %v1707, -1e+30
  %v1711 = vsel %vm569, %v1709, -inf
  %1712 = vmax.xlane.f32.xlu0 %v1711
  %v1713 = vpop.xlane.xlu0 %1712
  %v1714 = vsel %vm569, %v1710, -inf
  %1715 = vmax.xlane.f32.xlu0 %v1714
  %v1716 = vpop.xlane.xlu0 %1715
  %v1717 = vsub.f32 %v1709, %v1713
  %v1718 = vsub.f32 %v1710, %v1716
  %v1719 = vmul.f32 %v1717, 1.442695
  %v1720 = vpow.pop %v1719
  %v1721 = vmul.f32 %v1718, 1.442695
  %v1722 = vpow.pop %v1721
  %v1723 = vsel %vm569, %v1720, 0.0
  %1724 = vadd.xlane.f32.xlu0 %v1723
  %v1725 = vpop.xlane.xlu0 %1724
  %v1726 = vsel %vm569, %v1722, 0.0
  %1727 = vadd.xlane.f32.xlu0 %v1726
  %v1728 = vpop.xlane.xlu0 %1727
  %v1729 = vrcp.pop %v1725
  %v1730 = vrcp.pop %v1728
  %v1731 = vmul.f32 %v1720, %v1729
  %v1732 = vmul.f32 %v1722, %v1730
  %v1734 = vsel %vm592, %v1731, 0
  %1736 = vmatpush.msra.mxu0 0.0
  %1737 = vmatpush.msra.mxu0 0.0
  %1738 = vmatpush.msra.mxu0 0.0
  %1739 = vmatpush.msra.mxu0 0.0
  %1740 = vmatpush.msra.mxu0 0.0
  %1741 = vmatpush.msra.mxu0 0.0
  %1742 = vmatpush.msra.mxu0 0.0
  %1743 = vmatpush.msra.mxu0 0.0
  %1744 = vmatpush.msra.mxu0 0.0
  %1745 = vmatpush.msra.mxu0 0.0
  %1746 = vmatpush.msra.mxu0 0.0
  %1747 = vmatpush.msra.mxu0 0.0
  %1748 = vmatpush.msra.mxu0 0.0
  %1749 = vmatpush.msra.mxu0 0.0
  %1750 = vmatpush.msra.mxu0 %v160
  %1751 = vmatpush.msra.mxu0 %v159
  %1752 = vmatmul.f32.gmra.mxu0 %v1734
  %v1753 = vpop.f32.mrf.mxu0
  %v1754 = vadd.f32 0.0, %v1753
  %1755 = vdwg.mxu0
  %v1757 = vsel %vm592, %v1732, 0
  %1759 = vmatpush.msra.mxu0 0.0
  %1760 = vmatpush.msra.mxu0 0.0
  %1761 = vmatpush.msra.mxu0 0.0
  %1762 = vmatpush.msra.mxu0 0.0
  %1763 = vmatpush.msra.mxu0 0.0
  %1764 = vmatpush.msra.mxu0 0.0
  %1765 = vmatpush.msra.mxu0 0.0
  %1766 = vmatpush.msra.mxu0 0.0
  %1767 = vmatpush.msra.mxu0 0.0
  %1768 = vmatpush.msra.mxu0 0.0
  %1769 = vmatpush.msra.mxu0 0.0
  %1770 = vmatpush.msra.mxu0 0.0
  %1771 = vmatpush.msra.mxu0 0.0
  %1772 = vmatpush.msra.mxu0 0.0
  %1773 = vmatpush.msra.mxu0 %v162
  %1774 = vmatpush.msra.mxu0 %v161
  %1775 = vmatmul.f32.gmra.mxu0 %v1757
  %v1776 = vpop.f32.mrf.mxu0
  %v1777 = vadd.f32 0.0, %v1776
  %1778 = vdwg.mxu0
  %v1780 = vsel %vm171, %v1754, 0
  %1782 = vmatpush.msra.mxu0 0.0
  %1783 = vmatpush.msra.mxu0 0.0
  %1784 = vmatpush.msra.mxu0 0.0
  %1785 = vmatpush.msra.mxu0 0.0
  %1786 = vmatpush.msra.mxu0 0.0
  %1787 = vmatpush.msra.mxu0 0.0
  %1788 = vmatpush.msra.mxu0 0.0
  %1789 = vmatpush.msra.mxu0 0.0
  %1790 = vmatpush.msra.mxu0 %v158
  %1791 = vmatpush.msra.mxu0 %v157
  %1792 = vmatpush.msra.mxu0 %v156
  %1793 = vmatpush.msra.mxu0 %v155
  %1794 = vmatpush.msra.mxu0 %v154
  %1795 = vmatpush.msra.mxu0 %v153
  %1796 = vmatpush.msra.mxu0 %v152
  %1797 = vmatpush.msra.mxu0 %v151
  %1798 = vmatmul.f32.gmra.mxu0 %v1780
  %v1799 = vpop.f32.mrf.mxu0
  %v1800 = vadd.f32 0.0, %v1799
  %1801 = vdwg.mxu0
  %v1803 = vsel %vm171, %v1777, 0
  %1805 = vmatpush.msra.mxu0 0.0
  %1806 = vmatpush.msra.mxu0 0.0
  %1807 = vmatpush.msra.mxu0 0.0
  %1808 = vmatpush.msra.mxu0 0.0
  %1809 = vmatpush.msra.mxu0 0.0
  %1810 = vmatpush.msra.mxu0 0.0
  %1811 = vmatpush.msra.mxu0 0.0
  %1812 = vmatpush.msra.mxu0 0.0
  %1813 = vmatpush.msra.mxu0 %v158
  %1814 = vmatpush.msra.mxu0 %v157
  %1815 = vmatpush.msra.mxu0 %v156
  %1816 = vmatpush.msra.mxu0 %v155
  %1817 = vmatpush.msra.mxu0 %v154
  %1818 = vmatpush.msra.mxu0 %v153
  %1819 = vmatpush.msra.mxu0 %v152
  %1820 = vmatpush.msra.mxu0 %v151
  %1821 = vmatmul.f32.gmra.mxu0 %v1803
  %v1822 = vpop.f32.mrf.mxu0
  %v1823 = vadd.f32 0.0, %v1822
  %1824 = vdwg.mxu0
  %1825 = vmatpush.msra.mxu0 0.0
  %1826 = vmatpush.msra.mxu0 0.0
  %1827 = vmatpush.msra.mxu0 0.0
  %1828 = vmatpush.msra.mxu0 0.0
  %1829 = vmatpush.msra.mxu0 0.0
  %1830 = vmatpush.msra.mxu0 0.0
  %1831 = vmatpush.msra.mxu0 0.0
  %1832 = vmatpush.msra.mxu0 0.0
  %1833 = vmatpush.msra.mxu0 0.0
  %1834 = vmatpush.msra.mxu0 0.0
  %1835 = vmatpush.msra.mxu0 0.0
  %1836 = vmatpush.msra.mxu0 0.0
  %1837 = vmatpush.msra.mxu0 %v150
  %1838 = vmatpush.msra.mxu0 %v149
  %1839 = vmatpush.msra.mxu0 %v148
  %1840 = vmatpush.msra.mxu0 %v147
  %1841 = vmatmul.f32.gmra.mxu0 %v1661
  %v1842 = vpop.f32.mrf.mxu0
  %v1843 = vadd.f32 %v1800, %v1842
  %1844 = vdwg.mxu0
  %1845 = vmatpush.msra.mxu0 0.0
  %1846 = vmatpush.msra.mxu0 0.0
  %1847 = vmatpush.msra.mxu0 0.0
  %1848 = vmatpush.msra.mxu0 0.0
  %1849 = vmatpush.msra.mxu0 0.0
  %1850 = vmatpush.msra.mxu0 0.0
  %1851 = vmatpush.msra.mxu0 0.0
  %1852 = vmatpush.msra.mxu0 0.0
  %1853 = vmatpush.msra.mxu0 0.0
  %1854 = vmatpush.msra.mxu0 0.0
  %1855 = vmatpush.msra.mxu0 0.0
  %1856 = vmatpush.msra.mxu0 0.0
  %1857 = vmatpush.msra.mxu0 %v150
  %1858 = vmatpush.msra.mxu0 %v149
  %1859 = vmatpush.msra.mxu0 %v148
  %1860 = vmatpush.msra.mxu0 %v147
  %1861 = vmatmul.f32.gmra.mxu0 %v1687
  %v1862 = vpop.f32.mrf.mxu0
  %v1863 = vadd.f32 %v1823, %v1862
  %1864 = vdwg.mxu0
  %v1865 = vtanh.pop %v1843
  %v1866 = vtanh.pop %v1863
  %s1867 = scalar_lea.vmem [#allocation3], 6
  %1868 = vst.msk [vmem:[%s1867] sm:$0x1] %vm727, %v1865
  %1869 = vst.msk [vmem:[%s1867 + $0x1] sm:$0x1] %vm727, %v1866
  %s1870 = scalar_lea.vmem [#allocation2], 8
  %v1871 = vld [vmem:[%s1870] sm:$0x1]
  %v1872 = vld [vmem:[%s1870 + $0x1] sm:$0x1]
  %v1874 = vsel %vm63, %v1865, 0
  %1876 = vmatpush.msra.mxu0 0.0
  %1877 = vmatpush.msra.mxu0 0.0
  %1878 = vmatpush.msra.mxu0 0.0
  %1879 = vmatpush.msra.mxu0 0.0
  %1880 = vmatpush.msra.mxu0 0.0
  %1881 = vmatpush.msra.mxu0 0.0
  %1882 = vmatpush.msra.mxu0 0.0
  %1883 = vmatpush.msra.mxu0 0.0
  %1884 = vmatpush.msra.mxu0 0.0
  %1885 = vmatpush.msra.mxu0 0.0
  %1886 = vmatpush.msra.mxu0 0.0
  %1887 = vmatpush.msra.mxu0 0.0
  %1888 = vmatpush.msra.mxu0 %v142
  %1889 = vmatpush.msra.mxu0 %v141
  %1890 = vmatpush.msra.mxu0 %v140
  %1891 = vmatpush.msra.mxu0 %v139
  %1892 = vmatmul.f32.gmra.mxu0 %v1874
  %v1893 = vpop.f32.mrf.mxu0
  %v1894 = vadd.f32 0.0, %v1893
  %1895 = vdwg.mxu0
  %v1897 = vsel %vm63, %v1866, 0
  %1899 = vmatpush.msra.mxu0 0.0
  %1900 = vmatpush.msra.mxu0 0.0
  %1901 = vmatpush.msra.mxu0 0.0
  %1902 = vmatpush.msra.mxu0 0.0
  %1903 = vmatpush.msra.mxu0 0.0
  %1904 = vmatpush.msra.mxu0 0.0
  %1905 = vmatpush.msra.mxu0 0.0
  %1906 = vmatpush.msra.mxu0 0.0
  %1907 = vmatpush.msra.mxu0 0.0
  %1908 = vmatpush.msra.mxu0 0.0
  %1909 = vmatpush.msra.mxu0 0.0
  %1910 = vmatpush.msra.mxu0 0.0
  %1911 = vmatpush.msra.mxu0 %v142
  %1912 = vmatpush.msra.mxu0 %v141
  %1913 = vmatpush.msra.mxu0 %v140
  %1914 = vmatpush.msra.mxu0 %v139
  %1915 = vmatmul.f32.gmra.mxu0 %v1897
  %v1916 = vpop.f32.mrf.mxu0
  %v1917 = vadd.f32 0.0, %v1916
  %1918 = vdwg.mxu0
  %v1919 = vadd.f32 %v1871, %v1894
  %v1920 = vadd.f32 %v1872, %v1917
  %1921 = vmatpush.msra.mxu0 0.0
  %1922 = vmatpush.msra.mxu0 0.0
  %1923 = vmatpush.msra.mxu0 0.0
  %1924 = vmatpush.msra.mxu0 0.0
  %1925 = vmatpush.msra.mxu0 0.0
  %1926 = vmatpush.msra.mxu0 0.0
  %1927 = vmatpush.msra.mxu0 0.0
  %1928 = vmatpush.msra.mxu0 0.0
  %1929 = vmatpush.msra.mxu0 0.0
  %1930 = vmatpush.msra.mxu0 0.0
  %1931 = vmatpush.msra.mxu0 0.0
  %1932 = vmatpush.msra.mxu0 0.0
  %1933 = vmatpush.msra.mxu0 %v146
  %1934 = vmatpush.msra.mxu0 %v145
  %1935 = vmatpush.msra.mxu0 %v144
  %1936 = vmatpush.msra.mxu0 %v143
  %1937 = vmatmul.f32.gmra.mxu0 %v1661
  %v1938 = vpop.f32.mrf.mxu0
  %v1939 = vadd.f32 0.0, %v1938
  %1940 = vdwg.mxu0
  %1941 = vmatpush.msra.mxu0 0.0
  %1942 = vmatpush.msra.mxu0 0.0
  %1943 = vmatpush.msra.mxu0 0.0
  %1944 = vmatpush.msra.mxu0 0.0
  %1945 = vmatpush.msra.mxu0 0.0
  %1946 = vmatpush.msra.mxu0 0.0
  %1947 = vmatpush.msra.mxu0 0.0
  %1948 = vmatpush.msra.mxu0 0.0
  %1949 = vmatpush.msra.mxu0 0.0
  %1950 = vmatpush.msra.mxu0 0.0
  %1951 = vmatpush.msra.mxu0 0.0
  %1952 = vmatpush.msra.mxu0 0.0
  %1953 = vmatpush.msra.mxu0 %v146
  %1954 = vmatpush.msra.mxu0 %v145
  %1955 = vmatpush.msra.mxu0 %v144
  %1956 = vmatpush.msra.mxu0 %v143
  %1957 = vmatmul.f32.gmra.mxu0 %v1687
  %v1958 = vpop.f32.mrf.mxu0
  %v1959 = vadd.f32 0.0, %v1958
  %1960 = vdwg.mxu0
  %v1961 = vadd.f32 %v1919, %v1939
  %v1962 = vadd.f32 %v1920, %v1959
  %v1963 = vxor.u32 %v1961, 2147483648
  %v1964 = vxor.u32 %v1962, 2147483648
  %v1965 = vmul.f32 %v1963, 1.442695
  %v1966 = vpow.pop %v1965
  %v1967 = vmul.f32 %v1964, 1.442695
  %v1968 = vpow.pop %v1967
  %v1969 = vadd.f32 %v1966, 1.0
  %v1970 = vadd.f32 %v1968, 1.0
  %v1971 = vrcp.pop %v1969
  %v1972 = vmul.f32 %v1969, %v1971
  %v1973 = vsub.f32 1.0, %v1972
  %v1974 = vmul.f32 %v1971, %v1973
  %v1975 = vadd.f32 %v1971, %v1974
  %vm1976 = vweird.f32 %v1969
  %vm1977 = vweird.f32 %v1971
  %vm1978 = vmor %vm1976, %vm1977
  %v1979 = vsel %vm1978, %v1971, %v1975
  %v1980 = vand.u32 2147483647, %v1969
  %vm1981 = vcmp.eq.f32.partialorder %v1980, 8.507059e+37
  %v1982 = vand.u32 %v1969, 2147483648
  %v1983 = vor.u32 1.1754944e-38, %v1982
  %v1984 = vsel %vm1981, %v1983, %v1979
  %v1985 = vmul.f32 1.0, %v1984
  %v1986 = vrcp.pop %v1970
  %v1987 = vmul.f32 %v1970, %v1986
  %v1988 = vsub.f32 1.0, %v1987
  %v1989 = vmul.f32 %v1986, %v1988
  %v1990 = vadd.f32 %v1986, %v1989
  %vm1991 = vweird.f32 %v1970
  %vm1992 = vweird.f32 %v1986
  %vm1993 = vmor %vm1991, %vm1992
  %v1994 = vsel %vm1993, %v1986, %v1990
  %v1995 = vand.u32 2147483647, %v1970
  %vm1996 = vcmp.eq.f32.partialorder %v1995, 8.507059e+37
  %v1997 = vand.u32 %v1970, 2147483648
  %v1998 = vor.u32 1.1754944e-38, %v1997
  %v1999 = vsel %vm1996, %v1998, %v1994
  %v2000 = vmul.f32 1.0, %v1999
  %v2001 = vtanh.pop %v1961
  %v2002 = vtanh.pop %v1962
  %v2003 = vmul.f32 %v1985, %v1643
  %v2004 = vmul.f32 %v2000, %v1644
  %2007 = vrot.lane.b32.xlu0 %v2001, 64
  %v2008 = vpop.permute.xlu0 %2007
  %2009 = vrot.lane.b32.xlu0 %v2002, 64
  %v2010 = vpop.permute.xlu0 %2009
  %v2013 = vmul.f32 %v1985, %v2008
  %v2014 = vmul.f32 %v2000, %v2010
  %2017 = vrot.lane.b32.xlu0 %v2013, 32
  %v2018 = vpop.permute.xlu0 %2017
  %2019 = vrot.lane.b32.xlu0 %v2014, 32
  %v2020 = vpop.permute.xlu0 %2019
  %v2023 = vadd.f32 %v2003, %v2018
  %v2024 = vadd.f32 %v2004, %v2020
  %v2025 = vtanh.pop %v2023
  %v2026 = vtanh.pop %v2024
  %2029 = vrot.lane.b32.xlu0 %v2025, 64
  %v2030 = vpop.permute.xlu0 %2029
  %2031 = vrot.lane.b32.xlu0 %v2026, 64
  %v2032 = vpop.permute.xlu0 %2031
  %v2035 = vmul.f32 %v1985, %v2030
  %v2036 = vmul.f32 %v2000, %v2032
  %v2038 = vperm.slane %v2035, 0
  %2039 = vrot.lane.b32.xlu0 %v2038, 32
  %v2040 = vpop.permute.xlu0 %2039
  %v2041 = vsel %vm63, %v2040, 0
  %2043 = vmatpush.xpose.msra.mxu0 0.0
  %2044 = vmatpush.xpose.msra.mxu0 0.0
  %2045 = vmatpush.xpose.msra.mxu0 0.0
  %2046 = vmatpush.xpose.msra.mxu0 0.0
  %2047 = vmatpush.xpose.msra.mxu0 0.0
  %2048 = vmatpush.xpose.msra.mxu0 0.0
  %2049 = vmatpush.xpose.msra.mxu0 0.0
  %2050 = vmatpush.xpose.msra.mxu0 0.0
  %2051 = vmatpush.xpose.msra.mxu0 0.0
  %2052 = vmatpush.xpose.msra.mxu0 0.0
  %2053 = vmatpush.xpose.msra.mxu0 0.0
  %2054 = vmatpush.xpose.msra.mxu0 0.0
  %2055 = vmatpush.xpose.msra.mxu0 0.0
  %2056 = vmatpush.xpose.msra.mxu0 0.0
  %2057 = vmatpush.xpose.msra.mxu0 %v511
  %2058 = vmatpush.xpose.msra.mxu0 %v508
  %2059 = vmatmul.f32.gmra.mxu0 %v2041
  %v2060 = vpop.f32.mrf.mxu0
  %v2061 = vadd.f32 0.0, %v2060
  %2062 = vdwg.mxu0
  %v2064 = vperm.slane %v2036, 0
  %2065 = vrot.lane.b32.xlu0 %v2064, 32
  %v2066 = vpop.permute.xlu0 %2065
  %v2067 = vsel %vm63, %v2066, 0
  %2069 = vmatpush.xpose.msra.mxu0 0.0
  %2070 = vmatpush.xpose.msra.mxu0 0.0
  %2071 = vmatpush.xpose.msra.mxu0 0.0
  %2072 = vmatpush.xpose.msra.mxu0 0.0
  %2073 = vmatpush.xpose.msra.mxu0 0.0
  %2074 = vmatpush.xpose.msra.mxu0 0.0
  %2075 = vmatpush.xpose.msra.mxu0 0.0
  %2076 = vmatpush.xpose.msra.mxu0 0.0
  %2077 = vmatpush.xpose.msra.mxu0 0.0
  %2078 = vmatpush.xpose.msra.mxu0 0.0
  %2079 = vmatpush.xpose.msra.mxu0 0.0
  %2080 = vmatpush.xpose.msra.mxu0 0.0
  %2081 = vmatpush.xpose.msra.mxu0 0.0
  %2082 = vmatpush.xpose.msra.mxu0 0.0
  %2083 = vmatpush.xpose.msra.mxu0 %v543
  %2084 = vmatpush.xpose.msra.mxu0 %v540
  %2085 = vmatmul.f32.gmra.mxu0 %v2067
  %v2086 = vpop.f32.mrf.mxu0
  %v2087 = vadd.f32 0.0, %v2086
  %2088 = vdwg.mxu0
  %v2089 = vsel %vm565, %v2061, -1e+30
  %v2090 = vsel %vm566, %v2087, -1e+30
  %v2091 = vsel %vm569, %v2089, -inf
  %2092 = vmax.xlane.f32.xlu0 %v2091
  %v2093 = vpop.xlane.xlu0 %2092
  %v2094 = vsel %vm569, %v2090, -inf
  %2095 = vmax.xlane.f32.xlu0 %v2094
  %v2096 = vpop.xlane.xlu0 %2095
  %v2097 = vsub.f32 %v2089, %v2093
  %v2098 = vsub.f32 %v2090, %v2096
  %v2099 = vmul.f32 %v2097, 1.442695
  %v2100 = vpow.pop %v2099
  %v2101 = vmul.f32 %v2098, 1.442695
  %v2102 = vpow.pop %v2101
  %v2103 = vsel %vm569, %v2100, 0.0
  %2104 = vadd.xlane.f32.xlu0 %v2103
  %v2105 = vpop.xlane.xlu0 %2104
  %v2106 = vsel %vm569, %v2102, 0.0
  %2107 = vadd.xlane.f32.xlu0 %v2106
  %v2108 = vpop.xlane.xlu0 %2107
  %v2109 = vrcp.pop %v2105
  %v2110 = vrcp.pop %v2108
  %v2111 = vmul.f32 %v2100, %v2109
  %v2112 = vmul.f32 %v2102, %v2110
  %v2114 = vsel %vm592, %v2111, 0
  %2116 = vmatpush.msra.mxu0 0.0
  %2117 = vmatpush.msra.mxu0 0.0
  %2118 = vmatpush.msra.mxu0 0.0
  %2119 = vmatpush.msra.mxu0 0.0
  %2120 = vmatpush.msra.mxu0 0.0
  %2121 = vmatpush.msra.mxu0 0.0
  %2122 = vmatpush.msra.mxu0 0.0
  %2123 = vmatpush.msra.mxu0 0.0
  %2124 = vmatpush.msra.mxu0 0.0
  %2125 = vmatpush.msra.mxu0 0.0
  %2126 = vmatpush.msra.mxu0 0.0
  %2127 = vmatpush.msra.mxu0 0.0
  %2128 = vmatpush.msra.mxu0 0.0
  %2129 = vmatpush.msra.mxu0 0.0
  %2130 = vmatpush.msra.mxu0 %v160
  %2131 = vmatpush.msra.mxu0 %v159
  %2132 = vmatmul.f32.gmra.mxu0 %v2114
  %v2133 = vpop.f32.mrf.mxu0
  %v2134 = vadd.f32 0.0, %v2133
  %2135 = vdwg.mxu0
  %v2137 = vsel %vm592, %v2112, 0
  %2139 = vmatpush.msra.mxu0 0.0
  %2140 = vmatpush.msra.mxu0 0.0
  %2141 = vmatpush.msra.mxu0 0.0
  %2142 = vmatpush.msra.mxu0 0.0
  %2143 = vmatpush.msra.mxu0 0.0
  %2144 = vmatpush.msra.mxu0 0.0
  %2145 = vmatpush.msra.mxu0 0.0
  %2146 = vmatpush.msra.mxu0 0.0
  %2147 = vmatpush.msra.mxu0 0.0
  %2148 = vmatpush.msra.mxu0 0.0
  %2149 = vmatpush.msra.mxu0 0.0
  %2150 = vmatpush.msra.mxu0 0.0
  %2151 = vmatpush.msra.mxu0 0.0
  %2152 = vmatpush.msra.mxu0 0.0
  %2153 = vmatpush.msra.mxu0 %v162
  %2154 = vmatpush.msra.mxu0 %v161
  %2155 = vmatmul.f32.gmra.mxu0 %v2137
  %v2156 = vpop.f32.mrf.mxu0
  %v2157 = vadd.f32 0.0, %v2156
  %2158 = vdwg.mxu0
  %v2160 = vsel %vm171, %v2134, 0
  %2162 = vmatpush.msra.mxu0 0.0
  %2163 = vmatpush.msra.mxu0 0.0
  %2164 = vmatpush.msra.mxu0 0.0
  %2165 = vmatpush.msra.mxu0 0.0
  %2166 = vmatpush.msra.mxu0 0.0
  %2167 = vmatpush.msra.mxu0 0.0
  %2168 = vmatpush.msra.mxu0 0.0
  %2169 = vmatpush.msra.mxu0 0.0
  %2170 = vmatpush.msra.mxu0 %v158
  %2171 = vmatpush.msra.mxu0 %v157
  %2172 = vmatpush.msra.mxu0 %v156
  %2173 = vmatpush.msra.mxu0 %v155
  %2174 = vmatpush.msra.mxu0 %v154
  %2175 = vmatpush.msra.mxu0 %v153
  %2176 = vmatpush.msra.mxu0 %v152
  %2177 = vmatpush.msra.mxu0 %v151
  %2178 = vmatmul.f32.gmra.mxu0 %v2160
  %v2179 = vpop.f32.mrf.mxu0
  %v2180 = vadd.f32 0.0, %v2179
  %2181 = vdwg.mxu0
  %v2183 = vsel %vm171, %v2157, 0
  %2185 = vmatpush.msra.mxu0 0.0
  %2186 = vmatpush.msra.mxu0 0.0
  %2187 = vmatpush.msra.mxu0 0.0
  %2188 = vmatpush.msra.mxu0 0.0
  %2189 = vmatpush.msra.mxu0 0.0
  %2190 = vmatpush.msra.mxu0 0.0
  %2191 = vmatpush.msra.mxu0 0.0
  %2192 = vmatpush.msra.mxu0 0.0
  %2193 = vmatpush.msra.mxu0 %v158
  %2194 = vmatpush.msra.mxu0 %v157
  %2195 = vmatpush.msra.mxu0 %v156
  %2196 = vmatpush.msra.mxu0 %v155
  %2197 = vmatpush.msra.mxu0 %v154
  %2198 = vmatpush.msra.mxu0 %v153
  %2199 = vmatpush.msra.mxu0 %v152
  %2200 = vmatpush.msra.mxu0 %v151
  %2201 = vmatmul.f32.gmra.mxu0 %v2183
  %v2202 = vpop.f32.mrf.mxu0
  %v2203 = vadd.f32 0.0, %v2202
  %2204 = vdwg.mxu0
  %2205 = vmatpush.msra.mxu0 0.0
  %2206 = vmatpush.msra.mxu0 0.0
  %2207 = vmatpush.msra.mxu0 0.0
  %2208 = vmatpush.msra.mxu0 0.0
  %2209 = vmatpush.msra.mxu0 0.0
  %2210 = vmatpush.msra.mxu0 0.0
  %2211 = vmatpush.msra.mxu0 0.0
  %2212 = vmatpush.msra.mxu0 0.0
  %2213 = vmatpush.msra.mxu0 0.0
  %2214 = vmatpush.msra.mxu0 0.0
  %2215 = vmatpush.msra.mxu0 0.0
  %2216 = vmatpush.msra.mxu0 0.0
  %2217 = vmatpush.msra.mxu0 %v150
  %2218 = vmatpush.msra.mxu0 %v149
  %2219 = vmatpush.msra.mxu0 %v148
  %2220 = vmatpush.msra.mxu0 %v147
  %2221 = vmatmul.f32.gmra.mxu0 %v2041
  %v2222 = vpop.f32.mrf.mxu0
  %v2223 = vadd.f32 %v2180, %v2222
  %2224 = vdwg.mxu0
  %2225 = vmatpush.msra.mxu0 0.0
  %2226 = vmatpush.msra.mxu0 0.0
  %2227 = vmatpush.msra.mxu0 0.0
  %2228 = vmatpush.msra.mxu0 0.0
  %2229 = vmatpush.msra.mxu0 0.0
  %2230 = vmatpush.msra.mxu0 0.0
  %2231 = vmatpush.msra.mxu0 0.0
  %2232 = vmatpush.msra.mxu0 0.0
  %2233 = vmatpush.msra.mxu0 0.0
  %2234 = vmatpush.msra.mxu0 0.0
  %2235 = vmatpush.msra.mxu0 0.0
  %2236 = vmatpush.msra.mxu0 0.0
  %2237 = vmatpush.msra.mxu0 %v150
  %2238 = vmatpush.msra.mxu0 %v149
  %2239 = vmatpush.msra.mxu0 %v148
  %2240 = vmatpush.msra.mxu0 %v147
  %2241 = vmatmul.f32.gmra.mxu0 %v2067
  %v2242 = vpop.f32.mrf.mxu0
  %v2243 = vadd.f32 %v2203, %v2242
  %2244 = vdwg.mxu0
  %v2245 = vtanh.pop %v2223
  %v2246 = vtanh.pop %v2243
  %s2247 = scalar_lea.vmem [#allocation3], 8
  %2248 = vst.msk [vmem:[%s2247] sm:$0x1] %vm727, %v2245
  %2249 = vst.msk [vmem:[%s2247 + $0x1] sm:$0x1] %vm727, %v2246
  %s2250 = scalar_lea.vmem [#allocation2], 10
  %v2251 = vld [vmem:[%s2250] sm:$0x1]
  %v2252 = vld [vmem:[%s2250 + $0x1] sm:$0x1]
  %v2254 = vsel %vm63, %v2245, 0
  %2256 = vmatpush.msra.mxu0 0.0
  %2257 = vmatpush.msra.mxu0 0.0
  %2258 = vmatpush.msra.mxu0 0.0
  %2259 = vmatpush.msra.mxu0 0.0
  %2260 = vmatpush.msra.mxu0 0.0
  %2261 = vmatpush.msra.mxu0 0.0
  %2262 = vmatpush.msra.mxu0 0.0
  %2263 = vmatpush.msra.mxu0 0.0
  %2264 = vmatpush.msra.mxu0 0.0
  %2265 = vmatpush.msra.mxu0 0.0
  %2266 = vmatpush.msra.mxu0 0.0
  %2267 = vmatpush.msra.mxu0 0.0
  %2268 = vmatpush.msra.mxu0 %v142
  %2269 = vmatpush.msra.mxu0 %v141
  %2270 = vmatpush.msra.mxu0 %v140
  %2271 = vmatpush.msra.mxu0 %v139
  %2272 = vmatmul.f32.gmra.mxu0 %v2254
  %v2273 = vpop.f32.mrf.mxu0
  %v2274 = vadd.f32 0.0, %v2273
  %2275 = vdwg.mxu0
  %v2277 = vsel %vm63, %v2246, 0
  %2279 = vmatpush.msra.mxu0 0.0
  %2280 = vmatpush.msra.mxu0 0.0
  %2281 = vmatpush.msra.mxu0 0.0
  %2282 = vmatpush.msra.mxu0 0.0
  %2283 = vmatpush.msra.mxu0 0.0
  %2284 = vmatpush.msra.mxu0 0.0
  %2285 = vmatpush.msra.mxu0 0.0
  %2286 = vmatpush.msra.mxu0 0.0
  %2287 = vmatpush.msra.mxu0 0.0
  %2288 = vmatpush.msra.mxu0 0.0
  %2289 = vmatpush.msra.mxu0 0.0
  %2290 = vmatpush.msra.mxu0 0.0
  %2291 = vmatpush.msra.mxu0 %v142
  %2292 = vmatpush.msra.mxu0 %v141
  %2293 = vmatpush.msra.mxu0 %v140
  %2294 = vmatpush.msra.mxu0 %v139
  %2295 = vmatmul.f32.gmra.mxu0 %v2277
  %v2296 = vpop.f32.mrf.mxu0
  %v2297 = vadd.f32 0.0, %v2296
  %2298 = vdwg.mxu0
  %v2299 = vadd.f32 %v2251, %v2274
  %v2300 = vadd.f32 %v2252, %v2297
  %2301 = vmatpush.msra.mxu0 0.0
  %2302 = vmatpush.msra.mxu0 0.0
  %2303 = vmatpush.msra.mxu0 0.0
  %2304 = vmatpush.msra.mxu0 0.0
  %2305 = vmatpush.msra.mxu0 0.0
  %2306 = vmatpush.msra.mxu0 0.0
  %2307 = vmatpush.msra.mxu0 0.0
  %2308 = vmatpush.msra.mxu0 0.0
  %2309 = vmatpush.msra.mxu0 0.0
  %2310 = vmatpush.msra.mxu0 0.0
  %2311 = vmatpush.msra.mxu0 0.0
  %2312 = vmatpush.msra.mxu0 0.0
  %2313 = vmatpush.msra.mxu0 %v146
  %2314 = vmatpush.msra.mxu0 %v145
  %2315 = vmatpush.msra.mxu0 %v144
  %2316 = vmatpush.msra.mxu0 %v143
  %2317 = vmatmul.f32.gmra.mxu0 %v2041
  %v2318 = vpop.f32.mrf.mxu0
  %v2319 = vadd.f32 0.0, %v2318
  %2320 = vdwg.mxu0
  %2321 = vmatpush.msra.mxu0 0.0
  %2322 = vmatpush.msra.mxu0 0.0
  %2323 = vmatpush.msra.mxu0 0.0
  %2324 = vmatpush.msra.mxu0 0.0
  %2325 = vmatpush.msra.mxu0 0.0
  %2326 = vmatpush.msra.mxu0 0.0
  %2327 = vmatpush.msra.mxu0 0.0
  %2328 = vmatpush.msra.mxu0 0.0
  %2329 = vmatpush.msra.mxu0 0.0
  %2330 = vmatpush.msra.mxu0 0.0
  %2331 = vmatpush.msra.mxu0 0.0
  %2332 = vmatpush.msra.mxu0 0.0
  %2333 = vmatpush.msra.mxu0 %v146
  %2334 = vmatpush.msra.mxu0 %v145
  %2335 = vmatpush.msra.mxu0 %v144
  %2336 = vmatpush.msra.mxu0 %v143
  %2337 = vmatmul.f32.gmra.mxu0 %v2067
  %v2338 = vpop.f32.mrf.mxu0
  %v2339 = vadd.f32 0.0, %v2338
  %2340 = vdwg.mxu0
  %v2341 = vadd.f32 %v2299, %v2319
  %v2342 = vadd.f32 %v2300, %v2339
  %v2343 = vxor.u32 %v2341, 2147483648
  %v2344 = vxor.u32 %v2342, 2147483648
  %v2345 = vmul.f32 %v2343, 1.442695
  %v2346 = vpow.pop %v2345
  %v2347 = vmul.f32 %v2344, 1.442695
  %v2348 = vpow.pop %v2347
  %v2349 = vadd.f32 %v2346, 1.0
  %v2350 = vadd.f32 %v2348, 1.0
  %v2351 = vrcp.pop %v2349
  %v2352 = vmul.f32 %v2349, %v2351
  %v2353 = vsub.f32 1.0, %v2352
  %v2354 = vmul.f32 %v2351, %v2353
  %v2355 = vadd.f32 %v2351, %v2354
  %vm2356 = vweird.f32 %v2349
  %vm2357 = vweird.f32 %v2351
  %vm2358 = vmor %vm2356, %vm2357
  %v2359 = vsel %vm2358, %v2351, %v2355
  %v2360 = vand.u32 2147483647, %v2349
  %vm2361 = vcmp.eq.f32.partialorder %v2360, 8.507059e+37
  %v2362 = vand.u32 %v2349, 2147483648
  %v2363 = vor.u32 1.1754944e-38, %v2362
  %v2364 = vsel %vm2361, %v2363, %v2359
  %v2365 = vmul.f32 1.0, %v2364
  %v2366 = vrcp.pop %v2350
  %v2367 = vmul.f32 %v2350, %v2366
  %v2368 = vsub.f32 1.0, %v2367
  %v2369 = vmul.f32 %v2366, %v2368
  %v2370 = vadd.f32 %v2366, %v2369
  %vm2371 = vweird.f32 %v2350
  %vm2372 = vweird.f32 %v2366
  %vm2373 = vmor %vm2371, %vm2372
  %v2374 = vsel %vm2373, %v2366, %v2370
  %v2375 = vand.u32 2147483647, %v2350
  %vm2376 = vcmp.eq.f32.partialorder %v2375, 8.507059e+37
  %v2377 = vand.u32 %v2350, 2147483648
  %v2378 = vor.u32 1.1754944e-38, %v2377
  %v2379 = vsel %vm2376, %v2378, %v2374
  %v2380 = vmul.f32 1.0, %v2379
  %v2381 = vtanh.pop %v2341
  %v2382 = vtanh.pop %v2342
  %v2383 = vmul.f32 %v2365, %v2023
  %v2384 = vmul.f32 %v2380, %v2024
  %2387 = vrot.lane.b32.xlu0 %v2381, 64
  %v2388 = vpop.permute.xlu0 %2387
  %2389 = vrot.lane.b32.xlu0 %v2382, 64
  %v2390 = vpop.permute.xlu0 %2389
  %v2393 = vmul.f32 %v2365, %v2388
  %v2394 = vmul.f32 %v2380, %v2390
  %2397 = vrot.lane.b32.xlu0 %v2393, 32
  %v2398 = vpop.permute.xlu0 %2397
  %2399 = vrot.lane.b32.xlu0 %v2394, 32
  %v2400 = vpop.permute.xlu0 %2399
  %v2403 = vadd.f32 %v2383, %v2398
  %v2404 = vadd.f32 %v2384, %v2400
  %v2405 = vtanh.pop %v2403
  %v2406 = vtanh.pop %v2404
  %2409 = vrot.lane.b32.xlu0 %v2405, 64
  %v2410 = vpop.permute.xlu0 %2409
  %2411 = vrot.lane.b32.xlu0 %v2406, 64
  %v2412 = vpop.permute.xlu0 %2411
  %v2415 = vmul.f32 %v2365, %v2410
  %v2416 = vmul.f32 %v2380, %v2412
  %v2418 = vperm.slane %v2415, 0
  %2419 = vrot.lane.b32.xlu0 %v2418, 32
  %v2420 = vpop.permute.xlu0 %2419
  %v2421 = vsel %vm63, %v2420, 0
  %2423 = vmatpush.xpose.msra.mxu0 0.0
  %2424 = vmatpush.xpose.msra.mxu0 0.0
  %2425 = vmatpush.xpose.msra.mxu0 0.0
  %2426 = vmatpush.xpose.msra.mxu0 0.0
  %2427 = vmatpush.xpose.msra.mxu0 0.0
  %2428 = vmatpush.xpose.msra.mxu0 0.0
  %2429 = vmatpush.xpose.msra.mxu0 0.0
  %2430 = vmatpush.xpose.msra.mxu0 0.0
  %2431 = vmatpush.xpose.msra.mxu0 0.0
  %2432 = vmatpush.xpose.msra.mxu0 0.0
  %2433 = vmatpush.xpose.msra.mxu0 0.0
  %2434 = vmatpush.xpose.msra.mxu0 0.0
  %2435 = vmatpush.xpose.msra.mxu0 0.0
  %2436 = vmatpush.xpose.msra.mxu0 0.0
  %2437 = vmatpush.xpose.msra.mxu0 %v511
  %2438 = vmatpush.xpose.msra.mxu0 %v508
  %2439 = vmatmul.f32.gmra.mxu0 %v2421
  %v2440 = vpop.f32.mrf.mxu0
  %v2441 = vadd.f32 0.0, %v2440
  %2442 = vdwg.mxu0
  %v2444 = vperm.slane %v2416, 0
  %2445 = vrot.lane.b32.xlu0 %v2444, 32
  %v2446 = vpop.permute.xlu0 %2445
  %v2447 = vsel %vm63, %v2446, 0
  %2449 = vmatpush.xpose.msra.mxu0 0.0
  %2450 = vmatpush.xpose.msra.mxu0 0.0
  %2451 = vmatpush.xpose.msra.mxu0 0.0
  %2452 = vmatpush.xpose.msra.mxu0 0.0
  %2453 = vmatpush.xpose.msra.mxu0 0.0
  %2454 = vmatpush.xpose.msra.mxu0 0.0
  %2455 = vmatpush.xpose.msra.mxu0 0.0
  %2456 = vmatpush.xpose.msra.mxu0 0.0
  %2457 = vmatpush.xpose.msra.mxu0 0.0
  %2458 = vmatpush.xpose.msra.mxu0 0.0
  %2459 = vmatpush.xpose.msra.mxu0 0.0
  %2460 = vmatpush.xpose.msra.mxu0 0.0
  %2461 = vmatpush.xpose.msra.mxu0 0.0
  %2462 = vmatpush.xpose.msra.mxu0 0.0
  %2463 = vmatpush.xpose.msra.mxu0 %v543
  %2464 = vmatpush.xpose.msra.mxu0 %v540
  %2465 = vmatmul.f32.gmra.mxu0 %v2447
  %v2466 = vpop.f32.mrf.mxu0
  %v2467 = vadd.f32 0.0, %v2466
  %2468 = vdwg.mxu0
  %v2469 = vsel %vm565, %v2441, -1e+30
  %v2470 = vsel %vm566, %v2467, -1e+30
  %v2471 = vsel %vm569, %v2469, -inf
  %2472 = vmax.xlane.f32.xlu0 %v2471
  %v2473 = vpop.xlane.xlu0 %2472
  %v2474 = vsel %vm569, %v2470, -inf
  %2475 = vmax.xlane.f32.xlu0 %v2474
  %v2476 = vpop.xlane.xlu0 %2475
  %v2477 = vsub.f32 %v2469, %v2473
  %v2478 = vsub.f32 %v2470, %v2476
  %v2479 = vmul.f32 %v2477, 1.442695
  %v2480 = vpow.pop %v2479
  %v2481 = vmul.f32 %v2478, 1.442695
  %v2482 = vpow.pop %v2481
  %v2483 = vsel %vm569, %v2480, 0.0
  %2484 = vadd.xlane.f32.xlu0 %v2483
  %v2485 = vpop.xlane.xlu0 %2484
  %v2486 = vsel %vm569, %v2482, 0.0
  %2487 = vadd.xlane.f32.xlu0 %v2486
  %v2488 = vpop.xlane.xlu0 %2487
  %v2489 = vrcp.pop %v2485
  %v2490 = vrcp.pop %v2488
  %v2491 = vmul.f32 %v2480, %v2489
  %v2492 = vmul.f32 %v2482, %v2490
  %v2494 = vsel %vm592, %v2491, 0
  %2496 = vmatpush.msra.mxu0 0.0
  %2497 = vmatpush.msra.mxu0 0.0
  %2498 = vmatpush.msra.mxu0 0.0
  %2499 = vmatpush.msra.mxu0 0.0
  %2500 = vmatpush.msra.mxu0 0.0
  %2501 = vmatpush.msra.mxu0 0.0
  %2502 = vmatpush.msra.mxu0 0.0
  %2503 = vmatpush.msra.mxu0 0.0
  %2504 = vmatpush.msra.mxu0 0.0
  %2505 = vmatpush.msra.mxu0 0.0
  %2506 = vmatpush.msra.mxu0 0.0
  %2507 = vmatpush.msra.mxu0 0.0
  %2508 = vmatpush.msra.mxu0 0.0
  %2509 = vmatpush.msra.mxu0 0.0
  %2510 = vmatpush.msra.mxu0 %v160
  %2511 = vmatpush.msra.mxu0 %v159
  %2512 = vmatmul.f32.gmra.mxu0 %v2494
  %v2513 = vpop.f32.mrf.mxu0
  %v2514 = vadd.f32 0.0, %v2513
  %2515 = vdwg.mxu0
  %v2517 = vsel %vm592, %v2492, 0
  %2519 = vmatpush.msra.mxu0 0.0
  %2520 = vmatpush.msra.mxu0 0.0
  %2521 = vmatpush.msra.mxu0 0.0
  %2522 = vmatpush.msra.mxu0 0.0
  %2523 = vmatpush.msra.mxu0 0.0
  %2524 = vmatpush.msra.mxu0 0.0
  %2525 = vmatpush.msra.mxu0 0.0
  %2526 = vmatpush.msra.mxu0 0.0
  %2527 = vmatpush.msra.mxu0 0.0
  %2528 = vmatpush.msra.mxu0 0.0
  %2529 = vmatpush.msra.mxu0 0.0
  %2530 = vmatpush.msra.mxu0 0.0
  %2531 = vmatpush.msra.mxu0 0.0
  %2532 = vmatpush.msra.mxu0 0.0
  %2533 = vmatpush.msra.mxu0 %v162
  %2534 = vmatpush.msra.mxu0 %v161
  %2535 = vmatmul.f32.gmra.mxu0 %v2517
  %v2536 = vpop.f32.mrf.mxu0
  %v2537 = vadd.f32 0.0, %v2536
  %2538 = vdwg.mxu0
  %v2540 = vsel %vm171, %v2514, 0
  %2542 = vmatpush.msra.mxu0 0.0
  %2543 = vmatpush.msra.mxu0 0.0
  %2544 = vmatpush.msra.mxu0 0.0
  %2545 = vmatpush.msra.mxu0 0.0
  %2546 = vmatpush.msra.mxu0 0.0
  %2547 = vmatpush.msra.mxu0 0.0
  %2548 = vmatpush.msra.mxu0 0.0
  %2549 = vmatpush.msra.mxu0 0.0
  %2550 = vmatpush.msra.mxu0 %v158
  %2551 = vmatpush.msra.mxu0 %v157
  %2552 = vmatpush.msra.mxu0 %v156
  %2553 = vmatpush.msra.mxu0 %v155
  %2554 = vmatpush.msra.mxu0 %v154
  %2555 = vmatpush.msra.mxu0 %v153
  %2556 = vmatpush.msra.mxu0 %v152
  %2557 = vmatpush.msra.mxu0 %v151
  %2558 = vmatmul.f32.gmra.mxu0 %v2540
  %v2559 = vpop.f32.mrf.mxu0
  %v2560 = vadd.f32 0.0, %v2559
  %2561 = vdwg.mxu0
  %v2563 = vsel %vm171, %v2537, 0
  %2565 = vmatpush.msra.mxu0 0.0
  %2566 = vmatpush.msra.mxu0 0.0
  %2567 = vmatpush.msra.mxu0 0.0
  %2568 = vmatpush.msra.mxu0 0.0
  %2569 = vmatpush.msra.mxu0 0.0
  %2570 = vmatpush.msra.mxu0 0.0
  %2571 = vmatpush.msra.mxu0 0.0
  %2572 = vmatpush.msra.mxu0 0.0
  %2573 = vmatpush.msra.mxu0 %v158
  %2574 = vmatpush.msra.mxu0 %v157
  %2575 = vmatpush.msra.mxu0 %v156
  %2576 = vmatpush.msra.mxu0 %v155
  %2577 = vmatpush.msra.mxu0 %v154
  %2578 = vmatpush.msra.mxu0 %v153
  %2579 = vmatpush.msra.mxu0 %v152
  %2580 = vmatpush.msra.mxu0 %v151
  %2581 = vmatmul.f32.gmra.mxu0 %v2563
  %v2582 = vpop.f32.mrf.mxu0
  %v2583 = vadd.f32 0.0, %v2582
  %2584 = vdwg.mxu0
  %2585 = vmatpush.msra.mxu0 0.0
  %2586 = vmatpush.msra.mxu0 0.0
  %2587 = vmatpush.msra.mxu0 0.0
  %2588 = vmatpush.msra.mxu0 0.0
  %2589 = vmatpush.msra.mxu0 0.0
  %2590 = vmatpush.msra.mxu0 0.0
  %2591 = vmatpush.msra.mxu0 0.0
  %2592 = vmatpush.msra.mxu0 0.0
  %2593 = vmatpush.msra.mxu0 0.0
  %2594 = vmatpush.msra.mxu0 0.0
  %2595 = vmatpush.msra.mxu0 0.0
  %2596 = vmatpush.msra.mxu0 0.0
  %2597 = vmatpush.msra.mxu0 %v150
  %2598 = vmatpush.msra.mxu0 %v149
  %2599 = vmatpush.msra.mxu0 %v148
  %2600 = vmatpush.msra.mxu0 %v147
  %2601 = vmatmul.f32.gmra.mxu0 %v2421
  %v2602 = vpop.f32.mrf.mxu0
  %v2603 = vadd.f32 %v2560, %v2602
  %2604 = vdwg.mxu0
  %2605 = vmatpush.msra.mxu0 0.0
  %2606 = vmatpush.msra.mxu0 0.0
  %2607 = vmatpush.msra.mxu0 0.0
  %2608 = vmatpush.msra.mxu0 0.0
  %2609 = vmatpush.msra.mxu0 0.0
  %2610 = vmatpush.msra.mxu0 0.0
  %2611 = vmatpush.msra.mxu0 0.0
  %2612 = vmatpush.msra.mxu0 0.0
  %2613 = vmatpush.msra.mxu0 0.0
  %2614 = vmatpush.msra.mxu0 0.0
  %2615 = vmatpush.msra.mxu0 0.0
  %2616 = vmatpush.msra.mxu0 0.0
  %2617 = vmatpush.msra.mxu0 %v150
  %2618 = vmatpush.msra.mxu0 %v149
  %2619 = vmatpush.msra.mxu0 %v148
  %2620 = vmatpush.msra.mxu0 %v147
  %2621 = vmatmul.f32.gmra.mxu0 %v2447
  %v2622 = vpop.f32.mrf.mxu0
  %v2623 = vadd.f32 %v2583, %v2622
  %2624 = vdwg.mxu0
  %v2625 = vtanh.pop %v2603
  %v2626 = vtanh.pop %v2623
  %s2627 = scalar_lea.vmem [#allocation3], 10
  %2628 = vst.msk [vmem:[%s2627] sm:$0x1] %vm727, %v2625
  %2629 = vst.msk [vmem:[%s2627 + $0x1] sm:$0x1] %vm727, %v2626
  %s2630 = scalar_lea.vmem [#allocation2], 12
  %v2631 = vld [vmem:[%s2630] sm:$0x1]
  %v2632 = vld [vmem:[%s2630 + $0x1] sm:$0x1]
  %v2634 = vsel %vm63, %v2625, 0
  %2636 = vmatpush.msra.mxu0 0.0
  %2637 = vmatpush.msra.mxu0 0.0
  %2638 = vmatpush.msra.mxu0 0.0
  %2639 = vmatpush.msra.mxu0 0.0
  %2640 = vmatpush.msra.mxu0 0.0
  %2641 = vmatpush.msra.mxu0 0.0
  %2642 = vmatpush.msra.mxu0 0.0
  %2643 = vmatpush.msra.mxu0 0.0
  %2644 = vmatpush.msra.mxu0 0.0
  %2645 = vmatpush.msra.mxu0 0.0
  %2646 = vmatpush.msra.mxu0 0.0
  %2647 = vmatpush.msra.mxu0 0.0
  %2648 = vmatpush.msra.mxu0 %v142
  %2649 = vmatpush.msra.mxu0 %v141
  %2650 = vmatpush.msra.mxu0 %v140
  %2651 = vmatpush.msra.mxu0 %v139
  %2652 = vmatmul.f32.gmra.mxu0 %v2634
  %v2653 = vpop.f32.mrf.mxu0
  %v2654 = vadd.f32 0.0, %v2653
  %2655 = vdwg.mxu0
  %v2657 = vsel %vm63, %v2626, 0
  %2659 = vmatpush.msra.mxu0 0.0
  %2660 = vmatpush.msra.mxu0 0.0
  %2661 = vmatpush.msra.mxu0 0.0
  %2662 = vmatpush.msra.mxu0 0.0
  %2663 = vmatpush.msra.mxu0 0.0
  %2664 = vmatpush.msra.mxu0 0.0
  %2665 = vmatpush.msra.mxu0 0.0
  %2666 = vmatpush.msra.mxu0 0.0
  %2667 = vmatpush.msra.mxu0 0.0
  %2668 = vmatpush.msra.mxu0 0.0
  %2669 = vmatpush.msra.mxu0 0.0
  %2670 = vmatpush.msra.mxu0 0.0
  %2671 = vmatpush.msra.mxu0 %v142
  %2672 = vmatpush.msra.mxu0 %v141
  %2673 = vmatpush.msra.mxu0 %v140
  %2674 = vmatpush.msra.mxu0 %v139
  %2675 = vmatmul.f32.gmra.mxu0 %v2657
  %v2676 = vpop.f32.mrf.mxu0
  %v2677 = vadd.f32 0.0, %v2676
  %2678 = vdwg.mxu0
  %v2679 = vadd.f32 %v2631, %v2654
  %v2680 = vadd.f32 %v2632, %v2677
  %2681 = vmatpush.msra.mxu0 0.0
  %2682 = vmatpush.msra.mxu0 0.0
  %2683 = vmatpush.msra.mxu0 0.0
  %2684 = vmatpush.msra.mxu0 0.0
  %2685 = vmatpush.msra.mxu0 0.0
  %2686 = vmatpush.msra.mxu0 0.0
  %2687 = vmatpush.msra.mxu0 0.0
  %2688 = vmatpush.msra.mxu0 0.0
  %2689 = vmatpush.msra.mxu0 0.0
  %2690 = vmatpush.msra.mxu0 0.0
  %2691 = vmatpush.msra.mxu0 0.0
  %2692 = vmatpush.msra.mxu0 0.0
  %2693 = vmatpush.msra.mxu0 %v146
  %2694 = vmatpush.msra.mxu0 %v145
  %2695 = vmatpush.msra.mxu0 %v144
  %2696 = vmatpush.msra.mxu0 %v143
  %2697 = vmatmul.f32.gmra.mxu0 %v2421
  %v2698 = vpop.f32.mrf.mxu0
  %v2699 = vadd.f32 0.0, %v2698
  %2700 = vdwg.mxu0
  %2701 = vmatpush.msra.mxu0 0.0
  %2702 = vmatpush.msra.mxu0 0.0
  %2703 = vmatpush.msra.mxu0 0.0
  %2704 = vmatpush.msra.mxu0 0.0
  %2705 = vmatpush.msra.mxu0 0.0
  %2706 = vmatpush.msra.mxu0 0.0
  %2707 = vmatpush.msra.mxu0 0.0
  %2708 = vmatpush.msra.mxu0 0.0
  %2709 = vmatpush.msra.mxu0 0.0
  %2710 = vmatpush.msra.mxu0 0.0
  %2711 = vmatpush.msra.mxu0 0.0
  %2712 = vmatpush.msra.mxu0 0.0
  %2713 = vmatpush.msra.mxu0 %v146
  %2714 = vmatpush.msra.mxu0 %v145
  %2715 = vmatpush.msra.mxu0 %v144
  %2716 = vmatpush.msra.mxu0 %v143
  %2717 = vmatmul.f32.gmra.mxu0 %v2447
  %v2718 = vpop.f32.mrf.mxu0
  %v2719 = vadd.f32 0.0, %v2718
  %2720 = vdwg.mxu0
  %v2721 = vadd.f32 %v2679, %v2699
  %v2722 = vadd.f32 %v2680, %v2719
  %v2723 = vxor.u32 %v2721, 2147483648
  %v2724 = vxor.u32 %v2722, 2147483648
  %v2725 = vmul.f32 %v2723, 1.442695
  %v2726 = vpow.pop %v2725
  %v2727 = vmul.f32 %v2724, 1.442695
  %v2728 = vpow.pop %v2727
  %v2729 = vadd.f32 %v2726, 1.0
  %v2730 = vadd.f32 %v2728, 1.0
  %v2731 = vrcp.pop %v2729
  %v2732 = vmul.f32 %v2729, %v2731
  %v2733 = vsub.f32 1.0, %v2732
  %v2734 = vmul.f32 %v2731, %v2733
  %v2735 = vadd.f32 %v2731, %v2734
  %vm2736 = vweird.f32 %v2729
  %vm2737 = vweird.f32 %v2731
  %vm2738 = vmor %vm2736, %vm2737
  %v2739 = vsel %vm2738, %v2731, %v2735
  %v2740 = vand.u32 2147483647, %v2729
  %vm2741 = vcmp.eq.f32.partialorder %v2740, 8.507059e+37
  %v2742 = vand.u32 %v2729, 2147483648
  %v2743 = vor.u32 1.1754944e-38, %v2742
  %v2744 = vsel %vm2741, %v2743, %v2739
  %v2745 = vmul.f32 1.0, %v2744
  %v2746 = vrcp.pop %v2730
  %v2747 = vmul.f32 %v2730, %v2746
  %v2748 = vsub.f32 1.0, %v2747
  %v2749 = vmul.f32 %v2746, %v2748
  %v2750 = vadd.f32 %v2746, %v2749
  %vm2751 = vweird.f32 %v2730
  %vm2752 = vweird.f32 %v2746
  %vm2753 = vmor %vm2751, %vm2752
  %v2754 = vsel %vm2753, %v2746, %v2750
  %v2755 = vand.u32 2147483647, %v2730
  %vm2756 = vcmp.eq.f32.partialorder %v2755, 8.507059e+37
  %v2757 = vand.u32 %v2730, 2147483648
  %v2758 = vor.u32 1.1754944e-38, %v2757
  %v2759 = vsel %vm2756, %v2758, %v2754
  %v2760 = vmul.f32 1.0, %v2759
  %v2761 = vtanh.pop %v2721
  %v2762 = vtanh.pop %v2722
  %v2763 = vmul.f32 %v2745, %v2403
  %v2764 = vmul.f32 %v2760, %v2404
  %2767 = vrot.lane.b32.xlu0 %v2761, 64
  %v2768 = vpop.permute.xlu0 %2767
  %2769 = vrot.lane.b32.xlu0 %v2762, 64
  %v2770 = vpop.permute.xlu0 %2769
  %v2773 = vmul.f32 %v2745, %v2768
  %v2774 = vmul.f32 %v2760, %v2770
  %2777 = vrot.lane.b32.xlu0 %v2773, 32
  %v2778 = vpop.permute.xlu0 %2777
  %2779 = vrot.lane.b32.xlu0 %v2774, 32
  %v2780 = vpop.permute.xlu0 %2779
  %v2783 = vadd.f32 %v2763, %v2778
  %v2784 = vadd.f32 %v2764, %v2780
  %v2785 = vtanh.pop %v2783
  %v2786 = vtanh.pop %v2784
  %2789 = vrot.lane.b32.xlu0 %v2785, 64
  %v2790 = vpop.permute.xlu0 %2789
  %2791 = vrot.lane.b32.xlu0 %v2786, 64
  %v2792 = vpop.permute.xlu0 %2791
  %v2795 = vmul.f32 %v2745, %v2790
  %v2796 = vmul.f32 %v2760, %v2792
  %v2798 = vperm.slane %v2795, 0
  %2799 = vrot.lane.b32.xlu0 %v2798, 32
  %v2800 = vpop.permute.xlu0 %2799
  %v2801 = vsel %vm63, %v2800, 0
  %2803 = vmatpush.xpose.msra.mxu0 0.0
  %2804 = vmatpush.xpose.msra.mxu0 0.0
  %2805 = vmatpush.xpose.msra.mxu0 0.0
  %2806 = vmatpush.xpose.msra.mxu0 0.0
  %2807 = vmatpush.xpose.msra.mxu0 0.0
  %2808 = vmatpush.xpose.msra.mxu0 0.0
  %2809 = vmatpush.xpose.msra.mxu0 0.0
  %2810 = vmatpush.xpose.msra.mxu0 0.0
  %2811 = vmatpush.xpose.msra.mxu0 0.0
  %2812 = vmatpush.xpose.msra.mxu0 0.0
  %2813 = vmatpush.xpose.msra.mxu0 0.0
  %2814 = vmatpush.xpose.msra.mxu0 0.0
  %2815 = vmatpush.xpose.msra.mxu0 0.0
  %2816 = vmatpush.xpose.msra.mxu0 0.0
  %2817 = vmatpush.xpose.msra.mxu0 %v511
  %2818 = vmatpush.xpose.msra.mxu0 %v508
  %2819 = vmatmul.f32.gmra.mxu0 %v2801
  %v2820 = vpop.f32.mrf.mxu0
  %v2821 = vadd.f32 0.0, %v2820
  %2822 = vdwg.mxu0
  %v2824 = vperm.slane %v2796, 0
  %2825 = vrot.lane.b32.xlu0 %v2824, 32
  %v2826 = vpop.permute.xlu0 %2825
  %v2827 = vsel %vm63, %v2826, 0
  %2829 = vmatpush.xpose.msra.mxu0 0.0
  %2830 = vmatpush.xpose.msra.mxu0 0.0
  %2831 = vmatpush.xpose.msra.mxu0 0.0
  %2832 = vmatpush.xpose.msra.mxu0 0.0
  %2833 = vmatpush.xpose.msra.mxu0 0.0
  %2834 = vmatpush.xpose.msra.mxu0 0.0
  %2835 = vmatpush.xpose.msra.mxu0 0.0
  %2836 = vmatpush.xpose.msra.mxu0 0.0
  %2837 = vmatpush.xpose.msra.mxu0 0.0
  %2838 = vmatpush.xpose.msra.mxu0 0.0
  %2839 = vmatpush.xpose.msra.mxu0 0.0
  %2840 = vmatpush.xpose.msra.mxu0 0.0
  %2841 = vmatpush.xpose.msra.mxu0 0.0
  %2842 = vmatpush.xpose.msra.mxu0 0.0
  %2843 = vmatpush.xpose.msra.mxu0 %v543
  %2844 = vmatpush.xpose.msra.mxu0 %v540
  %2845 = vmatmul.f32.gmra.mxu0 %v2827
  %v2846 = vpop.f32.mrf.mxu0
  %v2847 = vadd.f32 0.0, %v2846
  %2848 = vdwg.mxu0
  %v2849 = vsel %vm565, %v2821, -1e+30
  %v2850 = vsel %vm566, %v2847, -1e+30
  %v2851 = vsel %vm569, %v2849, -inf
  %2852 = vmax.xlane.f32.xlu0 %v2851
  %v2853 = vpop.xlane.xlu0 %2852
  %v2854 = vsel %vm569, %v2850, -inf
  %2855 = vmax.xlane.f32.xlu0 %v2854
  %v2856 = vpop.xlane.xlu0 %2855
  %v2857 = vsub.f32 %v2849, %v2853
  %v2858 = vsub.f32 %v2850, %v2856
  %v2859 = vmul.f32 %v2857, 1.442695
  %v2860 = vpow.pop %v2859
  %v2861 = vmul.f32 %v2858, 1.442695
  %v2862 = vpow.pop %v2861
  %v2863 = vsel %vm569, %v2860, 0.0
  %2864 = vadd.xlane.f32.xlu0 %v2863
  %v2865 = vpop.xlane.xlu0 %2864
  %v2866 = vsel %vm569, %v2862, 0.0
  %2867 = vadd.xlane.f32.xlu0 %v2866
  %v2868 = vpop.xlane.xlu0 %2867
  %v2869 = vrcp.pop %v2865
  %v2870 = vrcp.pop %v2868
  %v2871 = vmul.f32 %v2860, %v2869
  %v2872 = vmul.f32 %v2862, %v2870
  %v2874 = vsel %vm592, %v2871, 0
  %2876 = vmatpush.msra.mxu0 0.0
  %2877 = vmatpush.msra.mxu0 0.0
  %2878 = vmatpush.msra.mxu0 0.0
  %2879 = vmatpush.msra.mxu0 0.0
  %2880 = vmatpush.msra.mxu0 0.0
  %2881 = vmatpush.msra.mxu0 0.0
  %2882 = vmatpush.msra.mxu0 0.0
  %2883 = vmatpush.msra.mxu0 0.0
  %2884 = vmatpush.msra.mxu0 0.0
  %2885 = vmatpush.msra.mxu0 0.0
  %2886 = vmatpush.msra.mxu0 0.0
  %2887 = vmatpush.msra.mxu0 0.0
  %2888 = vmatpush.msra.mxu0 0.0
  %2889 = vmatpush.msra.mxu0 0.0
  %2890 = vmatpush.msra.mxu0 %v160
  %2891 = vmatpush.msra.mxu0 %v159
  %2892 = vmatmul.f32.gmra.mxu0 %v2874
  %v2893 = vpop.f32.mrf.mxu0
  %v2894 = vadd.f32 0.0, %v2893
  %2895 = vdwg.mxu0
  %v2897 = vsel %vm592, %v2872, 0
  %2899 = vmatpush.msra.mxu0 0.0
  %2900 = vmatpush.msra.mxu0 0.0
  %2901 = vmatpush.msra.mxu0 0.0
  %2902 = vmatpush.msra.mxu0 0.0
  %2903 = vmatpush.msra.mxu0 0.0
  %2904 = vmatpush.msra.mxu0 0.0
  %2905 = vmatpush.msra.mxu0 0.0
  %2906 = vmatpush.msra.mxu0 0.0
  %2907 = vmatpush.msra.mxu0 0.0
  %2908 = vmatpush.msra.mxu0 0.0
  %2909 = vmatpush.msra.mxu0 0.0
  %2910 = vmatpush.msra.mxu0 0.0
  %2911 = vmatpush.msra.mxu0 0.0
  %2912 = vmatpush.msra.mxu0 0.0
  %2913 = vmatpush.msra.mxu0 %v162
  %2914 = vmatpush.msra.mxu0 %v161
  %2915 = vmatmul.f32.gmra.mxu0 %v2897
  %v2916 = vpop.f32.mrf.mxu0
  %v2917 = vadd.f32 0.0, %v2916
  %2918 = vdwg.mxu0
  %v2920 = vsel %vm171, %v2894, 0
  %2922 = vmatpush.msra.mxu0 0.0
  %2923 = vmatpush.msra.mxu0 0.0
  %2924 = vmatpush.msra.mxu0 0.0
  %2925 = vmatpush.msra.mxu0 0.0
  %2926 = vmatpush.msra.mxu0 0.0
  %2927 = vmatpush.msra.mxu0 0.0
  %2928 = vmatpush.msra.mxu0 0.0
  %2929 = vmatpush.msra.mxu0 0.0
  %2930 = vmatpush.msra.mxu0 %v158
  %2931 = vmatpush.msra.mxu0 %v157
  %2932 = vmatpush.msra.mxu0 %v156
  %2933 = vmatpush.msra.mxu0 %v155
  %2934 = vmatpush.msra.mxu0 %v154
  %2935 = vmatpush.msra.mxu0 %v153
  %2936 = vmatpush.msra.mxu0 %v152
  %2937 = vmatpush.msra.mxu0 %v151
  %2938 = vmatmul.f32.gmra.mxu0 %v2920
  %v2939 = vpop.f32.mrf.mxu0
  %v2940 = vadd.f32 0.0, %v2939
  %2941 = vdwg.mxu0
  %v2943 = vsel %vm171, %v2917, 0
  %2945 = vmatpush.msra.mxu0 0.0
  %2946 = vmatpush.msra.mxu0 0.0
  %2947 = vmatpush.msra.mxu0 0.0
  %2948 = vmatpush.msra.mxu0 0.0
  %2949 = vmatpush.msra.mxu0 0.0
  %2950 = vmatpush.msra.mxu0 0.0
  %2951 = vmatpush.msra.mxu0 0.0
  %2952 = vmatpush.msra.mxu0 0.0
  %2953 = vmatpush.msra.mxu0 %v158
  %2954 = vmatpush.msra.mxu0 %v157
  %2955 = vmatpush.msra.mxu0 %v156
  %2956 = vmatpush.msra.mxu0 %v155
  %2957 = vmatpush.msra.mxu0 %v154
  %2958 = vmatpush.msra.mxu0 %v153
  %2959 = vmatpush.msra.mxu0 %v152
  %2960 = vmatpush.msra.mxu0 %v151
  %2961 = vmatmul.f32.gmra.mxu0 %v2943
  %v2962 = vpop.f32.mrf.mxu0
  %v2963 = vadd.f32 0.0, %v2962
  %2964 = vdwg.mxu0
  %2965 = vmatpush.msra.mxu0 0.0
  %2966 = vmatpush.msra.mxu0 0.0
  %2967 = vmatpush.msra.mxu0 0.0
  %2968 = vmatpush.msra.mxu0 0.0
  %2969 = vmatpush.msra.mxu0 0.0
  %2970 = vmatpush.msra.mxu0 0.0
  %2971 = vmatpush.msra.mxu0 0.0
  %2972 = vmatpush.msra.mxu0 0.0
  %2973 = vmatpush.msra.mxu0 0.0
  %2974 = vmatpush.msra.mxu0 0.0
  %2975 = vmatpush.msra.mxu0 0.0
  %2976 = vmatpush.msra.mxu0 0.0
  %2977 = vmatpush.msra.mxu0 %v150
  %2978 = vmatpush.msra.mxu0 %v149
  %2979 = vmatpush.msra.mxu0 %v148
  %2980 = vmatpush.msra.mxu0 %v147
  %2981 = vmatmul.f32.gmra.mxu0 %v2801
  %v2982 = vpop.f32.mrf.mxu0
  %v2983 = vadd.f32 %v2940, %v2982
  %2984 = vdwg.mxu0
  %2985 = vmatpush.msra.mxu0 0.0
  %2986 = vmatpush.msra.mxu0 0.0
  %2987 = vmatpush.msra.mxu0 0.0
  %2988 = vmatpush.msra.mxu0 0.0
  %2989 = vmatpush.msra.mxu0 0.0
  %2990 = vmatpush.msra.mxu0 0.0
  %2991 = vmatpush.msra.mxu0 0.0
  %2992 = vmatpush.msra.mxu0 0.0
  %2993 = vmatpush.msra.mxu0 0.0
  %2994 = vmatpush.msra.mxu0 0.0
  %2995 = vmatpush.msra.mxu0 0.0
  %2996 = vmatpush.msra.mxu0 0.0
  %2997 = vmatpush.msra.mxu0 %v150
  %2998 = vmatpush.msra.mxu0 %v149
  %2999 = vmatpush.msra.mxu0 %v148
  %3000 = vmatpush.msra.mxu0 %v147
  %3001 = vmatmul.f32.gmra.mxu0 %v2827
  %v3002 = vpop.f32.mrf.mxu0
  %v3003 = vadd.f32 %v2963, %v3002
  %3004 = vdwg.mxu0
  %v3005 = vtanh.pop %v2983
  %v3006 = vtanh.pop %v3003
  %s3007 = scalar_lea.vmem [#allocation3], 12
  %3008 = vst.msk [vmem:[%s3007] sm:$0x1] %vm727, %v3005
  %3009 = vst.msk [vmem:[%s3007 + $0x1] sm:$0x1] %vm727, %v3006
  %s3010 = scalar_lea.vmem [#allocation2], 14
  %v3011 = vld [vmem:[%s3010] sm:$0x1]
  %v3012 = vld [vmem:[%s3010 + $0x1] sm:$0x1]
  %v3014 = vsel %vm63, %v3005, 0
  %3016 = vmatpush.msra.mxu0 0.0
  %3017 = vmatpush.msra.mxu0 0.0
  %3018 = vmatpush.msra.mxu0 0.0
  %3019 = vmatpush.msra.mxu0 0.0
  %3020 = vmatpush.msra.mxu0 0.0
  %3021 = vmatpush.msra.mxu0 0.0
  %3022 = vmatpush.msra.mxu0 0.0
  %3023 = vmatpush.msra.mxu0 0.0
  %3024 = vmatpush.msra.mxu0 0.0
  %3025 = vmatpush.msra.mxu0 0.0
  %3026 = vmatpush.msra.mxu0 0.0
  %3027 = vmatpush.msra.mxu0 0.0
  %3028 = vmatpush.msra.mxu0 %v142
  %3029 = vmatpush.msra.mxu0 %v141
  %3030 = vmatpush.msra.mxu0 %v140
  %3031 = vmatpush.msra.mxu0 %v139
  %3032 = vmatmul.f32.gmra.mxu0 %v3014
  %v3033 = vpop.f32.mrf.mxu0
  %v3034 = vadd.f32 0.0, %v3033
  %3035 = vdwg.mxu0
  %v3037 = vsel %vm63, %v3006, 0
  %3039 = vmatpush.msra.mxu0 0.0
  %3040 = vmatpush.msra.mxu0 0.0
  %3041 = vmatpush.msra.mxu0 0.0
  %3042 = vmatpush.msra.mxu0 0.0
  %3043 = vmatpush.msra.mxu0 0.0
  %3044 = vmatpush.msra.mxu0 0.0
  %3045 = vmatpush.msra.mxu0 0.0
  %3046 = vmatpush.msra.mxu0 0.0
  %3047 = vmatpush.msra.mxu0 0.0
  %3048 = vmatpush.msra.mxu0 0.0
  %3049 = vmatpush.msra.mxu0 0.0
  %3050 = vmatpush.msra.mxu0 0.0
  %3051 = vmatpush.msra.mxu0 %v142
  %3052 = vmatpush.msra.mxu0 %v141
  %3053 = vmatpush.msra.mxu0 %v140
  %3054 = vmatpush.msra.mxu0 %v139
  %3055 = vmatmul.f32.gmra.mxu0 %v3037
  %v3056 = vpop.f32.mrf.mxu0
  %v3057 = vadd.f32 0.0, %v3056
  %3058 = vdwg.mxu0
  %v3059 = vadd.f32 %v3011, %v3034
  %v3060 = vadd.f32 %v3012, %v3057
  %3061 = vmatpush.msra.mxu0 0.0
  %3062 = vmatpush.msra.mxu0 0.0
  %3063 = vmatpush.msra.mxu0 0.0
  %3064 = vmatpush.msra.mxu0 0.0
  %3065 = vmatpush.msra.mxu0 0.0
  %3066 = vmatpush.msra.mxu0 0.0
  %3067 = vmatpush.msra.mxu0 0.0
  %3068 = vmatpush.msra.mxu0 0.0
  %3069 = vmatpush.msra.mxu0 0.0
  %3070 = vmatpush.msra.mxu0 0.0
  %3071 = vmatpush.msra.mxu0 0.0
  %3072 = vmatpush.msra.mxu0 0.0
  %3073 = vmatpush.msra.mxu0 %v146
  %3074 = vmatpush.msra.mxu0 %v145
  %3075 = vmatpush.msra.mxu0 %v144
  %3076 = vmatpush.msra.mxu0 %v143
  %3077 = vmatmul.f32.gmra.mxu0 %v2801
  %v3078 = vpop.f32.mrf.mxu0
  %v3079 = vadd.f32 0.0, %v3078
  %3080 = vdwg.mxu0
  %3081 = vmatpush.msra.mxu0 0.0
  %3082 = vmatpush.msra.mxu0 0.0
  %3083 = vmatpush.msra.mxu0 0.0
  %3084 = vmatpush.msra.mxu0 0.0
  %3085 = vmatpush.msra.mxu0 0.0
  %3086 = vmatpush.msra.mxu0 0.0
  %3087 = vmatpush.msra.mxu0 0.0
  %3088 = vmatpush.msra.mxu0 0.0
  %3089 = vmatpush.msra.mxu0 0.0
  %3090 = vmatpush.msra.mxu0 0.0
  %3091 = vmatpush.msra.mxu0 0.0
  %3092 = vmatpush.msra.mxu0 0.0
  %3093 = vmatpush.msra.mxu0 %v146
  %3094 = vmatpush.msra.mxu0 %v145
  %3095 = vmatpush.msra.mxu0 %v144
  %3096 = vmatpush.msra.mxu0 %v143
  %3097 = vmatmul.f32.gmra.mxu0 %v2827
  %v3098 = vpop.f32.mrf.mxu0
  %v3099 = vadd.f32 0.0, %v3098
  %3100 = vdwg.mxu0
  %v3101 = vadd.f32 %v3059, %v3079
  %v3102 = vadd.f32 %v3060, %v3099
  %v3103 = vxor.u32 %v3101, 2147483648
  %v3104 = vxor.u32 %v3102, 2147483648
  %v3105 = vmul.f32 %v3103, 1.442695
  %v3106 = vpow.pop %v3105
  %v3107 = vmul.f32 %v3104, 1.442695
  %v3108 = vpow.pop %v3107
  %v3109 = vadd.f32 %v3106, 1.0
  %v3110 = vadd.f32 %v3108, 1.0
  %v3111 = vrcp.pop %v3109
  %v3112 = vmul.f32 %v3109, %v3111
  %v3113 = vsub.f32 1.0, %v3112
  %v3114 = vmul.f32 %v3111, %v3113
  %v3115 = vadd.f32 %v3111, %v3114
  %vm3116 = vweird.f32 %v3109
  %vm3117 = vweird.f32 %v3111
  %vm3118 = vmor %vm3116, %vm3117
  %v3119 = vsel %vm3118, %v3111, %v3115
  %v3120 = vand.u32 2147483647, %v3109
  %vm3121 = vcmp.eq.f32.partialorder %v3120, 8.507059e+37
  %v3122 = vand.u32 %v3109, 2147483648
  %v3123 = vor.u32 1.1754944e-38, %v3122
  %v3124 = vsel %vm3121, %v3123, %v3119
  %v3125 = vmul.f32 1.0, %v3124
  %v3126 = vrcp.pop %v3110
  %v3127 = vmul.f32 %v3110, %v3126
  %v3128 = vsub.f32 1.0, %v3127
  %v3129 = vmul.f32 %v3126, %v3128
  %v3130 = vadd.f32 %v3126, %v3129
  %vm3131 = vweird.f32 %v3110
  %vm3132 = vweird.f32 %v3126
  %vm3133 = vmor %vm3131, %vm3132
  %v3134 = vsel %vm3133, %v3126, %v3130
  %v3135 = vand.u32 2147483647, %v3110
  %vm3136 = vcmp.eq.f32.partialorder %v3135, 8.507059e+37
  %v3137 = vand.u32 %v3110, 2147483648
  %v3138 = vor.u32 1.1754944e-38, %v3137
  %v3139 = vsel %vm3136, %v3138, %v3134
  %v3140 = vmul.f32 1.0, %v3139
  %v3141 = vtanh.pop %v3101
  %v3142 = vtanh.pop %v3102
  %v3143 = vmul.f32 %v3125, %v2783
  %v3144 = vmul.f32 %v3140, %v2784
  %3147 = vrot.lane.b32.xlu0 %v3141, 64
  %v3148 = vpop.permute.xlu0 %3147
  %3149 = vrot.lane.b32.xlu0 %v3142, 64
  %v3150 = vpop.permute.xlu0 %3149
  %v3153 = vmul.f32 %v3125, %v3148
  %v3154 = vmul.f32 %v3140, %v3150
  %3157 = vrot.lane.b32.xlu0 %v3153, 32
  %v3158 = vpop.permute.xlu0 %3157
  %3159 = vrot.lane.b32.xlu0 %v3154, 32
  %v3160 = vpop.permute.xlu0 %3159
  %v3163 = vadd.f32 %v3143, %v3158
  %v3164 = vadd.f32 %v3144, %v3160
  %v3165 = vtanh.pop %v3163
  %v3166 = vtanh.pop %v3164
  %3169 = vrot.lane.b32.xlu0 %v3165, 64
  %v3170 = vpop.permute.xlu0 %3169
  %3171 = vrot.lane.b32.xlu0 %v3166, 64
  %v3172 = vpop.permute.xlu0 %3171
  %v3175 = vmul.f32 %v3125, %v3170
  %v3176 = vmul.f32 %v3140, %v3172
  %v3178 = vperm.slane %v3175, 0
  %3179 = vrot.lane.b32.xlu0 %v3178, 32
  %v3180 = vpop.permute.xlu0 %3179
  %v3181 = vsel %vm63, %v3180, 0
  %3183 = vmatpush.xpose.msra.mxu0 0.0
  %3184 = vmatpush.xpose.msra.mxu0 0.0
  %3185 = vmatpush.xpose.msra.mxu0 0.0
  %3186 = vmatpush.xpose.msra.mxu0 0.0
  %3187 = vmatpush.xpose.msra.mxu0 0.0
  %3188 = vmatpush.xpose.msra.mxu0 0.0
  %3189 = vmatpush.xpose.msra.mxu0 0.0
  %3190 = vmatpush.xpose.msra.mxu0 0.0
  %3191 = vmatpush.xpose.msra.mxu0 0.0
  %3192 = vmatpush.xpose.msra.mxu0 0.0
  %3193 = vmatpush.xpose.msra.mxu0 0.0
  %3194 = vmatpush.xpose.msra.mxu0 0.0
  %3195 = vmatpush.xpose.msra.mxu0 0.0
  %3196 = vmatpush.xpose.msra.mxu0 0.0
  %3197 = vmatpush.xpose.msra.mxu0 %v511
  %3198 = vmatpush.xpose.msra.mxu0 %v508
  %3199 = vmatmul.f32.gmra.mxu0 %v3181
  %v3200 = vpop.f32.mrf.mxu0
  %v3201 = vadd.f32 0.0, %v3200
  %3202 = vdwg.mxu0
  %v3204 = vperm.slane %v3176, 0
  %3205 = vrot.lane.b32.xlu0 %v3204, 32
  %v3206 = vpop.permute.xlu0 %3205
  %v3207 = vsel %vm63, %v3206, 0
  %3209 = vmatpush.xpose.msra.mxu0 0.0
  %3210 = vmatpush.xpose.msra.mxu0 0.0
  %3211 = vmatpush.xpose.msra.mxu0 0.0
  %3212 = vmatpush.xpose.msra.mxu0 0.0
  %3213 = vmatpush.xpose.msra.mxu0 0.0
  %3214 = vmatpush.xpose.msra.mxu0 0.0
  %3215 = vmatpush.xpose.msra.mxu0 0.0
  %3216 = vmatpush.xpose.msra.mxu0 0.0
  %3217 = vmatpush.xpose.msra.mxu0 0.0
  %3218 = vmatpush.xpose.msra.mxu0 0.0
  %3219 = vmatpush.xpose.msra.mxu0 0.0
  %3220 = vmatpush.xpose.msra.mxu0 0.0
  %3221 = vmatpush.xpose.msra.mxu0 0.0
  %3222 = vmatpush.xpose.msra.mxu0 0.0
  %3223 = vmatpush.xpose.msra.mxu0 %v543
  %3224 = vmatpush.xpose.msra.mxu0 %v540
  %3225 = vmatmul.f32.gmra.mxu0 %v3207
  %v3226 = vpop.f32.mrf.mxu0
  %v3227 = vadd.f32 0.0, %v3226
  %3228 = vdwg.mxu0
  %v3229 = vsel %vm565, %v3201, -1e+30
  %v3230 = vsel %vm566, %v3227, -1e+30
  %v3231 = vsel %vm569, %v3229, -inf
  %3232 = vmax.xlane.f32.xlu0 %v3231
  %v3233 = vpop.xlane.xlu0 %3232
  %v3234 = vsel %vm569, %v3230, -inf
  %3235 = vmax.xlane.f32.xlu0 %v3234
  %v3236 = vpop.xlane.xlu0 %3235
  %v3237 = vsub.f32 %v3229, %v3233
  %v3238 = vsub.f32 %v3230, %v3236
  %v3239 = vmul.f32 %v3237, 1.442695
  %v3240 = vpow.pop %v3239
  %v3241 = vmul.f32 %v3238, 1.442695
  %v3242 = vpow.pop %v3241
  %v3243 = vsel %vm569, %v3240, 0.0
  %3244 = vadd.xlane.f32.xlu0 %v3243
  %v3245 = vpop.xlane.xlu0 %3244
  %v3246 = vsel %vm569, %v3242, 0.0
  %3247 = vadd.xlane.f32.xlu0 %v3246
  %v3248 = vpop.xlane.xlu0 %3247
  %v3249 = vrcp.pop %v3245
  %v3250 = vrcp.pop %v3248
  %v3251 = vmul.f32 %v3240, %v3249
  %v3252 = vmul.f32 %v3242, %v3250
  %v3254 = vsel %vm592, %v3251, 0
  %3256 = vmatpush.msra.mxu0 0.0
  %3257 = vmatpush.msra.mxu0 0.0
  %3258 = vmatpush.msra.mxu0 0.0
  %3259 = vmatpush.msra.mxu0 0.0
  %3260 = vmatpush.msra.mxu0 0.0
  %3261 = vmatpush.msra.mxu0 0.0
  %3262 = vmatpush.msra.mxu0 0.0
  %3263 = vmatpush.msra.mxu0 0.0
  %3264 = vmatpush.msra.mxu0 0.0
  %3265 = vmatpush.msra.mxu0 0.0
  %3266 = vmatpush.msra.mxu0 0.0
  %3267 = vmatpush.msra.mxu0 0.0
  %3268 = vmatpush.msra.mxu0 0.0
  %3269 = vmatpush.msra.mxu0 0.0
  %3270 = vmatpush.msra.mxu0 %v160
  %3271 = vmatpush.msra.mxu0 %v159
  %3272 = vmatmul.f32.gmra.mxu0 %v3254
  %v3273 = vpop.f32.mrf.mxu0
  %v3274 = vadd.f32 0.0, %v3273
  %3275 = vdwg.mxu0
  %v3277 = vsel %vm592, %v3252, 0
  %3279 = vmatpush.msra.mxu0 0.0
  %3280 = vmatpush.msra.mxu0 0.0
  %3281 = vmatpush.msra.mxu0 0.0
  %3282 = vmatpush.msra.mxu0 0.0
  %3283 = vmatpush.msra.mxu0 0.0
  %3284 = vmatpush.msra.mxu0 0.0
  %3285 = vmatpush.msra.mxu0 0.0
  %3286 = vmatpush.msra.mxu0 0.0
  %3287 = vmatpush.msra.mxu0 0.0
  %3288 = vmatpush.msra.mxu0 0.0
  %3289 = vmatpush.msra.mxu0 0.0
  %3290 = vmatpush.msra.mxu0 0.0
  %3291 = vmatpush.msra.mxu0 0.0
  %3292 = vmatpush.msra.mxu0 0.0
  %3293 = vmatpush.msra.mxu0 %v162
  %3294 = vmatpush.msra.mxu0 %v161
  %3295 = vmatmul.f32.gmra.mxu0 %v3277
  %v3296 = vpop.f32.mrf.mxu0
  %v3297 = vadd.f32 0.0, %v3296
  %3298 = vdwg.mxu0
  %v3300 = vsel %vm171, %v3274, 0
  %3302 = vmatpush.msra.mxu0 0.0
  %3303 = vmatpush.msra.mxu0 0.0
  %3304 = vmatpush.msra.mxu0 0.0
  %3305 = vmatpush.msra.mxu0 0.0
  %3306 = vmatpush.msra.mxu0 0.0
  %3307 = vmatpush.msra.mxu0 0.0
  %3308 = vmatpush.msra.mxu0 0.0
  %3309 = vmatpush.msra.mxu0 0.0
  %3310 = vmatpush.msra.mxu0 %v158
  %3311 = vmatpush.msra.mxu0 %v157
  %3312 = vmatpush.msra.mxu0 %v156
  %3313 = vmatpush.msra.mxu0 %v155
  %3314 = vmatpush.msra.mxu0 %v154
  %3315 = vmatpush.msra.mxu0 %v153
  %3316 = vmatpush.msra.mxu0 %v152
  %3317 = vmatpush.msra.mxu0 %v151
  %3318 = vmatmul.f32.gmra.mxu0 %v3300
  %v3319 = vpop.f32.mrf.mxu0
  %v3320 = vadd.f32 0.0, %v3319
  %3321 = vdwg.mxu0
  %v3323 = vsel %vm171, %v3297, 0
  %3325 = vmatpush.msra.mxu0 0.0
  %3326 = vmatpush.msra.mxu0 0.0
  %3327 = vmatpush.msra.mxu0 0.0
  %3328 = vmatpush.msra.mxu0 0.0
  %3329 = vmatpush.msra.mxu0 0.0
  %3330 = vmatpush.msra.mxu0 0.0
  %3331 = vmatpush.msra.mxu0 0.0
  %3332 = vmatpush.msra.mxu0 0.0
  %3333 = vmatpush.msra.mxu0 %v158
  %3334 = vmatpush.msra.mxu0 %v157
  %3335 = vmatpush.msra.mxu0 %v156
  %3336 = vmatpush.msra.mxu0 %v155
  %3337 = vmatpush.msra.mxu0 %v154
  %3338 = vmatpush.msra.mxu0 %v153
  %3339 = vmatpush.msra.mxu0 %v152
  %3340 = vmatpush.msra.mxu0 %v151
  %3341 = vmatmul.f32.gmra.mxu0 %v3323
  %v3342 = vpop.f32.mrf.mxu0
  %v3343 = vadd.f32 0.0, %v3342
  %3344 = vdwg.mxu0
  %3345 = vmatpush.msra.mxu0 0.0
  %3346 = vmatpush.msra.mxu0 0.0
  %3347 = vmatpush.msra.mxu0 0.0
  %3348 = vmatpush.msra.mxu0 0.0
  %3349 = vmatpush.msra.mxu0 0.0
  %3350 = vmatpush.msra.mxu0 0.0
  %3351 = vmatpush.msra.mxu0 0.0
  %3352 = vmatpush.msra.mxu0 0.0
  %3353 = vmatpush.msra.mxu0 0.0
  %3354 = vmatpush.msra.mxu0 0.0
  %3355 = vmatpush.msra.mxu0 0.0
  %3356 = vmatpush.msra.mxu0 0.0
  %3357 = vmatpush.msra.mxu0 %v150
  %3358 = vmatpush.msra.mxu0 %v149
  %3359 = vmatpush.msra.mxu0 %v148
  %3360 = vmatpush.msra.mxu0 %v147
  %3361 = vmatmul.f32.gmra.mxu0 %v3181
  %v3362 = vpop.f32.mrf.mxu0
  %v3363 = vadd.f32 %v3320, %v3362
  %3364 = vdwg.mxu0
  %3365 = vmatpush.msra.mxu0 0.0
  %3366 = vmatpush.msra.mxu0 0.0
  %3367 = vmatpush.msra.mxu0 0.0
  %3368 = vmatpush.msra.mxu0 0.0
  %3369 = vmatpush.msra.mxu0 0.0
  %3370 = vmatpush.msra.mxu0 0.0
  %3371 = vmatpush.msra.mxu0 0.0
  %3372 = vmatpush.msra.mxu0 0.0
  %3373 = vmatpush.msra.mxu0 0.0
  %3374 = vmatpush.msra.mxu0 0.0
  %3375 = vmatpush.msra.mxu0 0.0
  %3376 = vmatpush.msra.mxu0 0.0
  %3377 = vmatpush.msra.mxu0 %v150
  %3378 = vmatpush.msra.mxu0 %v149
  %3379 = vmatpush.msra.mxu0 %v148
  %3380 = vmatpush.msra.mxu0 %v147
  %3381 = vmatmul.f32.gmra.mxu0 %v3207
  %v3382 = vpop.f32.mrf.mxu0
  %v3383 = vadd.f32 %v3343, %v3382
  %3384 = vdwg.mxu0
  %v3385 = vtanh.pop %v3363
  %v3386 = vtanh.pop %v3383
  %s3387 = scalar_lea.vmem [#allocation3], 14
  %3388 = vst.msk [vmem:[%s3387] sm:$0x1] %vm727, %v3385
  %3389 = vst.msk [vmem:[%s3387 + $0x1] sm:$0x1] %vm727, %v3386
  %v3390 = vld [vmem:[#allocation3] sm:$0x1]
  %v3391 = vld [vmem:[#allocation3 + $0x1] sm:$0x1]
  %v3392 = vld [vmem:[#allocation3 + $0x2] sm:$0x1]
  %v3393 = vld [vmem:[#allocation3 + $0x3] sm:$0x1]
  %v3394 = vld [vmem:[#allocation3 + $0x4] sm:$0x1]
  %v3395 = vld [vmem:[#allocation3 + $0x5] sm:$0x1]
  %v3396 = vld [vmem:[#allocation3 + $0x6] sm:$0x1]
  %v3397 = vld [vmem:[#allocation3 + $0x7] sm:$0x1]
  %v3398 = vld [vmem:[#allocation3 + $0x8] sm:$0x1]
  %v3399 = vld [vmem:[#allocation3 + $0x9] sm:$0x1]
  %v3400 = vld [vmem:[#allocation3 + $0xa] sm:$0x1]
  %v3401 = vld [vmem:[#allocation3 + $0xb] sm:$0x1]
  %v3402 = vld [vmem:[#allocation3 + $0xc] sm:$0x1]
  %v3403 = vld [vmem:[#allocation3 + $0xd] sm:$0x1]
  %v3404 = vld [vmem:[#allocation3 + $0xe] sm:$0x1]
  %v3405 = vld [vmem:[#allocation3 + $0xf] sm:$0x1]
  %v3406 = vld [vmem:[%s14] sm:$0xff]
  %v3407 = vld [vmem:[%s14 + $0x8] sm:$0xff]
  %v3408 = vld [vmem:[%s14 + $0x10] sm:$0xff]
  %v3409 = vld [vmem:[%s14 + $0x18] sm:$0xff]
  %v3410 = vld [vmem:[%s15] sm:$0x1]
  %v3412 = vperm.slane %v3410, 0
  %3430 = vst [vmem:[#allocation1] ss:$9 sm:$0xff] %v3390
  %s3431 = scalar_lea.vmem [#allocation1], 1
  %3432 = vst [vmem:[%s3431] ss:$9 sm:$0xff] %v3391
  %s3433 = scalar_lea.vmem [#allocation1], 2
  %3434 = vst [vmem:[%s3433] ss:$9 sm:$0xff] %v3392
  %s3435 = scalar_lea.vmem [#allocation1], 3
  %3436 = vst [vmem:[%s3435] ss:$9 sm:$0xff] %v3393
  %s3437 = scalar_lea.vmem [#allocation1], 4
  %3438 = vst [vmem:[%s3437] ss:$9 sm:$0xff] %v3394
  %s3439 = scalar_lea.vmem [#allocation1], 5
  %3440 = vst [vmem:[%s3439] ss:$9 sm:$0xff] %v3395
  %s3441 = scalar_lea.vmem [#allocation1], 6
  %3442 = vst [vmem:[%s3441] ss:$9 sm:$0xff] %v3396
  %s3443 = scalar_lea.vmem [#allocation1], 7
  %3444 = vst [vmem:[%s3443] ss:$9 sm:$0xff] %v3397
  %v3445 = vld [vmem:[#allocation1] sm:$0xff]
  %3446 = vst [vmem:[#allocation1] ss:$9 sm:$0xff] %v3398
  %3447 = vst [vmem:[%s3431] ss:$9 sm:$0xff] %v3399
  %3448 = vst [vmem:[%s3433] ss:$9 sm:$0xff] %v3400
  %3449 = vst [vmem:[%s3435] ss:$9 sm:$0xff] %v3401
  %3450 = vst [vmem:[%s3437] ss:$9 sm:$0xff] %v3402
  %3451 = vst [vmem:[%s3439] ss:$9 sm:$0xff] %v3403
  %3452 = vst [vmem:[%s3441] ss:$9 sm:$0xff] %v3404
  %3453 = vst [vmem:[%s3443] ss:$9 sm:$0xff] %v3405
  %v3454 = vld [vmem:[#allocation1] sm:$0xff]
  %v3455 = vsel %vm63, %v3445, 0
  %v3457 = vsel %vm63, %v3454, 0
  %3459 = vmatpush.msra.mxu0 0.0
  %3460 = vmatpush.msra.mxu0 0.0
  %3461 = vmatpush.msra.mxu0 0.0
  %3462 = vmatpush.msra.mxu0 0.0
  %3463 = vmatpush.msra.mxu0 0.0
  %3464 = vmatpush.msra.mxu0 0.0
  %3465 = vmatpush.msra.mxu0 0.0
  %3466 = vmatpush.msra.mxu0 0.0
  %3467 = vmatpush.msra.mxu0 0.0
  %3468 = vmatpush.msra.mxu0 0.0
  %3469 = vmatpush.msra.mxu0 0.0
  %3470 = vmatpush.msra.mxu0 0.0
  %3471 = vmatpush.msra.mxu0 %v3409
  %3472 = vmatpush.msra.mxu0 %v3408
  %3473 = vmatpush.msra.mxu0 %v3407
  %3474 = vmatpush.msra.mxu0 %v3406
  %3475 = vmatmul.f32.gmra.mxu0 %v3455
  %v3476 = vpop.f32.mrf.mxu0
  %v3477 = vadd.f32 %v3412, %v3476
  %3478 = vmatmul.f32.gmra.mxu0 %v3457
  %v3479 = vpop.f32.mrf.mxu0
  %v3480 = vadd.f32 %v3412, %v3479
  %3481 = vdwg.mxu0
  %3482 = vmax.xlane.f32.xlu0 %v3477
  %v3483 = vpop.xlane.xlu0 %3482
  %3484 = vmax.xlane.f32.xlu0 %v3480
  %v3485 = vpop.xlane.xlu0 %3484
  %v3486 = vsub.f32 %v3477, %v3483
  %v3487 = vsub.f32 %v3480, %v3485
  %v3488 = vmul.f32 %v3486, 1.442695
  %v3489 = vpow.pop %v3488
  %v3490 = vmul.f32 %v3487, 1.442695
  %v3491 = vpow.pop %v3490
  %3492 = vadd.xlane.f32.xlu0 %v3489
  %v3493 = vpop.xlane.xlu0 %3492
  %3494 = vadd.xlane.f32.xlu0 %v3491
  %v3495 = vpop.xlane.xlu0 %3494
  %v3496 = vlog2.pop %v3493
  %v3497 = vmul.f32 %v3496, 0.6931472
  %v3498 = vlog2.pop %v3495
  %v3499 = vmul.f32 %v3498, 0.6931472
  %v3500 = vsub.f32 %v3486, %v3497
  %v3501 = vsub.f32 %v3487, %v3499
  %3502 = vst [vmem:[%s16] sm:$0xff] %v3500
  %3503 = vst [vmem:[%s16 + $0x8] sm:$0xff] %v3501
  // Predicated region
  $region66: #{_lambda_.3} parent=0 // pred_check
    _
  $region67: #{_lambda_.3} parent=0 // pred_check_branch
    %3505 = sbr.rel (0) target = $region69
  $region68: #{_lambda_.3} parent=0 // pred_region
    _
  $region69: #{_lambda_.3} parent=0 // pred_fallthru
    _
  // Predicated region
  $region70: #{_lambda_.3} parent=0 // pred_check
    _
  $region71: #{_lambda_.3} parent=0 // pred_check_branch
    %3507 = sbr.rel (0) target = $region73
  $region72: #{_lambda_.3} parent=0 // pred_region
    _
  $region73: #{_lambda_.3} parent=0 // pred_fallthru
    _

</llo_original>
